<compile_context>
chip_gen: v7x
topology: tpu7x:2x2x1
jax: 0.10.0
libtpu: 0.0.40
codegen_flags: <defaults>
</compile_context>

<pallas_src>
import functools

import jax
import jax.numpy as jnp
import numpy as np
from jax.experimental import pallas as pl
from jax.experimental.pallas import tpu as pltpu

BN_EPS = 1e-5
LEAKY_SLOPE = 0.1


# ----------------------------------------------------------------------------
# Pallas kernel
# ----------------------------------------------------------------------------
def _k_butterfly(v, op, step, width):
    """Reduce over stride-`step` lane classes of `v` with a cyclic-roll butterfly.

    After log2(width/step) steps every lane holds the reduction over its whole
    residue class (mod `step`), i.e. over the K neighbors of its channel.
    """
    sh = step
    while sh < width:
        v = op(v, pltpu.roll(v, shift=sh, axis=1))
        sh *= 2
    return v


def _lfa_kernel(g_ref, xkp_ref, w1sk_ref, b1_ref, w2_ref, b2_ref, w3_ref,
                b3_ref, out_ref, *, mid, km):
    g = g_ref[...]        # (TN, GW=128) bf16: [dist | xyz | posk | xfeat | 0pad]
    xkp = xkp_ref[...]    # (TN, K*mid)  bf16: gathered neighbor feats, lane k*mid+c

    # posmlp (Linear(10,mid)+folded BN+ReLU over all K neighbors) and the skip
    # Linear share g as LHS -> ONE matmul against [w1_big | wskip_big].
    r = jnp.dot(g, w1sk_ref[...], preferred_element_type=jnp.float32)
    fxyz = jnp.maximum(r[:, :km] + b1_ref[...], 0.0)       # (TN, K*mid) f32
    skip = r[:, km:]                                        # (TN, outc)  f32

    # attmlp: Linear(2*mid,2*mid)+folded BN+ReLU as ONE 2*KM-deep contraction.
    # Column layout: lanes [0,KM) weight fxyz in the pooling, [KM,2KM) weight
    # the neighbor features.  Both concat halves are 128-lane aligned.
    u = jnp.concatenate([fxyz.astype(jnp.bfloat16), xkp], axis=1)   # (TN, 2KM)
    s = jnp.maximum(
        jnp.dot(u, w2_ref[...], preferred_element_type=jnp.float32)
        + b2_ref[...], 0.0)                                  # (TN, 2*K*mid) f32

    # softmax over the K neighbors (torch Softmax(dim=1)): neighbors of one
    # channel sit at lane stride `mid`; roll butterflies (XLU) give per-class
    # max/sum broadcast back to every lane -> no reshape/relayout needed.
    def softmax_over_k(v):
        m = _k_butterfly(v, jnp.maximum, mid, km)
        e = jnp.exp(v - m)
        z = _k_butterfly(e, jnp.add, mid, km)
        return e * pl.reciprocal(z, approx=True)

    att_lo = softmax_over_k(s[:, :km])
    att_hi = softmax_over_k(s[:, km:])

    # Attentive pooling fused with mlpout: the sum over K folds into ONE
    # 2*KM-deep contraction against the row-tiled/stacked W3.
    v = jnp.concatenate(
        [fxyz * att_lo, xkp.astype(jnp.float32) * att_hi],
        axis=1).astype(jnp.bfloat16)                         # (TN, 2KM)
    lse = jnp.maximum(
        jnp.dot(v, w3_ref[...], preferred_element_type=jnp.float32)
        + b3_ref[...], 0.0)                                  # (TN, outc)

    # LFA tail: skip + LeakyReLU(0.1) fused in.
    y = skip + lse
    out_ref[...] = jnp.maximum(y, LEAKY_SLOPE * y).astype(out_ref.dtype)


# ----------------------------------------------------------------------------
# Weight repacking: logical LFA params -> block-diagonal / lane-tiled matrices
# matching the packed (TN, K*C) layouts used inside the kernel.
# Run ONCE at setup (hoisted out of the jitted forward).
# ----------------------------------------------------------------------------
def pack_lfa_params(params, k):
    w_in, w_skip, w1, b1, w2, b2, w3, b3 = params
    inc = w_skip.shape[0]
    mid = w_in.shape[1]
    outc = w3.shape[1]
    km = k * mid
    raw_gw = 4 * k + 3 + inc
    gw = ((raw_gw + 127) // 128) * 128          # pad g's lane dim to 128 multiple
    eye_k = jnp.eye(k, dtype=jnp.float32)

    # posenc = [dist, xyz - posk, xyz, posk] @ W1 is rewritten as
    #   dist*W1[0] + xyz@(W1[1:4]+W1[4:7]) + posk@(W1[7:10]-W1[1:4]) + b1
    # laid out against g = [dist(K) | xyz(3) | posk(3K) | xfeat(inc) | 0pad].
    wd = jnp.kron(eye_k, w1[0:1, :])                          # (K,  K*mid)
    wxyz = jnp.tile(w1[1:4, :] + w1[4:7, :], (1, k))          # (3,  K*mid)
    wpk = jnp.kron(eye_k, w1[7:10, :] - w1[1:4, :])           # (3K, K*mid)
    w1_big = jnp.concatenate(
        [wd, wxyz, wpk,
         jnp.zeros((inc, km), jnp.float32),
         jnp.zeros((gw - raw_gw, km), jnp.float32)], axis=0)  # (GW, K*mid)
    # skip Linear reads only the xfeat rows of g (no bias in the module).
    wskip_big = jnp.concatenate(
        [jnp.zeros((4 * k + 3, outc), jnp.float32), w_skip,
         jnp.zeros((gw - raw_gw, outc), jnp.float32)], axis=0)  # (GW, outc)
    w1sk = jnp.concatenate([w1_big, wskip_big], axis=1)         # (GW, K*mid+outc)
    b1_t = jnp.tile(b1, (1, k))                                 # (1, K*mid)

    # attmlp weight: rows split [fxyz | xk] (stacked), columns split [lo | hi],
    # block-diagonal over the K neighbors.
    def blockdiag_cols(w):     # (mid, 2*mid) -> (K*mid, 2*K*mid)
        return jnp.concatenate([jnp.kron(eye_k, w[:, :mid]),
                                jnp.kron(eye_k, w[:, mid:])], axis=1)
    w2_big = jnp.concatenate(
        [blockdiag_cols(w2[:mid, :]), blockdiag_cols(w2[mid:, :])], axis=0)
    b2_t = jnp.concatenate(
        [jnp.tile(b2[:, :mid], (1, k)), jnp.tile(b2[:, mid:], (1, k))], axis=1)

    # mlpout with the sum over K folded in (row-tiled), stacked over [fxyz | xk].
    w3_big = jnp.concatenate(
        [jnp.tile(w3[:mid, :], (k, 1)), jnp.tile(w3[mid:, :], (k, 1))], axis=0)

    bf = jnp.bfloat16
    return (w_in,                                # f32, used by XLA for in_lin
            w1sk.astype(bf), b1_t,               # biases stay f32 (post-accum add)
            w2_big.astype(bf), b2_t,
            w3_big.astype(bf), b3)


# ----------------------------------------------------------------------------
# Wrapper
# ----------------------------------------------------------------------------
@functools.partial(jax.jit, static_argnames=("tn",))
def lfa_forward(x, pos, idx, dist, packed, *, tn=1024):
    w_in, w1sk, b1_t, w2_big, b2_t, w3_big, b3 = packed
    n, inc = x.shape
    k = idx.shape[1]
    mid = w_in.shape[1]
    km = k * mid
    outc = w3_big.shape[1]
    raw_gw = 4 * k + 3 + inc
    gw = w1sk.shape[0]
    assert k & (k - 1) == 0, "K must be a power of two for the roll butterfly"

    xf = x.astype(jnp.float32)
    xyz = pos[:, :3].astype(jnp.float32)

    # in_lin before the gather ((x @ W_in)[idx] == x[idx] @ W_in); gathering the
    # mid-channel bf16 features moves the least HBM.
    x1 = (xf @ w_in).astype(jnp.bfloat16)                     # (N, mid)
    xyz_b = xyz.astype(jnp.bfloat16)

    # Neighbor gathers, packed lane-dense ((N,K,C)->(N,K*C) is a free row-major
    # reshape in HBM); g is one contiguous bf16 slab padded to 128 lanes.
    posk = jnp.take(xyz_b, idx, axis=0).reshape(n, 3 * k)     # (N, 3K)
    xkp = jnp.take(x1, idx, axis=0).reshape(n, km)            # (N, K*mid)
    pieces = [dist.astype(jnp.bfloat16), xyz_b, posk, xf.astype(jnp.bfloat16)]
    if gw > raw_gw:
        pieces.append(jnp.zeros((n, gw - raw_gw), jnp.bfloat16))
    g = jnp.concatenate(pieces, axis=1)                       # (N, GW)

    # Pad the point axis to a multiple of the tile (padded rows are finite
    # junk, sliced off at the end).
    n_pad = pl.cdiv(n, tn) * tn
    if n_pad != n:
        g = jnp.pad(g, ((0, n_pad - n), (0, 0)))
        xkp = jnp.pad(xkp, ((0, n_pad - n), (0, 0)))

    kernel = functools.partial(_lfa_kernel, mid=mid, km=km)

    out = pl.pallas_call(
        kernel,
        out_shape=jax.ShapeDtypeStruct((n_pad, outc), jnp.float32),
        grid_spec=pltpu.PrefetchScalarGridSpec(
            num_scalar_prefetch=0,
            grid=(n_pad // tn,),
            in_specs=[
                pl.BlockSpec((tn, gw), lambda i: (i, 0)),
                pl.BlockSpec((tn, km), lambda i: (i, 0)),
                pl.BlockSpec(w1sk.shape, lambda i: (0, 0)),
                pl.BlockSpec(b1_t.shape, lambda i: (0, 0)),
                pl.BlockSpec(w2_big.shape, lambda i: (0, 0)),
                pl.BlockSpec(b2_t.shape, lambda i: (0, 0)),
                pl.BlockSpec(w3_big.shape, lambda i: (0, 0)),
                pl.BlockSpec(b3.shape, lambda i: (0, 0)),
            ],
            out_specs=pl.BlockSpec((tn, outc), lambda i: (i, 0)),
        ),
        compiler_params=pltpu.CompilerParams(
            dimension_semantics=("parallel",),   # megacore / v7x 2-TC sharding
            # ~8 MiB actually needed at TN=1024 (tiles + intermediates);
            # 32 MiB gives 4x headroom and fits v7x's 64 MiB VMEM.
            vmem_limit_bytes=32 * 1024 * 1024),
    )(g, xkp, w1sk, b1_t, w2_big, b2_t, w3_big, b3)
    return out[:n]


# ----------------------------------------------------------------------------
# Deterministic parameters (Linear + eval-mode BN folded)
# ----------------------------------------------------------------------------
def _folded_linear_bn(key, din, dout):
    kw, kb, kg, kbeta, kmn, kv = jax.random.split(key, 6)
    w = jax.random.normal(kw, (din, dout), jnp.float32) / np.sqrt(din)
    b = 0.1 * jax.random.normal(kb, (dout,), jnp.float32)
    gamma = 1.0 + 0.1 * jax.random.normal(kg, (dout,), jnp.float32)
    beta = 0.1 * jax.random.normal(kbeta, (dout,), jnp.float32)
    mean = 0.1 * jax.random.normal(kmn, (dout,), jnp.float32)
    var = 1.0 + 0.1 * jax.random.uniform(kv, (dout,), jnp.float32)
    scale = gamma / jnp.sqrt(var + BN_EPS)
    return w * scale[None, :], (b * scale + beta - mean * scale)[None, :]


def make_params(key, inc=16, outc=32):
    mid = outc // 4
    kin, kskip, k1, k2, k3 = jax.random.split(key, 5)
    w_in = jax.random.normal(kin, (inc, mid), jnp.float32) / np.sqrt(inc)
    w_skip = jax.random.normal(kskip, (inc, outc), jnp.float32) / np.sqrt(inc)
    w1, b1 = _folded_linear_bn(k1, 10, mid)              # posmlp
    w2, b2 = _folded_linear_bn(k2, 2 * mid, 2 * mid)     # attmlp
    w3, b3 = _folded_linear_bn(k3, 2 * mid, outc)        # mlpout
    return (w_in, w_skip, w1, b1, w2, b2, w3, b3)


# ----------------------------------------------------------------------------
# Pure-JAX f32 reference mirroring LFA.forward (eval-mode BN folded)
# ----------------------------------------------------------------------------
def lfa_reference(x, pos, idx, dist, params):
    w_in, w_skip, w1, b1, w2, b2, w3, b3 = params
    n, k = idx.shape
    xf = x.astype(jnp.float32)
    xyz = pos[:, :3].astype(jnp.float32)
    x1 = xf @ w_in
    posk = xyz[idx]
    xyzk = jnp.broadcast_to(xyz[:, None, :], (n, k, 3))
    posenc = jnp.concatenate(
        [dist[:, :, None], xyzk - posk, xyzk, posk], axis=-1)
    fxyz = jnp.maximum(posenc @ w1 + b1[None], 0.0)
    ffeats = x1[idx]
    stack = jnp.concatenate([fxyz, ffeats], axis=-1)
    scores = jnp.maximum(stack @ w2 + b2[None], 0.0)
    scores = jax.nn.softmax(scores, axis=1)
    pooled = jnp.sum(stack * scores, axis=1)
    lse = jnp.maximum(pooled @ w3 + b3, 0.0)
    y = xf @ w_skip + lse
    return jnp.where(y > 0, y, LEAKY_SLOPE * y)


if __name__ == "__main__":
    key = jax.random.PRNGKey(0)
    kx, kp, ki, kd, kparams = jax.random.split(key, 5)

    N, INC, OUTC, K = 600, 16, 32, 16                     # mid = OUTC // 4 = 8
    x = jax.random.normal(kx, (N, INC), jnp.float32)          # x.F
    pos = 2.0 * jax.random.normal(kp, (N, 4), jnp.float32)    # x.C (xyz + batch)
    idx = jax.random.randint(ki, (N, K), 0, N, jnp.int32)     # knn indices
    dist = jax.random.uniform(kd, (N, K), jnp.float32)        # knn distances

    params = make_params(kparams, inc=INC, outc=OUTC)
    packed = pack_lfa_params(params, K)      # repack once, outside the jit

    # TN=512 -> grid of 2 at N=600 (even tile count for v7x's two TensorCores).
    out = jax.block_until_ready(
        lfa_forward(x, pos, idx, dist, packed, tn=512))
    ref = jax.block_until_ready(lfa_reference(x, pos, idx, dist, params))
    # bf16 activations/weights end-to-end (f32 accumulation): typical max abs
    # error ~1e-2 on O(1) outputs; any layout/algebra bug would be O(1).
    np.testing.assert_allclose(np.asarray(out), np.asarray(ref),
                               rtol=1e-1, atol=1e-1)

    print("KERNEL_OK")
</pallas_src>

<mosaic_0001>
module attributes {stable_mosaic.version = 11 : i64} {
  func.func @_lfa_kernel(%arg0: i32, %arg1: memref<512x128xbf16, #tpu.memory_space<vmem>>, %arg2: memref<512x128xbf16, #tpu.memory_space<vmem>>, %arg3: memref<128x160xbf16, #tpu.memory_space<vmem>>, %arg4: memref<1x128xf32, #tpu.memory_space<vmem>>, %arg5: memref<256x256xbf16, #tpu.memory_space<vmem>>, %arg6: memref<1x256xf32, #tpu.memory_space<vmem>>, %arg7: memref<256x32xbf16, #tpu.memory_space<vmem>>, %arg8: memref<1x32xf32, #tpu.memory_space<vmem>>, %arg9: memref<512x32xf32, #tpu.memory_space<vmem>>) attributes {dimension_semantics = [#tpu.dimension_semantics<parallel>], iteration_bounds = array<i64: 2>, scalar_prefetch = 0 : i64, scratch_operands = 0 : i64, tpu.core_type = #tpu.core_type<tc>, window_params = [{transform_indices = @transform_0, window_bounds = array<i64: 512, 128>}, {transform_indices = @transform_1, window_bounds = array<i64: 512, 128>}, {pipeline_mode = #tpu.pipeline_mode<synchronous>, transform_indices = @transform_2, window_bounds = array<i64: 128, 160>}, {pipeline_mode = #tpu.pipeline_mode<synchronous>, transform_indices = @transform_3, window_bounds = array<i64: 1, 128>}, {pipeline_mode = #tpu.pipeline_mode<synchronous>, transform_indices = @transform_4, window_bounds = array<i64: 256, 256>}, {pipeline_mode = #tpu.pipeline_mode<synchronous>, transform_indices = @transform_5, window_bounds = array<i64: 1, 256>}, {pipeline_mode = #tpu.pipeline_mode<synchronous>, transform_indices = @transform_6, window_bounds = array<i64: 256, 32>}, {pipeline_mode = #tpu.pipeline_mode<synchronous>, transform_indices = @transform_7, window_bounds = array<i64: 1, 32>}, {transform_indices = @transform_8, window_bounds = array<i64: 512, 32>}]} {
    %c0 = arith.constant 0 : index
    %c0_0 = arith.constant 0 : index
    %0 = vector.load %arg1[%c0, %c0_0] : memref<512x128xbf16, #tpu.memory_space<vmem>>, vector<512x128xbf16>
    %c0_1 = arith.constant 0 : index
    %c0_2 = arith.constant 0 : index
    %1 = vector.load %arg2[%c0_1, %c0_2] : memref<512x128xbf16, #tpu.memory_space<vmem>>, vector<512x128xbf16>
    %c0_3 = arith.constant 0 : index
    %c0_4 = arith.constant 0 : index
    %2 = vector.load %arg3[%c0_3, %c0_4] : memref<128x160xbf16, #tpu.memory_space<vmem>>, vector<128x160xbf16>
    %cst = arith.constant dense<0.000000e+00> : vector<512x160xf32>
    %3 = tpu.matmul %0, %2, %cst {dimension_numbers = #tpu.dot_dimension_numbers<[1], [0], [0], [1], [0, 0, 1, 1], [], []>} : vector<512x128xbf16>, vector<128x160xbf16>, vector<512x160xf32> -> vector<512x160xf32>
    %4 = vector.extract_strided_slice %3 {offsets = [0, 0], sizes = [512, 128], strides = [1, 1]} : vector<512x160xf32> to vector<512x128xf32>
    %c0_5 = arith.constant 0 : index
    %c0_6 = arith.constant 0 : index
    %5 = vector.load %arg4[%c0_5, %c0_6] : memref<1x128xf32, #tpu.memory_space<vmem>>, vector<1x128xf32>
    %6 = vector.broadcast %5 : vector<1x128xf32> to vector<512x128xf32>
    %7 = arith.addf %4, %6 : vector<512x128xf32>
    %cst_7 = arith.constant 0.000000e+00 : f32
    %8 = vector.broadcast %cst_7 : f32 to vector<512x128xf32>
    %9 = arith.maximumf %7, %8 : vector<512x128xf32>
    %10 = vector.extract_strided_slice %3 {offsets = [0, 128], sizes = [512, 32], strides = [1, 1]} : vector<512x160xf32> to vector<512x32xf32>
    %11 = arith.truncf %9 : vector<512x128xf32> to vector<512x128xbf16>
    %12 = tpu.concatenate %11, %1 in 1 : vector<512x128xbf16>, vector<512x128xbf16> -> vector<512x256xbf16>
    %c0_8 = arith.constant 0 : index
    %c0_9 = arith.constant 0 : index
    %13 = vector.load %arg5[%c0_8, %c0_9] : memref<256x256xbf16, #tpu.memory_space<vmem>>, vector<256x256xbf16>
    %cst_10 = arith.constant dense<0.000000e+00> : vector<512x256xf32>
    %14 = tpu.matmul %12, %13, %cst_10 {dimension_numbers = #tpu.dot_dimension_numbers<[1], [0], [0], [1], [0, 0, 1, 1], [], []>} : vector<512x256xbf16>, vector<256x256xbf16>, vector<512x256xf32> -> vector<512x256xf32>
    %c0_11 = arith.constant 0 : index
    %c0_12 = arith.constant 0 : index
    %15 = vector.load %arg6[%c0_11, %c0_12] : memref<1x256xf32, #tpu.memory_space<vmem>>, vector<1x256xf32>
    %16 = vector.broadcast %15 : vector<1x256xf32> to vector<512x256xf32>
    %17 = arith.addf %14, %16 : vector<512x256xf32>
    %cst_13 = arith.constant 0.000000e+00 : f32
    %18 = vector.broadcast %cst_13 : f32 to vector<512x256xf32>
    %19 = arith.maximumf %17, %18 : vector<512x256xf32>
    %20 = vector.extract_strided_slice %19 {offsets = [0, 0], sizes = [512, 128], strides = [1, 1]} : vector<512x256xf32> to vector<512x128xf32>
    %c8_i32 = arith.constant 8 : i32
    %21 = tpu.dynamic_rotate %20 by %c8_i32 dim 1 : vector<512x128xf32>, i32 -> vector<512x128xf32>
    %22 = arith.maximumf %20, %21 : vector<512x128xf32>
    %c16_i32 = arith.constant 16 : i32
    %23 = tpu.dynamic_rotate %22 by %c16_i32 dim 1 : vector<512x128xf32>, i32 -> vector<512x128xf32>
    %24 = arith.maximumf %22, %23 : vector<512x128xf32>
    %c32_i32 = arith.constant 32 : i32
    %25 = tpu.dynamic_rotate %24 by %c32_i32 dim 1 : vector<512x128xf32>, i32 -> vector<512x128xf32>
    %26 = arith.maximumf %24, %25 : vector<512x128xf32>
    %c64_i32 = arith.constant 64 : i32
    %27 = tpu.dynamic_rotate %26 by %c64_i32 dim 1 : vector<512x128xf32>, i32 -> vector<512x128xf32>
    %28 = arith.maximumf %26, %27 : vector<512x128xf32>
    %29 = arith.subf %20, %28 : vector<512x128xf32>
    %30 = math.exp %29 : vector<512x128xf32>
    %c8_i32_14 = arith.constant 8 : i32
    %31 = tpu.dynamic_rotate %30 by %c8_i32_14 dim 1 : vector<512x128xf32>, i32 -> vector<512x128xf32>
    %32 = arith.addf %30, %31 : vector<512x128xf32>
    %c16_i32_15 = arith.constant 16 : i32
    %33 = tpu.dynamic_rotate %32 by %c16_i32_15 dim 1 : vector<512x128xf32>, i32 -> vector<512x128xf32>
    %34 = arith.addf %32, %33 : vector<512x128xf32>
    %c32_i32_16 = arith.constant 32 : i32
    %35 = tpu.dynamic_rotate %34 by %c32_i32_16 dim 1 : vector<512x128xf32>, i32 -> vector<512x128xf32>
    %36 = arith.addf %34, %35 : vector<512x128xf32>
    %c64_i32_17 = arith.constant 64 : i32
    %37 = tpu.dynamic_rotate %36 by %c64_i32_17 dim 1 : vector<512x128xf32>, i32 -> vector<512x128xf32>
    %38 = arith.addf %36, %37 : vector<512x128xf32>
    %39 = tpu.reciprocal %38 {approx = true} : vector<512x128xf32> -> vector<512x128xf32>
    %40 = arith.mulf %30, %39 : vector<512x128xf32>
    %41 = vector.extract_strided_slice %19 {offsets = [0, 128], sizes = [512, 128], strides = [1, 1]} : vector<512x256xf32> to vector<512x128xf32>
    %c8_i32_18 = arith.constant 8 : i32
    %42 = tpu.dynamic_rotate %41 by %c8_i32_18 dim 1 : vector<512x128xf32>, i32 -> vector<512x128xf32>
    %43 = arith.maximumf %41, %42 : vector<512x128xf32>
    %c16_i32_19 = arith.constant 16 : i32
    %44 = tpu.dynamic_rotate %43 by %c16_i32_19 dim 1 : vector<512x128xf32>, i32 -> vector<512x128xf32>
    %45 = arith.maximumf %43, %44 : vector<512x128xf32>
    %c32_i32_20 = arith.constant 32 : i32
    %46 = tpu.dynamic_rotate %45 by %c32_i32_20 dim 1 : vector<512x128xf32>, i32 -> vector<512x128xf32>
    %47 = arith.maximumf %45, %46 : vector<512x128xf32>
    %c64_i32_21 = arith.constant 64 : i32
    %48 = tpu.dynamic_rotate %47 by %c64_i32_21 dim 1 : vector<512x128xf32>, i32 -> vector<512x128xf32>
    %49 = arith.maximumf %47, %48 : vector<512x128xf32>
    %50 = arith.subf %41, %49 : vector<512x128xf32>
    %51 = math.exp %50 : vector<512x128xf32>
    %c8_i32_22 = arith.constant 8 : i32
    %52 = tpu.dynamic_rotate %51 by %c8_i32_22 dim 1 : vector<512x128xf32>, i32 -> vector<512x128xf32>
    %53 = arith.addf %51, %52 : vector<512x128xf32>
    %c16_i32_23 = arith.constant 16 : i32
    %54 = tpu.dynamic_rotate %53 by %c16_i32_23 dim 1 : vector<512x128xf32>, i32 -> vector<512x128xf32>
    %55 = arith.addf %53, %54 : vector<512x128xf32>
    %c32_i32_24 = arith.constant 32 : i32
    %56 = tpu.dynamic_rotate %55 by %c32_i32_24 dim 1 : vector<512x128xf32>, i32 -> vector<512x128xf32>
    %57 = arith.addf %55, %56 : vector<512x128xf32>
    %c64_i32_25 = arith.constant 64 : i32
    %58 = tpu.dynamic_rotate %57 by %c64_i32_25 dim 1 : vector<512x128xf32>, i32 -> vector<512x128xf32>
    %59 = arith.addf %57, %58 : vector<512x128xf32>
    %60 = tpu.reciprocal %59 {approx = true} : vector<512x128xf32> -> vector<512x128xf32>
    %61 = arith.mulf %51, %60 : vector<512x128xf32>
    %62 = arith.mulf %9, %40 : vector<512x128xf32>
    %63 = arith.extf %1 : vector<512x128xbf16> to vector<512x128xf32>
    %64 = arith.mulf %63, %61 : vector<512x128xf32>
    %65 = tpu.concatenate %62, %64 in 1 : vector<512x128xf32>, vector<512x128xf32> -> vector<512x256xf32>
    %66 = arith.truncf %65 : vector<512x256xf32> to vector<512x256xbf16>
    %c0_26 = arith.constant 0 : index
    %c0_27 = arith.constant 0 : index
    %67 = vector.load %arg7[%c0_26, %c0_27] : memref<256x32xbf16, #tpu.memory_space<vmem>>, vector<256x32xbf16>
    %cst_28 = arith.constant dense<0.000000e+00> : vector<512x32xf32>
    %68 = tpu.matmul %66, %67, %cst_28 {dimension_numbers = #tpu.dot_dimension_numbers<[1], [0], [0], [1], [0, 0, 1, 1], [], []>} : vector<512x256xbf16>, vector<256x32xbf16>, vector<512x32xf32> -> vector<512x32xf32>
    %c0_29 = arith.constant 0 : index
    %c0_30 = arith.constant 0 : index
    %69 = vector.load %arg8[%c0_29, %c0_30] : memref<1x32xf32, #tpu.memory_space<vmem>>, vector<1x32xf32>
    %70 = vector.broadcast %69 : vector<1x32xf32> to vector<512x32xf32>
    %71 = arith.addf %68, %70 : vector<512x32xf32>
    %cst_31 = arith.constant 0.000000e+00 : f32
    %72 = vector.broadcast %cst_31 : f32 to vector<512x32xf32>
    %73 = arith.maximumf %71, %72 : vector<512x32xf32>
    %74 = arith.addf %10, %73 : vector<512x32xf32>
    %cst_32 = arith.constant 1.000000e-01 : f32
    %75 = vector.broadcast %cst_32 : f32 to vector<512x32xf32>
    %76 = arith.mulf %75, %74 : vector<512x32xf32>
    %77 = arith.maximumf %74, %76 : vector<512x32xf32>
    %c0_33 = arith.constant 0 : index
    %c0_34 = arith.constant 0 : index
    %78 = vector.load %arg9[%c0_33, %c0_34] : memref<512x32xf32, #tpu.memory_space<vmem>>, vector<512x32xf32>
    tpu.vector_store %arg9[%c0_33, %c0_34], %77 {strides = array<i32>} : memref<512x32xf32, #tpu.memory_space<vmem>>, vector<512x32xf32>,
    return
  }
  func.func @transform_0(%arg0: i32) -> (i32, i32) {
    %c0_i32 = arith.constant 0 : i32
    %c0_i32_0 = arith.constant 0 : i32
    return %arg0, %c0_i32 : i32, i32
  }
  func.func @transform_1(%arg0: i32) -> (i32, i32) {
    %c0_i32 = arith.constant 0 : i32
    %c0_i32_0 = arith.constant 0 : i32
    return %arg0, %c0_i32 : i32, i32
  }
  func.func @transform_2(%arg0: i32) -> (i32, i32) {
    %c0_i32 = arith.constant 0 : i32
    %c0_i32_0 = arith.constant 0 : i32
    %c0_i32_1 = arith.constant 0 : i32
    return %c0_i32, %c0_i32_0 : i32, i32
  }
  func.func @transform_3(%arg0: i32) -> (i32, i32) {
    %c0_i32 = arith.constant 0 : i32
    %c0_i32_0 = arith.constant 0 : i32
    %c0_i32_1 = arith.constant 0 : i32
    return %c0_i32, %c0_i32_0 : i32, i32
  }
  func.func @transform_4(%arg0: i32) -> (i32, i32) {
    %c0_i32 = arith.constant 0 : i32
    %c0_i32_0 = arith.constant 0 : i32
    %c0_i32_1 = arith.constant 0 : i32
    return %c0_i32, %c0_i32_0 : i32, i32
  }
  func.func @transform_5(%arg0: i32) -> (i32, i32) {
    %c0_i32 = arith.constant 0 : i32
    %c0_i32_0 = arith.constant 0 : i32
    %c0_i32_1 = arith.constant 0 : i32
    return %c0_i32, %c0_i32_0 : i32, i32
  }
  func.func @transform_6(%arg0: i32) -> (i32, i32) {
    %c0_i32 = arith.constant 0 : i32
    %c0_i32_0 = arith.constant 0 : i32
    %c0_i32_1 = arith.constant 0 : i32
    return %c0_i32, %c0_i32_0 : i32, i32
  }
  func.func @transform_7(%arg0: i32) -> (i32, i32) {
    %c0_i32 = arith.constant 0 : i32
    %c0_i32_0 = arith.constant 0 : i32
    %c0_i32_1 = arith.constant 0 : i32
    return %c0_i32, %c0_i32_0 : i32, i32
  }
  func.func @transform_8(%arg0: i32) -> (i32, i32) {
    %c0_i32 = arith.constant 0 : i32
    %c0_i32_0 = arith.constant 0 : i32
    return %arg0, %c0_i32 : i32, i32
  }
}

</mosaic_0001>

<llo_original>
// kernel: lfa_forward.1
$region0: #{lfa_forward.1}
  #allocation0 [shape = 'u32[]', space=smem, size = 0x4, offset = 0x4, fixed_abs, tag = 'smem constant byte address 0x4 - core index']
  #allocation1 [shape = 'u32[144,128]{1,0:T(1,128)}', space=vmem, size = 0x12000, scoped, tag = 'internal scratch']
  %s0 = inlined_call_operand.vmem [shape: bf16[1024,128], index: 0, kind: input, shape index: {}]
  %s1 = inlined_call_operand.vmem [shape: bf16[1024,128], index: 1, kind: input, shape index: {}]
  %s2 = inlined_call_operand.vmem [shape: bf16[128,160], index: 2, kind: input, shape index: {}]
  %s3 = inlined_call_operand.vmem [shape: f32[1,128], index: 3, kind: input, shape index: {}]
  %s4 = inlined_call_operand.vmem [shape: bf16[256,256], index: 4, kind: input, shape index: {}]
  %s5 = inlined_call_operand.vmem [shape: f32[1,256], index: 5, kind: input, shape index: {}]
  %s6 = inlined_call_operand.vmem [shape: bf16[256,32], index: 6, kind: input, shape index: {}]
  %s7 = inlined_call_operand.vmem [shape: f32[1,32], index: 7, kind: input, shape index: {}]
  %s8 = inlined_call_operand.vmem [shape: f32[1024,32], index: 8, kind: output, shape index: {}]
  %s9 = sld [smem:[#allocation0]]
  $region65: #{lfa_forward.1} parent=0
    _
  %s11 = ssub.s32 1, %s9
  %s12 = scalar_select 0, %s11, %s9
  loop: start=0, step=1, limit=4
  $region2: #{lfa_forward.1} parent=0 // loop_pre_header
    _
  $region3: #{lfa_forward.1} parent=0 // loop_header
    %s14 = sphi 0, %s18
    %p15 = scmp.ge.s32.totalorder %s14, 4
    %s24 = sphi 0, %s26
    %s27 = sphi 0, %s24
    %s28 = sphi 0, %s27
    %s44 = sphi 0, %s28
    %s50 = sphi 0, %s52
    %s53 = sphi 0, %s50
    %s54 = sphi 0, %s53
    %s70 = sphi 0, %s54
    %s74 = sphi 0, %s74
    %s76 = sphi 0, %s74
    %s77 = sphi 0, %s76
    %s91 = sphi 0, %s77
    %s95 = sphi 0, %s95
    %s97 = sphi 0, %s95
    %s98 = sphi 0, %s97
    %s112 = sphi 0, %s98
    %s116 = sphi 0, %s116
    %s118 = sphi 0, %s116
    %s119 = sphi 0, %s118
    %s133 = sphi 0, %s119
    %s137 = sphi 0, %s137
    %s139 = sphi 0, %s137
    %s140 = sphi 0, %s139
    %s154 = sphi 0, %s140
    %s158 = sphi 0, %s158
    %s160 = sphi 0, %s158
    %s161 = sphi 0, %s160
    %s175 = sphi 0, %s161
    %s179 = sphi 0, %s179
    %s181 = sphi 0, %s179
    %s182 = sphi 0, %s181
    %s196 = sphi 0, %s182
    %s202 = sphi 0, %s204
    %s205 = sphi 0, %s202
    %s206 = sphi 0, %s205
    %s222 = sphi 0, %s206
  $region4: #{lfa_forward.1} parent=0 // loop_header_branch
    %17 = sbr.rel (%p15) target = $region8
  $region5: #{lfa_forward.1} parent=0 // loop_body
    %s19 = ssub.s32 %s14, 1
    %s20 = ssub.s32 %s14, 2
    %s21 = sadd.s32 %s14, 1
    %s22 = ssub.s32 %s14, %s21
    %p23 = scmp.eq.s32.totalorder %s22, 0
    %s25 = sadd.s32 %s24, 1
    %s26 = scalar_select %p23, %s24, %s25
    %p29 = pneg %p23
    %p30 = scmp.eq.s32.totalorder %s14, 1
    %p31 = por %p29, %p30
    %p32 = scmp.ne.s32.totalorder %s24, %s27
    %p33 = scmp.eq.s32.totalorder %s14, 0
    %p34 = por %p32, %p33
    %p35 = scmp.ne.s32.totalorder %s24, %s27
    %p36 = scmp.eq.s32.totalorder %s19, 1
    %p37 = por %p35, %p36
    %p38 = scmp.ne.s32.totalorder %s27, %s28
    %p39 = scmp.eq.s32.totalorder %s19, 0
    %p40 = por %p38, %p39
    %p41 = scmp.ne.s32.totalorder %s27, %s28
    %p42 = scmp.eq.s32.totalorder %s20, 1
    %p43 = por %p41, %p42
    %p45 = scmp.ne.s32.totalorder %s28, %s44
    %p46 = scmp.eq.s32.totalorder %s20, 0
    %p47 = por %p45, %p46
    %s48 = ssub.s32 %s14, %s21
    %p49 = scmp.eq.s32.totalorder %s48, 0
    %s51 = sadd.s32 %s50, 1
    %s52 = scalar_select %p49, %s50, %s51
    %p55 = pneg %p49
    %p56 = scmp.eq.s32.totalorder %s14, 1
    %p57 = por %p55, %p56
    %p58 = scmp.ne.s32.totalorder %s50, %s53
    %p59 = scmp.eq.s32.totalorder %s14, 0
    %p60 = por %p58, %p59
    %p61 = scmp.ne.s32.totalorder %s50, %s53
    %p62 = scmp.eq.s32.totalorder %s19, 1
    %p63 = por %p61, %p62
    %p64 = scmp.ne.s32.totalorder %s53, %s54
    %p65 = scmp.eq.s32.totalorder %s19, 0
    %p66 = por %p64, %p65
    %p67 = scmp.ne.s32.totalorder %s53, %s54
    %p68 = scmp.eq.s32.totalorder %s20, 1
    %p69 = por %p67, %p68
    %p71 = scmp.ne.s32.totalorder %s54, %s70
    %p72 = scmp.eq.s32.totalorder %s20, 0
    %p73 = por %p71, %p72
    %s75 = sadd.s32 %s74, 1
    %p78 = scmp.eq.s32.totalorder %s14, 1
    %p79 = scmp.ne.s32.totalorder %s74, %s76
    %p80 = scmp.eq.s32.totalorder %s14, 0
    %p81 = por %p79, %p80
    %p82 = scmp.ne.s32.totalorder %s74, %s76
    %p83 = scmp.eq.s32.totalorder %s19, 1
    %p84 = por %p82, %p83
    %p85 = scmp.ne.s32.totalorder %s76, %s77
    %p86 = scmp.eq.s32.totalorder %s19, 0
    %p87 = por %p85, %p86
    %p88 = scmp.ne.s32.totalorder %s76, %s77
    %p89 = scmp.eq.s32.totalorder %s20, 1
    %p90 = por %p88, %p89
    %p92 = scmp.ne.s32.totalorder %s77, %s91
    %p93 = scmp.eq.s32.totalorder %s20, 0
    %p94 = por %p92, %p93
    %s96 = sadd.s32 %s95, 1
    %p99 = scmp.eq.s32.totalorder %s14, 1
    %p100 = scmp.ne.s32.totalorder %s95, %s97
    %p101 = scmp.eq.s32.totalorder %s14, 0
    %p102 = por %p100, %p101
    %p103 = scmp.ne.s32.totalorder %s95, %s97
    %p104 = scmp.eq.s32.totalorder %s19, 1
    %p105 = por %p103, %p104
    %p106 = scmp.ne.s32.totalorder %s97, %s98
    %p107 = scmp.eq.s32.totalorder %s19, 0
    %p108 = por %p106, %p107
    %p109 = scmp.ne.s32.totalorder %s97, %s98
    %p110 = scmp.eq.s32.totalorder %s20, 1
    %p111 = por %p109, %p110
    %p113 = scmp.ne.s32.totalorder %s98, %s112
    %p114 = scmp.eq.s32.totalorder %s20, 0
    %p115 = por %p113, %p114
    %s117 = sadd.s32 %s116, 1
    %p120 = scmp.eq.s32.totalorder %s14, 1
    %p121 = scmp.ne.s32.totalorder %s116, %s118
    %p122 = scmp.eq.s32.totalorder %s14, 0
    %p123 = por %p121, %p122
    %p124 = scmp.ne.s32.totalorder %s116, %s118
    %p125 = scmp.eq.s32.totalorder %s19, 1
    %p126 = por %p124, %p125
    %p127 = scmp.ne.s32.totalorder %s118, %s119
    %p128 = scmp.eq.s32.totalorder %s19, 0
    %p129 = por %p127, %p128
    %p130 = scmp.ne.s32.totalorder %s118, %s119
    %p131 = scmp.eq.s32.totalorder %s20, 1
    %p132 = por %p130, %p131
    %p134 = scmp.ne.s32.totalorder %s119, %s133
    %p135 = scmp.eq.s32.totalorder %s20, 0
    %p136 = por %p134, %p135
    %s138 = sadd.s32 %s137, 1
    %p141 = scmp.eq.s32.totalorder %s14, 1
    %p142 = scmp.ne.s32.totalorder %s137, %s139
    %p143 = scmp.eq.s32.totalorder %s14, 0
    %p144 = por %p142, %p143
    %p145 = scmp.ne.s32.totalorder %s137, %s139
    %p146 = scmp.eq.s32.totalorder %s19, 1
    %p147 = por %p145, %p146
    %p148 = scmp.ne.s32.totalorder %s139, %s140
    %p149 = scmp.eq.s32.totalorder %s19, 0
    %p150 = por %p148, %p149
    %p151 = scmp.ne.s32.totalorder %s139, %s140
    %p152 = scmp.eq.s32.totalorder %s20, 1
    %p153 = por %p151, %p152
    %p155 = scmp.ne.s32.totalorder %s140, %s154
    %p156 = scmp.eq.s32.totalorder %s20, 0
    %p157 = por %p155, %p156
    %s159 = sadd.s32 %s158, 1
    %p162 = scmp.eq.s32.totalorder %s14, 1
    %p163 = scmp.ne.s32.totalorder %s158, %s160
    %p164 = scmp.eq.s32.totalorder %s14, 0
    %p165 = por %p163, %p164
    %p166 = scmp.ne.s32.totalorder %s158, %s160
    %p167 = scmp.eq.s32.totalorder %s19, 1
    %p168 = por %p166, %p167
    %p169 = scmp.ne.s32.totalorder %s160, %s161
    %p170 = scmp.eq.s32.totalorder %s19, 0
    %p171 = por %p169, %p170
    %p172 = scmp.ne.s32.totalorder %s160, %s161
    %p173 = scmp.eq.s32.totalorder %s20, 1
    %p174 = por %p172, %p173
    %p176 = scmp.ne.s32.totalorder %s161, %s175
    %p177 = scmp.eq.s32.totalorder %s20, 0
    %p178 = por %p176, %p177
    %s180 = sadd.s32 %s179, 1
    %p183 = scmp.eq.s32.totalorder %s14, 1
    %p184 = scmp.ne.s32.totalorder %s179, %s181
    %p185 = scmp.eq.s32.totalorder %s14, 0
    %p186 = por %p184, %p185
    %p187 = scmp.ne.s32.totalorder %s179, %s181
    %p188 = scmp.eq.s32.totalorder %s19, 1
    %p189 = por %p187, %p188
    %p190 = scmp.ne.s32.totalorder %s181, %s182
    %p191 = scmp.eq.s32.totalorder %s19, 0
    %p192 = por %p190, %p191
    %p193 = scmp.ne.s32.totalorder %s181, %s182
    %p194 = scmp.eq.s32.totalorder %s20, 1
    %p195 = por %p193, %p194
    %p197 = scmp.ne.s32.totalorder %s182, %s196
    %p198 = scmp.eq.s32.totalorder %s20, 0
    %p199 = por %p197, %p198
    %s200 = ssub.s32 %s14, %s21
    %p201 = scmp.eq.s32.totalorder %s200, 0
    %s203 = sadd.s32 %s202, 1
    %s204 = scalar_select %p201, %s202, %s203
    %p207 = pneg %p201
    %p208 = scmp.eq.s32.totalorder %s14, 1
    %p209 = por %p207, %p208
    %p210 = scmp.ne.s32.totalorder %s202, %s205
    %p211 = scmp.eq.s32.totalorder %s14, 0
    %p212 = por %p210, %p211
    %p213 = scmp.ne.s32.totalorder %s202, %s205
    %p214 = scmp.eq.s32.totalorder %s19, 1
    %p215 = por %p213, %p214
    %p216 = scmp.ne.s32.totalorder %s205, %s206
    %p217 = scmp.eq.s32.totalorder %s19, 0
    %p218 = por %p216, %p217
    %p219 = scmp.ne.s32.totalorder %s205, %s206
    %p220 = scmp.eq.s32.totalorder %s20, 1
    %p221 = por %p219, %p220
    %p223 = scmp.ne.s32.totalorder %s206, %s222
    %p224 = scmp.eq.s32.totalorder %s20, 0
    %p225 = por %p223, %p224
    %p226 = scmp.le.s32.totalorder 1, %s14
    %p227 = scmp.lt.s32.totalorder %s14, 3
    %p228 = pnand %p226, %p227
    %p229 = pneg %p228
    // Predicated region
    $region9: #{lfa_forward.1} parent=5 // pred_check
      _
    $region10: #{lfa_forward.1} parent=5 // pred_check_branch
      %231 = sbr.rel (%p228) target = $region12
    $region11: #{lfa_forward.1} parent=5 // pred_region
      %s232 = ssub.s32 %s14, 1
      // Predicated region
      $region13: #{lfa_forward.1} parent=11 // pred_check
        %p233 = pneg %p87
      $region14: #{lfa_forward.1} parent=11 // pred_check_branch
        %235 = sbr.rel (%p233) target = $region16
      $region15: #{lfa_forward.1} parent=11 // pred_region
        _
      $region16: #{lfa_forward.1} parent=11 // pred_fallthru
        _
      // Predicated region
      $region17: #{lfa_forward.1} parent=11 // pred_check
        %p236 = pneg %p108
      $region18: #{lfa_forward.1} parent=11 // pred_check_branch
        %238 = sbr.rel (%p236) target = $region20
      $region19: #{lfa_forward.1} parent=11 // pred_region
        _
      $region20: #{lfa_forward.1} parent=11 // pred_fallthru
        _
      // Predicated region
      $region21: #{lfa_forward.1} parent=11 // pred_check
        %p239 = pneg %p129
      $region22: #{lfa_forward.1} parent=11 // pred_check_branch
        %241 = sbr.rel (%p239) target = $region24
      $region23: #{lfa_forward.1} parent=11 // pred_region
        _
      $region24: #{lfa_forward.1} parent=11 // pred_fallthru
        _
      // Predicated region
      $region25: #{lfa_forward.1} parent=11 // pred_check
        %p242 = pneg %p150
      $region26: #{lfa_forward.1} parent=11 // pred_check_branch
        %244 = sbr.rel (%p242) target = $region28
      $region27: #{lfa_forward.1} parent=11 // pred_region
        _
      $region28: #{lfa_forward.1} parent=11 // pred_fallthru
        _
      // Predicated region
      $region29: #{lfa_forward.1} parent=11 // pred_check
        %p245 = pneg %p171
      $region30: #{lfa_forward.1} parent=11 // pred_check_branch
        %247 = sbr.rel (%p245) target = $region32
      $region31: #{lfa_forward.1} parent=11 // pred_region
        _
      $region32: #{lfa_forward.1} parent=11 // pred_fallthru
        _
      // Predicated region
      $region33: #{lfa_forward.1} parent=11 // pred_check
        %p248 = pneg %p192
      $region34: #{lfa_forward.1} parent=11 // pred_check_branch
        %250 = sbr.rel (%p248) target = $region36
      $region35: #{lfa_forward.1} parent=11 // pred_region
        _
      $region36: #{lfa_forward.1} parent=11 // pred_fallthru
        _
    $region12: #{lfa_forward.1} parent=5 // pred_fallthru
      _
    %p251 = scmp.lt.s32.totalorder %s14, 2
    // Predicated region
    $region37: #{lfa_forward.1} parent=5 // pred_check
      %p252 = pneg %p251
    $region38: #{lfa_forward.1} parent=5 // pred_check_branch
      %254 = sbr.rel (%p252) target = $region40
    $region39: #{lfa_forward.1} parent=5 // pred_region
      // Predicated region
      $region41: #{lfa_forward.1} parent=39 // pred_check
        %p255 = pneg %p34
      $region42: #{lfa_forward.1} parent=39 // pred_check_branch
        %257 = sbr.rel (%p255) target = $region44
      $region43: #{lfa_forward.1} parent=39 // pred_region
        %s258 = smul.u32 64, %s14
        %p259 = scmp.lt.s32.totalorder %s258, 127
        %s260 = scalar_select %p259, %s258, 127
        %s261 = smul.addr %s260, 4
        %s262 = scalar_lea.vmem %s0, %s261
        %s263 = smul.u32 64, %s14
      $region44: #{lfa_forward.1} parent=39 // pred_fallthru
        _
      // Predicated region
      $region45: #{lfa_forward.1} parent=39 // pred_check
        %p264 = pneg %p60
      $region46: #{lfa_forward.1} parent=39 // pred_check_branch
        %266 = sbr.rel (%p264) target = $region48
      $region47: #{lfa_forward.1} parent=39 // pred_region
        %s267 = smul.u32 64, %s14
        %p268 = scmp.lt.s32.totalorder %s267, 127
        %s269 = scalar_select %p268, %s267, 127
        %s270 = smul.addr %s269, 4
        %s271 = scalar_lea.vmem %s1, %s270
        %s272 = smul.u32 64, %s14
      $region48: #{lfa_forward.1} parent=39 // pred_fallthru
        _
    $region40: #{lfa_forward.1} parent=5 // pred_fallthru
      _
    %p273 = scmp.le.s32.totalorder 1, %s14
    %p274 = scmp.lt.s32.totalorder %s14, 3
    %p275 = pnand %p273, %p274
    %p276 = pneg %p275
    // Predicated region
    $region49: #{lfa_forward.1} parent=5 // pred_check
      _
    $region50: #{lfa_forward.1} parent=5 // pred_check_branch
      %278 = sbr.rel (%p275) target = $region52
    $region51: #{lfa_forward.1} parent=5 // pred_region
      %s279 = ssub.s32 %s14, 1
      %s280 = smul.u32 64, %s19
      %p281 = scmp.lt.s32.totalorder %s280, 127
      %s282 = scalar_select %p281, %s280, 127
      %s283 = smul.addr %s282, 4
      %s284 = scalar_lea.vmem %s0, %s283
      %p285 = pneg %p40
      %p286 = pneg %p37
      %s287 = smul.u32 64, %s19
      %p288 = scmp.lt.s32.totalorder %s287, 127
      %s289 = scalar_select %p288, %s287, 127
      %s290 = smul.addr %s289, 4
      %s291 = scalar_lea.vmem %s1, %s290
      %p292 = pneg %p66
      %p293 = pneg %p63
      %p294 = pneg %p87
      %p295 = pneg %p84
      %p296 = pneg %p108
      %p297 = pneg %p105
      %p298 = pneg %p129
      %p299 = pneg %p126
      %p300 = pneg %p150
      %p301 = pneg %p147
      %p302 = pneg %p171
      %p303 = pneg %p168
      %p304 = pneg %p192
      %p305 = pneg %p189
      %p306 = pneg %p218
      %p307 = pneg %p215
      %s308 = smul.u32 64, %s19
      %p309 = scmp.lt.s32.totalorder %s308, 127
      %s310 = scalar_select %p309, %s308, 127
      %s311 = smul.addr %s310, 8
      %s312 = scalar_lea.vmem %s8, %s311
      %s313 = smul.u32 64, %s19
      %p314 = scmp.lt.s32.totalorder %s313, 127
      %s315 = scalar_select %p314, %s313, 127
      %s316 = smul.addr %s315, 4
      %s317 = scalar_lea.vmem %s0, %s316
      %s318 = smul.u32 64, %s19
      %s319 = smul.u32 64, %s19
      %p320 = scmp.lt.s32.totalorder %s319, 127
      %s321 = scalar_select %p320, %s319, 127
      %s322 = smul.addr %s321, 4
      %s323 = scalar_lea.vmem %s1, %s322
      %s324 = smul.u32 64, %s19
      %s325 = smul.u32 64, %s19
      %p326 = scmp.lt.s32.totalorder %s325, 127
      %s327 = scalar_select %p326, %s325, 127
      %s328 = smul.addr %s327, 8
      %s329 = scalar_lea.vmem %s8, %s328
      %s330 = smul.u32 64, %s19
      %v332 = vld [vmem:[%s317] sm:$0xf]
      %v333 = vld [vmem:[%s317 + $0x4] sm:$0xf]
      %v334 = vld [vmem:[%s317 + $0x8] sm:$0xf]
      %v335 = vld [vmem:[%s317 + $0xc] sm:$0xf]
      %v336 = vld [vmem:[%s317 + $0x10] sm:$0xf]
      %v337 = vld [vmem:[%s317 + $0x14] sm:$0xf]
      %v338 = vld [vmem:[%s317 + $0x18] sm:$0xf]
      %v339 = vld [vmem:[%s317 + $0x1c] sm:$0xf]
      %v340 = vld [vmem:[%s317 + $0x20] sm:$0xf]
      %v341 = vld [vmem:[%s317 + $0x24] sm:$0xf]
      %v342 = vld [vmem:[%s317 + $0x28] sm:$0xf]
      %v343 = vld [vmem:[%s317 + $0x2c] sm:$0xf]
      %v344 = vld [vmem:[%s317 + $0x30] sm:$0xf]
      %v345 = vld [vmem:[%s317 + $0x34] sm:$0xf]
      %v346 = vld [vmem:[%s317 + $0x38] sm:$0xf]
      %v347 = vld [vmem:[%s317 + $0x3c] sm:$0xf]
      %v348 = vld [vmem:[%s317 + $0x40] sm:$0xf]
      %v349 = vld [vmem:[%s317 + $0x44] sm:$0xf]
      %v350 = vld [vmem:[%s317 + $0x48] sm:$0xf]
      %v351 = vld [vmem:[%s317 + $0x4c] sm:$0xf]
      %v352 = vld [vmem:[%s317 + $0x50] sm:$0xf]
      %v353 = vld [vmem:[%s317 + $0x54] sm:$0xf]
      %v354 = vld [vmem:[%s317 + $0x58] sm:$0xf]
      %v355 = vld [vmem:[%s317 + $0x5c] sm:$0xf]
      %v356 = vld [vmem:[%s317 + $0x60] sm:$0xf]
      %v357 = vld [vmem:[%s317 + $0x64] sm:$0xf]
      %v358 = vld [vmem:[%s317 + $0x68] sm:$0xf]
      %v359 = vld [vmem:[%s317 + $0x6c] sm:$0xf]
      %v360 = vld [vmem:[%s317 + $0x70] sm:$0xf]
      %v361 = vld [vmem:[%s317 + $0x74] sm:$0xf]
      %v362 = vld [vmem:[%s317 + $0x78] sm:$0xf]
      %v363 = vld [vmem:[%s317 + $0x7c] sm:$0xf]
      %v364 = vld [vmem:[%s317 + $0x80] sm:$0xf]
      %v365 = vld [vmem:[%s317 + $0x84] sm:$0xf]
      %v366 = vld [vmem:[%s317 + $0x88] sm:$0xf]
      %v367 = vld [vmem:[%s317 + $0x8c] sm:$0xf]
      %v368 = vld [vmem:[%s317 + $0x90] sm:$0xf]
      %v369 = vld [vmem:[%s317 + $0x94] sm:$0xf]
      %v370 = vld [vmem:[%s317 + $0x98] sm:$0xf]
      %v371 = vld [vmem:[%s317 + $0x9c] sm:$0xf]
      %v372 = vld [vmem:[%s317 + $0xa0] sm:$0xf]
      %v373 = vld [vmem:[%s317 + $0xa4] sm:$0xf]
      %v374 = vld [vmem:[%s317 + $0xa8] sm:$0xf]
      %v375 = vld [vmem:[%s317 + $0xac] sm:$0xf]
      %v376 = vld [vmem:[%s317 + $0xb0] sm:$0xf]
      %v377 = vld [vmem:[%s317 + $0xb4] sm:$0xf]
      %v378 = vld [vmem:[%s317 + $0xb8] sm:$0xf]
      %v379 = vld [vmem:[%s317 + $0xbc] sm:$0xf]
      %v380 = vld [vmem:[%s317 + $0xc0] sm:$0xf]
      %v381 = vld [vmem:[%s317 + $0xc4] sm:$0xf]
      %v382 = vld [vmem:[%s317 + $0xc8] sm:$0xf]
      %v383 = vld [vmem:[%s317 + $0xcc] sm:$0xf]
      %v384 = vld [vmem:[%s317 + $0xd0] sm:$0xf]
      %v385 = vld [vmem:[%s317 + $0xd4] sm:$0xf]
      %v386 = vld [vmem:[%s317 + $0xd8] sm:$0xf]
      %v387 = vld [vmem:[%s317 + $0xdc] sm:$0xf]
      %v388 = vld [vmem:[%s317 + $0xe0] sm:$0xf]
      %v389 = vld [vmem:[%s317 + $0xe4] sm:$0xf]
      %v390 = vld [vmem:[%s317 + $0xe8] sm:$0xf]
      %v391 = vld [vmem:[%s317 + $0xec] sm:$0xf]
      %v392 = vld [vmem:[%s317 + $0xf0] sm:$0xf]
      %v393 = vld [vmem:[%s317 + $0xf4] sm:$0xf]
      %v394 = vld [vmem:[%s317 + $0xf8] sm:$0xf]
      %v395 = vld [vmem:[%s317 + $0xfc] sm:$0xf]
      %v396 = vld [vmem:[%s323] sm:$0xf]
      %v397 = vld [vmem:[%s323 + $0x4] sm:$0xf]
      %v398 = vld [vmem:[%s323 + $0x8] sm:$0xf]
      %v399 = vld [vmem:[%s323 + $0xc] sm:$0xf]
      %v400 = vld [vmem:[%s323 + $0x10] sm:$0xf]
      %v401 = vld [vmem:[%s323 + $0x14] sm:$0xf]
      %v402 = vld [vmem:[%s323 + $0x18] sm:$0xf]
      %v403 = vld [vmem:[%s323 + $0x1c] sm:$0xf]
      %v404 = vld [vmem:[%s323 + $0x20] sm:$0xf]
      %v405 = vld [vmem:[%s323 + $0x24] sm:$0xf]
      %v406 = vld [vmem:[%s323 + $0x28] sm:$0xf]
      %v407 = vld [vmem:[%s323 + $0x2c] sm:$0xf]
      %v408 = vld [vmem:[%s323 + $0x30] sm:$0xf]
      %v409 = vld [vmem:[%s323 + $0x34] sm:$0xf]
      %v410 = vld [vmem:[%s323 + $0x38] sm:$0xf]
      %v411 = vld [vmem:[%s323 + $0x3c] sm:$0xf]
      %v412 = vld [vmem:[%s323 + $0x40] sm:$0xf]
      %v413 = vld [vmem:[%s323 + $0x44] sm:$0xf]
      %v414 = vld [vmem:[%s323 + $0x48] sm:$0xf]
      %v415 = vld [vmem:[%s323 + $0x4c] sm:$0xf]
      %v416 = vld [vmem:[%s323 + $0x50] sm:$0xf]
      %v417 = vld [vmem:[%s323 + $0x54] sm:$0xf]
      %v418 = vld [vmem:[%s323 + $0x58] sm:$0xf]
      %v419 = vld [vmem:[%s323 + $0x5c] sm:$0xf]
      %v420 = vld [vmem:[%s323 + $0x60] sm:$0xf]
      %v421 = vld [vmem:[%s323 + $0x64] sm:$0xf]
      %v422 = vld [vmem:[%s323 + $0x68] sm:$0xf]
      %v423 = vld [vmem:[%s323 + $0x6c] sm:$0xf]
      %v424 = vld [vmem:[%s323 + $0x70] sm:$0xf]
      %v425 = vld [vmem:[%s323 + $0x74] sm:$0xf]
      %v426 = vld [vmem:[%s323 + $0x78] sm:$0xf]
      %v427 = vld [vmem:[%s323 + $0x7c] sm:$0xf]
      %v428 = vld [vmem:[%s323 + $0x80] sm:$0xf]
      %v429 = vld [vmem:[%s323 + $0x84] sm:$0xf]
      %v430 = vld [vmem:[%s323 + $0x88] sm:$0xf]
      %v431 = vld [vmem:[%s323 + $0x8c] sm:$0xf]
      %v432 = vld [vmem:[%s323 + $0x90] sm:$0xf]
      %v433 = vld [vmem:[%s323 + $0x94] sm:$0xf]
      %v434 = vld [vmem:[%s323 + $0x98] sm:$0xf]
      %v435 = vld [vmem:[%s323 + $0x9c] sm:$0xf]
      %v436 = vld [vmem:[%s323 + $0xa0] sm:$0xf]
      %v437 = vld [vmem:[%s323 + $0xa4] sm:$0xf]
      %v438 = vld [vmem:[%s323 + $0xa8] sm:$0xf]
      %v439 = vld [vmem:[%s323 + $0xac] sm:$0xf]
      %v440 = vld [vmem:[%s323 + $0xb0] sm:$0xf]
      %v441 = vld [vmem:[%s323 + $0xb4] sm:$0xf]
      %v442 = vld [vmem:[%s323 + $0xb8] sm:$0xf]
      %v443 = vld [vmem:[%s323 + $0xbc] sm:$0xf]
      %v444 = vld [vmem:[%s323 + $0xc0] sm:$0xf]
      %v445 = vld [vmem:[%s323 + $0xc4] sm:$0xf]
      %v446 = vld [vmem:[%s323 + $0xc8] sm:$0xf]
      %v447 = vld [vmem:[%s323 + $0xcc] sm:$0xf]
      %v448 = vld [vmem:[%s323 + $0xd0] sm:$0xf]
      %v449 = vld [vmem:[%s323 + $0xd4] sm:$0xf]
      %v450 = vld [vmem:[%s323 + $0xd8] sm:$0xf]
      %v451 = vld [vmem:[%s323 + $0xdc] sm:$0xf]
      %v452 = vld [vmem:[%s323 + $0xe0] sm:$0xf]
      %v453 = vld [vmem:[%s323 + $0xe4] sm:$0xf]
      %v454 = vld [vmem:[%s323 + $0xe8] sm:$0xf]
      %v455 = vld [vmem:[%s323 + $0xec] sm:$0xf]
      %v456 = vld [vmem:[%s323 + $0xf0] sm:$0xf]
      %v457 = vld [vmem:[%s323 + $0xf4] sm:$0xf]
      %v458 = vld [vmem:[%s323 + $0xf8] sm:$0xf]
      %v459 = vld [vmem:[%s323 + $0xfc] sm:$0xf]
      %v460 = vld [vmem:[%s2] sm:$0xff]
      %v461 = vld [vmem:[%s2 + $0x8] sm:$0xff]
      %v462 = vld [vmem:[%s2 + $0x10] sm:$0xff]
      %v463 = vld [vmem:[%s2 + $0x18] sm:$0xff]
      %v464 = vld [vmem:[%s2 + $0x20] sm:$0xff]
      %v465 = vld [vmem:[%s2 + $0x28] sm:$0xff]
      %v466 = vld [vmem:[%s2 + $0x30] sm:$0xff]
      %v467 = vld [vmem:[%s2 + $0x38] sm:$0xff]
      %v468 = vld [vmem:[%s2 + $0x40] sm:$0xff]
      %v469 = vld [vmem:[%s2 + $0x48] sm:$0xff]
      %v470 = vld [vmem:[%s2 + $0x50] sm:$0xff]
      %v471 = vld [vmem:[%s2 + $0x58] sm:$0xff]
      %v472 = vld [vmem:[%s2 + $0x60] sm:$0xff]
      %v473 = vld [vmem:[%s2 + $0x68] sm:$0xff]
      %v474 = vld [vmem:[%s2 + $0x70] sm:$0xff]
      %v475 = vld [vmem:[%s2 + $0x78] sm:$0xff]
      %v540 = vunpack.c.l.b16 %v332
      %v541 = vunpack.c.l.b16 %v333
      %v542 = vunpack.c.l.b16 %v334
      %v543 = vunpack.c.l.b16 %v335
      %v544 = vunpack.c.l.b16 %v336
      %v545 = vunpack.c.l.b16 %v337
      %v546 = vunpack.c.l.b16 %v338
      %v547 = vunpack.c.l.b16 %v339
      %v548 = vunpack.c.l.b16 %v340
      %v549 = vunpack.c.l.b16 %v341
      %v550 = vunpack.c.l.b16 %v342
      %v551 = vunpack.c.l.b16 %v343
      %v552 = vunpack.c.l.b16 %v344
      %v553 = vunpack.c.l.b16 %v345
      %v554 = vunpack.c.l.b16 %v346
      %v555 = vunpack.c.l.b16 %v347
      %v556 = vunpack.c.l.b16 %v348
      %v557 = vunpack.c.l.b16 %v349
      %v558 = vunpack.c.l.b16 %v350
      %v559 = vunpack.c.l.b16 %v351
      %v560 = vunpack.c.l.b16 %v352
      %v561 = vunpack.c.l.b16 %v353
      %v562 = vunpack.c.l.b16 %v354
      %v563 = vunpack.c.l.b16 %v355
      %v564 = vunpack.c.l.b16 %v356
      %v565 = vunpack.c.l.b16 %v357
      %v566 = vunpack.c.l.b16 %v358
      %v567 = vunpack.c.l.b16 %v359
      %v568 = vunpack.c.l.b16 %v360
      %v569 = vunpack.c.l.b16 %v361
      %v570 = vunpack.c.l.b16 %v362
      %v571 = vunpack.c.l.b16 %v363
      %v572 = vunpack.c.l.b16 %v364
      %v573 = vunpack.c.l.b16 %v365
      %v574 = vunpack.c.l.b16 %v366
      %v575 = vunpack.c.l.b16 %v367
      %v576 = vunpack.c.l.b16 %v368
      %v577 = vunpack.c.l.b16 %v369
      %v578 = vunpack.c.l.b16 %v370
      %v579 = vunpack.c.l.b16 %v371
      %v580 = vunpack.c.l.b16 %v372
      %v581 = vunpack.c.l.b16 %v373
      %v582 = vunpack.c.l.b16 %v374
      %v583 = vunpack.c.l.b16 %v375
      %v584 = vunpack.c.l.b16 %v376
      %v585 = vunpack.c.l.b16 %v377
      %v586 = vunpack.c.l.b16 %v378
      %v587 = vunpack.c.l.b16 %v379
      %v588 = vunpack.c.l.b16 %v380
      %v589 = vunpack.c.l.b16 %v381
      %v590 = vunpack.c.l.b16 %v382
      %v591 = vunpack.c.l.b16 %v383
      %v592 = vunpack.c.l.b16 %v384
      %v593 = vunpack.c.l.b16 %v385
      %v594 = vunpack.c.l.b16 %v386
      %v595 = vunpack.c.l.b16 %v387
      %v596 = vunpack.c.l.b16 %v388
      %v597 = vunpack.c.l.b16 %v389
      %v598 = vunpack.c.l.b16 %v390
      %v599 = vunpack.c.l.b16 %v391
      %v600 = vunpack.c.l.b16 %v392
      %v601 = vunpack.c.l.b16 %v393
      %v602 = vunpack.c.l.b16 %v394
      %v603 = vunpack.c.l.b16 %v395
      %v604 = vpack.c.b16 %v541, %v540
      %v605 = vpack.c.b16 %v543, %v542
      %v606 = vpack.c.b16 %v545, %v544
      %v607 = vpack.c.b16 %v547, %v546
      %v608 = vpack.c.b16 %v549, %v548
      %v609 = vpack.c.b16 %v551, %v550
      %v610 = vpack.c.b16 %v553, %v552
      %v611 = vpack.c.b16 %v555, %v554
      %v612 = vpack.c.b16 %v557, %v556
      %v613 = vpack.c.b16 %v559, %v558
      %v614 = vpack.c.b16 %v561, %v560
      %v615 = vpack.c.b16 %v563, %v562
      %v616 = vpack.c.b16 %v565, %v564
      %v617 = vpack.c.b16 %v567, %v566
      %v618 = vpack.c.b16 %v569, %v568
      %v619 = vpack.c.b16 %v571, %v570
      %v620 = vpack.c.b16 %v573, %v572
      %v621 = vpack.c.b16 %v575, %v574
      %v622 = vpack.c.b16 %v577, %v576
      %v623 = vpack.c.b16 %v579, %v578
      %v624 = vpack.c.b16 %v581, %v580
      %v625 = vpack.c.b16 %v583, %v582
      %v626 = vpack.c.b16 %v585, %v584
      %v627 = vpack.c.b16 %v587, %v586
      %v628 = vpack.c.b16 %v589, %v588
      %v629 = vpack.c.b16 %v591, %v590
      %v630 = vpack.c.b16 %v593, %v592
      %v631 = vpack.c.b16 %v595, %v594
      %v632 = vpack.c.b16 %v597, %v596
      %v633 = vpack.c.b16 %v599, %v598
      %v634 = vpack.c.b16 %v601, %v600
      %v635 = vpack.c.b16 %v603, %v602
      %v684 = vunpack.c.l.b16 %v460
      %v685 = vunpack.c.h.b16 %v460
      %v686 = vunpack.c.l.b16 %v461
      %v687 = vunpack.c.h.b16 %v461
      %v688 = vunpack.c.l.b16 %v462
      %v689 = vunpack.c.h.b16 %v462
      %v690 = vunpack.c.l.b16 %v463
      %v691 = vunpack.c.h.b16 %v463
      %v692 = vunpack.c.l.b16 %v464
      %v693 = vunpack.c.h.b16 %v464
      %v694 = vunpack.c.l.b16 %v465
      %v695 = vunpack.c.h.b16 %v465
      %v696 = vunpack.c.l.b16 %v466
      %v697 = vunpack.c.h.b16 %v466
      %v698 = vunpack.c.l.b16 %v467
      %v699 = vunpack.c.h.b16 %v467
      %v700 = vunpack.c.l.b16 %v468
      %v701 = vunpack.c.h.b16 %v468
      %v702 = vunpack.c.l.b16 %v469
      %v703 = vunpack.c.h.b16 %v469
      %v704 = vunpack.c.l.b16 %v470
      %v705 = vunpack.c.h.b16 %v470
      %v706 = vunpack.c.l.b16 %v471
      %v707 = vunpack.c.h.b16 %v471
      %v708 = vunpack.c.l.b16 %v472
      %v709 = vunpack.c.h.b16 %v472
      %v710 = vunpack.c.l.b16 %v473
      %v711 = vunpack.c.h.b16 %v473
      %v712 = vunpack.c.l.b16 %v474
      %v713 = vunpack.c.h.b16 %v474
      %v714 = vunpack.c.l.b16 %v475
      %v715 = vunpack.c.h.b16 %v475
      %v716 = vpack.c.b16 %v686, %v684
      %v717 = vpack.c.b16 %v687, %v685
      %v718 = vpack.c.b16 %v690, %v688
      %v719 = vpack.c.b16 %v691, %v689
      %v720 = vpack.c.b16 %v694, %v692
      %v721 = vpack.c.b16 %v695, %v693
      %v722 = vpack.c.b16 %v698, %v696
      %v723 = vpack.c.b16 %v699, %v697
      %v724 = vpack.c.b16 %v702, %v700
      %v725 = vpack.c.b16 %v703, %v701
      %v726 = vpack.c.b16 %v706, %v704
      %v727 = vpack.c.b16 %v707, %v705
      %v728 = vpack.c.b16 %v710, %v708
      %v729 = vpack.c.b16 %v711, %v709
      %v730 = vpack.c.b16 %v714, %v712
      %v731 = vpack.c.b16 %v715, %v713
      %748 = vmatprep.subr.bf16.mxu0 %v717
      %749 = vmatpush1.bf16.msra.mxu0 %v716
      %750 = vmatprep.subr.bf16.mxu0 %v719
      %751 = vmatpush1.bf16.msra.mxu0 %v718
      %752 = vmatprep.subr.bf16.mxu0 %v721
      %753 = vmatpush1.bf16.msra.mxu0 %v720
      %754 = vmatprep.subr.bf16.mxu0 %v723
      %755 = vmatpush1.bf16.msra.mxu0 %v722
      %756 = vmatprep.subr.bf16.mxu0 %v725
      %757 = vmatpush1.bf16.msra.mxu0 %v724
      %758 = vmatprep.subr.bf16.mxu0 %v727
      %759 = vmatpush1.bf16.msra.mxu0 %v726
      %760 = vmatprep.subr.bf16.mxu0 %v729
      %761 = vmatpush1.bf16.msra.mxu0 %v728
      %762 = vmatprep.subr.bf16.mxu0 %v731
      %763 = vmatpush1.bf16.msra.mxu0 %v730
      %764 = vmatprep.subr.bf16.mxu0 0
      %765 = vmatpush1.bf16.msra.mxu0 0
      %766 = vmatprep.subr.bf16.mxu0 0
      %767 = vmatpush1.bf16.msra.mxu0 0
      %768 = vmatprep.subr.bf16.mxu0 0
      %769 = vmatpush1.bf16.msra.mxu0 0
      %770 = vmatprep.subr.bf16.mxu0 0
      %771 = vmatpush1.bf16.msra.mxu0 0
      %772 = vmatprep.subr.bf16.mxu0 0
      %773 = vmatpush1.bf16.msra.mxu0 0
      %774 = vmatprep.subr.bf16.mxu0 0
      %775 = vmatpush1.bf16.msra.mxu0 0
      %776 = vmatprep.subr.bf16.mxu0 0
      %777 = vmatpush1.bf16.msra.mxu0 0
      %778 = vmatprep.subr.bf16.mxu0 0
      %779 = vmatpush1.bf16.msra.mxu0 0
      %780 = vmatprep.mubr.bf16.mxu0 0
      %781 = vmatmul.mubr.bf16.gmra.mrb[0].mxu0 %v604
      %v782 = vpop.f32.mrb[0].mxu0
      %v783 = vadd.f32 0.0, %v782
      %v784 = vpop.f32.mrb[0].mxu0
      %v785 = vadd.f32 0.0, %v784
      %v786 = vpop.f32.mrb[0].mxu0
      %v787 = vadd.f32 0.0, %v786
      %v788 = vpop.f32.mrb[0].mxu0
      %v789 = vadd.f32 0.0, %v788
      %790 = vmatprep.mubr.bf16.mxu0 0
      %791 = vmatmul.mubr.bf16.gmra.mrb[0].mxu0 %v605
      %v792 = vpop.f32.mrb[0].mxu0
      %v793 = vadd.f32 0.0, %v792
      %v794 = vpop.f32.mrb[0].mxu0
      %v795 = vadd.f32 0.0, %v794
      %v796 = vpop.f32.mrb[0].mxu0
      %v797 = vadd.f32 0.0, %v796
      %v798 = vpop.f32.mrb[0].mxu0
      %v799 = vadd.f32 0.0, %v798
      %800 = vmatprep.mubr.bf16.mxu0 0
      %801 = vmatmul.mubr.bf16.gmra.mrb[0].mxu0 %v606
      %v802 = vpop.f32.mrb[0].mxu0
      %v803 = vadd.f32 0.0, %v802
      %v804 = vpop.f32.mrb[0].mxu0
      %v805 = vadd.f32 0.0, %v804
      %v806 = vpop.f32.mrb[0].mxu0
      %v807 = vadd.f32 0.0, %v806
      %v808 = vpop.f32.mrb[0].mxu0
      %v809 = vadd.f32 0.0, %v808
      %810 = vmatprep.mubr.bf16.mxu0 0
      %811 = vmatmul.mubr.bf16.gmra.mrb[0].mxu0 %v607
      %v812 = vpop.f32.mrb[0].mxu0
      %v813 = vadd.f32 0.0, %v812
      %v814 = vpop.f32.mrb[0].mxu0
      %v815 = vadd.f32 0.0, %v814
      %v816 = vpop.f32.mrb[0].mxu0
      %v817 = vadd.f32 0.0, %v816
      %v818 = vpop.f32.mrb[0].mxu0
      %v819 = vadd.f32 0.0, %v818
      %820 = vmatprep.mubr.bf16.mxu0 0
      %821 = vmatmul.mubr.bf16.gmra.mrb[0].mxu0 %v608
      %v822 = vpop.f32.mrb[0].mxu0
      %v823 = vadd.f32 0.0, %v822
      %v824 = vpop.f32.mrb[0].mxu0
      %v825 = vadd.f32 0.0, %v824
      %v826 = vpop.f32.mrb[0].mxu0
      %v827 = vadd.f32 0.0, %v826
      %v828 = vpop.f32.mrb[0].mxu0
      %v829 = vadd.f32 0.0, %v828
      %830 = vmatprep.mubr.bf16.mxu0 0
      %831 = vmatmul.mubr.bf16.gmra.mrb[0].mxu0 %v609
      %v832 = vpop.f32.mrb[0].mxu0
      %v833 = vadd.f32 0.0, %v832
      %v834 = vpop.f32.mrb[0].mxu0
      %v835 = vadd.f32 0.0, %v834
      %v836 = vpop.f32.mrb[0].mxu0
      %v837 = vadd.f32 0.0, %v836
      %v838 = vpop.f32.mrb[0].mxu0
      %v839 = vadd.f32 0.0, %v838
      %840 = vmatprep.mubr.bf16.mxu0 0
      %841 = vmatmul.mubr.bf16.gmra.mrb[0].mxu0 %v610
      %v842 = vpop.f32.mrb[0].mxu0
      %v843 = vadd.f32 0.0, %v842
      %v844 = vpop.f32.mrb[0].mxu0
      %v845 = vadd.f32 0.0, %v844
      %v846 = vpop.f32.mrb[0].mxu0
      %v847 = vadd.f32 0.0, %v846
      %v848 = vpop.f32.mrb[0].mxu0
      %v849 = vadd.f32 0.0, %v848
      %850 = vmatprep.mubr.bf16.mxu0 0
      %851 = vmatmul.mubr.bf16.gmra.mrb[0].mxu0 %v611
      %v852 = vpop.f32.mrb[0].mxu0
      %v853 = vadd.f32 0.0, %v852
      %v854 = vpop.f32.mrb[0].mxu0
      %v855 = vadd.f32 0.0, %v854
      %v856 = vpop.f32.mrb[0].mxu0
      %v857 = vadd.f32 0.0, %v856
      %v858 = vpop.f32.mrb[0].mxu0
      %v859 = vadd.f32 0.0, %v858
      %860 = vmatprep.mubr.bf16.mxu0 0
      %861 = vmatmul.mubr.bf16.gmra.mrb[0].mxu0 %v612
      %v862 = vpop.f32.mrb[0].mxu0
      %v863 = vadd.f32 0.0, %v862
      %v864 = vpop.f32.mrb[0].mxu0
      %v865 = vadd.f32 0.0, %v864
      %v866 = vpop.f32.mrb[0].mxu0
      %v867 = vadd.f32 0.0, %v866
      %v868 = vpop.f32.mrb[0].mxu0
      %v869 = vadd.f32 0.0, %v868
      %870 = vmatprep.mubr.bf16.mxu0 0
      %871 = vmatmul.mubr.bf16.gmra.mrb[0].mxu0 %v613
      %v872 = vpop.f32.mrb[0].mxu0
      %v873 = vadd.f32 0.0, %v872
      %v874 = vpop.f32.mrb[0].mxu0
      %v875 = vadd.f32 0.0, %v874
      %v876 = vpop.f32.mrb[0].mxu0
      %v877 = vadd.f32 0.0, %v876
      %v878 = vpop.f32.mrb[0].mxu0
      %v879 = vadd.f32 0.0, %v878
      %880 = vmatprep.mubr.bf16.mxu0 0
      %881 = vmatmul.mubr.bf16.gmra.mrb[0].mxu0 %v614
      %v882 = vpop.f32.mrb[0].mxu0
      %v883 = vadd.f32 0.0, %v882
      %v884 = vpop.f32.mrb[0].mxu0
      %v885 = vadd.f32 0.0, %v884
      %v886 = vpop.f32.mrb[0].mxu0
      %v887 = vadd.f32 0.0, %v886
      %v888 = vpop.f32.mrb[0].mxu0
      %v889 = vadd.f32 0.0, %v888
      %890 = vmatprep.mubr.bf16.mxu0 0
      %891 = vmatmul.mubr.bf16.gmra.mrb[0].mxu0 %v615
      %v892 = vpop.f32.mrb[0].mxu0
      %v893 = vadd.f32 0.0, %v892
      %v894 = vpop.f32.mrb[0].mxu0
      %v895 = vadd.f32 0.0, %v894
      %v896 = vpop.f32.mrb[0].mxu0
      %v897 = vadd.f32 0.0, %v896
      %v898 = vpop.f32.mrb[0].mxu0
      %v899 = vadd.f32 0.0, %v898
      %900 = vmatprep.mubr.bf16.mxu0 0
      %901 = vmatmul.mubr.bf16.gmra.mrb[0].mxu0 %v616
      %v902 = vpop.f32.mrb[0].mxu0
      %v903 = vadd.f32 0.0, %v902
      %v904 = vpop.f32.mrb[0].mxu0
      %v905 = vadd.f32 0.0, %v904
      %v906 = vpop.f32.mrb[0].mxu0
      %v907 = vadd.f32 0.0, %v906
      %v908 = vpop.f32.mrb[0].mxu0
      %v909 = vadd.f32 0.0, %v908
      %910 = vmatprep.mubr.bf16.mxu0 0
      %911 = vmatmul.mubr.bf16.gmra.mrb[0].mxu0 %v617
      %v912 = vpop.f32.mrb[0].mxu0
      %v913 = vadd.f32 0.0, %v912
      %v914 = vpop.f32.mrb[0].mxu0
      %v915 = vadd.f32 0.0, %v914
      %v916 = vpop.f32.mrb[0].mxu0
      %v917 = vadd.f32 0.0, %v916
      %v918 = vpop.f32.mrb[0].mxu0
      %v919 = vadd.f32 0.0, %v918
      %920 = vmatprep.mubr.bf16.mxu0 0
      %921 = vmatmul.mubr.bf16.gmra.mrb[0].mxu0 %v618
      %v922 = vpop.f32.mrb[0].mxu0
      %v923 = vadd.f32 0.0, %v922
      %v924 = vpop.f32.mrb[0].mxu0
      %v925 = vadd.f32 0.0, %v924
      %v926 = vpop.f32.mrb[0].mxu0
      %v927 = vadd.f32 0.0, %v926
      %v928 = vpop.f32.mrb[0].mxu0
      %v929 = vadd.f32 0.0, %v928
      %930 = vmatprep.mubr.bf16.mxu0 0
      %931 = vmatmul.mubr.bf16.gmra.mrb[0].mxu0 %v619
      %v932 = vpop.f32.mrb[0].mxu0
      %v933 = vadd.f32 0.0, %v932
      %v934 = vpop.f32.mrb[0].mxu0
      %v935 = vadd.f32 0.0, %v934
      %v936 = vpop.f32.mrb[0].mxu0
      %v937 = vadd.f32 0.0, %v936
      %v938 = vpop.f32.mrb[0].mxu0
      %v939 = vadd.f32 0.0, %v938
      %940 = vmatprep.mubr.bf16.mxu0 0
      %941 = vmatmul.mubr.bf16.gmra.mrb[0].mxu0 %v620
      %v942 = vpop.f32.mrb[0].mxu0
      %v943 = vadd.f32 0.0, %v942
      %v944 = vpop.f32.mrb[0].mxu0
      %v945 = vadd.f32 0.0, %v944
      %v946 = vpop.f32.mrb[0].mxu0
      %v947 = vadd.f32 0.0, %v946
      %v948 = vpop.f32.mrb[0].mxu0
      %v949 = vadd.f32 0.0, %v948
      %950 = vmatprep.mubr.bf16.mxu0 0
      %951 = vmatmul.mubr.bf16.gmra.mrb[0].mxu0 %v621
      %v952 = vpop.f32.mrb[0].mxu0
      %v953 = vadd.f32 0.0, %v952
      %v954 = vpop.f32.mrb[0].mxu0
      %v955 = vadd.f32 0.0, %v954
      %v956 = vpop.f32.mrb[0].mxu0
      %v957 = vadd.f32 0.0, %v956
      %v958 = vpop.f32.mrb[0].mxu0
      %v959 = vadd.f32 0.0, %v958
      %960 = vmatprep.mubr.bf16.mxu0 0
      %961 = vmatmul.mubr.bf16.gmra.mrb[0].mxu0 %v622
      %v962 = vpop.f32.mrb[0].mxu0
      %v963 = vadd.f32 0.0, %v962
      %v964 = vpop.f32.mrb[0].mxu0
      %v965 = vadd.f32 0.0, %v964
      %v966 = vpop.f32.mrb[0].mxu0
      %v967 = vadd.f32 0.0, %v966
      %v968 = vpop.f32.mrb[0].mxu0
      %v969 = vadd.f32 0.0, %v968
      %970 = vmatprep.mubr.bf16.mxu0 0
      %971 = vmatmul.mubr.bf16.gmra.mrb[0].mxu0 %v623
      %v972 = vpop.f32.mrb[0].mxu0
      %v973 = vadd.f32 0.0, %v972
      %v974 = vpop.f32.mrb[0].mxu0
      %v975 = vadd.f32 0.0, %v974
      %v976 = vpop.f32.mrb[0].mxu0
      %v977 = vadd.f32 0.0, %v976
      %v978 = vpop.f32.mrb[0].mxu0
      %v979 = vadd.f32 0.0, %v978
      %980 = vmatprep.mubr.bf16.mxu0 0
      %981 = vmatmul.mubr.bf16.gmra.mrb[0].mxu0 %v624
      %v982 = vpop.f32.mrb[0].mxu0
      %v983 = vadd.f32 0.0, %v982
      %v984 = vpop.f32.mrb[0].mxu0
      %v985 = vadd.f32 0.0, %v984
      %v986 = vpop.f32.mrb[0].mxu0
      %v987 = vadd.f32 0.0, %v986
      %v988 = vpop.f32.mrb[0].mxu0
      %v989 = vadd.f32 0.0, %v988
      %990 = vmatprep.mubr.bf16.mxu0 0
      %991 = vmatmul.mubr.bf16.gmra.mrb[0].mxu0 %v625
      %v992 = vpop.f32.mrb[0].mxu0
      %v993 = vadd.f32 0.0, %v992
      %v994 = vpop.f32.mrb[0].mxu0
      %v995 = vadd.f32 0.0, %v994
      %v996 = vpop.f32.mrb[0].mxu0
      %v997 = vadd.f32 0.0, %v996
      %v998 = vpop.f32.mrb[0].mxu0
      %v999 = vadd.f32 0.0, %v998
      %1000 = vmatprep.mubr.bf16.mxu0 0
      %1001 = vmatmul.mubr.bf16.gmra.mrb[0].mxu0 %v626
      %v1002 = vpop.f32.mrb[0].mxu0
      %v1003 = vadd.f32 0.0, %v1002
      %v1004 = vpop.f32.mrb[0].mxu0
      %v1005 = vadd.f32 0.0, %v1004
      %v1006 = vpop.f32.mrb[0].mxu0
      %v1007 = vadd.f32 0.0, %v1006
      %v1008 = vpop.f32.mrb[0].mxu0
      %v1009 = vadd.f32 0.0, %v1008
      %1010 = vmatprep.mubr.bf16.mxu0 0
      %1011 = vmatmul.mubr.bf16.gmra.mrb[0].mxu0 %v627
      %v1012 = vpop.f32.mrb[0].mxu0
      %v1013 = vadd.f32 0.0, %v1012
      %v1014 = vpop.f32.mrb[0].mxu0
      %v1015 = vadd.f32 0.0, %v1014
      %v1016 = vpop.f32.mrb[0].mxu0
      %v1017 = vadd.f32 0.0, %v1016
      %v1018 = vpop.f32.mrb[0].mxu0
      %v1019 = vadd.f32 0.0, %v1018
      %1020 = vmatprep.mubr.bf16.mxu0 0
      %1021 = vmatmul.mubr.bf16.gmra.mrb[0].mxu0 %v628
      %v1022 = vpop.f32.mrb[0].mxu0
      %v1023 = vadd.f32 0.0, %v1022
      %v1024 = vpop.f32.mrb[0].mxu0
      %v1025 = vadd.f32 0.0, %v1024
      %v1026 = vpop.f32.mrb[0].mxu0
      %v1027 = vadd.f32 0.0, %v1026
      %v1028 = vpop.f32.mrb[0].mxu0
      %v1029 = vadd.f32 0.0, %v1028
      %1030 = vmatprep.mubr.bf16.mxu0 0
      %1031 = vmatmul.mubr.bf16.gmra.mrb[0].mxu0 %v629
      %v1032 = vpop.f32.mrb[0].mxu0
      %v1033 = vadd.f32 0.0, %v1032
      %v1034 = vpop.f32.mrb[0].mxu0
      %v1035 = vadd.f32 0.0, %v1034
      %v1036 = vpop.f32.mrb[0].mxu0
      %v1037 = vadd.f32 0.0, %v1036
      %v1038 = vpop.f32.mrb[0].mxu0
      %v1039 = vadd.f32 0.0, %v1038
      %1040 = vmatprep.mubr.bf16.mxu0 0
      %1041 = vmatmul.mubr.bf16.gmra.mrb[0].mxu0 %v630
      %v1042 = vpop.f32.mrb[0].mxu0
      %v1043 = vadd.f32 0.0, %v1042
      %v1044 = vpop.f32.mrb[0].mxu0
      %v1045 = vadd.f32 0.0, %v1044
      %v1046 = vpop.f32.mrb[0].mxu0
      %v1047 = vadd.f32 0.0, %v1046
      %v1048 = vpop.f32.mrb[0].mxu0
      %v1049 = vadd.f32 0.0, %v1048
      %1050 = vmatprep.mubr.bf16.mxu0 0
      %1051 = vmatmul.mubr.bf16.gmra.mrb[0].mxu0 %v631
      %v1052 = vpop.f32.mrb[0].mxu0
      %v1053 = vadd.f32 0.0, %v1052
      %v1054 = vpop.f32.mrb[0].mxu0
      %v1055 = vadd.f32 0.0, %v1054
      %v1056 = vpop.f32.mrb[0].mxu0
      %v1057 = vadd.f32 0.0, %v1056
      %v1058 = vpop.f32.mrb[0].mxu0
      %v1059 = vadd.f32 0.0, %v1058
      %1060 = vmatprep.mubr.bf16.mxu0 0
      %1061 = vmatmul.mubr.bf16.gmra.mrb[0].mxu0 %v632
      %v1062 = vpop.f32.mrb[0].mxu0
      %v1063 = vadd.f32 0.0, %v1062
      %v1064 = vpop.f32.mrb[0].mxu0
      %v1065 = vadd.f32 0.0, %v1064
      %v1066 = vpop.f32.mrb[0].mxu0
      %v1067 = vadd.f32 0.0, %v1066
      %v1068 = vpop.f32.mrb[0].mxu0
      %v1069 = vadd.f32 0.0, %v1068
      %1070 = vmatprep.mubr.bf16.mxu0 0
      %1071 = vmatmul.mubr.bf16.gmra.mrb[0].mxu0 %v633
      %v1072 = vpop.f32.mrb[0].mxu0
      %v1073 = vadd.f32 0.0, %v1072
      %v1074 = vpop.f32.mrb[0].mxu0
      %v1075 = vadd.f32 0.0, %v1074
      %v1076 = vpop.f32.mrb[0].mxu0
      %v1077 = vadd.f32 0.0, %v1076
      %v1078 = vpop.f32.mrb[0].mxu0
      %v1079 = vadd.f32 0.0, %v1078
      %1080 = vmatprep.mubr.bf16.mxu0 0
      %1081 = vmatmul.mubr.bf16.gmra.mrb[0].mxu0 %v634
      %v1082 = vpop.f32.mrb[0].mxu0
      %v1083 = vadd.f32 0.0, %v1082
      %v1084 = vpop.f32.mrb[0].mxu0
      %v1085 = vadd.f32 0.0, %v1084
      %v1086 = vpop.f32.mrb[0].mxu0
      %v1087 = vadd.f32 0.0, %v1086
      %v1088 = vpop.f32.mrb[0].mxu0
      %v1089 = vadd.f32 0.0, %v1088
      %1090 = vmatprep.mubr.bf16.mxu0 0
      %1091 = vmatmul.mubr.bf16.gmra.mrb[0].mxu0 %v635
      %v1092 = vpop.f32.mrb[0].mxu0
      %v1093 = vadd.f32 0.0, %v1092
      %v1094 = vpop.f32.mrb[0].mxu0
      %v1095 = vadd.f32 0.0, %v1094
      %v1096 = vpop.f32.mrb[0].mxu0
      %v1097 = vadd.f32 0.0, %v1096
      %v1098 = vpop.f32.mrb[0].mxu0
      %v1099 = vadd.f32 0.0, %v1098
      %1100 = vdwg.mxu0
      %v1101 = vld [vmem:[%s3] sm:$0x1]
      %v1103 = vlaneseq
      %v1104 = vshrl.u32 %v1103, 7
      %v1105 = vsub.s32 0, %v1104
      %v1106 = vrot.slane %v1101, %v1105
      %v1108 = vadd.f32 %v783, %v1106
      %v1109 = vadd.f32 %v787, %v1106
      %v1110 = vadd.f32 %v793, %v1106
      %v1111 = vadd.f32 %v797, %v1106
      %v1112 = vadd.f32 %v803, %v1106
      %v1113 = vadd.f32 %v807, %v1106
      %v1114 = vadd.f32 %v813, %v1106
      %v1115 = vadd.f32 %v817, %v1106
      %v1116 = vadd.f32 %v823, %v1106
      %v1117 = vadd.f32 %v827, %v1106
      %v1118 = vadd.f32 %v833, %v1106
      %v1119 = vadd.f32 %v837, %v1106
      %v1120 = vadd.f32 %v843, %v1106
      %v1121 = vadd.f32 %v847, %v1106
      %v1122 = vadd.f32 %v853, %v1106
      %v1123 = vadd.f32 %v857, %v1106
      %v1124 = vadd.f32 %v863, %v1106
      %v1125 = vadd.f32 %v867, %v1106
      %v1126 = vadd.f32 %v873, %v1106
      %v1127 = vadd.f32 %v877, %v1106
      %v1128 = vadd.f32 %v883, %v1106
      %v1129 = vadd.f32 %v887, %v1106
      %v1130 = vadd.f32 %v893, %v1106
      %v1131 = vadd.f32 %v897, %v1106
      %v1132 = vadd.f32 %v903, %v1106
      %v1133 = vadd.f32 %v907, %v1106
      %v1134 = vadd.f32 %v913, %v1106
      %v1135 = vadd.f32 %v917, %v1106
      %v1136 = vadd.f32 %v923, %v1106
      %v1137 = vadd.f32 %v927, %v1106
      %v1138 = vadd.f32 %v933, %v1106
      %v1139 = vadd.f32 %v937, %v1106
      %v1140 = vadd.f32 %v943, %v1106
      %v1141 = vadd.f32 %v947, %v1106
      %v1142 = vadd.f32 %v953, %v1106
      %v1143 = vadd.f32 %v957, %v1106
      %v1144 = vadd.f32 %v963, %v1106
      %v1145 = vadd.f32 %v967, %v1106
      %v1146 = vadd.f32 %v973, %v1106
      %v1147 = vadd.f32 %v977, %v1106
      %v1148 = vadd.f32 %v983, %v1106
      %v1149 = vadd.f32 %v987, %v1106
      %v1150 = vadd.f32 %v993, %v1106
      %v1151 = vadd.f32 %v997, %v1106
      %v1152 = vadd.f32 %v1003, %v1106
      %v1153 = vadd.f32 %v1007, %v1106
      %v1154 = vadd.f32 %v1013, %v1106
      %v1155 = vadd.f32 %v1017, %v1106
      %v1156 = vadd.f32 %v1023, %v1106
      %v1157 = vadd.f32 %v1027, %v1106
      %v1158 = vadd.f32 %v1033, %v1106
      %v1159 = vadd.f32 %v1037, %v1106
      %v1160 = vadd.f32 %v1043, %v1106
      %v1161 = vadd.f32 %v1047, %v1106
      %v1162 = vadd.f32 %v1053, %v1106
      %v1163 = vadd.f32 %v1057, %v1106
      %v1164 = vadd.f32 %v1063, %v1106
      %v1165 = vadd.f32 %v1067, %v1106
      %v1166 = vadd.f32 %v1073, %v1106
      %v1167 = vadd.f32 %v1077, %v1106
      %v1168 = vadd.f32 %v1083, %v1106
      %v1169 = vadd.f32 %v1087, %v1106
      %v1170 = vadd.f32 %v1093, %v1106
      %v1171 = vadd.f32 %v1097, %v1106
      %v1172 = vmax.f32 %v1108, 0.0
      %v1173 = vmax.f32 %v1109, 0.0
      %v1174 = vmax.f32 %v1110, 0.0
      %v1175 = vmax.f32 %v1111, 0.0
      %v1176 = vmax.f32 %v1112, 0.0
      %v1177 = vmax.f32 %v1113, 0.0
      %v1178 = vmax.f32 %v1114, 0.0
      %v1179 = vmax.f32 %v1115, 0.0
      %v1180 = vmax.f32 %v1116, 0.0
      %v1181 = vmax.f32 %v1117, 0.0
      %v1182 = vmax.f32 %v1118, 0.0
      %v1183 = vmax.f32 %v1119, 0.0
      %v1184 = vmax.f32 %v1120, 0.0
      %v1185 = vmax.f32 %v1121, 0.0
      %v1186 = vmax.f32 %v1122, 0.0
      %v1187 = vmax.f32 %v1123, 0.0
      %v1188 = vmax.f32 %v1124, 0.0
      %v1189 = vmax.f32 %v1125, 0.0
      %v1190 = vmax.f32 %v1126, 0.0
      %v1191 = vmax.f32 %v1127, 0.0
      %v1192 = vmax.f32 %v1128, 0.0
      %v1193 = vmax.f32 %v1129, 0.0
      %v1194 = vmax.f32 %v1130, 0.0
      %v1195 = vmax.f32 %v1131, 0.0
      %v1196 = vmax.f32 %v1132, 0.0
      %v1197 = vmax.f32 %v1133, 0.0
      %v1198 = vmax.f32 %v1134, 0.0
      %v1199 = vmax.f32 %v1135, 0.0
      %v1200 = vmax.f32 %v1136, 0.0
      %v1201 = vmax.f32 %v1137, 0.0
      %v1202 = vmax.f32 %v1138, 0.0
      %v1203 = vmax.f32 %v1139, 0.0
      %v1204 = vmax.f32 %v1140, 0.0
      %v1205 = vmax.f32 %v1141, 0.0
      %v1206 = vmax.f32 %v1142, 0.0
      %v1207 = vmax.f32 %v1143, 0.0
      %v1208 = vmax.f32 %v1144, 0.0
      %v1209 = vmax.f32 %v1145, 0.0
      %v1210 = vmax.f32 %v1146, 0.0
      %v1211 = vmax.f32 %v1147, 0.0
      %v1212 = vmax.f32 %v1148, 0.0
      %v1213 = vmax.f32 %v1149, 0.0
      %v1214 = vmax.f32 %v1150, 0.0
      %v1215 = vmax.f32 %v1151, 0.0
      %v1216 = vmax.f32 %v1152, 0.0
      %v1217 = vmax.f32 %v1153, 0.0
      %v1218 = vmax.f32 %v1154, 0.0
      %v1219 = vmax.f32 %v1155, 0.0
      %v1220 = vmax.f32 %v1156, 0.0
      %v1221 = vmax.f32 %v1157, 0.0
      %v1222 = vmax.f32 %v1158, 0.0
      %v1223 = vmax.f32 %v1159, 0.0
      %v1224 = vmax.f32 %v1160, 0.0
      %v1225 = vmax.f32 %v1161, 0.0
      %v1226 = vmax.f32 %v1162, 0.0
      %v1227 = vmax.f32 %v1163, 0.0
      %v1228 = vmax.f32 %v1164, 0.0
      %v1229 = vmax.f32 %v1165, 0.0
      %v1230 = vmax.f32 %v1166, 0.0
      %v1231 = vmax.f32 %v1167, 0.0
      %v1232 = vmax.f32 %v1168, 0.0
      %v1233 = vmax.f32 %v1169, 0.0
      %v1234 = vmax.f32 %v1170, 0.0
      %v1235 = vmax.f32 %v1171, 0.0
      %v1236 = vpack.c.bf16 %v1173, %v1172
      %v1237 = vpack.c.bf16 %v1175, %v1174
      %v1238 = vpack.c.bf16 %v1177, %v1176
      %v1239 = vpack.c.bf16 %v1179, %v1178
      %v1240 = vpack.c.bf16 %v1181, %v1180
      %v1241 = vpack.c.bf16 %v1183, %v1182
      %v1242 = vpack.c.bf16 %v1185, %v1184
      %v1243 = vpack.c.bf16 %v1187, %v1186
      %v1244 = vpack.c.bf16 %v1189, %v1188
      %v1245 = vpack.c.bf16 %v1191, %v1190
      %v1246 = vpack.c.bf16 %v1193, %v1192
      %v1247 = vpack.c.bf16 %v1195, %v1194
      %v1248 = vpack.c.bf16 %v1197, %v1196
      %v1249 = vpack.c.bf16 %v1199, %v1198
      %v1250 = vpack.c.bf16 %v1201, %v1200
      %v1251 = vpack.c.bf16 %v1203, %v1202
      %v1252 = vpack.c.bf16 %v1205, %v1204
      %v1253 = vpack.c.bf16 %v1207, %v1206
      %v1254 = vpack.c.bf16 %v1209, %v1208
      %v1255 = vpack.c.bf16 %v1211, %v1210
      %v1256 = vpack.c.bf16 %v1213, %v1212
      %v1257 = vpack.c.bf16 %v1215, %v1214
      %v1258 = vpack.c.bf16 %v1217, %v1216
      %v1259 = vpack.c.bf16 %v1219, %v1218
      %v1260 = vpack.c.bf16 %v1221, %v1220
      %v1261 = vpack.c.bf16 %v1223, %v1222
      %v1262 = vpack.c.bf16 %v1225, %v1224
      %v1263 = vpack.c.bf16 %v1227, %v1226
      %v1264 = vpack.c.bf16 %v1229, %v1228
      %v1265 = vpack.c.bf16 %v1231, %v1230
      %v1266 = vpack.c.bf16 %v1233, %v1232
      %v1267 = vpack.c.bf16 %v1235, %v1234
      %v1332 = vunpack.c.l.b16 %v396
      %v1333 = vunpack.c.l.b16 %v397
      %v1334 = vunpack.c.l.b16 %v398
      %v1335 = vunpack.c.l.b16 %v399
      %v1336 = vunpack.c.l.b16 %v400
      %v1337 = vunpack.c.l.b16 %v401
      %v1338 = vunpack.c.l.b16 %v402
      %v1339 = vunpack.c.l.b16 %v403
      %v1340 = vunpack.c.l.b16 %v404
      %v1341 = vunpack.c.l.b16 %v405
      %v1342 = vunpack.c.l.b16 %v406
      %v1343 = vunpack.c.l.b16 %v407
      %v1344 = vunpack.c.l.b16 %v408
      %v1345 = vunpack.c.l.b16 %v409
      %v1346 = vunpack.c.l.b16 %v410
      %v1347 = vunpack.c.l.b16 %v411
      %v1348 = vunpack.c.l.b16 %v412
      %v1349 = vunpack.c.l.b16 %v413
      %v1350 = vunpack.c.l.b16 %v414
      %v1351 = vunpack.c.l.b16 %v415
      %v1352 = vunpack.c.l.b16 %v416
      %v1353 = vunpack.c.l.b16 %v417
      %v1354 = vunpack.c.l.b16 %v418
      %v1355 = vunpack.c.l.b16 %v419
      %v1356 = vunpack.c.l.b16 %v420
      %v1357 = vunpack.c.l.b16 %v421
      %v1358 = vunpack.c.l.b16 %v422
      %v1359 = vunpack.c.l.b16 %v423
      %v1360 = vunpack.c.l.b16 %v424
      %v1361 = vunpack.c.l.b16 %v425
      %v1362 = vunpack.c.l.b16 %v426
      %v1363 = vunpack.c.l.b16 %v427
      %v1364 = vunpack.c.l.b16 %v428
      %v1365 = vunpack.c.l.b16 %v429
      %v1366 = vunpack.c.l.b16 %v430
      %v1367 = vunpack.c.l.b16 %v431
      %v1368 = vunpack.c.l.b16 %v432
      %v1369 = vunpack.c.l.b16 %v433
      %v1370 = vunpack.c.l.b16 %v434
      %v1371 = vunpack.c.l.b16 %v435
      %v1372 = vunpack.c.l.b16 %v436
      %v1373 = vunpack.c.l.b16 %v437
      %v1374 = vunpack.c.l.b16 %v438
      %v1375 = vunpack.c.l.b16 %v439
      %v1376 = vunpack.c.l.b16 %v440
      %v1377 = vunpack.c.l.b16 %v441
      %v1378 = vunpack.c.l.b16 %v442
      %v1379 = vunpack.c.l.b16 %v443
      %v1380 = vunpack.c.l.b16 %v444
      %v1381 = vunpack.c.l.b16 %v445
      %v1382 = vunpack.c.l.b16 %v446
      %v1383 = vunpack.c.l.b16 %v447
      %v1384 = vunpack.c.l.b16 %v448
      %v1385 = vunpack.c.l.b16 %v449
      %v1386 = vunpack.c.l.b16 %v450
      %v1387 = vunpack.c.l.b16 %v451
      %v1388 = vunpack.c.l.b16 %v452
      %v1389 = vunpack.c.l.b16 %v453
      %v1390 = vunpack.c.l.b16 %v454
      %v1391 = vunpack.c.l.b16 %v455
      %v1392 = vunpack.c.l.b16 %v456
      %v1393 = vunpack.c.l.b16 %v457
      %v1394 = vunpack.c.l.b16 %v458
      %v1395 = vunpack.c.l.b16 %v459
      %v1396 = vpack.c.b16 %v1333, %v1332
      %v1397 = vpack.c.b16 %v1335, %v1334
      %v1398 = vpack.c.b16 %v1337, %v1336
      %v1399 = vpack.c.b16 %v1339, %v1338
      %v1400 = vpack.c.b16 %v1341, %v1340
      %v1401 = vpack.c.b16 %v1343, %v1342
      %v1402 = vpack.c.b16 %v1345, %v1344
      %v1403 = vpack.c.b16 %v1347, %v1346
      %v1404 = vpack.c.b16 %v1349, %v1348
      %v1405 = vpack.c.b16 %v1351, %v1350
      %v1406 = vpack.c.b16 %v1353, %v1352
      %v1407 = vpack.c.b16 %v1355, %v1354
      %v1408 = vpack.c.b16 %v1357, %v1356
      %v1409 = vpack.c.b16 %v1359, %v1358
      %v1410 = vpack.c.b16 %v1361, %v1360
      %v1411 = vpack.c.b16 %v1363, %v1362
      %v1412 = vpack.c.b16 %v1365, %v1364
      %v1413 = vpack.c.b16 %v1367, %v1366
      %v1414 = vpack.c.b16 %v1369, %v1368
      %v1415 = vpack.c.b16 %v1371, %v1370
      %v1416 = vpack.c.b16 %v1373, %v1372
      %v1417 = vpack.c.b16 %v1375, %v1374
      %v1418 = vpack.c.b16 %v1377, %v1376
      %v1419 = vpack.c.b16 %v1379, %v1378
      %v1420 = vpack.c.b16 %v1381, %v1380
      %v1421 = vpack.c.b16 %v1383, %v1382
      %v1422 = vpack.c.b16 %v1385, %v1384
      %v1423 = vpack.c.b16 %v1387, %v1386
      %v1424 = vpack.c.b16 %v1389, %v1388
      %v1425 = vpack.c.b16 %v1391, %v1390
      %v1426 = vpack.c.b16 %v1393, %v1392
      %v1427 = vpack.c.b16 %v1395, %v1394
      %v1460 = vld [vmem:[%s4] sm:$0xff]
      %v1461 = vld [vmem:[%s4 + $0x8] sm:$0xff]
      %v1462 = vld [vmem:[%s4 + $0x10] sm:$0xff]
      %v1463 = vld [vmem:[%s4 + $0x18] sm:$0xff]
      %v1464 = vld [vmem:[%s4 + $0x20] sm:$0xff]
      %v1465 = vld [vmem:[%s4 + $0x28] sm:$0xff]
      %v1466 = vld [vmem:[%s4 + $0x30] sm:$0xff]
      %v1467 = vld [vmem:[%s4 + $0x38] sm:$0xff]
      %v1468 = vld [vmem:[%s4 + $0x40] sm:$0xff]
      %v1469 = vld [vmem:[%s4 + $0x48] sm:$0xff]
      %v1470 = vld [vmem:[%s4 + $0x50] sm:$0xff]
      %v1471 = vld [vmem:[%s4 + $0x58] sm:$0xff]
      %v1472 = vld [vmem:[%s4 + $0x60] sm:$0xff]
      %v1473 = vld [vmem:[%s4 + $0x68] sm:$0xff]
      %v1474 = vld [vmem:[%s4 + $0x70] sm:$0xff]
      %v1475 = vld [vmem:[%s4 + $0x78] sm:$0xff]
      %v1476 = vld [vmem:[%s4 + $0x80] sm:$0xff]
      %v1477 = vld [vmem:[%s4 + $0x88] sm:$0xff]
      %v1478 = vld [vmem:[%s4 + $0x90] sm:$0xff]
      %v1479 = vld [vmem:[%s4 + $0x98] sm:$0xff]
      %v1480 = vld [vmem:[%s4 + $0xa0] sm:$0xff]
      %v1481 = vld [vmem:[%s4 + $0xa8] sm:$0xff]
      %v1482 = vld [vmem:[%s4 + $0xb0] sm:$0xff]
      %v1483 = vld [vmem:[%s4 + $0xb8] sm:$0xff]
      %v1484 = vld [vmem:[%s4 + $0xc0] sm:$0xff]
      %v1485 = vld [vmem:[%s4 + $0xc8] sm:$0xff]
      %v1486 = vld [vmem:[%s4 + $0xd0] sm:$0xff]
      %v1487 = vld [vmem:[%s4 + $0xd8] sm:$0xff]
      %v1488 = vld [vmem:[%s4 + $0xe0] sm:$0xff]
      %v1489 = vld [vmem:[%s4 + $0xe8] sm:$0xff]
      %v1490 = vld [vmem:[%s4 + $0xf0] sm:$0xff]
      %v1491 = vld [vmem:[%s4 + $0xf8] sm:$0xff]
      %v1492 = vld [vmem:[%s5] sm:$0x3]
      %v1494 = vlaneseq
      %v1495 = vshrl.u32 %v1494, 7
      %v1496 = vsub.s32 0, %v1495
      %v1497 = vrot.slane %v1492, %v1496
      %v1498 = vlaneseq
      %v1499 = vshrl.u32 %v1498, 7
      %v1500 = vsub.s32 1, %v1499
      %v1501 = vrot.slane %v1492, %v1500
      %v1536 = vunpack.c.l.b16 %v1460
      %v1537 = vunpack.c.h.b16 %v1460
      %v1538 = vunpack.c.l.b16 %v1461
      %v1539 = vunpack.c.h.b16 %v1461
      %v1540 = vunpack.c.l.b16 %v1462
      %v1541 = vunpack.c.h.b16 %v1462
      %v1542 = vunpack.c.l.b16 %v1463
      %v1543 = vunpack.c.h.b16 %v1463
      %v1544 = vunpack.c.l.b16 %v1464
      %v1545 = vunpack.c.h.b16 %v1464
      %v1546 = vunpack.c.l.b16 %v1465
      %v1547 = vunpack.c.h.b16 %v1465
      %v1548 = vunpack.c.l.b16 %v1466
      %v1549 = vunpack.c.h.b16 %v1466
      %v1550 = vunpack.c.l.b16 %v1467
      %v1551 = vunpack.c.h.b16 %v1467
      %v1552 = vunpack.c.l.b16 %v1468
      %v1553 = vunpack.c.h.b16 %v1468
      %v1554 = vunpack.c.l.b16 %v1469
      %v1555 = vunpack.c.h.b16 %v1469
      %v1556 = vunpack.c.l.b16 %v1470
      %v1557 = vunpack.c.h.b16 %v1470
      %v1558 = vunpack.c.l.b16 %v1471
      %v1559 = vunpack.c.h.b16 %v1471
      %v1560 = vunpack.c.l.b16 %v1472
      %v1561 = vunpack.c.h.b16 %v1472
      %v1562 = vunpack.c.l.b16 %v1473
      %v1563 = vunpack.c.h.b16 %v1473
      %v1564 = vunpack.c.l.b16 %v1474
      %v1565 = vunpack.c.h.b16 %v1474
      %v1566 = vunpack.c.l.b16 %v1475
      %v1567 = vunpack.c.h.b16 %v1475
      %v1568 = vunpack.c.l.b16 %v1476
      %v1569 = vunpack.c.h.b16 %v1476
      %v1570 = vunpack.c.l.b16 %v1477
      %v1571 = vunpack.c.h.b16 %v1477
      %v1572 = vunpack.c.l.b16 %v1478
      %v1573 = vunpack.c.h.b16 %v1478
      %v1574 = vunpack.c.l.b16 %v1479
      %v1575 = vunpack.c.h.b16 %v1479
      %v1576 = vunpack.c.l.b16 %v1480
      %v1577 = vunpack.c.h.b16 %v1480
      %v1578 = vunpack.c.l.b16 %v1481
      %v1579 = vunpack.c.h.b16 %v1481
      %v1580 = vunpack.c.l.b16 %v1482
      %v1581 = vunpack.c.h.b16 %v1482
      %v1582 = vunpack.c.l.b16 %v1483
      %v1583 = vunpack.c.h.b16 %v1483
      %v1584 = vunpack.c.l.b16 %v1484
      %v1585 = vunpack.c.h.b16 %v1484
      %v1586 = vunpack.c.l.b16 %v1485
      %v1587 = vunpack.c.h.b16 %v1485
      %v1588 = vunpack.c.l.b16 %v1486
      %v1589 = vunpack.c.h.b16 %v1486
      %v1590 = vunpack.c.l.b16 %v1487
      %v1591 = vunpack.c.h.b16 %v1487
      %v1592 = vunpack.c.l.b16 %v1488
      %v1593 = vunpack.c.h.b16 %v1488
      %v1594 = vunpack.c.l.b16 %v1489
      %v1595 = vunpack.c.h.b16 %v1489
      %v1596 = vunpack.c.l.b16 %v1490
      %v1597 = vunpack.c.h.b16 %v1490
      %v1598 = vunpack.c.l.b16 %v1491
      %v1599 = vunpack.c.h.b16 %v1491
      %v1600 = vpack.c.b16 %v1538, %v1536
      %v1601 = vpack.c.b16 %v1539, %v1537
      %v1602 = vpack.c.b16 %v1542, %v1540
      %v1603 = vpack.c.b16 %v1543, %v1541
      %v1604 = vpack.c.b16 %v1546, %v1544
      %v1605 = vpack.c.b16 %v1547, %v1545
      %v1606 = vpack.c.b16 %v1550, %v1548
      %v1607 = vpack.c.b16 %v1551, %v1549
      %v1608 = vpack.c.b16 %v1554, %v1552
      %v1609 = vpack.c.b16 %v1555, %v1553
      %v1610 = vpack.c.b16 %v1558, %v1556
      %v1611 = vpack.c.b16 %v1559, %v1557
      %v1612 = vpack.c.b16 %v1562, %v1560
      %v1613 = vpack.c.b16 %v1563, %v1561
      %v1614 = vpack.c.b16 %v1566, %v1564
      %v1615 = vpack.c.b16 %v1567, %v1565
      %v1616 = vpack.c.b16 %v1570, %v1568
      %v1617 = vpack.c.b16 %v1571, %v1569
      %v1618 = vpack.c.b16 %v1574, %v1572
      %v1619 = vpack.c.b16 %v1575, %v1573
      %v1620 = vpack.c.b16 %v1578, %v1576
      %v1621 = vpack.c.b16 %v1579, %v1577
      %v1622 = vpack.c.b16 %v1582, %v1580
      %v1623 = vpack.c.b16 %v1583, %v1581
      %v1624 = vpack.c.b16 %v1586, %v1584
      %v1625 = vpack.c.b16 %v1587, %v1585
      %v1626 = vpack.c.b16 %v1590, %v1588
      %v1627 = vpack.c.b16 %v1591, %v1589
      %v1628 = vpack.c.b16 %v1594, %v1592
      %v1629 = vpack.c.b16 %v1595, %v1593
      %v1630 = vpack.c.b16 %v1598, %v1596
      %v1631 = vpack.c.b16 %v1599, %v1597
      %1664 = vmatprep.subr.bf16.mxu0 %v1601
      %1665 = vmatpush1.bf16.msra.mxu0 %v1600
      %1666 = vmatprep.subr.bf16.mxu0 %v1603
      %1667 = vmatpush1.bf16.msra.mxu0 %v1602
      %1668 = vmatprep.subr.bf16.mxu0 %v1605
      %1669 = vmatpush1.bf16.msra.mxu0 %v1604
      %1670 = vmatprep.subr.bf16.mxu0 %v1607
      %1671 = vmatpush1.bf16.msra.mxu0 %v1606
      %1672 = vmatprep.subr.bf16.mxu0 %v1609
      %1673 = vmatpush1.bf16.msra.mxu0 %v1608
      %1674 = vmatprep.subr.bf16.mxu0 %v1611
      %1675 = vmatpush1.bf16.msra.mxu0 %v1610
      %1676 = vmatprep.subr.bf16.mxu0 %v1613
      %1677 = vmatpush1.bf16.msra.mxu0 %v1612
      %1678 = vmatprep.subr.bf16.mxu0 %v1615
      %1679 = vmatpush1.bf16.msra.mxu0 %v1614
      %1680 = vmatprep.subr.bf16.mxu0 %v1617
      %1681 = vmatpush1.bf16.msra.mxu0 %v1616
      %1682 = vmatprep.subr.bf16.mxu0 %v1619
      %1683 = vmatpush1.bf16.msra.mxu0 %v1618
      %1684 = vmatprep.subr.bf16.mxu0 %v1621
      %1685 = vmatpush1.bf16.msra.mxu0 %v1620
      %1686 = vmatprep.subr.bf16.mxu0 %v1623
      %1687 = vmatpush1.bf16.msra.mxu0 %v1622
      %1688 = vmatprep.subr.bf16.mxu0 %v1625
      %1689 = vmatpush1.bf16.msra.mxu0 %v1624
      %1690 = vmatprep.subr.bf16.mxu0 %v1627
      %1691 = vmatpush1.bf16.msra.mxu0 %v1626
      %1692 = vmatprep.subr.bf16.mxu0 %v1629
      %1693 = vmatpush1.bf16.msra.mxu0 %v1628
      %1694 = vmatprep.subr.bf16.mxu0 %v1631
      %1695 = vmatpush1.bf16.msra.mxu0 %v1630
      %1696 = vmatprep.mubr.bf16.mxu0 %v1396
      %1697 = vmatmul.mubr.bf16.gmra.mrb[0].mxu0 %v1236
      %v1698 = vpop.f32.mrb[0].mxu0
      %v1699 = vadd.f32 %v1497, %v1698
      %v1700 = vpop.f32.mrb[0].mxu0
      %v1701 = vadd.f32 %v1501, %v1700
      %v1702 = vpop.f32.mrb[0].mxu0
      %v1703 = vadd.f32 %v1497, %v1702
      %v1704 = vpop.f32.mrb[0].mxu0
      %v1705 = vadd.f32 %v1501, %v1704
      %1706 = vmatprep.mubr.bf16.mxu0 %v1397
      %1707 = vmatmul.mubr.bf16.gmra.mrb[0].mxu0 %v1237
      %v1708 = vpop.f32.mrb[0].mxu0
      %v1709 = vadd.f32 %v1497, %v1708
      %v1710 = vpop.f32.mrb[0].mxu0
      %v1711 = vadd.f32 %v1501, %v1710
      %v1712 = vpop.f32.mrb[0].mxu0
      %v1713 = vadd.f32 %v1497, %v1712
      %v1714 = vpop.f32.mrb[0].mxu0
      %v1715 = vadd.f32 %v1501, %v1714
      %1716 = vmatprep.mubr.bf16.mxu0 %v1398
      %1717 = vmatmul.mubr.bf16.gmra.mrb[0].mxu0 %v1238
      %v1718 = vpop.f32.mrb[0].mxu0
      %v1719 = vadd.f32 %v1497, %v1718
      %v1720 = vpop.f32.mrb[0].mxu0
      %v1721 = vadd.f32 %v1501, %v1720
      %v1722 = vpop.f32.mrb[0].mxu0
      %v1723 = vadd.f32 %v1497, %v1722
      %v1724 = vpop.f32.mrb[0].mxu0
      %v1725 = vadd.f32 %v1501, %v1724
      %1726 = vmatprep.mubr.bf16.mxu0 %v1399
      %1727 = vmatmul.mubr.bf16.gmra.mrb[0].mxu0 %v1239
      %v1728 = vpop.f32.mrb[0].mxu0
      %v1729 = vadd.f32 %v1497, %v1728
      %v1730 = vpop.f32.mrb[0].mxu0
      %v1731 = vadd.f32 %v1501, %v1730
      %v1732 = vpop.f32.mrb[0].mxu0
      %v1733 = vadd.f32 %v1497, %v1732
      %v1734 = vpop.f32.mrb[0].mxu0
      %v1735 = vadd.f32 %v1501, %v1734
      %1736 = vmatprep.mubr.bf16.mxu0 %v1400
      %1737 = vmatmul.mubr.bf16.gmra.mrb[0].mxu0 %v1240
      %v1738 = vpop.f32.mrb[0].mxu0
      %v1739 = vadd.f32 %v1497, %v1738
      %v1740 = vpop.f32.mrb[0].mxu0
      %v1741 = vadd.f32 %v1501, %v1740
      %v1742 = vpop.f32.mrb[0].mxu0
      %v1743 = vadd.f32 %v1497, %v1742
      %v1744 = vpop.f32.mrb[0].mxu0
      %v1745 = vadd.f32 %v1501, %v1744
      %1746 = vmatprep.mubr.bf16.mxu0 %v1401
      %1747 = vmatmul.mubr.bf16.gmra.mrb[0].mxu0 %v1241
      %v1748 = vpop.f32.mrb[0].mxu0
      %v1749 = vadd.f32 %v1497, %v1748
      %v1750 = vpop.f32.mrb[0].mxu0
      %v1751 = vadd.f32 %v1501, %v1750
      %v1752 = vpop.f32.mrb[0].mxu0
      %v1753 = vadd.f32 %v1497, %v1752
      %v1754 = vpop.f32.mrb[0].mxu0
      %v1755 = vadd.f32 %v1501, %v1754
      %1756 = vmatprep.mubr.bf16.mxu0 %v1402
      %1757 = vmatmul.mubr.bf16.gmra.mrb[0].mxu0 %v1242
      %v1758 = vpop.f32.mrb[0].mxu0
      %v1759 = vadd.f32 %v1497, %v1758
      %v1760 = vpop.f32.mrb[0].mxu0
      %v1761 = vadd.f32 %v1501, %v1760
      %v1762 = vpop.f32.mrb[0].mxu0
      %v1763 = vadd.f32 %v1497, %v1762
      %v1764 = vpop.f32.mrb[0].mxu0
      %v1765 = vadd.f32 %v1501, %v1764
      %1766 = vmatprep.mubr.bf16.mxu0 %v1403
      %1767 = vmatmul.mubr.bf16.gmra.mrb[0].mxu0 %v1243
      %v1768 = vpop.f32.mrb[0].mxu0
      %v1769 = vadd.f32 %v1497, %v1768
      %v1770 = vpop.f32.mrb[0].mxu0
      %v1771 = vadd.f32 %v1501, %v1770
      %v1772 = vpop.f32.mrb[0].mxu0
      %v1773 = vadd.f32 %v1497, %v1772
      %v1774 = vpop.f32.mrb[0].mxu0
      %v1775 = vadd.f32 %v1501, %v1774
      %1776 = vmatprep.mubr.bf16.mxu0 %v1404
      %1777 = vmatmul.mubr.bf16.gmra.mrb[0].mxu0 %v1244
      %v1778 = vpop.f32.mrb[0].mxu0
      %v1779 = vadd.f32 %v1497, %v1778
      %v1780 = vpop.f32.mrb[0].mxu0
      %v1781 = vadd.f32 %v1501, %v1780
      %v1782 = vpop.f32.mrb[0].mxu0
      %v1783 = vadd.f32 %v1497, %v1782
      %v1784 = vpop.f32.mrb[0].mxu0
      %v1785 = vadd.f32 %v1501, %v1784
      %1786 = vmatprep.mubr.bf16.mxu0 %v1405
      %1787 = vmatmul.mubr.bf16.gmra.mrb[0].mxu0 %v1245
      %v1788 = vpop.f32.mrb[0].mxu0
      %v1789 = vadd.f32 %v1497, %v1788
      %v1790 = vpop.f32.mrb[0].mxu0
      %v1791 = vadd.f32 %v1501, %v1790
      %v1792 = vpop.f32.mrb[0].mxu0
      %v1793 = vadd.f32 %v1497, %v1792
      %v1794 = vpop.f32.mrb[0].mxu0
      %v1795 = vadd.f32 %v1501, %v1794
      %1796 = vmatprep.mubr.bf16.mxu0 %v1406
      %1797 = vmatmul.mubr.bf16.gmra.mrb[0].mxu0 %v1246
      %v1798 = vpop.f32.mrb[0].mxu0
      %v1799 = vadd.f32 %v1497, %v1798
      %v1800 = vpop.f32.mrb[0].mxu0
      %v1801 = vadd.f32 %v1501, %v1800
      %v1802 = vpop.f32.mrb[0].mxu0
      %v1803 = vadd.f32 %v1497, %v1802
      %v1804 = vpop.f32.mrb[0].mxu0
      %v1805 = vadd.f32 %v1501, %v1804
      %1806 = vmatprep.mubr.bf16.mxu0 %v1407
      %1807 = vmatmul.mubr.bf16.gmra.mrb[0].mxu0 %v1247
      %v1808 = vpop.f32.mrb[0].mxu0
      %v1809 = vadd.f32 %v1497, %v1808
      %v1810 = vpop.f32.mrb[0].mxu0
      %v1811 = vadd.f32 %v1501, %v1810
      %v1812 = vpop.f32.mrb[0].mxu0
      %v1813 = vadd.f32 %v1497, %v1812
      %v1814 = vpop.f32.mrb[0].mxu0
      %v1815 = vadd.f32 %v1501, %v1814
      %1816 = vmatprep.mubr.bf16.mxu0 %v1408
      %1817 = vmatmul.mubr.bf16.gmra.mrb[0].mxu0 %v1248
      %v1818 = vpop.f32.mrb[0].mxu0
      %v1819 = vadd.f32 %v1497, %v1818
      %v1820 = vpop.f32.mrb[0].mxu0
      %v1821 = vadd.f32 %v1501, %v1820
      %v1822 = vpop.f32.mrb[0].mxu0
      %v1823 = vadd.f32 %v1497, %v1822
      %v1824 = vpop.f32.mrb[0].mxu0
      %v1825 = vadd.f32 %v1501, %v1824
      %1826 = vmatprep.mubr.bf16.mxu0 %v1409
      %1827 = vmatmul.mubr.bf16.gmra.mrb[0].mxu0 %v1249
      %v1828 = vpop.f32.mrb[0].mxu0
      %v1829 = vadd.f32 %v1497, %v1828
      %v1830 = vpop.f32.mrb[0].mxu0
      %v1831 = vadd.f32 %v1501, %v1830
      %v1832 = vpop.f32.mrb[0].mxu0
      %v1833 = vadd.f32 %v1497, %v1832
      %v1834 = vpop.f32.mrb[0].mxu0
      %v1835 = vadd.f32 %v1501, %v1834
      %1836 = vmatprep.mubr.bf16.mxu0 %v1410
      %1837 = vmatmul.mubr.bf16.gmra.mrb[0].mxu0 %v1250
      %v1838 = vpop.f32.mrb[0].mxu0
      %v1839 = vadd.f32 %v1497, %v1838
      %v1840 = vpop.f32.mrb[0].mxu0
      %v1841 = vadd.f32 %v1501, %v1840
      %v1842 = vpop.f32.mrb[0].mxu0
      %v1843 = vadd.f32 %v1497, %v1842
      %v1844 = vpop.f32.mrb[0].mxu0
      %v1845 = vadd.f32 %v1501, %v1844
      %1846 = vmatprep.mubr.bf16.mxu0 %v1411
      %1847 = vmatmul.mubr.bf16.gmra.mrb[0].mxu0 %v1251
      %v1848 = vpop.f32.mrb[0].mxu0
      %v1849 = vadd.f32 %v1497, %v1848
      %v1850 = vpop.f32.mrb[0].mxu0
      %v1851 = vadd.f32 %v1501, %v1850
      %v1852 = vpop.f32.mrb[0].mxu0
      %v1853 = vadd.f32 %v1497, %v1852
      %v1854 = vpop.f32.mrb[0].mxu0
      %v1855 = vadd.f32 %v1501, %v1854
      %1856 = vmatprep.mubr.bf16.mxu0 %v1412
      %1857 = vmatmul.mubr.bf16.gmra.mrb[0].mxu0 %v1252
      %v1858 = vpop.f32.mrb[0].mxu0
      %v1859 = vadd.f32 %v1497, %v1858
      %v1860 = vpop.f32.mrb[0].mxu0
      %v1861 = vadd.f32 %v1501, %v1860
      %v1862 = vpop.f32.mrb[0].mxu0
      %v1863 = vadd.f32 %v1497, %v1862
      %v1864 = vpop.f32.mrb[0].mxu0
      %v1865 = vadd.f32 %v1501, %v1864
      %1866 = vmatprep.mubr.bf16.mxu0 %v1413
      %1867 = vmatmul.mubr.bf16.gmra.mrb[0].mxu0 %v1253
      %v1868 = vpop.f32.mrb[0].mxu0
      %v1869 = vadd.f32 %v1497, %v1868
      %v1870 = vpop.f32.mrb[0].mxu0
      %v1871 = vadd.f32 %v1501, %v1870
      %v1872 = vpop.f32.mrb[0].mxu0
      %v1873 = vadd.f32 %v1497, %v1872
      %v1874 = vpop.f32.mrb[0].mxu0
      %v1875 = vadd.f32 %v1501, %v1874
      %1876 = vmatprep.mubr.bf16.mxu0 %v1414
      %1877 = vmatmul.mubr.bf16.gmra.mrb[0].mxu0 %v1254
      %v1878 = vpop.f32.mrb[0].mxu0
      %v1879 = vadd.f32 %v1497, %v1878
      %v1880 = vpop.f32.mrb[0].mxu0
      %v1881 = vadd.f32 %v1501, %v1880
      %v1882 = vpop.f32.mrb[0].mxu0
      %v1883 = vadd.f32 %v1497, %v1882
      %v1884 = vpop.f32.mrb[0].mxu0
      %v1885 = vadd.f32 %v1501, %v1884
      %1886 = vmatprep.mubr.bf16.mxu0 %v1415
      %1887 = vmatmul.mubr.bf16.gmra.mrb[0].mxu0 %v1255
      %v1888 = vpop.f32.mrb[0].mxu0
      %v1889 = vadd.f32 %v1497, %v1888
      %v1890 = vpop.f32.mrb[0].mxu0
      %v1891 = vadd.f32 %v1501, %v1890
      %v1892 = vpop.f32.mrb[0].mxu0
      %v1893 = vadd.f32 %v1497, %v1892
      %v1894 = vpop.f32.mrb[0].mxu0
      %v1895 = vadd.f32 %v1501, %v1894
      %1896 = vmatprep.mubr.bf16.mxu0 %v1416
      %1897 = vmatmul.mubr.bf16.gmra.mrb[0].mxu0 %v1256
      %v1898 = vpop.f32.mrb[0].mxu0
      %v1899 = vadd.f32 %v1497, %v1898
      %v1900 = vpop.f32.mrb[0].mxu0
      %v1901 = vadd.f32 %v1501, %v1900
      %v1902 = vpop.f32.mrb[0].mxu0
      %v1903 = vadd.f32 %v1497, %v1902
      %v1904 = vpop.f32.mrb[0].mxu0
      %v1905 = vadd.f32 %v1501, %v1904
      %1906 = vmatprep.mubr.bf16.mxu0 %v1417
      %1907 = vmatmul.mubr.bf16.gmra.mrb[0].mxu0 %v1257
      %v1908 = vpop.f32.mrb[0].mxu0
      %v1909 = vadd.f32 %v1497, %v1908
      %v1910 = vpop.f32.mrb[0].mxu0
      %v1911 = vadd.f32 %v1501, %v1910
      %v1912 = vpop.f32.mrb[0].mxu0
      %v1913 = vadd.f32 %v1497, %v1912
      %v1914 = vpop.f32.mrb[0].mxu0
      %v1915 = vadd.f32 %v1501, %v1914
      %1916 = vmatprep.mubr.bf16.mxu0 %v1418
      %1917 = vmatmul.mubr.bf16.gmra.mrb[0].mxu0 %v1258
      %v1918 = vpop.f32.mrb[0].mxu0
      %v1919 = vadd.f32 %v1497, %v1918
      %v1920 = vpop.f32.mrb[0].mxu0
      %v1921 = vadd.f32 %v1501, %v1920
      %v1922 = vpop.f32.mrb[0].mxu0
      %v1923 = vadd.f32 %v1497, %v1922
      %v1924 = vpop.f32.mrb[0].mxu0
      %v1925 = vadd.f32 %v1501, %v1924
      %1926 = vmatprep.mubr.bf16.mxu0 %v1419
      %1927 = vmatmul.mubr.bf16.gmra.mrb[0].mxu0 %v1259
      %v1928 = vpop.f32.mrb[0].mxu0
      %v1929 = vadd.f32 %v1497, %v1928
      %v1930 = vpop.f32.mrb[0].mxu0
      %v1931 = vadd.f32 %v1501, %v1930
      %v1932 = vpop.f32.mrb[0].mxu0
      %v1933 = vadd.f32 %v1497, %v1932
      %v1934 = vpop.f32.mrb[0].mxu0
      %v1935 = vadd.f32 %v1501, %v1934
      %1936 = vmatprep.mubr.bf16.mxu0 %v1420
      %1937 = vmatmul.mubr.bf16.gmra.mrb[0].mxu0 %v1260
      %v1938 = vpop.f32.mrb[0].mxu0
      %v1939 = vadd.f32 %v1497, %v1938
      %v1940 = vpop.f32.mrb[0].mxu0
      %v1941 = vadd.f32 %v1501, %v1940
      %v1942 = vpop.f32.mrb[0].mxu0
      %v1943 = vadd.f32 %v1497, %v1942
      %v1944 = vpop.f32.mrb[0].mxu0
      %v1945 = vadd.f32 %v1501, %v1944
      %1946 = vmatprep.mubr.bf16.mxu0 %v1421
      %1947 = vmatmul.mubr.bf16.gmra.mrb[0].mxu0 %v1261
      %v1948 = vpop.f32.mrb[0].mxu0
      %v1949 = vadd.f32 %v1497, %v1948
      %v1950 = vpop.f32.mrb[0].mxu0
      %v1951 = vadd.f32 %v1501, %v1950
      %v1952 = vpop.f32.mrb[0].mxu0
      %v1953 = vadd.f32 %v1497, %v1952
      %v1954 = vpop.f32.mrb[0].mxu0
      %v1955 = vadd.f32 %v1501, %v1954
      %1956 = vmatprep.mubr.bf16.mxu0 %v1422
      %1957 = vmatmul.mubr.bf16.gmra.mrb[0].mxu0 %v1262
      %v1958 = vpop.f32.mrb[0].mxu0
      %v1959 = vadd.f32 %v1497, %v1958
      %v1960 = vpop.f32.mrb[0].mxu0
      %v1961 = vadd.f32 %v1501, %v1960
      %v1962 = vpop.f32.mrb[0].mxu0
      %v1963 = vadd.f32 %v1497, %v1962
      %v1964 = vpop.f32.mrb[0].mxu0
      %v1965 = vadd.f32 %v1501, %v1964
      %1966 = vmatprep.mubr.bf16.mxu0 %v1423
      %1967 = vmatmul.mubr.bf16.gmra.mrb[0].mxu0 %v1263
      %v1968 = vpop.f32.mrb[0].mxu0
      %v1969 = vadd.f32 %v1497, %v1968
      %v1970 = vpop.f32.mrb[0].mxu0
      %v1971 = vadd.f32 %v1501, %v1970
      %v1972 = vpop.f32.mrb[0].mxu0
      %v1973 = vadd.f32 %v1497, %v1972
      %v1974 = vpop.f32.mrb[0].mxu0
      %v1975 = vadd.f32 %v1501, %v1974
      %1976 = vmatprep.mubr.bf16.mxu0 %v1424
      %1977 = vmatmul.mubr.bf16.gmra.mrb[0].mxu0 %v1264
      %v1978 = vpop.f32.mrb[0].mxu0
      %v1979 = vadd.f32 %v1497, %v1978
      %v1980 = vpop.f32.mrb[0].mxu0
      %v1981 = vadd.f32 %v1501, %v1980
      %v1982 = vpop.f32.mrb[0].mxu0
      %v1983 = vadd.f32 %v1497, %v1982
      %v1984 = vpop.f32.mrb[0].mxu0
      %v1985 = vadd.f32 %v1501, %v1984
      %1986 = vmatprep.mubr.bf16.mxu0 %v1425
      %1987 = vmatmul.mubr.bf16.gmra.mrb[0].mxu0 %v1265
      %v1988 = vpop.f32.mrb[0].mxu0
      %v1989 = vadd.f32 %v1497, %v1988
      %v1990 = vpop.f32.mrb[0].mxu0
      %v1991 = vadd.f32 %v1501, %v1990
      %v1992 = vpop.f32.mrb[0].mxu0
      %v1993 = vadd.f32 %v1497, %v1992
      %v1994 = vpop.f32.mrb[0].mxu0
      %v1995 = vadd.f32 %v1501, %v1994
      %1996 = vmatprep.mubr.bf16.mxu0 %v1426
      %1997 = vmatmul.mubr.bf16.gmra.mrb[0].mxu0 %v1266
      %v1998 = vpop.f32.mrb[0].mxu0
      %v1999 = vadd.f32 %v1497, %v1998
      %v2000 = vpop.f32.mrb[0].mxu0
      %v2001 = vadd.f32 %v1501, %v2000
      %v2002 = vpop.f32.mrb[0].mxu0
      %v2003 = vadd.f32 %v1497, %v2002
      %v2004 = vpop.f32.mrb[0].mxu0
      %v2005 = vadd.f32 %v1501, %v2004
      %2006 = vmatprep.mubr.bf16.mxu0 %v1427
      %2007 = vmatmul.mubr.bf16.gmra.mrb[0].mxu0 %v1267
      %v2008 = vpop.f32.mrb[0].mxu0
      %v2009 = vadd.f32 %v1497, %v2008
      %v2010 = vpop.f32.mrb[0].mxu0
      %v2011 = vadd.f32 %v1501, %v2010
      %v2012 = vpop.f32.mrb[0].mxu0
      %v2013 = vadd.f32 %v1497, %v2012
      %v2014 = vpop.f32.mrb[0].mxu0
      %v2015 = vadd.f32 %v1501, %v2014
      %2016 = vdwg.mxu0
      %v2017 = vmax.f32 %v1699, 0.0
      %v2018 = vmax.f32 %v1701, 0.0
      %v2019 = vmax.f32 %v1703, 0.0
      %v2020 = vmax.f32 %v1705, 0.0
      %v2021 = vmax.f32 %v1709, 0.0
      %v2022 = vmax.f32 %v1711, 0.0
      %v2023 = vmax.f32 %v1713, 0.0
      %v2024 = vmax.f32 %v1715, 0.0
      %v2025 = vmax.f32 %v1719, 0.0
      %v2026 = vmax.f32 %v1721, 0.0
      %v2027 = vmax.f32 %v1723, 0.0
      %v2028 = vmax.f32 %v1725, 0.0
      %v2029 = vmax.f32 %v1729, 0.0
      %v2030 = vmax.f32 %v1731, 0.0
      %v2031 = vmax.f32 %v1733, 0.0
      %v2032 = vmax.f32 %v1735, 0.0
      %v2033 = vmax.f32 %v1739, 0.0
      %v2034 = vmax.f32 %v1741, 0.0
      %v2035 = vmax.f32 %v1743, 0.0
      %v2036 = vmax.f32 %v1745, 0.0
      %v2037 = vmax.f32 %v1749, 0.0
      %v2038 = vmax.f32 %v1751, 0.0
      %v2039 = vmax.f32 %v1753, 0.0
      %v2040 = vmax.f32 %v1755, 0.0
      %v2041 = vmax.f32 %v1759, 0.0
      %v2042 = vmax.f32 %v1761, 0.0
      %v2043 = vmax.f32 %v1763, 0.0
      %v2044 = vmax.f32 %v1765, 0.0
      %v2045 = vmax.f32 %v1769, 0.0
      %v2046 = vmax.f32 %v1771, 0.0
      %v2047 = vmax.f32 %v1773, 0.0
      %v2048 = vmax.f32 %v1775, 0.0
      %v2049 = vmax.f32 %v1779, 0.0
      %v2050 = vmax.f32 %v1781, 0.0
      %v2051 = vmax.f32 %v1783, 0.0
      %v2052 = vmax.f32 %v1785, 0.0
      %v2053 = vmax.f32 %v1789, 0.0
      %v2054 = vmax.f32 %v1791, 0.0
      %v2055 = vmax.f32 %v1793, 0.0
      %v2056 = vmax.f32 %v1795, 0.0
      %v2057 = vmax.f32 %v1799, 0.0
      %v2058 = vmax.f32 %v1801, 0.0
      %v2059 = vmax.f32 %v1803, 0.0
      %v2060 = vmax.f32 %v1805, 0.0
      %v2061 = vmax.f32 %v1809, 0.0
      %v2062 = vmax.f32 %v1811, 0.0
      %v2063 = vmax.f32 %v1813, 0.0
      %v2064 = vmax.f32 %v1815, 0.0
      %v2065 = vmax.f32 %v1819, 0.0
      %v2066 = vmax.f32 %v1821, 0.0
      %v2067 = vmax.f32 %v1823, 0.0
      %v2068 = vmax.f32 %v1825, 0.0
      %v2069 = vmax.f32 %v1829, 0.0
      %v2070 = vmax.f32 %v1831, 0.0
      %v2071 = vmax.f32 %v1833, 0.0
      %v2072 = vmax.f32 %v1835, 0.0
      %v2073 = vmax.f32 %v1839, 0.0
      %v2074 = vmax.f32 %v1841, 0.0
      %v2075 = vmax.f32 %v1843, 0.0
      %v2076 = vmax.f32 %v1845, 0.0
      %v2077 = vmax.f32 %v1849, 0.0
      %v2078 = vmax.f32 %v1851, 0.0
      %v2079 = vmax.f32 %v1853, 0.0
      %v2080 = vmax.f32 %v1855, 0.0
      %v2081 = vmax.f32 %v1859, 0.0
      %v2082 = vmax.f32 %v1861, 0.0
      %v2083 = vmax.f32 %v1863, 0.0
      %v2084 = vmax.f32 %v1865, 0.0
      %v2085 = vmax.f32 %v1869, 0.0
      %v2086 = vmax.f32 %v1871, 0.0
      %v2087 = vmax.f32 %v1873, 0.0
      %v2088 = vmax.f32 %v1875, 0.0
      %v2089 = vmax.f32 %v1879, 0.0
      %v2090 = vmax.f32 %v1881, 0.0
      %v2091 = vmax.f32 %v1883, 0.0
      %v2092 = vmax.f32 %v1885, 0.0
      %v2093 = vmax.f32 %v1889, 0.0
      %v2094 = vmax.f32 %v1891, 0.0
      %v2095 = vmax.f32 %v1893, 0.0
      %v2096 = vmax.f32 %v1895, 0.0
      %v2097 = vmax.f32 %v1899, 0.0
      %v2098 = vmax.f32 %v1901, 0.0
      %v2099 = vmax.f32 %v1903, 0.0
      %v2100 = vmax.f32 %v1905, 0.0
      %v2101 = vmax.f32 %v1909, 0.0
      %v2102 = vmax.f32 %v1911, 0.0
      %v2103 = vmax.f32 %v1913, 0.0
      %v2104 = vmax.f32 %v1915, 0.0
      %v2105 = vmax.f32 %v1919, 0.0
      %v2106 = vmax.f32 %v1921, 0.0
      %v2107 = vmax.f32 %v1923, 0.0
      %v2108 = vmax.f32 %v1925, 0.0
      %v2109 = vmax.f32 %v1929, 0.0
      %v2110 = vmax.f32 %v1931, 0.0
      %v2111 = vmax.f32 %v1933, 0.0
      %v2112 = vmax.f32 %v1935, 0.0
      %v2113 = vmax.f32 %v1939, 0.0
      %v2114 = vmax.f32 %v1941, 0.0
      %v2115 = vmax.f32 %v1943, 0.0
      %v2116 = vmax.f32 %v1945, 0.0
      %v2117 = vmax.f32 %v1949, 0.0
      %v2118 = vmax.f32 %v1951, 0.0
      %v2119 = vmax.f32 %v1953, 0.0
      %v2120 = vmax.f32 %v1955, 0.0
      %v2121 = vmax.f32 %v1959, 0.0
      %v2122 = vmax.f32 %v1961, 0.0
      %v2123 = vmax.f32 %v1963, 0.0
      %v2124 = vmax.f32 %v1965, 0.0
      %v2125 = vmax.f32 %v1969, 0.0
      %v2126 = vmax.f32 %v1971, 0.0
      %v2127 = vmax.f32 %v1973, 0.0
      %v2128 = vmax.f32 %v1975, 0.0
      %v2129 = vmax.f32 %v1979, 0.0
      %v2130 = vmax.f32 %v1981, 0.0
      %v2131 = vmax.f32 %v1983, 0.0
      %v2132 = vmax.f32 %v1985, 0.0
      %v2133 = vmax.f32 %v1989, 0.0
      %v2134 = vmax.f32 %v1991, 0.0
      %v2135 = vmax.f32 %v1993, 0.0
      %v2136 = vmax.f32 %v1995, 0.0
      %v2137 = vmax.f32 %v1999, 0.0
      %v2138 = vmax.f32 %v2001, 0.0
      %v2139 = vmax.f32 %v2003, 0.0
      %v2140 = vmax.f32 %v2005, 0.0
      %v2141 = vmax.f32 %v2009, 0.0
      %v2142 = vmax.f32 %v2011, 0.0
      %v2143 = vmax.f32 %v2013, 0.0
      %v2144 = vmax.f32 %v2015, 0.0
      %2145 = vrot.lane.b32.xlu0 %v2017, 8
      %v2146 = vpop.permute.xlu0 %2145
      %2147 = vrot.lane.b32.xlu0 %v2019, 8
      %v2148 = vpop.permute.xlu0 %2147
      %2149 = vrot.lane.b32.xlu0 %v2021, 8
      %v2150 = vpop.permute.xlu0 %2149
      %2151 = vrot.lane.b32.xlu0 %v2023, 8
      %v2152 = vpop.permute.xlu0 %2151
      %2153 = vrot.lane.b32.xlu0 %v2025, 8
      %v2154 = vpop.permute.xlu0 %2153
      %2155 = vrot.lane.b32.xlu0 %v2027, 8
      %v2156 = vpop.permute.xlu0 %2155
      %2157 = vrot.lane.b32.xlu0 %v2029, 8
      %v2158 = vpop.permute.xlu0 %2157
      %2159 = vrot.lane.b32.xlu0 %v2031, 8
      %v2160 = vpop.permute.xlu0 %2159
      %2161 = vrot.lane.b32.xlu0 %v2033, 8
      %v2162 = vpop.permute.xlu0 %2161
      %2163 = vrot.lane.b32.xlu0 %v2035, 8
      %v2164 = vpop.permute.xlu0 %2163
      %2165 = vrot.lane.b32.xlu0 %v2037, 8
      %v2166 = vpop.permute.xlu0 %2165
      %2167 = vrot.lane.b32.xlu0 %v2039, 8
      %v2168 = vpop.permute.xlu0 %2167
      %2169 = vrot.lane.b32.xlu0 %v2041, 8
      %v2170 = vpop.permute.xlu0 %2169
      %2171 = vrot.lane.b32.xlu0 %v2043, 8
      %v2172 = vpop.permute.xlu0 %2171
      %2173 = vrot.lane.b32.xlu0 %v2045, 8
      %v2174 = vpop.permute.xlu0 %2173
      %2175 = vrot.lane.b32.xlu0 %v2047, 8
      %v2176 = vpop.permute.xlu0 %2175
      %2177 = vrot.lane.b32.xlu0 %v2049, 8
      %v2178 = vpop.permute.xlu0 %2177
      %2179 = vrot.lane.b32.xlu0 %v2051, 8
      %v2180 = vpop.permute.xlu0 %2179
      %2181 = vrot.lane.b32.xlu0 %v2053, 8
      %v2182 = vpop.permute.xlu0 %2181
      %2183 = vrot.lane.b32.xlu0 %v2055, 8
      %v2184 = vpop.permute.xlu0 %2183
      %2185 = vrot.lane.b32.xlu0 %v2057, 8
      %v2186 = vpop.permute.xlu0 %2185
      %2187 = vrot.lane.b32.xlu0 %v2059, 8
      %v2188 = vpop.permute.xlu0 %2187
      %2189 = vrot.lane.b32.xlu0 %v2061, 8
      %v2190 = vpop.permute.xlu0 %2189
      %2191 = vrot.lane.b32.xlu0 %v2063, 8
      %v2192 = vpop.permute.xlu0 %2191
      %2193 = vrot.lane.b32.xlu0 %v2065, 8
      %v2194 = vpop.permute.xlu0 %2193
      %2195 = vrot.lane.b32.xlu0 %v2067, 8
      %v2196 = vpop.permute.xlu0 %2195
      %2197 = vrot.lane.b32.xlu0 %v2069, 8
      %v2198 = vpop.permute.xlu0 %2197
      %2199 = vrot.lane.b32.xlu0 %v2071, 8
      %v2200 = vpop.permute.xlu0 %2199
      %2201 = vrot.lane.b32.xlu0 %v2073, 8
      %v2202 = vpop.permute.xlu0 %2201
      %2203 = vrot.lane.b32.xlu0 %v2075, 8
      %v2204 = vpop.permute.xlu0 %2203
      %2205 = vrot.lane.b32.xlu0 %v2077, 8
      %v2206 = vpop.permute.xlu0 %2205
      %2207 = vrot.lane.b32.xlu0 %v2079, 8
      %v2208 = vpop.permute.xlu0 %2207
      %2209 = vrot.lane.b32.xlu0 %v2081, 8
      %v2210 = vpop.permute.xlu0 %2209
      %2211 = vrot.lane.b32.xlu0 %v2083, 8
      %v2212 = vpop.permute.xlu0 %2211
      %2213 = vrot.lane.b32.xlu0 %v2085, 8
      %v2214 = vpop.permute.xlu0 %2213
      %2215 = vrot.lane.b32.xlu0 %v2087, 8
      %v2216 = vpop.permute.xlu0 %2215
      %2217 = vrot.lane.b32.xlu0 %v2089, 8
      %v2218 = vpop.permute.xlu0 %2217
      %2219 = vrot.lane.b32.xlu0 %v2091, 8
      %v2220 = vpop.permute.xlu0 %2219
      %2221 = vrot.lane.b32.xlu0 %v2093, 8
      %v2222 = vpop.permute.xlu0 %2221
      %2223 = vrot.lane.b32.xlu0 %v2095, 8
      %v2224 = vpop.permute.xlu0 %2223
      %2225 = vrot.lane.b32.xlu0 %v2097, 8
      %v2226 = vpop.permute.xlu0 %2225
      %2227 = vrot.lane.b32.xlu0 %v2099, 8
      %v2228 = vpop.permute.xlu0 %2227
      %2229 = vrot.lane.b32.xlu0 %v2101, 8
      %v2230 = vpop.permute.xlu0 %2229
      %2231 = vrot.lane.b32.xlu0 %v2103, 8
      %v2232 = vpop.permute.xlu0 %2231
      %2233 = vrot.lane.b32.xlu0 %v2105, 8
      %v2234 = vpop.permute.xlu0 %2233
      %2235 = vrot.lane.b32.xlu0 %v2107, 8
      %v2236 = vpop.permute.xlu0 %2235
      %2237 = vrot.lane.b32.xlu0 %v2109, 8
      %v2238 = vpop.permute.xlu0 %2237
      %2239 = vrot.lane.b32.xlu0 %v2111, 8
      %v2240 = vpop.permute.xlu0 %2239
      %2241 = vrot.lane.b32.xlu0 %v2113, 8
      %v2242 = vpop.permute.xlu0 %2241
      %2243 = vrot.lane.b32.xlu0 %v2115, 8
      %v2244 = vpop.permute.xlu0 %2243
      %2245 = vrot.lane.b32.xlu0 %v2117, 8
      %v2246 = vpop.permute.xlu0 %2245
      %2247 = vrot.lane.b32.xlu0 %v2119, 8
      %v2248 = vpop.permute.xlu0 %2247
      %2249 = vrot.lane.b32.xlu0 %v2121, 8
      %v2250 = vpop.permute.xlu0 %2249
      %2251 = vrot.lane.b32.xlu0 %v2123, 8
      %v2252 = vpop.permute.xlu0 %2251
      %2253 = vrot.lane.b32.xlu0 %v2125, 8
      %v2254 = vpop.permute.xlu0 %2253
      %2255 = vrot.lane.b32.xlu0 %v2127, 8
      %v2256 = vpop.permute.xlu0 %2255
      %2257 = vrot.lane.b32.xlu0 %v2129, 8
      %v2258 = vpop.permute.xlu0 %2257
      %2259 = vrot.lane.b32.xlu0 %v2131, 8
      %v2260 = vpop.permute.xlu0 %2259
      %2261 = vrot.lane.b32.xlu0 %v2133, 8
      %v2262 = vpop.permute.xlu0 %2261
      %2263 = vrot.lane.b32.xlu0 %v2135, 8
      %v2264 = vpop.permute.xlu0 %2263
      %2265 = vrot.lane.b32.xlu0 %v2137, 8
      %v2266 = vpop.permute.xlu0 %2265
      %2267 = vrot.lane.b32.xlu0 %v2139, 8
      %v2268 = vpop.permute.xlu0 %2267
      %2269 = vrot.lane.b32.xlu0 %v2141, 8
      %v2270 = vpop.permute.xlu0 %2269
      %2271 = vrot.lane.b32.xlu0 %v2143, 8
      %v2272 = vpop.permute.xlu0 %2271
      %v2273 = vmax.f32 %v2017, %v2146
      %v2274 = vmax.f32 %v2019, %v2148
      %v2275 = vmax.f32 %v2021, %v2150
      %v2276 = vmax.f32 %v2023, %v2152
      %v2277 = vmax.f32 %v2025, %v2154
      %v2278 = vmax.f32 %v2027, %v2156
      %v2279 = vmax.f32 %v2029, %v2158
      %v2280 = vmax.f32 %v2031, %v2160
      %v2281 = vmax.f32 %v2033, %v2162
      %v2282 = vmax.f32 %v2035, %v2164
      %v2283 = vmax.f32 %v2037, %v2166
      %v2284 = vmax.f32 %v2039, %v2168
      %v2285 = vmax.f32 %v2041, %v2170
      %v2286 = vmax.f32 %v2043, %v2172
      %v2287 = vmax.f32 %v2045, %v2174
      %v2288 = vmax.f32 %v2047, %v2176
      %v2289 = vmax.f32 %v2049, %v2178
      %v2290 = vmax.f32 %v2051, %v2180
      %v2291 = vmax.f32 %v2053, %v2182
      %v2292 = vmax.f32 %v2055, %v2184
      %v2293 = vmax.f32 %v2057, %v2186
      %v2294 = vmax.f32 %v2059, %v2188
      %v2295 = vmax.f32 %v2061, %v2190
      %v2296 = vmax.f32 %v2063, %v2192
      %v2297 = vmax.f32 %v2065, %v2194
      %v2298 = vmax.f32 %v2067, %v2196
      %v2299 = vmax.f32 %v2069, %v2198
      %v2300 = vmax.f32 %v2071, %v2200
      %v2301 = vmax.f32 %v2073, %v2202
      %v2302 = vmax.f32 %v2075, %v2204
      %v2303 = vmax.f32 %v2077, %v2206
      %v2304 = vmax.f32 %v2079, %v2208
      %v2305 = vmax.f32 %v2081, %v2210
      %v2306 = vmax.f32 %v2083, %v2212
      %v2307 = vmax.f32 %v2085, %v2214
      %v2308 = vmax.f32 %v2087, %v2216
      %v2309 = vmax.f32 %v2089, %v2218
      %v2310 = vmax.f32 %v2091, %v2220
      %v2311 = vmax.f32 %v2093, %v2222
      %v2312 = vmax.f32 %v2095, %v2224
      %v2313 = vmax.f32 %v2097, %v2226
      %v2314 = vmax.f32 %v2099, %v2228
      %v2315 = vmax.f32 %v2101, %v2230
      %v2316 = vmax.f32 %v2103, %v2232
      %v2317 = vmax.f32 %v2105, %v2234
      %v2318 = vmax.f32 %v2107, %v2236
      %v2319 = vmax.f32 %v2109, %v2238
      %v2320 = vmax.f32 %v2111, %v2240
      %v2321 = vmax.f32 %v2113, %v2242
      %v2322 = vmax.f32 %v2115, %v2244
      %v2323 = vmax.f32 %v2117, %v2246
      %v2324 = vmax.f32 %v2119, %v2248
      %v2325 = vmax.f32 %v2121, %v2250
      %v2326 = vmax.f32 %v2123, %v2252
      %v2327 = vmax.f32 %v2125, %v2254
      %v2328 = vmax.f32 %v2127, %v2256
      %v2329 = vmax.f32 %v2129, %v2258
      %v2330 = vmax.f32 %v2131, %v2260
      %v2331 = vmax.f32 %v2133, %v2262
      %v2332 = vmax.f32 %v2135, %v2264
      %v2333 = vmax.f32 %v2137, %v2266
      %v2334 = vmax.f32 %v2139, %v2268
      %v2335 = vmax.f32 %v2141, %v2270
      %v2336 = vmax.f32 %v2143, %v2272
      %2337 = vrot.lane.b32.xlu0 %v2273, 16
      %v2338 = vpop.permute.xlu0 %2337
      %2339 = vrot.lane.b32.xlu0 %v2274, 16
      %v2340 = vpop.permute.xlu0 %2339
      %2341 = vrot.lane.b32.xlu0 %v2275, 16
      %v2342 = vpop.permute.xlu0 %2341
      %2343 = vrot.lane.b32.xlu0 %v2276, 16
      %v2344 = vpop.permute.xlu0 %2343
      %2345 = vrot.lane.b32.xlu0 %v2277, 16
      %v2346 = vpop.permute.xlu0 %2345
      %2347 = vrot.lane.b32.xlu0 %v2278, 16
      %v2348 = vpop.permute.xlu0 %2347
      %2349 = vrot.lane.b32.xlu0 %v2279, 16
      %v2350 = vpop.permute.xlu0 %2349
      %2351 = vrot.lane.b32.xlu0 %v2280, 16
      %v2352 = vpop.permute.xlu0 %2351
      %2353 = vrot.lane.b32.xlu0 %v2281, 16
      %v2354 = vpop.permute.xlu0 %2353
      %2355 = vrot.lane.b32.xlu0 %v2282, 16
      %v2356 = vpop.permute.xlu0 %2355
      %2357 = vrot.lane.b32.xlu0 %v2283, 16
      %v2358 = vpop.permute.xlu0 %2357
      %2359 = vrot.lane.b32.xlu0 %v2284, 16
      %v2360 = vpop.permute.xlu0 %2359
      %2361 = vrot.lane.b32.xlu0 %v2285, 16
      %v2362 = vpop.permute.xlu0 %2361
      %2363 = vrot.lane.b32.xlu0 %v2286, 16
      %v2364 = vpop.permute.xlu0 %2363
      %2365 = vrot.lane.b32.xlu0 %v2287, 16
      %v2366 = vpop.permute.xlu0 %2365
      %2367 = vrot.lane.b32.xlu0 %v2288, 16
      %v2368 = vpop.permute.xlu0 %2367
      %2369 = vrot.lane.b32.xlu0 %v2289, 16
      %v2370 = vpop.permute.xlu0 %2369
      %2371 = vrot.lane.b32.xlu0 %v2290, 16
      %v2372 = vpop.permute.xlu0 %2371
      %2373 = vrot.lane.b32.xlu0 %v2291, 16
      %v2374 = vpop.permute.xlu0 %2373
      %2375 = vrot.lane.b32.xlu0 %v2292, 16
      %v2376 = vpop.permute.xlu0 %2375
      %2377 = vrot.lane.b32.xlu0 %v2293, 16
      %v2378 = vpop.permute.xlu0 %2377
      %2379 = vrot.lane.b32.xlu0 %v2294, 16
      %v2380 = vpop.permute.xlu0 %2379
      %2381 = vrot.lane.b32.xlu0 %v2295, 16
      %v2382 = vpop.permute.xlu0 %2381
      %2383 = vrot.lane.b32.xlu0 %v2296, 16
      %v2384 = vpop.permute.xlu0 %2383
      %2385 = vrot.lane.b32.xlu0 %v2297, 16
      %v2386 = vpop.permute.xlu0 %2385
      %2387 = vrot.lane.b32.xlu0 %v2298, 16
      %v2388 = vpop.permute.xlu0 %2387
      %2389 = vrot.lane.b32.xlu0 %v2299, 16
      %v2390 = vpop.permute.xlu0 %2389
      %2391 = vrot.lane.b32.xlu0 %v2300, 16
      %v2392 = vpop.permute.xlu0 %2391
      %2393 = vrot.lane.b32.xlu0 %v2301, 16
      %v2394 = vpop.permute.xlu0 %2393
      %2395 = vrot.lane.b32.xlu0 %v2302, 16
      %v2396 = vpop.permute.xlu0 %2395
      %2397 = vrot.lane.b32.xlu0 %v2303, 16
      %v2398 = vpop.permute.xlu0 %2397
      %2399 = vrot.lane.b32.xlu0 %v2304, 16
      %v2400 = vpop.permute.xlu0 %2399
      %2401 = vrot.lane.b32.xlu0 %v2305, 16
      %v2402 = vpop.permute.xlu0 %2401
      %2403 = vrot.lane.b32.xlu0 %v2306, 16
      %v2404 = vpop.permute.xlu0 %2403
      %2405 = vrot.lane.b32.xlu0 %v2307, 16
      %v2406 = vpop.permute.xlu0 %2405
      %2407 = vrot.lane.b32.xlu0 %v2308, 16
      %v2408 = vpop.permute.xlu0 %2407
      %2409 = vrot.lane.b32.xlu0 %v2309, 16
      %v2410 = vpop.permute.xlu0 %2409
      %2411 = vrot.lane.b32.xlu0 %v2310, 16
      %v2412 = vpop.permute.xlu0 %2411
      %2413 = vrot.lane.b32.xlu0 %v2311, 16
      %v2414 = vpop.permute.xlu0 %2413
      %2415 = vrot.lane.b32.xlu0 %v2312, 16
      %v2416 = vpop.permute.xlu0 %2415
      %2417 = vrot.lane.b32.xlu0 %v2313, 16
      %v2418 = vpop.permute.xlu0 %2417
      %2419 = vrot.lane.b32.xlu0 %v2314, 16
      %v2420 = vpop.permute.xlu0 %2419
      %2421 = vrot.lane.b32.xlu0 %v2315, 16
      %v2422 = vpop.permute.xlu0 %2421
      %2423 = vrot.lane.b32.xlu0 %v2316, 16
      %v2424 = vpop.permute.xlu0 %2423
      %2425 = vrot.lane.b32.xlu0 %v2317, 16
      %v2426 = vpop.permute.xlu0 %2425
      %2427 = vrot.lane.b32.xlu0 %v2318, 16
      %v2428 = vpop.permute.xlu0 %2427
      %2429 = vrot.lane.b32.xlu0 %v2319, 16
      %v2430 = vpop.permute.xlu0 %2429
      %2431 = vrot.lane.b32.xlu0 %v2320, 16
      %v2432 = vpop.permute.xlu0 %2431
      %2433 = vrot.lane.b32.xlu0 %v2321, 16
      %v2434 = vpop.permute.xlu0 %2433
      %2435 = vrot.lane.b32.xlu0 %v2322, 16
      %v2436 = vpop.permute.xlu0 %2435
      %2437 = vrot.lane.b32.xlu0 %v2323, 16
      %v2438 = vpop.permute.xlu0 %2437
      %2439 = vrot.lane.b32.xlu0 %v2324, 16
      %v2440 = vpop.permute.xlu0 %2439
      %2441 = vrot.lane.b32.xlu0 %v2325, 16
      %v2442 = vpop.permute.xlu0 %2441
      %2443 = vrot.lane.b32.xlu0 %v2326, 16
      %v2444 = vpop.permute.xlu0 %2443
      %2445 = vrot.lane.b32.xlu0 %v2327, 16
      %v2446 = vpop.permute.xlu0 %2445
      %2447 = vrot.lane.b32.xlu0 %v2328, 16
      %v2448 = vpop.permute.xlu0 %2447
      %2449 = vrot.lane.b32.xlu0 %v2329, 16
      %v2450 = vpop.permute.xlu0 %2449
      %2451 = vrot.lane.b32.xlu0 %v2330, 16
      %v2452 = vpop.permute.xlu0 %2451
      %2453 = vrot.lane.b32.xlu0 %v2331, 16
      %v2454 = vpop.permute.xlu0 %2453
      %2455 = vrot.lane.b32.xlu0 %v2332, 16
      %v2456 = vpop.permute.xlu0 %2455
      %2457 = vrot.lane.b32.xlu0 %v2333, 16
      %v2458 = vpop.permute.xlu0 %2457
      %2459 = vrot.lane.b32.xlu0 %v2334, 16
      %v2460 = vpop.permute.xlu0 %2459
      %2461 = vrot.lane.b32.xlu0 %v2335, 16
      %v2462 = vpop.permute.xlu0 %2461
      %2463 = vrot.lane.b32.xlu0 %v2336, 16
      %v2464 = vpop.permute.xlu0 %2463
      %v2465 = vmax.f32 %v2273, %v2338
      %v2466 = vmax.f32 %v2274, %v2340
      %v2467 = vmax.f32 %v2275, %v2342
      %v2468 = vmax.f32 %v2276, %v2344
      %v2469 = vmax.f32 %v2277, %v2346
      %v2470 = vmax.f32 %v2278, %v2348
      %v2471 = vmax.f32 %v2279, %v2350
      %v2472 = vmax.f32 %v2280, %v2352
      %v2473 = vmax.f32 %v2281, %v2354
      %v2474 = vmax.f32 %v2282, %v2356
      %v2475 = vmax.f32 %v2283, %v2358
      %v2476 = vmax.f32 %v2284, %v2360
      %v2477 = vmax.f32 %v2285, %v2362
      %v2478 = vmax.f32 %v2286, %v2364
      %v2479 = vmax.f32 %v2287, %v2366
      %v2480 = vmax.f32 %v2288, %v2368
      %v2481 = vmax.f32 %v2289, %v2370
      %v2482 = vmax.f32 %v2290, %v2372
      %v2483 = vmax.f32 %v2291, %v2374
      %v2484 = vmax.f32 %v2292, %v2376
      %v2485 = vmax.f32 %v2293, %v2378
      %v2486 = vmax.f32 %v2294, %v2380
      %v2487 = vmax.f32 %v2295, %v2382
      %v2488 = vmax.f32 %v2296, %v2384
      %v2489 = vmax.f32 %v2297, %v2386
      %v2490 = vmax.f32 %v2298, %v2388
      %v2491 = vmax.f32 %v2299, %v2390
      %v2492 = vmax.f32 %v2300, %v2392
      %v2493 = vmax.f32 %v2301, %v2394
      %v2494 = vmax.f32 %v2302, %v2396
      %v2495 = vmax.f32 %v2303, %v2398
      %v2496 = vmax.f32 %v2304, %v2400
      %v2497 = vmax.f32 %v2305, %v2402
      %v2498 = vmax.f32 %v2306, %v2404
      %v2499 = vmax.f32 %v2307, %v2406
      %v2500 = vmax.f32 %v2308, %v2408
      %v2501 = vmax.f32 %v2309, %v2410
      %v2502 = vmax.f32 %v2310, %v2412
      %v2503 = vmax.f32 %v2311, %v2414
      %v2504 = vmax.f32 %v2312, %v2416
      %v2505 = vmax.f32 %v2313, %v2418
      %v2506 = vmax.f32 %v2314, %v2420
      %v2507 = vmax.f32 %v2315, %v2422
      %v2508 = vmax.f32 %v2316, %v2424
      %v2509 = vmax.f32 %v2317, %v2426
      %v2510 = vmax.f32 %v2318, %v2428
      %v2511 = vmax.f32 %v2319, %v2430
      %v2512 = vmax.f32 %v2320, %v2432
      %v2513 = vmax.f32 %v2321, %v2434
      %v2514 = vmax.f32 %v2322, %v2436
      %v2515 = vmax.f32 %v2323, %v2438
      %v2516 = vmax.f32 %v2324, %v2440
      %v2517 = vmax.f32 %v2325, %v2442
      %v2518 = vmax.f32 %v2326, %v2444
      %v2519 = vmax.f32 %v2327, %v2446
      %v2520 = vmax.f32 %v2328, %v2448
      %v2521 = vmax.f32 %v2329, %v2450
      %v2522 = vmax.f32 %v2330, %v2452
      %v2523 = vmax.f32 %v2331, %v2454
      %v2524 = vmax.f32 %v2332, %v2456
      %v2525 = vmax.f32 %v2333, %v2458
      %v2526 = vmax.f32 %v2334, %v2460
      %v2527 = vmax.f32 %v2335, %v2462
      %v2528 = vmax.f32 %v2336, %v2464
      %2529 = vrot.lane.b32.xlu0 %v2465, 32
      %v2530 = vpop.permute.xlu0 %2529
      %2531 = vrot.lane.b32.xlu0 %v2466, 32
      %v2532 = vpop.permute.xlu0 %2531
      %2533 = vrot.lane.b32.xlu0 %v2467, 32
      %v2534 = vpop.permute.xlu0 %2533
      %2535 = vrot.lane.b32.xlu0 %v2468, 32
      %v2536 = vpop.permute.xlu0 %2535
      %2537 = vrot.lane.b32.xlu0 %v2469, 32
      %v2538 = vpop.permute.xlu0 %2537
      %2539 = vrot.lane.b32.xlu0 %v2470, 32
      %v2540 = vpop.permute.xlu0 %2539
      %2541 = vrot.lane.b32.xlu0 %v2471, 32
      %v2542 = vpop.permute.xlu0 %2541
      %2543 = vrot.lane.b32.xlu0 %v2472, 32
      %v2544 = vpop.permute.xlu0 %2543
      %2545 = vrot.lane.b32.xlu0 %v2473, 32
      %v2546 = vpop.permute.xlu0 %2545
      %2547 = vrot.lane.b32.xlu0 %v2474, 32
      %v2548 = vpop.permute.xlu0 %2547
      %2549 = vrot.lane.b32.xlu0 %v2475, 32
      %v2550 = vpop.permute.xlu0 %2549
      %2551 = vrot.lane.b32.xlu0 %v2476, 32
      %v2552 = vpop.permute.xlu0 %2551
      %2553 = vrot.lane.b32.xlu0 %v2477, 32
      %v2554 = vpop.permute.xlu0 %2553
      %2555 = vrot.lane.b32.xlu0 %v2478, 32
      %v2556 = vpop.permute.xlu0 %2555
      %2557 = vrot.lane.b32.xlu0 %v2479, 32
      %v2558 = vpop.permute.xlu0 %2557
      %2559 = vrot.lane.b32.xlu0 %v2480, 32
      %v2560 = vpop.permute.xlu0 %2559
      %2561 = vrot.lane.b32.xlu0 %v2481, 32
      %v2562 = vpop.permute.xlu0 %2561
      %2563 = vrot.lane.b32.xlu0 %v2482, 32
      %v2564 = vpop.permute.xlu0 %2563
      %2565 = vrot.lane.b32.xlu0 %v2483, 32
      %v2566 = vpop.permute.xlu0 %2565
      %2567 = vrot.lane.b32.xlu0 %v2484, 32
      %v2568 = vpop.permute.xlu0 %2567
      %2569 = vrot.lane.b32.xlu0 %v2485, 32
      %v2570 = vpop.permute.xlu0 %2569
      %2571 = vrot.lane.b32.xlu0 %v2486, 32
      %v2572 = vpop.permute.xlu0 %2571
      %2573 = vrot.lane.b32.xlu0 %v2487, 32
      %v2574 = vpop.permute.xlu0 %2573
      %2575 = vrot.lane.b32.xlu0 %v2488, 32
      %v2576 = vpop.permute.xlu0 %2575
      %2577 = vrot.lane.b32.xlu0 %v2489, 32
      %v2578 = vpop.permute.xlu0 %2577
      %2579 = vrot.lane.b32.xlu0 %v2490, 32
      %v2580 = vpop.permute.xlu0 %2579
      %2581 = vrot.lane.b32.xlu0 %v2491, 32
      %v2582 = vpop.permute.xlu0 %2581
      %2583 = vrot.lane.b32.xlu0 %v2492, 32
      %v2584 = vpop.permute.xlu0 %2583
      %2585 = vrot.lane.b32.xlu0 %v2493, 32
      %v2586 = vpop.permute.xlu0 %2585
      %2587 = vrot.lane.b32.xlu0 %v2494, 32
      %v2588 = vpop.permute.xlu0 %2587
      %2589 = vrot.lane.b32.xlu0 %v2495, 32
      %v2590 = vpop.permute.xlu0 %2589
      %2591 = vrot.lane.b32.xlu0 %v2496, 32
      %v2592 = vpop.permute.xlu0 %2591
      %2593 = vrot.lane.b32.xlu0 %v2497, 32
      %v2594 = vpop.permute.xlu0 %2593
      %2595 = vrot.lane.b32.xlu0 %v2498, 32
      %v2596 = vpop.permute.xlu0 %2595
      %2597 = vrot.lane.b32.xlu0 %v2499, 32
      %v2598 = vpop.permute.xlu0 %2597
      %2599 = vrot.lane.b32.xlu0 %v2500, 32
      %v2600 = vpop.permute.xlu0 %2599
      %2601 = vrot.lane.b32.xlu0 %v2501, 32
      %v2602 = vpop.permute.xlu0 %2601
      %2603 = vrot.lane.b32.xlu0 %v2502, 32
      %v2604 = vpop.permute.xlu0 %2603
      %2605 = vrot.lane.b32.xlu0 %v2503, 32
      %v2606 = vpop.permute.xlu0 %2605
      %2607 = vrot.lane.b32.xlu0 %v2504, 32
      %v2608 = vpop.permute.xlu0 %2607
      %2609 = vrot.lane.b32.xlu0 %v2505, 32
      %v2610 = vpop.permute.xlu0 %2609
      %2611 = vrot.lane.b32.xlu0 %v2506, 32
      %v2612 = vpop.permute.xlu0 %2611
      %2613 = vrot.lane.b32.xlu0 %v2507, 32
      %v2614 = vpop.permute.xlu0 %2613
      %2615 = vrot.lane.b32.xlu0 %v2508, 32
      %v2616 = vpop.permute.xlu0 %2615
      %2617 = vrot.lane.b32.xlu0 %v2509, 32
      %v2618 = vpop.permute.xlu0 %2617
      %2619 = vrot.lane.b32.xlu0 %v2510, 32
      %v2620 = vpop.permute.xlu0 %2619
      %2621 = vrot.lane.b32.xlu0 %v2511, 32
      %v2622 = vpop.permute.xlu0 %2621
      %2623 = vrot.lane.b32.xlu0 %v2512, 32
      %v2624 = vpop.permute.xlu0 %2623
      %2625 = vrot.lane.b32.xlu0 %v2513, 32
      %v2626 = vpop.permute.xlu0 %2625
      %2627 = vrot.lane.b32.xlu0 %v2514, 32
      %v2628 = vpop.permute.xlu0 %2627
      %2629 = vrot.lane.b32.xlu0 %v2515, 32
      %v2630 = vpop.permute.xlu0 %2629
      %2631 = vrot.lane.b32.xlu0 %v2516, 32
      %v2632 = vpop.permute.xlu0 %2631
      %2633 = vrot.lane.b32.xlu0 %v2517, 32
      %v2634 = vpop.permute.xlu0 %2633
      %2635 = vrot.lane.b32.xlu0 %v2518, 32
      %v2636 = vpop.permute.xlu0 %2635
      %2637 = vrot.lane.b32.xlu0 %v2519, 32
      %v2638 = vpop.permute.xlu0 %2637
      %2639 = vrot.lane.b32.xlu0 %v2520, 32
      %v2640 = vpop.permute.xlu0 %2639
      %2641 = vrot.lane.b32.xlu0 %v2521, 32
      %v2642 = vpop.permute.xlu0 %2641
      %2643 = vrot.lane.b32.xlu0 %v2522, 32
      %v2644 = vpop.permute.xlu0 %2643
      %2645 = vrot.lane.b32.xlu0 %v2523, 32
      %v2646 = vpop.permute.xlu0 %2645
      %2647 = vrot.lane.b32.xlu0 %v2524, 32
      %v2648 = vpop.permute.xlu0 %2647
      %2649 = vrot.lane.b32.xlu0 %v2525, 32
      %v2650 = vpop.permute.xlu0 %2649
      %2651 = vrot.lane.b32.xlu0 %v2526, 32
      %v2652 = vpop.permute.xlu0 %2651
      %2653 = vrot.lane.b32.xlu0 %v2527, 32
      %v2654 = vpop.permute.xlu0 %2653
      %2655 = vrot.lane.b32.xlu0 %v2528, 32
      %v2656 = vpop.permute.xlu0 %2655
      %v2657 = vmax.f32 %v2465, %v2530
      %v2658 = vmax.f32 %v2466, %v2532
      %v2659 = vmax.f32 %v2467, %v2534
      %v2660 = vmax.f32 %v2468, %v2536
      %v2661 = vmax.f32 %v2469, %v2538
      %v2662 = vmax.f32 %v2470, %v2540
      %v2663 = vmax.f32 %v2471, %v2542
      %v2664 = vmax.f32 %v2472, %v2544
      %v2665 = vmax.f32 %v2473, %v2546
      %v2666 = vmax.f32 %v2474, %v2548
      %v2667 = vmax.f32 %v2475, %v2550
      %v2668 = vmax.f32 %v2476, %v2552
      %v2669 = vmax.f32 %v2477, %v2554
      %v2670 = vmax.f32 %v2478, %v2556
      %v2671 = vmax.f32 %v2479, %v2558
      %v2672 = vmax.f32 %v2480, %v2560
      %v2673 = vmax.f32 %v2481, %v2562
      %v2674 = vmax.f32 %v2482, %v2564
      %v2675 = vmax.f32 %v2483, %v2566
      %v2676 = vmax.f32 %v2484, %v2568
      %v2677 = vmax.f32 %v2485, %v2570
      %v2678 = vmax.f32 %v2486, %v2572
      %v2679 = vmax.f32 %v2487, %v2574
      %v2680 = vmax.f32 %v2488, %v2576
      %v2681 = vmax.f32 %v2489, %v2578
      %v2682 = vmax.f32 %v2490, %v2580
      %v2683 = vmax.f32 %v2491, %v2582
      %v2684 = vmax.f32 %v2492, %v2584
      %v2685 = vmax.f32 %v2493, %v2586
      %v2686 = vmax.f32 %v2494, %v2588
      %v2687 = vmax.f32 %v2495, %v2590
      %v2688 = vmax.f32 %v2496, %v2592
      %v2689 = vmax.f32 %v2497, %v2594
      %v2690 = vmax.f32 %v2498, %v2596
      %v2691 = vmax.f32 %v2499, %v2598
      %v2692 = vmax.f32 %v2500, %v2600
      %v2693 = vmax.f32 %v2501, %v2602
      %v2694 = vmax.f32 %v2502, %v2604
      %v2695 = vmax.f32 %v2503, %v2606
      %v2696 = vmax.f32 %v2504, %v2608
      %v2697 = vmax.f32 %v2505, %v2610
      %v2698 = vmax.f32 %v2506, %v2612
      %v2699 = vmax.f32 %v2507, %v2614
      %v2700 = vmax.f32 %v2508, %v2616
      %v2701 = vmax.f32 %v2509, %v2618
      %v2702 = vmax.f32 %v2510, %v2620
      %v2703 = vmax.f32 %v2511, %v2622
      %v2704 = vmax.f32 %v2512, %v2624
      %v2705 = vmax.f32 %v2513, %v2626
      %v2706 = vmax.f32 %v2514, %v2628
      %v2707 = vmax.f32 %v2515, %v2630
      %v2708 = vmax.f32 %v2516, %v2632
      %v2709 = vmax.f32 %v2517, %v2634
      %v2710 = vmax.f32 %v2518, %v2636
      %v2711 = vmax.f32 %v2519, %v2638
      %v2712 = vmax.f32 %v2520, %v2640
      %v2713 = vmax.f32 %v2521, %v2642
      %v2714 = vmax.f32 %v2522, %v2644
      %v2715 = vmax.f32 %v2523, %v2646
      %v2716 = vmax.f32 %v2524, %v2648
      %v2717 = vmax.f32 %v2525, %v2650
      %v2718 = vmax.f32 %v2526, %v2652
      %v2719 = vmax.f32 %v2527, %v2654
      %v2720 = vmax.f32 %v2528, %v2656
      %2721 = vrot.lane.b32.xlu0 %v2657, 64
      %v2722 = vpop.permute.xlu0 %2721
      %2723 = vrot.lane.b32.xlu0 %v2658, 64
      %v2724 = vpop.permute.xlu0 %2723
      %2725 = vrot.lane.b32.xlu0 %v2659, 64
      %v2726 = vpop.permute.xlu0 %2725
      %2727 = vrot.lane.b32.xlu0 %v2660, 64
      %v2728 = vpop.permute.xlu0 %2727
      %2729 = vrot.lane.b32.xlu0 %v2661, 64
      %v2730 = vpop.permute.xlu0 %2729
      %2731 = vrot.lane.b32.xlu0 %v2662, 64
      %v2732 = vpop.permute.xlu0 %2731
      %2733 = vrot.lane.b32.xlu0 %v2663, 64
      %v2734 = vpop.permute.xlu0 %2733
      %2735 = vrot.lane.b32.xlu0 %v2664, 64
      %v2736 = vpop.permute.xlu0 %2735
      %2737 = vrot.lane.b32.xlu0 %v2665, 64
      %v2738 = vpop.permute.xlu0 %2737
      %2739 = vrot.lane.b32.xlu0 %v2666, 64
      %v2740 = vpop.permute.xlu0 %2739
      %2741 = vrot.lane.b32.xlu0 %v2667, 64
      %v2742 = vpop.permute.xlu0 %2741
      %2743 = vrot.lane.b32.xlu0 %v2668, 64
      %v2744 = vpop.permute.xlu0 %2743
      %2745 = vrot.lane.b32.xlu0 %v2669, 64
      %v2746 = vpop.permute.xlu0 %2745
      %2747 = vrot.lane.b32.xlu0 %v2670, 64
      %v2748 = vpop.permute.xlu0 %2747
      %2749 = vrot.lane.b32.xlu0 %v2671, 64
      %v2750 = vpop.permute.xlu0 %2749
      %2751 = vrot.lane.b32.xlu0 %v2672, 64
      %v2752 = vpop.permute.xlu0 %2751
      %2753 = vrot.lane.b32.xlu0 %v2673, 64
      %v2754 = vpop.permute.xlu0 %2753
      %2755 = vrot.lane.b32.xlu0 %v2674, 64
      %v2756 = vpop.permute.xlu0 %2755
      %2757 = vrot.lane.b32.xlu0 %v2675, 64
      %v2758 = vpop.permute.xlu0 %2757
      %2759 = vrot.lane.b32.xlu0 %v2676, 64
      %v2760 = vpop.permute.xlu0 %2759
      %2761 = vrot.lane.b32.xlu0 %v2677, 64
      %v2762 = vpop.permute.xlu0 %2761
      %2763 = vrot.lane.b32.xlu0 %v2678, 64
      %v2764 = vpop.permute.xlu0 %2763
      %2765 = vrot.lane.b32.xlu0 %v2679, 64
      %v2766 = vpop.permute.xlu0 %2765
      %2767 = vrot.lane.b32.xlu0 %v2680, 64
      %v2768 = vpop.permute.xlu0 %2767
      %2769 = vrot.lane.b32.xlu0 %v2681, 64
      %v2770 = vpop.permute.xlu0 %2769
      %2771 = vrot.lane.b32.xlu0 %v2682, 64
      %v2772 = vpop.permute.xlu0 %2771
      %2773 = vrot.lane.b32.xlu0 %v2683, 64
      %v2774 = vpop.permute.xlu0 %2773
      %2775 = vrot.lane.b32.xlu0 %v2684, 64
      %v2776 = vpop.permute.xlu0 %2775
      %2777 = vrot.lane.b32.xlu0 %v2685, 64
      %v2778 = vpop.permute.xlu0 %2777
      %2779 = vrot.lane.b32.xlu0 %v2686, 64
      %v2780 = vpop.permute.xlu0 %2779
      %2781 = vrot.lane.b32.xlu0 %v2687, 64
      %v2782 = vpop.permute.xlu0 %2781
      %2783 = vrot.lane.b32.xlu0 %v2688, 64
      %v2784 = vpop.permute.xlu0 %2783
      %2785 = vrot.lane.b32.xlu0 %v2689, 64
      %v2786 = vpop.permute.xlu0 %2785
      %2787 = vrot.lane.b32.xlu0 %v2690, 64
      %v2788 = vpop.permute.xlu0 %2787
      %2789 = vrot.lane.b32.xlu0 %v2691, 64
      %v2790 = vpop.permute.xlu0 %2789
      %2791 = vrot.lane.b32.xlu0 %v2692, 64
      %v2792 = vpop.permute.xlu0 %2791
      %2793 = vrot.lane.b32.xlu0 %v2693, 64
      %v2794 = vpop.permute.xlu0 %2793
      %2795 = vrot.lane.b32.xlu0 %v2694, 64
      %v2796 = vpop.permute.xlu0 %2795
      %2797 = vrot.lane.b32.xlu0 %v2695, 64
      %v2798 = vpop.permute.xlu0 %2797
      %2799 = vrot.lane.b32.xlu0 %v2696, 64
      %v2800 = vpop.permute.xlu0 %2799
      %2801 = vrot.lane.b32.xlu0 %v2697, 64
      %v2802 = vpop.permute.xlu0 %2801
      %2803 = vrot.lane.b32.xlu0 %v2698, 64
      %v2804 = vpop.permute.xlu0 %2803
      %2805 = vrot.lane.b32.xlu0 %v2699, 64
      %v2806 = vpop.permute.xlu0 %2805
      %2807 = vrot.lane.b32.xlu0 %v2700, 64
      %v2808 = vpop.permute.xlu0 %2807
      %2809 = vrot.lane.b32.xlu0 %v2701, 64
      %v2810 = vpop.permute.xlu0 %2809
      %2811 = vrot.lane.b32.xlu0 %v2702, 64
      %v2812 = vpop.permute.xlu0 %2811
      %2813 = vrot.lane.b32.xlu0 %v2703, 64
      %v2814 = vpop.permute.xlu0 %2813
      %2815 = vrot.lane.b32.xlu0 %v2704, 64
      %v2816 = vpop.permute.xlu0 %2815
      %2817 = vrot.lane.b32.xlu0 %v2705, 64
      %v2818 = vpop.permute.xlu0 %2817
      %2819 = vrot.lane.b32.xlu0 %v2706, 64
      %v2820 = vpop.permute.xlu0 %2819
      %2821 = vrot.lane.b32.xlu0 %v2707, 64
      %v2822 = vpop.permute.xlu0 %2821
      %2823 = vrot.lane.b32.xlu0 %v2708, 64
      %v2824 = vpop.permute.xlu0 %2823
      %2825 = vrot.lane.b32.xlu0 %v2709, 64
      %v2826 = vpop.permute.xlu0 %2825
      %2827 = vrot.lane.b32.xlu0 %v2710, 64
      %v2828 = vpop.permute.xlu0 %2827
      %2829 = vrot.lane.b32.xlu0 %v2711, 64
      %v2830 = vpop.permute.xlu0 %2829
      %2831 = vrot.lane.b32.xlu0 %v2712, 64
      %v2832 = vpop.permute.xlu0 %2831
      %2833 = vrot.lane.b32.xlu0 %v2713, 64
      %v2834 = vpop.permute.xlu0 %2833
      %2835 = vrot.lane.b32.xlu0 %v2714, 64
      %v2836 = vpop.permute.xlu0 %2835
      %2837 = vrot.lane.b32.xlu0 %v2715, 64
      %v2838 = vpop.permute.xlu0 %2837
      %2839 = vrot.lane.b32.xlu0 %v2716, 64
      %v2840 = vpop.permute.xlu0 %2839
      %2841 = vrot.lane.b32.xlu0 %v2717, 64
      %v2842 = vpop.permute.xlu0 %2841
      %2843 = vrot.lane.b32.xlu0 %v2718, 64
      %v2844 = vpop.permute.xlu0 %2843
      %2845 = vrot.lane.b32.xlu0 %v2719, 64
      %v2846 = vpop.permute.xlu0 %2845
      %2847 = vrot.lane.b32.xlu0 %v2720, 64
      %v2848 = vpop.permute.xlu0 %2847
      %v2849 = vmax.f32 %v2657, %v2722
      %v2850 = vmax.f32 %v2658, %v2724
      %v2851 = vmax.f32 %v2659, %v2726
      %v2852 = vmax.f32 %v2660, %v2728
      %v2853 = vmax.f32 %v2661, %v2730
      %v2854 = vmax.f32 %v2662, %v2732
      %v2855 = vmax.f32 %v2663, %v2734
      %v2856 = vmax.f32 %v2664, %v2736
      %v2857 = vmax.f32 %v2665, %v2738
      %v2858 = vmax.f32 %v2666, %v2740
      %v2859 = vmax.f32 %v2667, %v2742
      %v2860 = vmax.f32 %v2668, %v2744
      %v2861 = vmax.f32 %v2669, %v2746
      %v2862 = vmax.f32 %v2670, %v2748
      %v2863 = vmax.f32 %v2671, %v2750
      %v2864 = vmax.f32 %v2672, %v2752
      %v2865 = vmax.f32 %v2673, %v2754
      %v2866 = vmax.f32 %v2674, %v2756
      %v2867 = vmax.f32 %v2675, %v2758
      %v2868 = vmax.f32 %v2676, %v2760
      %v2869 = vmax.f32 %v2677, %v2762
      %v2870 = vmax.f32 %v2678, %v2764
      %v2871 = vmax.f32 %v2679, %v2766
      %v2872 = vmax.f32 %v2680, %v2768
      %v2873 = vmax.f32 %v2681, %v2770
      %v2874 = vmax.f32 %v2682, %v2772
      %v2875 = vmax.f32 %v2683, %v2774
      %v2876 = vmax.f32 %v2684, %v2776
      %v2877 = vmax.f32 %v2685, %v2778
      %v2878 = vmax.f32 %v2686, %v2780
      %v2879 = vmax.f32 %v2687, %v2782
      %v2880 = vmax.f32 %v2688, %v2784
      %v2881 = vmax.f32 %v2689, %v2786
      %v2882 = vmax.f32 %v2690, %v2788
      %v2883 = vmax.f32 %v2691, %v2790
      %v2884 = vmax.f32 %v2692, %v2792
      %v2885 = vmax.f32 %v2693, %v2794
      %v2886 = vmax.f32 %v2694, %v2796
      %v2887 = vmax.f32 %v2695, %v2798
      %v2888 = vmax.f32 %v2696, %v2800
      %v2889 = vmax.f32 %v2697, %v2802
      %v2890 = vmax.f32 %v2698, %v2804
      %v2891 = vmax.f32 %v2699, %v2806
      %v2892 = vmax.f32 %v2700, %v2808
      %v2893 = vmax.f32 %v2701, %v2810
      %v2894 = vmax.f32 %v2702, %v2812
      %v2895 = vmax.f32 %v2703, %v2814
      %v2896 = vmax.f32 %v2704, %v2816
      %v2897 = vmax.f32 %v2705, %v2818
      %v2898 = vmax.f32 %v2706, %v2820
      %v2899 = vmax.f32 %v2707, %v2822
      %v2900 = vmax.f32 %v2708, %v2824
      %v2901 = vmax.f32 %v2709, %v2826
      %v2902 = vmax.f32 %v2710, %v2828
      %v2903 = vmax.f32 %v2711, %v2830
      %v2904 = vmax.f32 %v2712, %v2832
      %v2905 = vmax.f32 %v2713, %v2834
      %v2906 = vmax.f32 %v2714, %v2836
      %v2907 = vmax.f32 %v2715, %v2838
      %v2908 = vmax.f32 %v2716, %v2840
      %v2909 = vmax.f32 %v2717, %v2842
      %v2910 = vmax.f32 %v2718, %v2844
      %v2911 = vmax.f32 %v2719, %v2846
      %v2912 = vmax.f32 %v2720, %v2848
      %v2913 = vsub.f32 %v2017, %v2849
      %v2914 = vsub.f32 %v2019, %v2850
      %v2915 = vsub.f32 %v2021, %v2851
      %v2916 = vsub.f32 %v2023, %v2852
      %v2917 = vsub.f32 %v2025, %v2853
      %v2918 = vsub.f32 %v2027, %v2854
      %v2919 = vsub.f32 %v2029, %v2855
      %v2920 = vsub.f32 %v2031, %v2856
      %v2921 = vsub.f32 %v2033, %v2857
      %v2922 = vsub.f32 %v2035, %v2858
      %v2923 = vsub.f32 %v2037, %v2859
      %v2924 = vsub.f32 %v2039, %v2860
      %v2925 = vsub.f32 %v2041, %v2861
      %v2926 = vsub.f32 %v2043, %v2862
      %v2927 = vsub.f32 %v2045, %v2863
      %v2928 = vsub.f32 %v2047, %v2864
      %v2929 = vsub.f32 %v2049, %v2865
      %v2930 = vsub.f32 %v2051, %v2866
      %v2931 = vsub.f32 %v2053, %v2867
      %v2932 = vsub.f32 %v2055, %v2868
      %v2933 = vsub.f32 %v2057, %v2869
      %v2934 = vsub.f32 %v2059, %v2870
      %v2935 = vsub.f32 %v2061, %v2871
      %v2936 = vsub.f32 %v2063, %v2872
      %v2937 = vsub.f32 %v2065, %v2873
      %v2938 = vsub.f32 %v2067, %v2874
      %v2939 = vsub.f32 %v2069, %v2875
      %v2940 = vsub.f32 %v2071, %v2876
      %v2941 = vsub.f32 %v2073, %v2877
      %v2942 = vsub.f32 %v2075, %v2878
      %v2943 = vsub.f32 %v2077, %v2879
      %v2944 = vsub.f32 %v2079, %v2880
      %v2945 = vsub.f32 %v2081, %v2881
      %v2946 = vsub.f32 %v2083, %v2882
      %v2947 = vsub.f32 %v2085, %v2883
      %v2948 = vsub.f32 %v2087, %v2884
      %v2949 = vsub.f32 %v2089, %v2885
      %v2950 = vsub.f32 %v2091, %v2886
      %v2951 = vsub.f32 %v2093, %v2887
      %v2952 = vsub.f32 %v2095, %v2888
      %v2953 = vsub.f32 %v2097, %v2889
      %v2954 = vsub.f32 %v2099, %v2890
      %v2955 = vsub.f32 %v2101, %v2891
      %v2956 = vsub.f32 %v2103, %v2892
      %v2957 = vsub.f32 %v2105, %v2893
      %v2958 = vsub.f32 %v2107, %v2894
      %v2959 = vsub.f32 %v2109, %v2895
      %v2960 = vsub.f32 %v2111, %v2896
      %v2961 = vsub.f32 %v2113, %v2897
      %v2962 = vsub.f32 %v2115, %v2898
      %v2963 = vsub.f32 %v2117, %v2899
      %v2964 = vsub.f32 %v2119, %v2900
      %v2965 = vsub.f32 %v2121, %v2901
      %v2966 = vsub.f32 %v2123, %v2902
      %v2967 = vsub.f32 %v2125, %v2903
      %v2968 = vsub.f32 %v2127, %v2904
      %v2969 = vsub.f32 %v2129, %v2905
      %v2970 = vsub.f32 %v2131, %v2906
      %v2971 = vsub.f32 %v2133, %v2907
      %v2972 = vsub.f32 %v2135, %v2908
      %v2973 = vsub.f32 %v2137, %v2909
      %v2974 = vsub.f32 %v2139, %v2910
      %v2975 = vsub.f32 %v2141, %v2911
      %v2976 = vsub.f32 %v2143, %v2912
      %v2977 = vmul.f32 %v2913, 1.442695
      %v2978 = vpow.pop %v2977
      %v2979 = vmul.f32 %v2914, 1.442695
      %v2980 = vpow.pop %v2979
      %v2981 = vmul.f32 %v2915, 1.442695
      %v2982 = vpow.pop %v2981
      %v2983 = vmul.f32 %v2916, 1.442695
      %v2984 = vpow.pop %v2983
      %v2985 = vmul.f32 %v2917, 1.442695
      %v2986 = vpow.pop %v2985
      %v2987 = vmul.f32 %v2918, 1.442695
      %v2988 = vpow.pop %v2987
      %v2989 = vmul.f32 %v2919, 1.442695
      %v2990 = vpow.pop %v2989
      %v2991 = vmul.f32 %v2920, 1.442695
      %v2992 = vpow.pop %v2991
      %v2993 = vmul.f32 %v2921, 1.442695
      %v2994 = vpow.pop %v2993
      %v2995 = vmul.f32 %v2922, 1.442695
      %v2996 = vpow.pop %v2995
      %v2997 = vmul.f32 %v2923, 1.442695
      %v2998 = vpow.pop %v2997
      %v2999 = vmul.f32 %v2924, 1.442695
      %v3000 = vpow.pop %v2999
      %v3001 = vmul.f32 %v2925, 1.442695
      %v3002 = vpow.pop %v3001
      %v3003 = vmul.f32 %v2926, 1.442695
      %v3004 = vpow.pop %v3003
      %v3005 = vmul.f32 %v2927, 1.442695
      %v3006 = vpow.pop %v3005
      %v3007 = vmul.f32 %v2928, 1.442695
      %v3008 = vpow.pop %v3007
      %v3009 = vmul.f32 %v2929, 1.442695
      %v3010 = vpow.pop %v3009
      %v3011 = vmul.f32 %v2930, 1.442695
      %v3012 = vpow.pop %v3011
      %v3013 = vmul.f32 %v2931, 1.442695
      %v3014 = vpow.pop %v3013
      %v3015 = vmul.f32 %v2932, 1.442695
      %v3016 = vpow.pop %v3015
      %v3017 = vmul.f32 %v2933, 1.442695
      %v3018 = vpow.pop %v3017
      %v3019 = vmul.f32 %v2934, 1.442695
      %v3020 = vpow.pop %v3019
      %v3021 = vmul.f32 %v2935, 1.442695
      %v3022 = vpow.pop %v3021
      %v3023 = vmul.f32 %v2936, 1.442695
      %v3024 = vpow.pop %v3023
      %v3025 = vmul.f32 %v2937, 1.442695
      %v3026 = vpow.pop %v3025
      %v3027 = vmul.f32 %v2938, 1.442695
      %v3028 = vpow.pop %v3027
      %v3029 = vmul.f32 %v2939, 1.442695
      %v3030 = vpow.pop %v3029
      %v3031 = vmul.f32 %v2940, 1.442695
      %v3032 = vpow.pop %v3031
      %v3033 = vmul.f32 %v2941, 1.442695
      %v3034 = vpow.pop %v3033
      %v3035 = vmul.f32 %v2942, 1.442695
      %v3036 = vpow.pop %v3035
      %v3037 = vmul.f32 %v2943, 1.442695
      %v3038 = vpow.pop %v3037
      %v3039 = vmul.f32 %v2944, 1.442695
      %v3040 = vpow.pop %v3039
      %v3041 = vmul.f32 %v2945, 1.442695
      %v3042 = vpow.pop %v3041
      %v3043 = vmul.f32 %v2946, 1.442695
      %v3044 = vpow.pop %v3043
      %v3045 = vmul.f32 %v2947, 1.442695
      %v3046 = vpow.pop %v3045
      %v3047 = vmul.f32 %v2948, 1.442695
      %v3048 = vpow.pop %v3047
      %v3049 = vmul.f32 %v2949, 1.442695
      %v3050 = vpow.pop %v3049
      %v3051 = vmul.f32 %v2950, 1.442695
      %v3052 = vpow.pop %v3051
      %v3053 = vmul.f32 %v2951, 1.442695
      %v3054 = vpow.pop %v3053
      %v3055 = vmul.f32 %v2952, 1.442695
      %v3056 = vpow.pop %v3055
      %v3057 = vmul.f32 %v2953, 1.442695
      %v3058 = vpow.pop %v3057
      %v3059 = vmul.f32 %v2954, 1.442695
      %v3060 = vpow.pop %v3059
      %v3061 = vmul.f32 %v2955, 1.442695
      %v3062 = vpow.pop %v3061
      %v3063 = vmul.f32 %v2956, 1.442695
      %v3064 = vpow.pop %v3063
      %v3065 = vmul.f32 %v2957, 1.442695
      %v3066 = vpow.pop %v3065
      %v3067 = vmul.f32 %v2958, 1.442695
      %v3068 = vpow.pop %v3067
      %v3069 = vmul.f32 %v2959, 1.442695
      %v3070 = vpow.pop %v3069
      %v3071 = vmul.f32 %v2960, 1.442695
      %v3072 = vpow.pop %v3071
      %v3073 = vmul.f32 %v2961, 1.442695
      %v3074 = vpow.pop %v3073
      %v3075 = vmul.f32 %v2962, 1.442695
      %v3076 = vpow.pop %v3075
      %v3077 = vmul.f32 %v2963, 1.442695
      %v3078 = vpow.pop %v3077
      %v3079 = vmul.f32 %v2964, 1.442695
      %v3080 = vpow.pop %v3079
      %v3081 = vmul.f32 %v2965, 1.442695
      %v3082 = vpow.pop %v3081
      %v3083 = vmul.f32 %v2966, 1.442695
      %v3084 = vpow.pop %v3083
      %v3085 = vmul.f32 %v2967, 1.442695
      %v3086 = vpow.pop %v3085
      %v3087 = vmul.f32 %v2968, 1.442695
      %v3088 = vpow.pop %v3087
      %v3089 = vmul.f32 %v2969, 1.442695
      %v3090 = vpow.pop %v3089
      %v3091 = vmul.f32 %v2970, 1.442695
      %v3092 = vpow.pop %v3091
      %v3093 = vmul.f32 %v2971, 1.442695
      %v3094 = vpow.pop %v3093
      %v3095 = vmul.f32 %v2972, 1.442695
      %v3096 = vpow.pop %v3095
      %v3097 = vmul.f32 %v2973, 1.442695
      %v3098 = vpow.pop %v3097
      %v3099 = vmul.f32 %v2974, 1.442695
      %v3100 = vpow.pop %v3099
      %v3101 = vmul.f32 %v2975, 1.442695
      %v3102 = vpow.pop %v3101
      %v3103 = vmul.f32 %v2976, 1.442695
      %v3104 = vpow.pop %v3103
      %3105 = vrot.lane.b32.xlu0 %v2978, 8
      %v3106 = vpop.permute.xlu0 %3105
      %3107 = vrot.lane.b32.xlu0 %v2980, 8
      %v3108 = vpop.permute.xlu0 %3107
      %3109 = vrot.lane.b32.xlu0 %v2982, 8
      %v3110 = vpop.permute.xlu0 %3109
      %3111 = vrot.lane.b32.xlu0 %v2984, 8
      %v3112 = vpop.permute.xlu0 %3111
      %3113 = vrot.lane.b32.xlu0 %v2986, 8
      %v3114 = vpop.permute.xlu0 %3113
      %3115 = vrot.lane.b32.xlu0 %v2988, 8
      %v3116 = vpop.permute.xlu0 %3115
      %3117 = vrot.lane.b32.xlu0 %v2990, 8
      %v3118 = vpop.permute.xlu0 %3117
      %3119 = vrot.lane.b32.xlu0 %v2992, 8
      %v3120 = vpop.permute.xlu0 %3119
      %3121 = vrot.lane.b32.xlu0 %v2994, 8
      %v3122 = vpop.permute.xlu0 %3121
      %3123 = vrot.lane.b32.xlu0 %v2996, 8
      %v3124 = vpop.permute.xlu0 %3123
      %3125 = vrot.lane.b32.xlu0 %v2998, 8
      %v3126 = vpop.permute.xlu0 %3125
      %3127 = vrot.lane.b32.xlu0 %v3000, 8
      %v3128 = vpop.permute.xlu0 %3127
      %3129 = vrot.lane.b32.xlu0 %v3002, 8
      %v3130 = vpop.permute.xlu0 %3129
      %3131 = vrot.lane.b32.xlu0 %v3004, 8
      %v3132 = vpop.permute.xlu0 %3131
      %3133 = vrot.lane.b32.xlu0 %v3006, 8
      %v3134 = vpop.permute.xlu0 %3133
      %3135 = vrot.lane.b32.xlu0 %v3008, 8
      %v3136 = vpop.permute.xlu0 %3135
      %3137 = vrot.lane.b32.xlu0 %v3010, 8
      %v3138 = vpop.permute.xlu0 %3137
      %3139 = vrot.lane.b32.xlu0 %v3012, 8
      %v3140 = vpop.permute.xlu0 %3139
      %3141 = vrot.lane.b32.xlu0 %v3014, 8
      %v3142 = vpop.permute.xlu0 %3141
      %3143 = vrot.lane.b32.xlu0 %v3016, 8
      %v3144 = vpop.permute.xlu0 %3143
      %3145 = vrot.lane.b32.xlu0 %v3018, 8
      %v3146 = vpop.permute.xlu0 %3145
      %3147 = vrot.lane.b32.xlu0 %v3020, 8
      %v3148 = vpop.permute.xlu0 %3147
      %3149 = vrot.lane.b32.xlu0 %v3022, 8
      %v3150 = vpop.permute.xlu0 %3149
      %3151 = vrot.lane.b32.xlu0 %v3024, 8
      %v3152 = vpop.permute.xlu0 %3151
      %3153 = vrot.lane.b32.xlu0 %v3026, 8
      %v3154 = vpop.permute.xlu0 %3153
      %3155 = vrot.lane.b32.xlu0 %v3028, 8
      %v3156 = vpop.permute.xlu0 %3155
      %3157 = vrot.lane.b32.xlu0 %v3030, 8
      %v3158 = vpop.permute.xlu0 %3157
      %3159 = vrot.lane.b32.xlu0 %v3032, 8
      %v3160 = vpop.permute.xlu0 %3159
      %3161 = vrot.lane.b32.xlu0 %v3034, 8
      %v3162 = vpop.permute.xlu0 %3161
      %3163 = vrot.lane.b32.xlu0 %v3036, 8
      %v3164 = vpop.permute.xlu0 %3163
      %3165 = vrot.lane.b32.xlu0 %v3038, 8
      %v3166 = vpop.permute.xlu0 %3165
      %3167 = vrot.lane.b32.xlu0 %v3040, 8
      %v3168 = vpop.permute.xlu0 %3167
      %3169 = vrot.lane.b32.xlu0 %v3042, 8
      %v3170 = vpop.permute.xlu0 %3169
      %3171 = vrot.lane.b32.xlu0 %v3044, 8
      %v3172 = vpop.permute.xlu0 %3171
      %3173 = vrot.lane.b32.xlu0 %v3046, 8
      %v3174 = vpop.permute.xlu0 %3173
      %3175 = vrot.lane.b32.xlu0 %v3048, 8
      %v3176 = vpop.permute.xlu0 %3175
      %3177 = vrot.lane.b32.xlu0 %v3050, 8
      %v3178 = vpop.permute.xlu0 %3177
      %3179 = vrot.lane.b32.xlu0 %v3052, 8
      %v3180 = vpop.permute.xlu0 %3179
      %3181 = vrot.lane.b32.xlu0 %v3054, 8
      %v3182 = vpop.permute.xlu0 %3181
      %3183 = vrot.lane.b32.xlu0 %v3056, 8
      %v3184 = vpop.permute.xlu0 %3183
      %3185 = vrot.lane.b32.xlu0 %v3058, 8
      %v3186 = vpop.permute.xlu0 %3185
      %3187 = vrot.lane.b32.xlu0 %v3060, 8
      %v3188 = vpop.permute.xlu0 %3187
      %3189 = vrot.lane.b32.xlu0 %v3062, 8
      %v3190 = vpop.permute.xlu0 %3189
      %3191 = vrot.lane.b32.xlu0 %v3064, 8
      %v3192 = vpop.permute.xlu0 %3191
      %3193 = vrot.lane.b32.xlu0 %v3066, 8
      %v3194 = vpop.permute.xlu0 %3193
      %3195 = vrot.lane.b32.xlu0 %v3068, 8
      %v3196 = vpop.permute.xlu0 %3195
      %3197 = vrot.lane.b32.xlu0 %v3070, 8
      %v3198 = vpop.permute.xlu0 %3197
      %3199 = vrot.lane.b32.xlu0 %v3072, 8
      %v3200 = vpop.permute.xlu0 %3199
      %3201 = vrot.lane.b32.xlu0 %v3074, 8
      %v3202 = vpop.permute.xlu0 %3201
      %3203 = vrot.lane.b32.xlu0 %v3076, 8
      %v3204 = vpop.permute.xlu0 %3203
      %3205 = vrot.lane.b32.xlu0 %v3078, 8
      %v3206 = vpop.permute.xlu0 %3205
      %3207 = vrot.lane.b32.xlu0 %v3080, 8
      %v3208 = vpop.permute.xlu0 %3207
      %3209 = vrot.lane.b32.xlu0 %v3082, 8
      %v3210 = vpop.permute.xlu0 %3209
      %3211 = vrot.lane.b32.xlu0 %v3084, 8
      %v3212 = vpop.permute.xlu0 %3211
      %3213 = vrot.lane.b32.xlu0 %v3086, 8
      %v3214 = vpop.permute.xlu0 %3213
      %3215 = vrot.lane.b32.xlu0 %v3088, 8
      %v3216 = vpop.permute.xlu0 %3215
      %3217 = vrot.lane.b32.xlu0 %v3090, 8
      %v3218 = vpop.permute.xlu0 %3217
      %3219 = vrot.lane.b32.xlu0 %v3092, 8
      %v3220 = vpop.permute.xlu0 %3219
      %3221 = vrot.lane.b32.xlu0 %v3094, 8
      %v3222 = vpop.permute.xlu0 %3221
      %3223 = vrot.lane.b32.xlu0 %v3096, 8
      %v3224 = vpop.permute.xlu0 %3223
      %3225 = vrot.lane.b32.xlu0 %v3098, 8
      %v3226 = vpop.permute.xlu0 %3225
      %3227 = vrot.lane.b32.xlu0 %v3100, 8
      %v3228 = vpop.permute.xlu0 %3227
      %3229 = vrot.lane.b32.xlu0 %v3102, 8
      %v3230 = vpop.permute.xlu0 %3229
      %3231 = vrot.lane.b32.xlu0 %v3104, 8
      %v3232 = vpop.permute.xlu0 %3231
      %v3233 = vadd.f32 %v2978, %v3106
      %v3234 = vadd.f32 %v2980, %v3108
      %v3235 = vadd.f32 %v2982, %v3110
      %v3236 = vadd.f32 %v2984, %v3112
      %v3237 = vadd.f32 %v2986, %v3114
      %v3238 = vadd.f32 %v2988, %v3116
      %v3239 = vadd.f32 %v2990, %v3118
      %v3240 = vadd.f32 %v2992, %v3120
      %v3241 = vadd.f32 %v2994, %v3122
      %v3242 = vadd.f32 %v2996, %v3124
      %v3243 = vadd.f32 %v2998, %v3126
      %v3244 = vadd.f32 %v3000, %v3128
      %v3245 = vadd.f32 %v3002, %v3130
      %v3246 = vadd.f32 %v3004, %v3132
      %v3247 = vadd.f32 %v3006, %v3134
      %v3248 = vadd.f32 %v3008, %v3136
      %v3249 = vadd.f32 %v3010, %v3138
      %v3250 = vadd.f32 %v3012, %v3140
      %v3251 = vadd.f32 %v3014, %v3142
      %v3252 = vadd.f32 %v3016, %v3144
      %v3253 = vadd.f32 %v3018, %v3146
      %v3254 = vadd.f32 %v3020, %v3148
      %v3255 = vadd.f32 %v3022, %v3150
      %v3256 = vadd.f32 %v3024, %v3152
      %v3257 = vadd.f32 %v3026, %v3154
      %v3258 = vadd.f32 %v3028, %v3156
      %v3259 = vadd.f32 %v3030, %v3158
      %v3260 = vadd.f32 %v3032, %v3160
      %v3261 = vadd.f32 %v3034, %v3162
      %v3262 = vadd.f32 %v3036, %v3164
      %v3263 = vadd.f32 %v3038, %v3166
      %v3264 = vadd.f32 %v3040, %v3168
      %v3265 = vadd.f32 %v3042, %v3170
      %v3266 = vadd.f32 %v3044, %v3172
      %v3267 = vadd.f32 %v3046, %v3174
      %v3268 = vadd.f32 %v3048, %v3176
      %v3269 = vadd.f32 %v3050, %v3178
      %v3270 = vadd.f32 %v3052, %v3180
      %v3271 = vadd.f32 %v3054, %v3182
      %v3272 = vadd.f32 %v3056, %v3184
      %v3273 = vadd.f32 %v3058, %v3186
      %v3274 = vadd.f32 %v3060, %v3188
      %v3275 = vadd.f32 %v3062, %v3190
      %v3276 = vadd.f32 %v3064, %v3192
      %v3277 = vadd.f32 %v3066, %v3194
      %v3278 = vadd.f32 %v3068, %v3196
      %v3279 = vadd.f32 %v3070, %v3198
      %v3280 = vadd.f32 %v3072, %v3200
      %v3281 = vadd.f32 %v3074, %v3202
      %v3282 = vadd.f32 %v3076, %v3204
      %v3283 = vadd.f32 %v3078, %v3206
      %v3284 = vadd.f32 %v3080, %v3208
      %v3285 = vadd.f32 %v3082, %v3210
      %v3286 = vadd.f32 %v3084, %v3212
      %v3287 = vadd.f32 %v3086, %v3214
      %v3288 = vadd.f32 %v3088, %v3216
      %v3289 = vadd.f32 %v3090, %v3218
      %v3290 = vadd.f32 %v3092, %v3220
      %v3291 = vadd.f32 %v3094, %v3222
      %v3292 = vadd.f32 %v3096, %v3224
      %v3293 = vadd.f32 %v3098, %v3226
      %v3294 = vadd.f32 %v3100, %v3228
      %v3295 = vadd.f32 %v3102, %v3230
      %v3296 = vadd.f32 %v3104, %v3232
      %3297 = vrot.lane.b32.xlu0 %v3233, 16
      %v3298 = vpop.permute.xlu0 %3297
      %3299 = vrot.lane.b32.xlu0 %v3234, 16
      %v3300 = vpop.permute.xlu0 %3299
      %3301 = vrot.lane.b32.xlu0 %v3235, 16
      %v3302 = vpop.permute.xlu0 %3301
      %3303 = vrot.lane.b32.xlu0 %v3236, 16
      %v3304 = vpop.permute.xlu0 %3303
      %3305 = vrot.lane.b32.xlu0 %v3237, 16
      %v3306 = vpop.permute.xlu0 %3305
      %3307 = vrot.lane.b32.xlu0 %v3238, 16
      %v3308 = vpop.permute.xlu0 %3307
      %3309 = vrot.lane.b32.xlu0 %v3239, 16
      %v3310 = vpop.permute.xlu0 %3309
      %3311 = vrot.lane.b32.xlu0 %v3240, 16
      %v3312 = vpop.permute.xlu0 %3311
      %3313 = vrot.lane.b32.xlu0 %v3241, 16
      %v3314 = vpop.permute.xlu0 %3313
      %3315 = vrot.lane.b32.xlu0 %v3242, 16
      %v3316 = vpop.permute.xlu0 %3315
      %3317 = vrot.lane.b32.xlu0 %v3243, 16
      %v3318 = vpop.permute.xlu0 %3317
      %3319 = vrot.lane.b32.xlu0 %v3244, 16
      %v3320 = vpop.permute.xlu0 %3319
      %3321 = vrot.lane.b32.xlu0 %v3245, 16
      %v3322 = vpop.permute.xlu0 %3321
      %3323 = vrot.lane.b32.xlu0 %v3246, 16
      %v3324 = vpop.permute.xlu0 %3323
      %3325 = vrot.lane.b32.xlu0 %v3247, 16
      %v3326 = vpop.permute.xlu0 %3325
      %3327 = vrot.lane.b32.xlu0 %v3248, 16
      %v3328 = vpop.permute.xlu0 %3327
      %3329 = vrot.lane.b32.xlu0 %v3249, 16
      %v3330 = vpop.permute.xlu0 %3329
      %3331 = vrot.lane.b32.xlu0 %v3250, 16
      %v3332 = vpop.permute.xlu0 %3331
      %3333 = vrot.lane.b32.xlu0 %v3251, 16
      %v3334 = vpop.permute.xlu0 %3333
      %3335 = vrot.lane.b32.xlu0 %v3252, 16
      %v3336 = vpop.permute.xlu0 %3335
      %3337 = vrot.lane.b32.xlu0 %v3253, 16
      %v3338 = vpop.permute.xlu0 %3337
      %3339 = vrot.lane.b32.xlu0 %v3254, 16
      %v3340 = vpop.permute.xlu0 %3339
      %3341 = vrot.lane.b32.xlu0 %v3255, 16
      %v3342 = vpop.permute.xlu0 %3341
      %3343 = vrot.lane.b32.xlu0 %v3256, 16
      %v3344 = vpop.permute.xlu0 %3343
      %3345 = vrot.lane.b32.xlu0 %v3257, 16
      %v3346 = vpop.permute.xlu0 %3345
      %3347 = vrot.lane.b32.xlu0 %v3258, 16
      %v3348 = vpop.permute.xlu0 %3347
      %3349 = vrot.lane.b32.xlu0 %v3259, 16
      %v3350 = vpop.permute.xlu0 %3349
      %3351 = vrot.lane.b32.xlu0 %v3260, 16
      %v3352 = vpop.permute.xlu0 %3351
      %3353 = vrot.lane.b32.xlu0 %v3261, 16
      %v3354 = vpop.permute.xlu0 %3353
      %3355 = vrot.lane.b32.xlu0 %v3262, 16
      %v3356 = vpop.permute.xlu0 %3355
      %3357 = vrot.lane.b32.xlu0 %v3263, 16
      %v3358 = vpop.permute.xlu0 %3357
      %3359 = vrot.lane.b32.xlu0 %v3264, 16
      %v3360 = vpop.permute.xlu0 %3359
      %3361 = vrot.lane.b32.xlu0 %v3265, 16
      %v3362 = vpop.permute.xlu0 %3361
      %3363 = vrot.lane.b32.xlu0 %v3266, 16
      %v3364 = vpop.permute.xlu0 %3363
      %3365 = vrot.lane.b32.xlu0 %v3267, 16
      %v3366 = vpop.permute.xlu0 %3365
      %3367 = vrot.lane.b32.xlu0 %v3268, 16
      %v3368 = vpop.permute.xlu0 %3367
      %3369 = vrot.lane.b32.xlu0 %v3269, 16
      %v3370 = vpop.permute.xlu0 %3369
      %3371 = vrot.lane.b32.xlu0 %v3270, 16
      %v3372 = vpop.permute.xlu0 %3371
      %3373 = vrot.lane.b32.xlu0 %v3271, 16
      %v3374 = vpop.permute.xlu0 %3373
      %3375 = vrot.lane.b32.xlu0 %v3272, 16
      %v3376 = vpop.permute.xlu0 %3375
      %3377 = vrot.lane.b32.xlu0 %v3273, 16
      %v3378 = vpop.permute.xlu0 %3377
      %3379 = vrot.lane.b32.xlu0 %v3274, 16
      %v3380 = vpop.permute.xlu0 %3379
      %3381 = vrot.lane.b32.xlu0 %v3275, 16
      %v3382 = vpop.permute.xlu0 %3381
      %3383 = vrot.lane.b32.xlu0 %v3276, 16
      %v3384 = vpop.permute.xlu0 %3383
      %3385 = vrot.lane.b32.xlu0 %v3277, 16
      %v3386 = vpop.permute.xlu0 %3385
      %3387 = vrot.lane.b32.xlu0 %v3278, 16
      %v3388 = vpop.permute.xlu0 %3387
      %3389 = vrot.lane.b32.xlu0 %v3279, 16
      %v3390 = vpop.permute.xlu0 %3389
      %3391 = vrot.lane.b32.xlu0 %v3280, 16
      %v3392 = vpop.permute.xlu0 %3391
      %3393 = vrot.lane.b32.xlu0 %v3281, 16
      %v3394 = vpop.permute.xlu0 %3393
      %3395 = vrot.lane.b32.xlu0 %v3282, 16
      %v3396 = vpop.permute.xlu0 %3395
      %3397 = vrot.lane.b32.xlu0 %v3283, 16
      %v3398 = vpop.permute.xlu0 %3397
      %3399 = vrot.lane.b32.xlu0 %v3284, 16
      %v3400 = vpop.permute.xlu0 %3399
      %3401 = vrot.lane.b32.xlu0 %v3285, 16
      %v3402 = vpop.permute.xlu0 %3401
      %3403 = vrot.lane.b32.xlu0 %v3286, 16
      %v3404 = vpop.permute.xlu0 %3403
      %3405 = vrot.lane.b32.xlu0 %v3287, 16
      %v3406 = vpop.permute.xlu0 %3405
      %3407 = vrot.lane.b32.xlu0 %v3288, 16
      %v3408 = vpop.permute.xlu0 %3407
      %3409 = vrot.lane.b32.xlu0 %v3289, 16
      %v3410 = vpop.permute.xlu0 %3409
      %3411 = vrot.lane.b32.xlu0 %v3290, 16
      %v3412 = vpop.permute.xlu0 %3411
      %3413 = vrot.lane.b32.xlu0 %v3291, 16
      %v3414 = vpop.permute.xlu0 %3413
      %3415 = vrot.lane.b32.xlu0 %v3292, 16
      %v3416 = vpop.permute.xlu0 %3415
      %3417 = vrot.lane.b32.xlu0 %v3293, 16
      %v3418 = vpop.permute.xlu0 %3417
      %3419 = vrot.lane.b32.xlu0 %v3294, 16
      %v3420 = vpop.permute.xlu0 %3419
      %3421 = vrot.lane.b32.xlu0 %v3295, 16
      %v3422 = vpop.permute.xlu0 %3421
      %3423 = vrot.lane.b32.xlu0 %v3296, 16
      %v3424 = vpop.permute.xlu0 %3423
      %v3425 = vadd.f32 %v3233, %v3298
      %v3426 = vadd.f32 %v3234, %v3300
      %v3427 = vadd.f32 %v3235, %v3302
      %v3428 = vadd.f32 %v3236, %v3304
      %v3429 = vadd.f32 %v3237, %v3306
      %v3430 = vadd.f32 %v3238, %v3308
      %v3431 = vadd.f32 %v3239, %v3310
      %v3432 = vadd.f32 %v3240, %v3312
      %v3433 = vadd.f32 %v3241, %v3314
      %v3434 = vadd.f32 %v3242, %v3316
      %v3435 = vadd.f32 %v3243, %v3318
      %v3436 = vadd.f32 %v3244, %v3320
      %v3437 = vadd.f32 %v3245, %v3322
      %v3438 = vadd.f32 %v3246, %v3324
      %v3439 = vadd.f32 %v3247, %v3326
      %v3440 = vadd.f32 %v3248, %v3328
      %v3441 = vadd.f32 %v3249, %v3330
      %v3442 = vadd.f32 %v3250, %v3332
      %v3443 = vadd.f32 %v3251, %v3334
      %v3444 = vadd.f32 %v3252, %v3336
      %v3445 = vadd.f32 %v3253, %v3338
      %v3446 = vadd.f32 %v3254, %v3340
      %v3447 = vadd.f32 %v3255, %v3342
      %v3448 = vadd.f32 %v3256, %v3344
      %v3449 = vadd.f32 %v3257, %v3346
      %v3450 = vadd.f32 %v3258, %v3348
      %v3451 = vadd.f32 %v3259, %v3350
      %v3452 = vadd.f32 %v3260, %v3352
      %v3453 = vadd.f32 %v3261, %v3354
      %v3454 = vadd.f32 %v3262, %v3356
      %v3455 = vadd.f32 %v3263, %v3358
      %v3456 = vadd.f32 %v3264, %v3360
      %v3457 = vadd.f32 %v3265, %v3362
      %v3458 = vadd.f32 %v3266, %v3364
      %v3459 = vadd.f32 %v3267, %v3366
      %v3460 = vadd.f32 %v3268, %v3368
      %v3461 = vadd.f32 %v3269, %v3370
      %v3462 = vadd.f32 %v3270, %v3372
      %v3463 = vadd.f32 %v3271, %v3374
      %v3464 = vadd.f32 %v3272, %v3376
      %v3465 = vadd.f32 %v3273, %v3378
      %v3466 = vadd.f32 %v3274, %v3380
      %v3467 = vadd.f32 %v3275, %v3382
      %v3468 = vadd.f32 %v3276, %v3384
      %v3469 = vadd.f32 %v3277, %v3386
      %v3470 = vadd.f32 %v3278, %v3388
      %v3471 = vadd.f32 %v3279, %v3390
      %v3472 = vadd.f32 %v3280, %v3392
      %v3473 = vadd.f32 %v3281, %v3394
      %v3474 = vadd.f32 %v3282, %v3396
      %v3475 = vadd.f32 %v3283, %v3398
      %v3476 = vadd.f32 %v3284, %v3400
      %v3477 = vadd.f32 %v3285, %v3402
      %v3478 = vadd.f32 %v3286, %v3404
      %v3479 = vadd.f32 %v3287, %v3406
      %v3480 = vadd.f32 %v3288, %v3408
      %v3481 = vadd.f32 %v3289, %v3410
      %v3482 = vadd.f32 %v3290, %v3412
      %v3483 = vadd.f32 %v3291, %v3414
      %v3484 = vadd.f32 %v3292, %v3416
      %v3485 = vadd.f32 %v3293, %v3418
      %v3486 = vadd.f32 %v3294, %v3420
      %v3487 = vadd.f32 %v3295, %v3422
      %v3488 = vadd.f32 %v3296, %v3424
      %3489 = vrot.lane.b32.xlu0 %v3425, 32
      %v3490 = vpop.permute.xlu0 %3489
      %3491 = vrot.lane.b32.xlu0 %v3426, 32
      %v3492 = vpop.permute.xlu0 %3491
      %3493 = vrot.lane.b32.xlu0 %v3427, 32
      %v3494 = vpop.permute.xlu0 %3493
      %3495 = vrot.lane.b32.xlu0 %v3428, 32
      %v3496 = vpop.permute.xlu0 %3495
      %3497 = vrot.lane.b32.xlu0 %v3429, 32
      %v3498 = vpop.permute.xlu0 %3497
      %3499 = vrot.lane.b32.xlu0 %v3430, 32
      %v3500 = vpop.permute.xlu0 %3499
      %3501 = vrot.lane.b32.xlu0 %v3431, 32
      %v3502 = vpop.permute.xlu0 %3501
      %3503 = vrot.lane.b32.xlu0 %v3432, 32
      %v3504 = vpop.permute.xlu0 %3503
      %3505 = vrot.lane.b32.xlu0 %v3433, 32
      %v3506 = vpop.permute.xlu0 %3505
      %3507 = vrot.lane.b32.xlu0 %v3434, 32
      %v3508 = vpop.permute.xlu0 %3507
      %3509 = vrot.lane.b32.xlu0 %v3435, 32
      %v3510 = vpop.permute.xlu0 %3509
      %3511 = vrot.lane.b32.xlu0 %v3436, 32
      %v3512 = vpop.permute.xlu0 %3511
      %3513 = vrot.lane.b32.xlu0 %v3437, 32
      %v3514 = vpop.permute.xlu0 %3513
      %3515 = vrot.lane.b32.xlu0 %v3438, 32
      %v3516 = vpop.permute.xlu0 %3515
      %3517 = vrot.lane.b32.xlu0 %v3439, 32
      %v3518 = vpop.permute.xlu0 %3517
      %3519 = vrot.lane.b32.xlu0 %v3440, 32
      %v3520 = vpop.permute.xlu0 %3519
      %3521 = vrot.lane.b32.xlu0 %v3441, 32
      %v3522 = vpop.permute.xlu0 %3521
      %3523 = vrot.lane.b32.xlu0 %v3442, 32
      %v3524 = vpop.permute.xlu0 %3523
      %3525 = vrot.lane.b32.xlu0 %v3443, 32
      %v3526 = vpop.permute.xlu0 %3525
      %3527 = vrot.lane.b32.xlu0 %v3444, 32
      %v3528 = vpop.permute.xlu0 %3527
      %3529 = vrot.lane.b32.xlu0 %v3445, 32
      %v3530 = vpop.permute.xlu0 %3529
      %3531 = vrot.lane.b32.xlu0 %v3446, 32
      %v3532 = vpop.permute.xlu0 %3531
      %3533 = vrot.lane.b32.xlu0 %v3447, 32
      %v3534 = vpop.permute.xlu0 %3533
      %3535 = vrot.lane.b32.xlu0 %v3448, 32
      %v3536 = vpop.permute.xlu0 %3535
      %3537 = vrot.lane.b32.xlu0 %v3449, 32
      %v3538 = vpop.permute.xlu0 %3537
      %3539 = vrot.lane.b32.xlu0 %v3450, 32
      %v3540 = vpop.permute.xlu0 %3539
      %3541 = vrot.lane.b32.xlu0 %v3451, 32
      %v3542 = vpop.permute.xlu0 %3541
      %3543 = vrot.lane.b32.xlu0 %v3452, 32
      %v3544 = vpop.permute.xlu0 %3543
      %3545 = vrot.lane.b32.xlu0 %v3453, 32
      %v3546 = vpop.permute.xlu0 %3545
      %3547 = vrot.lane.b32.xlu0 %v3454, 32
      %v3548 = vpop.permute.xlu0 %3547
      %3549 = vrot.lane.b32.xlu0 %v3455, 32
      %v3550 = vpop.permute.xlu0 %3549
      %3551 = vrot.lane.b32.xlu0 %v3456, 32
      %v3552 = vpop.permute.xlu0 %3551
      %3553 = vrot.lane.b32.xlu0 %v3457, 32
      %v3554 = vpop.permute.xlu0 %3553
      %3555 = vrot.lane.b32.xlu0 %v3458, 32
      %v3556 = vpop.permute.xlu0 %3555
      %3557 = vrot.lane.b32.xlu0 %v3459, 32
      %v3558 = vpop.permute.xlu0 %3557
      %3559 = vrot.lane.b32.xlu0 %v3460, 32
      %v3560 = vpop.permute.xlu0 %3559
      %3561 = vrot.lane.b32.xlu0 %v3461, 32
      %v3562 = vpop.permute.xlu0 %3561
      %3563 = vrot.lane.b32.xlu0 %v3462, 32
      %v3564 = vpop.permute.xlu0 %3563
      %3565 = vrot.lane.b32.xlu0 %v3463, 32
      %v3566 = vpop.permute.xlu0 %3565
      %3567 = vrot.lane.b32.xlu0 %v3464, 32
      %v3568 = vpop.permute.xlu0 %3567
      %3569 = vrot.lane.b32.xlu0 %v3465, 32
      %v3570 = vpop.permute.xlu0 %3569
      %3571 = vrot.lane.b32.xlu0 %v3466, 32
      %v3572 = vpop.permute.xlu0 %3571
      %3573 = vrot.lane.b32.xlu0 %v3467, 32
      %v3574 = vpop.permute.xlu0 %3573
      %3575 = vrot.lane.b32.xlu0 %v3468, 32
      %v3576 = vpop.permute.xlu0 %3575
      %3577 = vrot.lane.b32.xlu0 %v3469, 32
      %v3578 = vpop.permute.xlu0 %3577
      %3579 = vrot.lane.b32.xlu0 %v3470, 32
      %v3580 = vpop.permute.xlu0 %3579
      %3581 = vrot.lane.b32.xlu0 %v3471, 32
      %v3582 = vpop.permute.xlu0 %3581
      %3583 = vrot.lane.b32.xlu0 %v3472, 32
      %v3584 = vpop.permute.xlu0 %3583
      %3585 = vrot.lane.b32.xlu0 %v3473, 32
      %v3586 = vpop.permute.xlu0 %3585
      %3587 = vrot.lane.b32.xlu0 %v3474, 32
      %v3588 = vpop.permute.xlu0 %3587
      %3589 = vrot.lane.b32.xlu0 %v3475, 32
      %v3590 = vpop.permute.xlu0 %3589
      %3591 = vrot.lane.b32.xlu0 %v3476, 32
      %v3592 = vpop.permute.xlu0 %3591
      %3593 = vrot.lane.b32.xlu0 %v3477, 32
      %v3594 = vpop.permute.xlu0 %3593
      %3595 = vrot.lane.b32.xlu0 %v3478, 32
      %v3596 = vpop.permute.xlu0 %3595
      %3597 = vrot.lane.b32.xlu0 %v3479, 32
      %v3598 = vpop.permute.xlu0 %3597
      %3599 = vrot.lane.b32.xlu0 %v3480, 32
      %v3600 = vpop.permute.xlu0 %3599
      %3601 = vrot.lane.b32.xlu0 %v3481, 32
      %v3602 = vpop.permute.xlu0 %3601
      %3603 = vrot.lane.b32.xlu0 %v3482, 32
      %v3604 = vpop.permute.xlu0 %3603
      %3605 = vrot.lane.b32.xlu0 %v3483, 32
      %v3606 = vpop.permute.xlu0 %3605
      %3607 = vrot.lane.b32.xlu0 %v3484, 32
      %v3608 = vpop.permute.xlu0 %3607
      %3609 = vrot.lane.b32.xlu0 %v3485, 32
      %v3610 = vpop.permute.xlu0 %3609
      %3611 = vrot.lane.b32.xlu0 %v3486, 32
      %v3612 = vpop.permute.xlu0 %3611
      %3613 = vrot.lane.b32.xlu0 %v3487, 32
      %v3614 = vpop.permute.xlu0 %3613
      %3615 = vrot.lane.b32.xlu0 %v3488, 32
      %v3616 = vpop.permute.xlu0 %3615
      %v3617 = vadd.f32 %v3425, %v3490
      %v3618 = vadd.f32 %v3426, %v3492
      %v3619 = vadd.f32 %v3427, %v3494
      %v3620 = vadd.f32 %v3428, %v3496
      %v3621 = vadd.f32 %v3429, %v3498
      %v3622 = vadd.f32 %v3430, %v3500
      %v3623 = vadd.f32 %v3431, %v3502
      %v3624 = vadd.f32 %v3432, %v3504
      %v3625 = vadd.f32 %v3433, %v3506
      %v3626 = vadd.f32 %v3434, %v3508
      %v3627 = vadd.f32 %v3435, %v3510
      %v3628 = vadd.f32 %v3436, %v3512
      %v3629 = vadd.f32 %v3437, %v3514
      %v3630 = vadd.f32 %v3438, %v3516
      %v3631 = vadd.f32 %v3439, %v3518
      %v3632 = vadd.f32 %v3440, %v3520
      %v3633 = vadd.f32 %v3441, %v3522
      %v3634 = vadd.f32 %v3442, %v3524
      %v3635 = vadd.f32 %v3443, %v3526
      %v3636 = vadd.f32 %v3444, %v3528
      %v3637 = vadd.f32 %v3445, %v3530
      %v3638 = vadd.f32 %v3446, %v3532
      %v3639 = vadd.f32 %v3447, %v3534
      %v3640 = vadd.f32 %v3448, %v3536
      %v3641 = vadd.f32 %v3449, %v3538
      %v3642 = vadd.f32 %v3450, %v3540
      %v3643 = vadd.f32 %v3451, %v3542
      %v3644 = vadd.f32 %v3452, %v3544
      %v3645 = vadd.f32 %v3453, %v3546
      %v3646 = vadd.f32 %v3454, %v3548
      %v3647 = vadd.f32 %v3455, %v3550
      %v3648 = vadd.f32 %v3456, %v3552
      %v3649 = vadd.f32 %v3457, %v3554
      %v3650 = vadd.f32 %v3458, %v3556
      %v3651 = vadd.f32 %v3459, %v3558
      %v3652 = vadd.f32 %v3460, %v3560
      %v3653 = vadd.f32 %v3461, %v3562
      %v3654 = vadd.f32 %v3462, %v3564
      %v3655 = vadd.f32 %v3463, %v3566
      %v3656 = vadd.f32 %v3464, %v3568
      %v3657 = vadd.f32 %v3465, %v3570
      %v3658 = vadd.f32 %v3466, %v3572
      %v3659 = vadd.f32 %v3467, %v3574
      %v3660 = vadd.f32 %v3468, %v3576
      %v3661 = vadd.f32 %v3469, %v3578
      %v3662 = vadd.f32 %v3470, %v3580
      %v3663 = vadd.f32 %v3471, %v3582
      %v3664 = vadd.f32 %v3472, %v3584
      %v3665 = vadd.f32 %v3473, %v3586
      %v3666 = vadd.f32 %v3474, %v3588
      %v3667 = vadd.f32 %v3475, %v3590
      %v3668 = vadd.f32 %v3476, %v3592
      %v3669 = vadd.f32 %v3477, %v3594
      %v3670 = vadd.f32 %v3478, %v3596
      %v3671 = vadd.f32 %v3479, %v3598
      %v3672 = vadd.f32 %v3480, %v3600
      %v3673 = vadd.f32 %v3481, %v3602
      %v3674 = vadd.f32 %v3482, %v3604
      %v3675 = vadd.f32 %v3483, %v3606
      %v3676 = vadd.f32 %v3484, %v3608
      %v3677 = vadd.f32 %v3485, %v3610
      %v3678 = vadd.f32 %v3486, %v3612
      %v3679 = vadd.f32 %v3487, %v3614
      %v3680 = vadd.f32 %v3488, %v3616
      %3681 = vrot.lane.b32.xlu0 %v3617, 64
      %v3682 = vpop.permute.xlu0 %3681
      %3683 = vrot.lane.b32.xlu0 %v3618, 64
      %v3684 = vpop.permute.xlu0 %3683
      %3685 = vrot.lane.b32.xlu0 %v3619, 64
      %v3686 = vpop.permute.xlu0 %3685
      %3687 = vrot.lane.b32.xlu0 %v3620, 64
      %v3688 = vpop.permute.xlu0 %3687
      %3689 = vrot.lane.b32.xlu0 %v3621, 64
      %v3690 = vpop.permute.xlu0 %3689
      %3691 = vrot.lane.b32.xlu0 %v3622, 64
      %v3692 = vpop.permute.xlu0 %3691
      %3693 = vrot.lane.b32.xlu0 %v3623, 64
      %v3694 = vpop.permute.xlu0 %3693
      %3695 = vrot.lane.b32.xlu0 %v3624, 64
      %v3696 = vpop.permute.xlu0 %3695
      %3697 = vrot.lane.b32.xlu0 %v3625, 64
      %v3698 = vpop.permute.xlu0 %3697
      %3699 = vrot.lane.b32.xlu0 %v3626, 64
      %v3700 = vpop.permute.xlu0 %3699
      %3701 = vrot.lane.b32.xlu0 %v3627, 64
      %v3702 = vpop.permute.xlu0 %3701
      %3703 = vrot.lane.b32.xlu0 %v3628, 64
      %v3704 = vpop.permute.xlu0 %3703
      %3705 = vrot.lane.b32.xlu0 %v3629, 64
      %v3706 = vpop.permute.xlu0 %3705
      %3707 = vrot.lane.b32.xlu0 %v3630, 64
      %v3708 = vpop.permute.xlu0 %3707
      %3709 = vrot.lane.b32.xlu0 %v3631, 64
      %v3710 = vpop.permute.xlu0 %3709
      %3711 = vrot.lane.b32.xlu0 %v3632, 64
      %v3712 = vpop.permute.xlu0 %3711
      %3713 = vrot.lane.b32.xlu0 %v3633, 64
      %v3714 = vpop.permute.xlu0 %3713
      %3715 = vrot.lane.b32.xlu0 %v3634, 64
      %v3716 = vpop.permute.xlu0 %3715
      %3717 = vrot.lane.b32.xlu0 %v3635, 64
      %v3718 = vpop.permute.xlu0 %3717
      %3719 = vrot.lane.b32.xlu0 %v3636, 64
      %v3720 = vpop.permute.xlu0 %3719
      %3721 = vrot.lane.b32.xlu0 %v3637, 64
      %v3722 = vpop.permute.xlu0 %3721
      %3723 = vrot.lane.b32.xlu0 %v3638, 64
      %v3724 = vpop.permute.xlu0 %3723
      %3725 = vrot.lane.b32.xlu0 %v3639, 64
      %v3726 = vpop.permute.xlu0 %3725
      %3727 = vrot.lane.b32.xlu0 %v3640, 64
      %v3728 = vpop.permute.xlu0 %3727
      %3729 = vrot.lane.b32.xlu0 %v3641, 64
      %v3730 = vpop.permute.xlu0 %3729
      %3731 = vrot.lane.b32.xlu0 %v3642, 64
      %v3732 = vpop.permute.xlu0 %3731
      %3733 = vrot.lane.b32.xlu0 %v3643, 64
      %v3734 = vpop.permute.xlu0 %3733
      %3735 = vrot.lane.b32.xlu0 %v3644, 64
      %v3736 = vpop.permute.xlu0 %3735
      %3737 = vrot.lane.b32.xlu0 %v3645, 64
      %v3738 = vpop.permute.xlu0 %3737
      %3739 = vrot.lane.b32.xlu0 %v3646, 64
      %v3740 = vpop.permute.xlu0 %3739
      %3741 = vrot.lane.b32.xlu0 %v3647, 64
      %v3742 = vpop.permute.xlu0 %3741
      %3743 = vrot.lane.b32.xlu0 %v3648, 64
      %v3744 = vpop.permute.xlu0 %3743
      %3745 = vrot.lane.b32.xlu0 %v3649, 64
      %v3746 = vpop.permute.xlu0 %3745
      %3747 = vrot.lane.b32.xlu0 %v3650, 64
      %v3748 = vpop.permute.xlu0 %3747
      %3749 = vrot.lane.b32.xlu0 %v3651, 64
      %v3750 = vpop.permute.xlu0 %3749
      %3751 = vrot.lane.b32.xlu0 %v3652, 64
      %v3752 = vpop.permute.xlu0 %3751
      %3753 = vrot.lane.b32.xlu0 %v3653, 64
      %v3754 = vpop.permute.xlu0 %3753
      %3755 = vrot.lane.b32.xlu0 %v3654, 64
      %v3756 = vpop.permute.xlu0 %3755
      %3757 = vrot.lane.b32.xlu0 %v3655, 64
      %v3758 = vpop.permute.xlu0 %3757
      %3759 = vrot.lane.b32.xlu0 %v3656, 64
      %v3760 = vpop.permute.xlu0 %3759
      %3761 = vrot.lane.b32.xlu0 %v3657, 64
      %v3762 = vpop.permute.xlu0 %3761
      %3763 = vrot.lane.b32.xlu0 %v3658, 64
      %v3764 = vpop.permute.xlu0 %3763
      %3765 = vrot.lane.b32.xlu0 %v3659, 64
      %v3766 = vpop.permute.xlu0 %3765
      %3767 = vrot.lane.b32.xlu0 %v3660, 64
      %v3768 = vpop.permute.xlu0 %3767
      %3769 = vrot.lane.b32.xlu0 %v3661, 64
      %v3770 = vpop.permute.xlu0 %3769
      %3771 = vrot.lane.b32.xlu0 %v3662, 64
      %v3772 = vpop.permute.xlu0 %3771
      %3773 = vrot.lane.b32.xlu0 %v3663, 64
      %v3774 = vpop.permute.xlu0 %3773
      %3775 = vrot.lane.b32.xlu0 %v3664, 64
      %v3776 = vpop.permute.xlu0 %3775
      %3777 = vrot.lane.b32.xlu0 %v3665, 64
      %v3778 = vpop.permute.xlu0 %3777
      %3779 = vrot.lane.b32.xlu0 %v3666, 64
      %v3780 = vpop.permute.xlu0 %3779
      %3781 = vrot.lane.b32.xlu0 %v3667, 64
      %v3782 = vpop.permute.xlu0 %3781
      %3783 = vrot.lane.b32.xlu0 %v3668, 64
      %v3784 = vpop.permute.xlu0 %3783
      %3785 = vrot.lane.b32.xlu0 %v3669, 64
      %v3786 = vpop.permute.xlu0 %3785
      %3787 = vrot.lane.b32.xlu0 %v3670, 64
      %v3788 = vpop.permute.xlu0 %3787
      %3789 = vrot.lane.b32.xlu0 %v3671, 64
      %v3790 = vpop.permute.xlu0 %3789
      %3791 = vrot.lane.b32.xlu0 %v3672, 64
      %v3792 = vpop.permute.xlu0 %3791
      %3793 = vrot.lane.b32.xlu0 %v3673, 64
      %v3794 = vpop.permute.xlu0 %3793
      %3795 = vrot.lane.b32.xlu0 %v3674, 64
      %v3796 = vpop.permute.xlu0 %3795
      %3797 = vrot.lane.b32.xlu0 %v3675, 64
      %v3798 = vpop.permute.xlu0 %3797
      %3799 = vrot.lane.b32.xlu0 %v3676, 64
      %v3800 = vpop.permute.xlu0 %3799
      %3801 = vrot.lane.b32.xlu0 %v3677, 64
      %v3802 = vpop.permute.xlu0 %3801
      %3803 = vrot.lane.b32.xlu0 %v3678, 64
      %v3804 = vpop.permute.xlu0 %3803
      %3805 = vrot.lane.b32.xlu0 %v3679, 64
      %v3806 = vpop.permute.xlu0 %3805
      %3807 = vrot.lane.b32.xlu0 %v3680, 64
      %v3808 = vpop.permute.xlu0 %3807
      %v3809 = vadd.f32 %v3617, %v3682
      %v3810 = vadd.f32 %v3618, %v3684
      %v3811 = vadd.f32 %v3619, %v3686
      %v3812 = vadd.f32 %v3620, %v3688
      %v3813 = vadd.f32 %v3621, %v3690
      %v3814 = vadd.f32 %v3622, %v3692
      %v3815 = vadd.f32 %v3623, %v3694
      %v3816 = vadd.f32 %v3624, %v3696
      %v3817 = vadd.f32 %v3625, %v3698
      %v3818 = vadd.f32 %v3626, %v3700
      %v3819 = vadd.f32 %v3627, %v3702
      %v3820 = vadd.f32 %v3628, %v3704
      %v3821 = vadd.f32 %v3629, %v3706
      %v3822 = vadd.f32 %v3630, %v3708
      %v3823 = vadd.f32 %v3631, %v3710
      %v3824 = vadd.f32 %v3632, %v3712
      %v3825 = vadd.f32 %v3633, %v3714
      %v3826 = vadd.f32 %v3634, %v3716
      %v3827 = vadd.f32 %v3635, %v3718
      %v3828 = vadd.f32 %v3636, %v3720
      %v3829 = vadd.f32 %v3637, %v3722
      %v3830 = vadd.f32 %v3638, %v3724
      %v3831 = vadd.f32 %v3639, %v3726
      %v3832 = vadd.f32 %v3640, %v3728
      %v3833 = vadd.f32 %v3641, %v3730
      %v3834 = vadd.f32 %v3642, %v3732
      %v3835 = vadd.f32 %v3643, %v3734
      %v3836 = vadd.f32 %v3644, %v3736
      %v3837 = vadd.f32 %v3645, %v3738
      %v3838 = vadd.f32 %v3646, %v3740
      %v3839 = vadd.f32 %v3647, %v3742
      %v3840 = vadd.f32 %v3648, %v3744
      %v3841 = vadd.f32 %v3649, %v3746
      %v3842 = vadd.f32 %v3650, %v3748
      %v3843 = vadd.f32 %v3651, %v3750
      %v3844 = vadd.f32 %v3652, %v3752
      %v3845 = vadd.f32 %v3653, %v3754
      %v3846 = vadd.f32 %v3654, %v3756
      %v3847 = vadd.f32 %v3655, %v3758
      %v3848 = vadd.f32 %v3656, %v3760
      %v3849 = vadd.f32 %v3657, %v3762
      %v3850 = vadd.f32 %v3658, %v3764
      %v3851 = vadd.f32 %v3659, %v3766
      %v3852 = vadd.f32 %v3660, %v3768
      %v3853 = vadd.f32 %v3661, %v3770
      %v3854 = vadd.f32 %v3662, %v3772
      %v3855 = vadd.f32 %v3663, %v3774
      %v3856 = vadd.f32 %v3664, %v3776
      %v3857 = vadd.f32 %v3665, %v3778
      %v3858 = vadd.f32 %v3666, %v3780
      %v3859 = vadd.f32 %v3667, %v3782
      %v3860 = vadd.f32 %v3668, %v3784
      %v3861 = vadd.f32 %v3669, %v3786
      %v3862 = vadd.f32 %v3670, %v3788
      %v3863 = vadd.f32 %v3671, %v3790
      %v3864 = vadd.f32 %v3672, %v3792
      %v3865 = vadd.f32 %v3673, %v3794
      %v3866 = vadd.f32 %v3674, %v3796
      %v3867 = vadd.f32 %v3675, %v3798
      %v3868 = vadd.f32 %v3676, %v3800
      %v3869 = vadd.f32 %v3677, %v3802
      %v3870 = vadd.f32 %v3678, %v3804
      %v3871 = vadd.f32 %v3679, %v3806
      %v3872 = vadd.f32 %v3680, %v3808
      %v3873 = vrcp.pop %v3809
      %v3874 = vrcp.pop %v3810
      %v3875 = vrcp.pop %v3811
      %v3876 = vrcp.pop %v3812
      %v3877 = vrcp.pop %v3813
      %v3878 = vrcp.pop %v3814
      %v3879 = vrcp.pop %v3815
      %v3880 = vrcp.pop %v3816
      %v3881 = vrcp.pop %v3817
      %v3882 = vrcp.pop %v3818
      %v3883 = vrcp.pop %v3819
      %v3884 = vrcp.pop %v3820
      %v3885 = vrcp.pop %v3821
      %v3886 = vrcp.pop %v3822
      %v3887 = vrcp.pop %v3823
      %v3888 = vrcp.pop %v3824
      %v3889 = vrcp.pop %v3825
      %v3890 = vrcp.pop %v3826
      %v3891 = vrcp.pop %v3827
      %v3892 = vrcp.pop %v3828
      %v3893 = vrcp.pop %v3829
      %v3894 = vrcp.pop %v3830
      %v3895 = vrcp.pop %v3831
      %v3896 = vrcp.pop %v3832
      %v3897 = vrcp.pop %v3833
      %v3898 = vrcp.pop %v3834
      %v3899 = vrcp.pop %v3835
      %v3900 = vrcp.pop %v3836
      %v3901 = vrcp.pop %v3837
      %v3902 = vrcp.pop %v3838
      %v3903 = vrcp.pop %v3839
      %v3904 = vrcp.pop %v3840
      %v3905 = vrcp.pop %v3841
      %v3906 = vrcp.pop %v3842
      %v3907 = vrcp.pop %v3843
      %v3908 = vrcp.pop %v3844
      %v3909 = vrcp.pop %v3845
      %v3910 = vrcp.pop %v3846
      %v3911 = vrcp.pop %v3847
      %v3912 = vrcp.pop %v3848
      %v3913 = vrcp.pop %v3849
      %v3914 = vrcp.pop %v3850
      %v3915 = vrcp.pop %v3851
      %v3916 = vrcp.pop %v3852
      %v3917 = vrcp.pop %v3853
      %v3918 = vrcp.pop %v3854
      %v3919 = vrcp.pop %v3855
      %v3920 = vrcp.pop %v3856
      %v3921 = vrcp.pop %v3857
      %v3922 = vrcp.pop %v3858
      %v3923 = vrcp.pop %v3859
      %v3924 = vrcp.pop %v3860
      %v3925 = vrcp.pop %v3861
      %v3926 = vrcp.pop %v3862
      %v3927 = vrcp.pop %v3863
      %v3928 = vrcp.pop %v3864
      %v3929 = vrcp.pop %v3865
      %v3930 = vrcp.pop %v3866
      %v3931 = vrcp.pop %v3867
      %v3932 = vrcp.pop %v3868
      %v3933 = vrcp.pop %v3869
      %v3934 = vrcp.pop %v3870
      %v3935 = vrcp.pop %v3871
      %v3936 = vrcp.pop %v3872
      %v3937 = vmul.f32 %v2978, %v3873
      %v3938 = vmul.f32 %v2980, %v3874
      %v3939 = vmul.f32 %v2982, %v3875
      %v3940 = vmul.f32 %v2984, %v3876
      %v3941 = vmul.f32 %v2986, %v3877
      %v3942 = vmul.f32 %v2988, %v3878
      %v3943 = vmul.f32 %v2990, %v3879
      %v3944 = vmul.f32 %v2992, %v3880
      %v3945 = vmul.f32 %v2994, %v3881
      %v3946 = vmul.f32 %v2996, %v3882
      %v3947 = vmul.f32 %v2998, %v3883
      %v3948 = vmul.f32 %v3000, %v3884
      %v3949 = vmul.f32 %v3002, %v3885
      %v3950 = vmul.f32 %v3004, %v3886
      %v3951 = vmul.f32 %v3006, %v3887
      %v3952 = vmul.f32 %v3008, %v3888
      %v3953 = vmul.f32 %v3010, %v3889
      %v3954 = vmul.f32 %v3012, %v3890
      %v3955 = vmul.f32 %v3014, %v3891
      %v3956 = vmul.f32 %v3016, %v3892
      %v3957 = vmul.f32 %v3018, %v3893
      %v3958 = vmul.f32 %v3020, %v3894
      %v3959 = vmul.f32 %v3022, %v3895
      %v3960 = vmul.f32 %v3024, %v3896
      %v3961 = vmul.f32 %v3026, %v3897
      %v3962 = vmul.f32 %v3028, %v3898
      %v3963 = vmul.f32 %v3030, %v3899
      %v3964 = vmul.f32 %v3032, %v3900
      %v3965 = vmul.f32 %v3034, %v3901
      %v3966 = vmul.f32 %v3036, %v3902
      %v3967 = vmul.f32 %v3038, %v3903
      %v3968 = vmul.f32 %v3040, %v3904
      %v3969 = vmul.f32 %v3042, %v3905
      %v3970 = vmul.f32 %v3044, %v3906
      %v3971 = vmul.f32 %v3046, %v3907
      %v3972 = vmul.f32 %v3048, %v3908
      %v3973 = vmul.f32 %v3050, %v3909
      %v3974 = vmul.f32 %v3052, %v3910
      %v3975 = vmul.f32 %v3054, %v3911
      %v3976 = vmul.f32 %v3056, %v3912
      %v3977 = vmul.f32 %v3058, %v3913
      %v3978 = vmul.f32 %v3060, %v3914
      %v3979 = vmul.f32 %v3062, %v3915
      %v3980 = vmul.f32 %v3064, %v3916
      %v3981 = vmul.f32 %v3066, %v3917
      %v3982 = vmul.f32 %v3068, %v3918
      %v3983 = vmul.f32 %v3070, %v3919
      %v3984 = vmul.f32 %v3072, %v3920
      %v3985 = vmul.f32 %v3074, %v3921
      %v3986 = vmul.f32 %v3076, %v3922
      %v3987 = vmul.f32 %v3078, %v3923
      %v3988 = vmul.f32 %v3080, %v3924
      %v3989 = vmul.f32 %v3082, %v3925
      %v3990 = vmul.f32 %v3084, %v3926
      %v3991 = vmul.f32 %v3086, %v3927
      %v3992 = vmul.f32 %v3088, %v3928
      %v3993 = vmul.f32 %v3090, %v3929
      %v3994 = vmul.f32 %v3092, %v3930
      %v3995 = vmul.f32 %v3094, %v3931
      %v3996 = vmul.f32 %v3096, %v3932
      %v3997 = vmul.f32 %v3098, %v3933
      %v3998 = vmul.f32 %v3100, %v3934
      %v3999 = vmul.f32 %v3102, %v3935
      %v4000 = vmul.f32 %v3104, %v3936
      %4001 = vrot.lane.b32.xlu0 %v2018, 8
      %v4002 = vpop.permute.xlu0 %4001
      %4003 = vrot.lane.b32.xlu0 %v2020, 8
      %v4004 = vpop.permute.xlu0 %4003
      %4005 = vrot.lane.b32.xlu0 %v2022, 8
      %v4006 = vpop.permute.xlu0 %4005
      %4007 = vrot.lane.b32.xlu0 %v2024, 8
      %v4008 = vpop.permute.xlu0 %4007
      %4009 = vrot.lane.b32.xlu0 %v2026, 8
      %v4010 = vpop.permute.xlu0 %4009
      %4011 = vrot.lane.b32.xlu0 %v2028, 8
      %v4012 = vpop.permute.xlu0 %4011
      %4013 = vrot.lane.b32.xlu0 %v2030, 8
      %v4014 = vpop.permute.xlu0 %4013
      %4015 = vrot.lane.b32.xlu0 %v2032, 8
      %v4016 = vpop.permute.xlu0 %4015
      %4017 = vrot.lane.b32.xlu0 %v2034, 8
      %v4018 = vpop.permute.xlu0 %4017
      %4019 = vrot.lane.b32.xlu0 %v2036, 8
      %v4020 = vpop.permute.xlu0 %4019
      %4021 = vrot.lane.b32.xlu0 %v2038, 8
      %v4022 = vpop.permute.xlu0 %4021
      %4023 = vrot.lane.b32.xlu0 %v2040, 8
      %v4024 = vpop.permute.xlu0 %4023
      %4025 = vrot.lane.b32.xlu0 %v2042, 8
      %v4026 = vpop.permute.xlu0 %4025
      %4027 = vrot.lane.b32.xlu0 %v2044, 8
      %v4028 = vpop.permute.xlu0 %4027
      %4029 = vrot.lane.b32.xlu0 %v2046, 8
      %v4030 = vpop.permute.xlu0 %4029
      %4031 = vrot.lane.b32.xlu0 %v2048, 8
      %v4032 = vpop.permute.xlu0 %4031
      %4033 = vrot.lane.b32.xlu0 %v2050, 8
      %v4034 = vpop.permute.xlu0 %4033
      %4035 = vrot.lane.b32.xlu0 %v2052, 8
      %v4036 = vpop.permute.xlu0 %4035
      %4037 = vrot.lane.b32.xlu0 %v2054, 8
      %v4038 = vpop.permute.xlu0 %4037
      %4039 = vrot.lane.b32.xlu0 %v2056, 8
      %v4040 = vpop.permute.xlu0 %4039
      %4041 = vrot.lane.b32.xlu0 %v2058, 8
      %v4042 = vpop.permute.xlu0 %4041
      %4043 = vrot.lane.b32.xlu0 %v2060, 8
      %v4044 = vpop.permute.xlu0 %4043
      %4045 = vrot.lane.b32.xlu0 %v2062, 8
      %v4046 = vpop.permute.xlu0 %4045
      %4047 = vrot.lane.b32.xlu0 %v2064, 8
      %v4048 = vpop.permute.xlu0 %4047
      %4049 = vrot.lane.b32.xlu0 %v2066, 8
      %v4050 = vpop.permute.xlu0 %4049
      %4051 = vrot.lane.b32.xlu0 %v2068, 8
      %v4052 = vpop.permute.xlu0 %4051
      %4053 = vrot.lane.b32.xlu0 %v2070, 8
      %v4054 = vpop.permute.xlu0 %4053
      %4055 = vrot.lane.b32.xlu0 %v2072, 8
      %v4056 = vpop.permute.xlu0 %4055
      %4057 = vrot.lane.b32.xlu0 %v2074, 8
      %v4058 = vpop.permute.xlu0 %4057
      %4059 = vrot.lane.b32.xlu0 %v2076, 8
      %v4060 = vpop.permute.xlu0 %4059
      %4061 = vrot.lane.b32.xlu0 %v2078, 8
      %v4062 = vpop.permute.xlu0 %4061
      %4063 = vrot.lane.b32.xlu0 %v2080, 8
      %v4064 = vpop.permute.xlu0 %4063
      %4065 = vrot.lane.b32.xlu0 %v2082, 8
      %v4066 = vpop.permute.xlu0 %4065
      %4067 = vrot.lane.b32.xlu0 %v2084, 8
      %v4068 = vpop.permute.xlu0 %4067
      %4069 = vrot.lane.b32.xlu0 %v2086, 8
      %v4070 = vpop.permute.xlu0 %4069
      %4071 = vrot.lane.b32.xlu0 %v2088, 8
      %v4072 = vpop.permute.xlu0 %4071
      %4073 = vrot.lane.b32.xlu0 %v2090, 8
      %v4074 = vpop.permute.xlu0 %4073
      %4075 = vrot.lane.b32.xlu0 %v2092, 8
      %v4076 = vpop.permute.xlu0 %4075
      %4077 = vrot.lane.b32.xlu0 %v2094, 8
      %v4078 = vpop.permute.xlu0 %4077
      %4079 = vrot.lane.b32.xlu0 %v2096, 8
      %v4080 = vpop.permute.xlu0 %4079
      %4081 = vrot.lane.b32.xlu0 %v2098, 8
      %v4082 = vpop.permute.xlu0 %4081
      %4083 = vrot.lane.b32.xlu0 %v2100, 8
      %v4084 = vpop.permute.xlu0 %4083
      %4085 = vrot.lane.b32.xlu0 %v2102, 8
      %v4086 = vpop.permute.xlu0 %4085
      %4087 = vrot.lane.b32.xlu0 %v2104, 8
      %v4088 = vpop.permute.xlu0 %4087
      %4089 = vrot.lane.b32.xlu0 %v2106, 8
      %v4090 = vpop.permute.xlu0 %4089
      %4091 = vrot.lane.b32.xlu0 %v2108, 8
      %v4092 = vpop.permute.xlu0 %4091
      %4093 = vrot.lane.b32.xlu0 %v2110, 8
      %v4094 = vpop.permute.xlu0 %4093
      %4095 = vrot.lane.b32.xlu0 %v2112, 8
      %v4096 = vpop.permute.xlu0 %4095
      %4097 = vrot.lane.b32.xlu0 %v2114, 8
      %v4098 = vpop.permute.xlu0 %4097
      %4099 = vrot.lane.b32.xlu0 %v2116, 8
      %v4100 = vpop.permute.xlu0 %4099
      %4101 = vrot.lane.b32.xlu0 %v2118, 8
      %v4102 = vpop.permute.xlu0 %4101
      %4103 = vrot.lane.b32.xlu0 %v2120, 8
      %v4104 = vpop.permute.xlu0 %4103
      %4105 = vrot.lane.b32.xlu0 %v2122, 8
      %v4106 = vpop.permute.xlu0 %4105
      %4107 = vrot.lane.b32.xlu0 %v2124, 8
      %v4108 = vpop.permute.xlu0 %4107
      %4109 = vrot.lane.b32.xlu0 %v2126, 8
      %v4110 = vpop.permute.xlu0 %4109
      %4111 = vrot.lane.b32.xlu0 %v2128, 8
      %v4112 = vpop.permute.xlu0 %4111
      %4113 = vrot.lane.b32.xlu0 %v2130, 8
      %v4114 = vpop.permute.xlu0 %4113
      %4115 = vrot.lane.b32.xlu0 %v2132, 8
      %v4116 = vpop.permute.xlu0 %4115
      %4117 = vrot.lane.b32.xlu0 %v2134, 8
      %v4118 = vpop.permute.xlu0 %4117
      %4119 = vrot.lane.b32.xlu0 %v2136, 8
      %v4120 = vpop.permute.xlu0 %4119
      %4121 = vrot.lane.b32.xlu0 %v2138, 8
      %v4122 = vpop.permute.xlu0 %4121
      %4123 = vrot.lane.b32.xlu0 %v2140, 8
      %v4124 = vpop.permute.xlu0 %4123
      %4125 = vrot.lane.b32.xlu0 %v2142, 8
      %v4126 = vpop.permute.xlu0 %4125
      %4127 = vrot.lane.b32.xlu0 %v2144, 8
      %v4128 = vpop.permute.xlu0 %4127
      %v4129 = vmax.f32 %v2018, %v4002
      %v4130 = vmax.f32 %v2020, %v4004
      %v4131 = vmax.f32 %v2022, %v4006
      %v4132 = vmax.f32 %v2024, %v4008
      %v4133 = vmax.f32 %v2026, %v4010
      %v4134 = vmax.f32 %v2028, %v4012
      %v4135 = vmax.f32 %v2030, %v4014
      %v4136 = vmax.f32 %v2032, %v4016
      %v4137 = vmax.f32 %v2034, %v4018
      %v4138 = vmax.f32 %v2036, %v4020
      %v4139 = vmax.f32 %v2038, %v4022
      %v4140 = vmax.f32 %v2040, %v4024
      %v4141 = vmax.f32 %v2042, %v4026
      %v4142 = vmax.f32 %v2044, %v4028
      %v4143 = vmax.f32 %v2046, %v4030
      %v4144 = vmax.f32 %v2048, %v4032
      %v4145 = vmax.f32 %v2050, %v4034
      %v4146 = vmax.f32 %v2052, %v4036
      %v4147 = vmax.f32 %v2054, %v4038
      %v4148 = vmax.f32 %v2056, %v4040
      %v4149 = vmax.f32 %v2058, %v4042
      %v4150 = vmax.f32 %v2060, %v4044
      %v4151 = vmax.f32 %v2062, %v4046
      %v4152 = vmax.f32 %v2064, %v4048
      %v4153 = vmax.f32 %v2066, %v4050
      %v4154 = vmax.f32 %v2068, %v4052
      %v4155 = vmax.f32 %v2070, %v4054
      %v4156 = vmax.f32 %v2072, %v4056
      %v4157 = vmax.f32 %v2074, %v4058
      %v4158 = vmax.f32 %v2076, %v4060
      %v4159 = vmax.f32 %v2078, %v4062
      %v4160 = vmax.f32 %v2080, %v4064
      %v4161 = vmax.f32 %v2082, %v4066
      %v4162 = vmax.f32 %v2084, %v4068
      %v4163 = vmax.f32 %v2086, %v4070
      %v4164 = vmax.f32 %v2088, %v4072
      %v4165 = vmax.f32 %v2090, %v4074
      %v4166 = vmax.f32 %v2092, %v4076
      %v4167 = vmax.f32 %v2094, %v4078
      %v4168 = vmax.f32 %v2096, %v4080
      %v4169 = vmax.f32 %v2098, %v4082
      %v4170 = vmax.f32 %v2100, %v4084
      %v4171 = vmax.f32 %v2102, %v4086
      %v4172 = vmax.f32 %v2104, %v4088
      %v4173 = vmax.f32 %v2106, %v4090
      %v4174 = vmax.f32 %v2108, %v4092
      %v4175 = vmax.f32 %v2110, %v4094
      %v4176 = vmax.f32 %v2112, %v4096
      %v4177 = vmax.f32 %v2114, %v4098
      %v4178 = vmax.f32 %v2116, %v4100
      %v4179 = vmax.f32 %v2118, %v4102
      %v4180 = vmax.f32 %v2120, %v4104
      %v4181 = vmax.f32 %v2122, %v4106
      %v4182 = vmax.f32 %v2124, %v4108
      %v4183 = vmax.f32 %v2126, %v4110
      %v4184 = vmax.f32 %v2128, %v4112
      %v4185 = vmax.f32 %v2130, %v4114
      %v4186 = vmax.f32 %v2132, %v4116
      %v4187 = vmax.f32 %v2134, %v4118
      %v4188 = vmax.f32 %v2136, %v4120
      %v4189 = vmax.f32 %v2138, %v4122
      %v4190 = vmax.f32 %v2140, %v4124
      %v4191 = vmax.f32 %v2142, %v4126
      %v4192 = vmax.f32 %v2144, %v4128
      %4193 = vrot.lane.b32.xlu0 %v4129, 16
      %v4194 = vpop.permute.xlu0 %4193
      %4195 = vrot.lane.b32.xlu0 %v4130, 16
      %v4196 = vpop.permute.xlu0 %4195
      %4197 = vrot.lane.b32.xlu0 %v4131, 16
      %v4198 = vpop.permute.xlu0 %4197
      %4199 = vrot.lane.b32.xlu0 %v4132, 16
      %v4200 = vpop.permute.xlu0 %4199
      %4201 = vrot.lane.b32.xlu0 %v4133, 16
      %v4202 = vpop.permute.xlu0 %4201
      %4203 = vrot.lane.b32.xlu0 %v4134, 16
      %v4204 = vpop.permute.xlu0 %4203
      %4205 = vrot.lane.b32.xlu0 %v4135, 16
      %v4206 = vpop.permute.xlu0 %4205
      %4207 = vrot.lane.b32.xlu0 %v4136, 16
      %v4208 = vpop.permute.xlu0 %4207
      %4209 = vrot.lane.b32.xlu0 %v4137, 16
      %v4210 = vpop.permute.xlu0 %4209
      %4211 = vrot.lane.b32.xlu0 %v4138, 16
      %v4212 = vpop.permute.xlu0 %4211
      %4213 = vrot.lane.b32.xlu0 %v4139, 16
      %v4214 = vpop.permute.xlu0 %4213
      %4215 = vrot.lane.b32.xlu0 %v4140, 16
      %v4216 = vpop.permute.xlu0 %4215
      %4217 = vrot.lane.b32.xlu0 %v4141, 16
      %v4218 = vpop.permute.xlu0 %4217
      %4219 = vrot.lane.b32.xlu0 %v4142, 16
      %v4220 = vpop.permute.xlu0 %4219
      %4221 = vrot.lane.b32.xlu0 %v4143, 16
      %v4222 = vpop.permute.xlu0 %4221
      %4223 = vrot.lane.b32.xlu0 %v4144, 16
      %v4224 = vpop.permute.xlu0 %4223
      %4225 = vrot.lane.b32.xlu0 %v4145, 16
      %v4226 = vpop.permute.xlu0 %4225
      %4227 = vrot.lane.b32.xlu0 %v4146, 16
      %v4228 = vpop.permute.xlu0 %4227
      %4229 = vrot.lane.b32.xlu0 %v4147, 16
      %v4230 = vpop.permute.xlu0 %4229
      %4231 = vrot.lane.b32.xlu0 %v4148, 16
      %v4232 = vpop.permute.xlu0 %4231
      %4233 = vrot.lane.b32.xlu0 %v4149, 16
      %v4234 = vpop.permute.xlu0 %4233
      %4235 = vrot.lane.b32.xlu0 %v4150, 16
      %v4236 = vpop.permute.xlu0 %4235
      %4237 = vrot.lane.b32.xlu0 %v4151, 16
      %v4238 = vpop.permute.xlu0 %4237
      %4239 = vrot.lane.b32.xlu0 %v4152, 16
      %v4240 = vpop.permute.xlu0 %4239
      %4241 = vrot.lane.b32.xlu0 %v4153, 16
      %v4242 = vpop.permute.xlu0 %4241
      %4243 = vrot.lane.b32.xlu0 %v4154, 16
      %v4244 = vpop.permute.xlu0 %4243
      %4245 = vrot.lane.b32.xlu0 %v4155, 16
      %v4246 = vpop.permute.xlu0 %4245
      %4247 = vrot.lane.b32.xlu0 %v4156, 16
      %v4248 = vpop.permute.xlu0 %4247
      %4249 = vrot.lane.b32.xlu0 %v4157, 16
      %v4250 = vpop.permute.xlu0 %4249
      %4251 = vrot.lane.b32.xlu0 %v4158, 16
      %v4252 = vpop.permute.xlu0 %4251
      %4253 = vrot.lane.b32.xlu0 %v4159, 16
      %v4254 = vpop.permute.xlu0 %4253
      %4255 = vrot.lane.b32.xlu0 %v4160, 16
      %v4256 = vpop.permute.xlu0 %4255
      %4257 = vrot.lane.b32.xlu0 %v4161, 16
      %v4258 = vpop.permute.xlu0 %4257
      %4259 = vrot.lane.b32.xlu0 %v4162, 16
      %v4260 = vpop.permute.xlu0 %4259
      %4261 = vrot.lane.b32.xlu0 %v4163, 16
      %v4262 = vpop.permute.xlu0 %4261
      %4263 = vrot.lane.b32.xlu0 %v4164, 16
      %v4264 = vpop.permute.xlu0 %4263
      %4265 = vrot.lane.b32.xlu0 %v4165, 16
      %v4266 = vpop.permute.xlu0 %4265
      %4267 = vrot.lane.b32.xlu0 %v4166, 16
      %v4268 = vpop.permute.xlu0 %4267
      %4269 = vrot.lane.b32.xlu0 %v4167, 16
      %v4270 = vpop.permute.xlu0 %4269
      %4271 = vrot.lane.b32.xlu0 %v4168, 16
      %v4272 = vpop.permute.xlu0 %4271
      %4273 = vrot.lane.b32.xlu0 %v4169, 16
      %v4274 = vpop.permute.xlu0 %4273
      %4275 = vrot.lane.b32.xlu0 %v4170, 16
      %v4276 = vpop.permute.xlu0 %4275
      %4277 = vrot.lane.b32.xlu0 %v4171, 16
      %v4278 = vpop.permute.xlu0 %4277
      %4279 = vrot.lane.b32.xlu0 %v4172, 16
      %v4280 = vpop.permute.xlu0 %4279
      %4281 = vrot.lane.b32.xlu0 %v4173, 16
      %v4282 = vpop.permute.xlu0 %4281
      %4283 = vrot.lane.b32.xlu0 %v4174, 16
      %v4284 = vpop.permute.xlu0 %4283
      %4285 = vrot.lane.b32.xlu0 %v4175, 16
      %v4286 = vpop.permute.xlu0 %4285
      %4287 = vrot.lane.b32.xlu0 %v4176, 16
      %v4288 = vpop.permute.xlu0 %4287
      %4289 = vrot.lane.b32.xlu0 %v4177, 16
      %v4290 = vpop.permute.xlu0 %4289
      %4291 = vrot.lane.b32.xlu0 %v4178, 16
      %v4292 = vpop.permute.xlu0 %4291
      %4293 = vrot.lane.b32.xlu0 %v4179, 16
      %v4294 = vpop.permute.xlu0 %4293
      %4295 = vrot.lane.b32.xlu0 %v4180, 16
      %v4296 = vpop.permute.xlu0 %4295
      %4297 = vrot.lane.b32.xlu0 %v4181, 16
      %v4298 = vpop.permute.xlu0 %4297
      %4299 = vrot.lane.b32.xlu0 %v4182, 16
      %v4300 = vpop.permute.xlu0 %4299
      %4301 = vrot.lane.b32.xlu0 %v4183, 16
      %v4302 = vpop.permute.xlu0 %4301
      %4303 = vrot.lane.b32.xlu0 %v4184, 16
      %v4304 = vpop.permute.xlu0 %4303
      %4305 = vrot.lane.b32.xlu0 %v4185, 16
      %v4306 = vpop.permute.xlu0 %4305
      %4307 = vrot.lane.b32.xlu0 %v4186, 16
      %v4308 = vpop.permute.xlu0 %4307
      %4309 = vrot.lane.b32.xlu0 %v4187, 16
      %v4310 = vpop.permute.xlu0 %4309
      %4311 = vrot.lane.b32.xlu0 %v4188, 16
      %v4312 = vpop.permute.xlu0 %4311
      %4313 = vrot.lane.b32.xlu0 %v4189, 16
      %v4314 = vpop.permute.xlu0 %4313
      %4315 = vrot.lane.b32.xlu0 %v4190, 16
      %v4316 = vpop.permute.xlu0 %4315
      %4317 = vrot.lane.b32.xlu0 %v4191, 16
      %v4318 = vpop.permute.xlu0 %4317
      %4319 = vrot.lane.b32.xlu0 %v4192, 16
      %v4320 = vpop.permute.xlu0 %4319
      %v4321 = vmax.f32 %v4129, %v4194
      %v4322 = vmax.f32 %v4130, %v4196
      %v4323 = vmax.f32 %v4131, %v4198
      %v4324 = vmax.f32 %v4132, %v4200
      %v4325 = vmax.f32 %v4133, %v4202
      %v4326 = vmax.f32 %v4134, %v4204
      %v4327 = vmax.f32 %v4135, %v4206
      %v4328 = vmax.f32 %v4136, %v4208
      %v4329 = vmax.f32 %v4137, %v4210
      %v4330 = vmax.f32 %v4138, %v4212
      %v4331 = vmax.f32 %v4139, %v4214
      %v4332 = vmax.f32 %v4140, %v4216
      %v4333 = vmax.f32 %v4141, %v4218
      %v4334 = vmax.f32 %v4142, %v4220
      %v4335 = vmax.f32 %v4143, %v4222
      %v4336 = vmax.f32 %v4144, %v4224
      %v4337 = vmax.f32 %v4145, %v4226
      %v4338 = vmax.f32 %v4146, %v4228
      %v4339 = vmax.f32 %v4147, %v4230
      %v4340 = vmax.f32 %v4148, %v4232
      %v4341 = vmax.f32 %v4149, %v4234
      %v4342 = vmax.f32 %v4150, %v4236
      %v4343 = vmax.f32 %v4151, %v4238
      %v4344 = vmax.f32 %v4152, %v4240
      %v4345 = vmax.f32 %v4153, %v4242
      %v4346 = vmax.f32 %v4154, %v4244
      %v4347 = vmax.f32 %v4155, %v4246
      %v4348 = vmax.f32 %v4156, %v4248
      %v4349 = vmax.f32 %v4157, %v4250
      %v4350 = vmax.f32 %v4158, %v4252
      %v4351 = vmax.f32 %v4159, %v4254
      %v4352 = vmax.f32 %v4160, %v4256
      %v4353 = vmax.f32 %v4161, %v4258
      %v4354 = vmax.f32 %v4162, %v4260
      %v4355 = vmax.f32 %v4163, %v4262
      %v4356 = vmax.f32 %v4164, %v4264
      %v4357 = vmax.f32 %v4165, %v4266
      %v4358 = vmax.f32 %v4166, %v4268
      %v4359 = vmax.f32 %v4167, %v4270
      %v4360 = vmax.f32 %v4168, %v4272
      %v4361 = vmax.f32 %v4169, %v4274
      %v4362 = vmax.f32 %v4170, %v4276
      %v4363 = vmax.f32 %v4171, %v4278
      %v4364 = vmax.f32 %v4172, %v4280
      %v4365 = vmax.f32 %v4173, %v4282
      %v4366 = vmax.f32 %v4174, %v4284
      %v4367 = vmax.f32 %v4175, %v4286
      %v4368 = vmax.f32 %v4176, %v4288
      %v4369 = vmax.f32 %v4177, %v4290
      %v4370 = vmax.f32 %v4178, %v4292
      %v4371 = vmax.f32 %v4179, %v4294
      %v4372 = vmax.f32 %v4180, %v4296
      %v4373 = vmax.f32 %v4181, %v4298
      %v4374 = vmax.f32 %v4182, %v4300
      %v4375 = vmax.f32 %v4183, %v4302
      %v4376 = vmax.f32 %v4184, %v4304
      %v4377 = vmax.f32 %v4185, %v4306
      %v4378 = vmax.f32 %v4186, %v4308
      %v4379 = vmax.f32 %v4187, %v4310
      %v4380 = vmax.f32 %v4188, %v4312
      %v4381 = vmax.f32 %v4189, %v4314
      %v4382 = vmax.f32 %v4190, %v4316
      %v4383 = vmax.f32 %v4191, %v4318
      %v4384 = vmax.f32 %v4192, %v4320
      %4385 = vrot.lane.b32.xlu0 %v4321, 32
      %v4386 = vpop.permute.xlu0 %4385
      %4387 = vrot.lane.b32.xlu0 %v4322, 32
      %v4388 = vpop.permute.xlu0 %4387
      %4389 = vrot.lane.b32.xlu0 %v4323, 32
      %v4390 = vpop.permute.xlu0 %4389
      %4391 = vrot.lane.b32.xlu0 %v4324, 32
      %v4392 = vpop.permute.xlu0 %4391
      %4393 = vrot.lane.b32.xlu0 %v4325, 32
      %v4394 = vpop.permute.xlu0 %4393
      %4395 = vrot.lane.b32.xlu0 %v4326, 32
      %v4396 = vpop.permute.xlu0 %4395
      %4397 = vrot.lane.b32.xlu0 %v4327, 32
      %v4398 = vpop.permute.xlu0 %4397
      %4399 = vrot.lane.b32.xlu0 %v4328, 32
      %v4400 = vpop.permute.xlu0 %4399
      %4401 = vrot.lane.b32.xlu0 %v4329, 32
      %v4402 = vpop.permute.xlu0 %4401
      %4403 = vrot.lane.b32.xlu0 %v4330, 32
      %v4404 = vpop.permute.xlu0 %4403
      %4405 = vrot.lane.b32.xlu0 %v4331, 32
      %v4406 = vpop.permute.xlu0 %4405
      %4407 = vrot.lane.b32.xlu0 %v4332, 32
      %v4408 = vpop.permute.xlu0 %4407
      %4409 = vrot.lane.b32.xlu0 %v4333, 32
      %v4410 = vpop.permute.xlu0 %4409
      %4411 = vrot.lane.b32.xlu0 %v4334, 32
      %v4412 = vpop.permute.xlu0 %4411
      %4413 = vrot.lane.b32.xlu0 %v4335, 32
      %v4414 = vpop.permute.xlu0 %4413
      %4415 = vrot.lane.b32.xlu0 %v4336, 32
      %v4416 = vpop.permute.xlu0 %4415
      %4417 = vrot.lane.b32.xlu0 %v4337, 32
      %v4418 = vpop.permute.xlu0 %4417
      %4419 = vrot.lane.b32.xlu0 %v4338, 32
      %v4420 = vpop.permute.xlu0 %4419
      %4421 = vrot.lane.b32.xlu0 %v4339, 32
      %v4422 = vpop.permute.xlu0 %4421
      %4423 = vrot.lane.b32.xlu0 %v4340, 32
      %v4424 = vpop.permute.xlu0 %4423
      %4425 = vrot.lane.b32.xlu0 %v4341, 32
      %v4426 = vpop.permute.xlu0 %4425
      %4427 = vrot.lane.b32.xlu0 %v4342, 32
      %v4428 = vpop.permute.xlu0 %4427
      %4429 = vrot.lane.b32.xlu0 %v4343, 32
      %v4430 = vpop.permute.xlu0 %4429
      %4431 = vrot.lane.b32.xlu0 %v4344, 32
      %v4432 = vpop.permute.xlu0 %4431
      %4433 = vrot.lane.b32.xlu0 %v4345, 32
      %v4434 = vpop.permute.xlu0 %4433
      %4435 = vrot.lane.b32.xlu0 %v4346, 32
      %v4436 = vpop.permute.xlu0 %4435
      %4437 = vrot.lane.b32.xlu0 %v4347, 32
      %v4438 = vpop.permute.xlu0 %4437
      %4439 = vrot.lane.b32.xlu0 %v4348, 32
      %v4440 = vpop.permute.xlu0 %4439
      %4441 = vrot.lane.b32.xlu0 %v4349, 32
      %v4442 = vpop.permute.xlu0 %4441
      %4443 = vrot.lane.b32.xlu0 %v4350, 32
      %v4444 = vpop.permute.xlu0 %4443
      %4445 = vrot.lane.b32.xlu0 %v4351, 32
      %v4446 = vpop.permute.xlu0 %4445
      %4447 = vrot.lane.b32.xlu0 %v4352, 32
      %v4448 = vpop.permute.xlu0 %4447
      %4449 = vrot.lane.b32.xlu0 %v4353, 32
      %v4450 = vpop.permute.xlu0 %4449
      %4451 = vrot.lane.b32.xlu0 %v4354, 32
      %v4452 = vpop.permute.xlu0 %4451
      %4453 = vrot.lane.b32.xlu0 %v4355, 32
      %v4454 = vpop.permute.xlu0 %4453
      %4455 = vrot.lane.b32.xlu0 %v4356, 32
      %v4456 = vpop.permute.xlu0 %4455
      %4457 = vrot.lane.b32.xlu0 %v4357, 32
      %v4458 = vpop.permute.xlu0 %4457
      %4459 = vrot.lane.b32.xlu0 %v4358, 32
      %v4460 = vpop.permute.xlu0 %4459
      %4461 = vrot.lane.b32.xlu0 %v4359, 32
      %v4462 = vpop.permute.xlu0 %4461
      %4463 = vrot.lane.b32.xlu0 %v4360, 32
      %v4464 = vpop.permute.xlu0 %4463
      %4465 = vrot.lane.b32.xlu0 %v4361, 32
      %v4466 = vpop.permute.xlu0 %4465
      %4467 = vrot.lane.b32.xlu0 %v4362, 32
      %v4468 = vpop.permute.xlu0 %4467
      %4469 = vrot.lane.b32.xlu0 %v4363, 32
      %v4470 = vpop.permute.xlu0 %4469
      %4471 = vrot.lane.b32.xlu0 %v4364, 32
      %v4472 = vpop.permute.xlu0 %4471
      %4473 = vrot.lane.b32.xlu0 %v4365, 32
      %v4474 = vpop.permute.xlu0 %4473
      %4475 = vrot.lane.b32.xlu0 %v4366, 32
      %v4476 = vpop.permute.xlu0 %4475
      %4477 = vrot.lane.b32.xlu0 %v4367, 32
      %v4478 = vpop.permute.xlu0 %4477
      %4479 = vrot.lane.b32.xlu0 %v4368, 32
      %v4480 = vpop.permute.xlu0 %4479
      %4481 = vrot.lane.b32.xlu0 %v4369, 32
      %v4482 = vpop.permute.xlu0 %4481
      %4483 = vrot.lane.b32.xlu0 %v4370, 32
      %v4484 = vpop.permute.xlu0 %4483
      %4485 = vrot.lane.b32.xlu0 %v4371, 32
      %v4486 = vpop.permute.xlu0 %4485
      %4487 = vrot.lane.b32.xlu0 %v4372, 32
      %v4488 = vpop.permute.xlu0 %4487
      %4489 = vrot.lane.b32.xlu0 %v4373, 32
      %v4490 = vpop.permute.xlu0 %4489
      %4491 = vrot.lane.b32.xlu0 %v4374, 32
      %v4492 = vpop.permute.xlu0 %4491
      %4493 = vrot.lane.b32.xlu0 %v4375, 32
      %v4494 = vpop.permute.xlu0 %4493
      %4495 = vrot.lane.b32.xlu0 %v4376, 32
      %v4496 = vpop.permute.xlu0 %4495
      %4497 = vrot.lane.b32.xlu0 %v4377, 32
      %v4498 = vpop.permute.xlu0 %4497
      %4499 = vrot.lane.b32.xlu0 %v4378, 32
      %v4500 = vpop.permute.xlu0 %4499
      %4501 = vrot.lane.b32.xlu0 %v4379, 32
      %v4502 = vpop.permute.xlu0 %4501
      %4503 = vrot.lane.b32.xlu0 %v4380, 32
      %v4504 = vpop.permute.xlu0 %4503
      %4505 = vrot.lane.b32.xlu0 %v4381, 32
      %v4506 = vpop.permute.xlu0 %4505
      %4507 = vrot.lane.b32.xlu0 %v4382, 32
      %v4508 = vpop.permute.xlu0 %4507
      %4509 = vrot.lane.b32.xlu0 %v4383, 32
      %v4510 = vpop.permute.xlu0 %4509
      %4511 = vrot.lane.b32.xlu0 %v4384, 32
      %v4512 = vpop.permute.xlu0 %4511
      %v4513 = vmax.f32 %v4321, %v4386
      %v4514 = vmax.f32 %v4322, %v4388
      %v4515 = vmax.f32 %v4323, %v4390
      %v4516 = vmax.f32 %v4324, %v4392
      %v4517 = vmax.f32 %v4325, %v4394
      %v4518 = vmax.f32 %v4326, %v4396
      %v4519 = vmax.f32 %v4327, %v4398
      %v4520 = vmax.f32 %v4328, %v4400
      %v4521 = vmax.f32 %v4329, %v4402
      %v4522 = vmax.f32 %v4330, %v4404
      %v4523 = vmax.f32 %v4331, %v4406
      %v4524 = vmax.f32 %v4332, %v4408
      %v4525 = vmax.f32 %v4333, %v4410
      %v4526 = vmax.f32 %v4334, %v4412
      %v4527 = vmax.f32 %v4335, %v4414
      %v4528 = vmax.f32 %v4336, %v4416
      %v4529 = vmax.f32 %v4337, %v4418
      %v4530 = vmax.f32 %v4338, %v4420
      %v4531 = vmax.f32 %v4339, %v4422
      %v4532 = vmax.f32 %v4340, %v4424
      %v4533 = vmax.f32 %v4341, %v4426
      %v4534 = vmax.f32 %v4342, %v4428
      %v4535 = vmax.f32 %v4343, %v4430
      %v4536 = vmax.f32 %v4344, %v4432
      %v4537 = vmax.f32 %v4345, %v4434
      %v4538 = vmax.f32 %v4346, %v4436
      %v4539 = vmax.f32 %v4347, %v4438
      %v4540 = vmax.f32 %v4348, %v4440
      %v4541 = vmax.f32 %v4349, %v4442
      %v4542 = vmax.f32 %v4350, %v4444
      %v4543 = vmax.f32 %v4351, %v4446
      %v4544 = vmax.f32 %v4352, %v4448
      %v4545 = vmax.f32 %v4353, %v4450
      %v4546 = vmax.f32 %v4354, %v4452
      %v4547 = vmax.f32 %v4355, %v4454
      %v4548 = vmax.f32 %v4356, %v4456
      %v4549 = vmax.f32 %v4357, %v4458
      %v4550 = vmax.f32 %v4358, %v4460
      %v4551 = vmax.f32 %v4359, %v4462
      %v4552 = vmax.f32 %v4360, %v4464
      %v4553 = vmax.f32 %v4361, %v4466
      %v4554 = vmax.f32 %v4362, %v4468
      %v4555 = vmax.f32 %v4363, %v4470
      %v4556 = vmax.f32 %v4364, %v4472
      %v4557 = vmax.f32 %v4365, %v4474
      %v4558 = vmax.f32 %v4366, %v4476
      %v4559 = vmax.f32 %v4367, %v4478
      %v4560 = vmax.f32 %v4368, %v4480
      %v4561 = vmax.f32 %v4369, %v4482
      %v4562 = vmax.f32 %v4370, %v4484
      %v4563 = vmax.f32 %v4371, %v4486
      %v4564 = vmax.f32 %v4372, %v4488
      %v4565 = vmax.f32 %v4373, %v4490
      %v4566 = vmax.f32 %v4374, %v4492
      %v4567 = vmax.f32 %v4375, %v4494
      %v4568 = vmax.f32 %v4376, %v4496
      %v4569 = vmax.f32 %v4377, %v4498
      %v4570 = vmax.f32 %v4378, %v4500
      %v4571 = vmax.f32 %v4379, %v4502
      %v4572 = vmax.f32 %v4380, %v4504
      %v4573 = vmax.f32 %v4381, %v4506
      %v4574 = vmax.f32 %v4382, %v4508
      %v4575 = vmax.f32 %v4383, %v4510
      %v4576 = vmax.f32 %v4384, %v4512
      %4577 = vrot.lane.b32.xlu0 %v4513, 64
      %v4578 = vpop.permute.xlu0 %4577
      %4579 = vrot.lane.b32.xlu0 %v4514, 64
      %v4580 = vpop.permute.xlu0 %4579
      %4581 = vrot.lane.b32.xlu0 %v4515, 64
      %v4582 = vpop.permute.xlu0 %4581
      %4583 = vrot.lane.b32.xlu0 %v4516, 64
      %v4584 = vpop.permute.xlu0 %4583
      %4585 = vrot.lane.b32.xlu0 %v4517, 64
      %v4586 = vpop.permute.xlu0 %4585
      %4587 = vrot.lane.b32.xlu0 %v4518, 64
      %v4588 = vpop.permute.xlu0 %4587
      %4589 = vrot.lane.b32.xlu0 %v4519, 64
      %v4590 = vpop.permute.xlu0 %4589
      %4591 = vrot.lane.b32.xlu0 %v4520, 64
      %v4592 = vpop.permute.xlu0 %4591
      %4593 = vrot.lane.b32.xlu0 %v4521, 64
      %v4594 = vpop.permute.xlu0 %4593
      %4595 = vrot.lane.b32.xlu0 %v4522, 64
      %v4596 = vpop.permute.xlu0 %4595
      %4597 = vrot.lane.b32.xlu0 %v4523, 64
      %v4598 = vpop.permute.xlu0 %4597
      %4599 = vrot.lane.b32.xlu0 %v4524, 64
      %v4600 = vpop.permute.xlu0 %4599
      %4601 = vrot.lane.b32.xlu0 %v4525, 64
      %v4602 = vpop.permute.xlu0 %4601
      %4603 = vrot.lane.b32.xlu0 %v4526, 64
      %v4604 = vpop.permute.xlu0 %4603
      %4605 = vrot.lane.b32.xlu0 %v4527, 64
      %v4606 = vpop.permute.xlu0 %4605
      %4607 = vrot.lane.b32.xlu0 %v4528, 64
      %v4608 = vpop.permute.xlu0 %4607
      %4609 = vrot.lane.b32.xlu0 %v4529, 64
      %v4610 = vpop.permute.xlu0 %4609
      %4611 = vrot.lane.b32.xlu0 %v4530, 64
      %v4612 = vpop.permute.xlu0 %4611
      %4613 = vrot.lane.b32.xlu0 %v4531, 64
      %v4614 = vpop.permute.xlu0 %4613
      %4615 = vrot.lane.b32.xlu0 %v4532, 64
      %v4616 = vpop.permute.xlu0 %4615
      %4617 = vrot.lane.b32.xlu0 %v4533, 64
      %v4618 = vpop.permute.xlu0 %4617
      %4619 = vrot.lane.b32.xlu0 %v4534, 64
      %v4620 = vpop.permute.xlu0 %4619
      %4621 = vrot.lane.b32.xlu0 %v4535, 64
      %v4622 = vpop.permute.xlu0 %4621
      %4623 = vrot.lane.b32.xlu0 %v4536, 64
      %v4624 = vpop.permute.xlu0 %4623
      %4625 = vrot.lane.b32.xlu0 %v4537, 64
      %v4626 = vpop.permute.xlu0 %4625
      %4627 = vrot.lane.b32.xlu0 %v4538, 64
      %v4628 = vpop.permute.xlu0 %4627
      %4629 = vrot.lane.b32.xlu0 %v4539, 64
      %v4630 = vpop.permute.xlu0 %4629
      %4631 = vrot.lane.b32.xlu0 %v4540, 64
      %v4632 = vpop.permute.xlu0 %4631
      %4633 = vrot.lane.b32.xlu0 %v4541, 64
      %v4634 = vpop.permute.xlu0 %4633
      %4635 = vrot.lane.b32.xlu0 %v4542, 64
      %v4636 = vpop.permute.xlu0 %4635
      %4637 = vrot.lane.b32.xlu0 %v4543, 64
      %v4638 = vpop.permute.xlu0 %4637
      %4639 = vrot.lane.b32.xlu0 %v4544, 64
      %v4640 = vpop.permute.xlu0 %4639
      %4641 = vrot.lane.b32.xlu0 %v4545, 64
      %v4642 = vpop.permute.xlu0 %4641
      %4643 = vrot.lane.b32.xlu0 %v4546, 64
      %v4644 = vpop.permute.xlu0 %4643
      %4645 = vrot.lane.b32.xlu0 %v4547, 64
      %v4646 = vpop.permute.xlu0 %4645
      %4647 = vrot.lane.b32.xlu0 %v4548, 64
      %v4648 = vpop.permute.xlu0 %4647
      %4649 = vrot.lane.b32.xlu0 %v4549, 64
      %v4650 = vpop.permute.xlu0 %4649
      %4651 = vrot.lane.b32.xlu0 %v4550, 64
      %v4652 = vpop.permute.xlu0 %4651
      %4653 = vrot.lane.b32.xlu0 %v4551, 64
      %v4654 = vpop.permute.xlu0 %4653
      %4655 = vrot.lane.b32.xlu0 %v4552, 64
      %v4656 = vpop.permute.xlu0 %4655
      %4657 = vrot.lane.b32.xlu0 %v4553, 64
      %v4658 = vpop.permute.xlu0 %4657
      %4659 = vrot.lane.b32.xlu0 %v4554, 64
      %v4660 = vpop.permute.xlu0 %4659
      %4661 = vrot.lane.b32.xlu0 %v4555, 64
      %v4662 = vpop.permute.xlu0 %4661
      %4663 = vrot.lane.b32.xlu0 %v4556, 64
      %v4664 = vpop.permute.xlu0 %4663
      %4665 = vrot.lane.b32.xlu0 %v4557, 64
      %v4666 = vpop.permute.xlu0 %4665
      %4667 = vrot.lane.b32.xlu0 %v4558, 64
      %v4668 = vpop.permute.xlu0 %4667
      %4669 = vrot.lane.b32.xlu0 %v4559, 64
      %v4670 = vpop.permute.xlu0 %4669
      %4671 = vrot.lane.b32.xlu0 %v4560, 64
      %v4672 = vpop.permute.xlu0 %4671
      %4673 = vrot.lane.b32.xlu0 %v4561, 64
      %v4674 = vpop.permute.xlu0 %4673
      %4675 = vrot.lane.b32.xlu0 %v4562, 64
      %v4676 = vpop.permute.xlu0 %4675
      %4677 = vrot.lane.b32.xlu0 %v4563, 64
      %v4678 = vpop.permute.xlu0 %4677
      %4679 = vrot.lane.b32.xlu0 %v4564, 64
      %v4680 = vpop.permute.xlu0 %4679
      %4681 = vrot.lane.b32.xlu0 %v4565, 64
      %v4682 = vpop.permute.xlu0 %4681
      %4683 = vrot.lane.b32.xlu0 %v4566, 64
      %v4684 = vpop.permute.xlu0 %4683
      %4685 = vrot.lane.b32.xlu0 %v4567, 64
      %v4686 = vpop.permute.xlu0 %4685
      %4687 = vrot.lane.b32.xlu0 %v4568, 64
      %v4688 = vpop.permute.xlu0 %4687
      %4689 = vrot.lane.b32.xlu0 %v4569, 64
      %v4690 = vpop.permute.xlu0 %4689
      %4691 = vrot.lane.b32.xlu0 %v4570, 64
      %v4692 = vpop.permute.xlu0 %4691
      %4693 = vrot.lane.b32.xlu0 %v4571, 64
      %v4694 = vpop.permute.xlu0 %4693
      %4695 = vrot.lane.b32.xlu0 %v4572, 64
      %v4696 = vpop.permute.xlu0 %4695
      %4697 = vrot.lane.b32.xlu0 %v4573, 64
      %v4698 = vpop.permute.xlu0 %4697
      %4699 = vrot.lane.b32.xlu0 %v4574, 64
      %v4700 = vpop.permute.xlu0 %4699
      %4701 = vrot.lane.b32.xlu0 %v4575, 64
      %v4702 = vpop.permute.xlu0 %4701
      %4703 = vrot.lane.b32.xlu0 %v4576, 64
      %v4704 = vpop.permute.xlu0 %4703
      %v4705 = vmax.f32 %v4513, %v4578
      %v4706 = vmax.f32 %v4514, %v4580
      %v4707 = vmax.f32 %v4515, %v4582
      %v4708 = vmax.f32 %v4516, %v4584
      %v4709 = vmax.f32 %v4517, %v4586
      %v4710 = vmax.f32 %v4518, %v4588
      %v4711 = vmax.f32 %v4519, %v4590
      %v4712 = vmax.f32 %v4520, %v4592
      %v4713 = vmax.f32 %v4521, %v4594
      %v4714 = vmax.f32 %v4522, %v4596
      %v4715 = vmax.f32 %v4523, %v4598
      %v4716 = vmax.f32 %v4524, %v4600
      %v4717 = vmax.f32 %v4525, %v4602
      %v4718 = vmax.f32 %v4526, %v4604
      %v4719 = vmax.f32 %v4527, %v4606
      %v4720 = vmax.f32 %v4528, %v4608
      %v4721 = vmax.f32 %v4529, %v4610
      %v4722 = vmax.f32 %v4530, %v4612
      %v4723 = vmax.f32 %v4531, %v4614
      %v4724 = vmax.f32 %v4532, %v4616
      %v4725 = vmax.f32 %v4533, %v4618
      %v4726 = vmax.f32 %v4534, %v4620
      %v4727 = vmax.f32 %v4535, %v4622
      %v4728 = vmax.f32 %v4536, %v4624
      %v4729 = vmax.f32 %v4537, %v4626
      %v4730 = vmax.f32 %v4538, %v4628
      %v4731 = vmax.f32 %v4539, %v4630
      %v4732 = vmax.f32 %v4540, %v4632
      %v4733 = vmax.f32 %v4541, %v4634
      %v4734 = vmax.f32 %v4542, %v4636
      %v4735 = vmax.f32 %v4543, %v4638
      %v4736 = vmax.f32 %v4544, %v4640
      %v4737 = vmax.f32 %v4545, %v4642
      %v4738 = vmax.f32 %v4546, %v4644
      %v4739 = vmax.f32 %v4547, %v4646
      %v4740 = vmax.f32 %v4548, %v4648
      %v4741 = vmax.f32 %v4549, %v4650
      %v4742 = vmax.f32 %v4550, %v4652
      %v4743 = vmax.f32 %v4551, %v4654
      %v4744 = vmax.f32 %v4552, %v4656
      %v4745 = vmax.f32 %v4553, %v4658
      %v4746 = vmax.f32 %v4554, %v4660
      %v4747 = vmax.f32 %v4555, %v4662
      %v4748 = vmax.f32 %v4556, %v4664
      %v4749 = vmax.f32 %v4557, %v4666
      %v4750 = vmax.f32 %v4558, %v4668
      %v4751 = vmax.f32 %v4559, %v4670
      %v4752 = vmax.f32 %v4560, %v4672
      %v4753 = vmax.f32 %v4561, %v4674
      %v4754 = vmax.f32 %v4562, %v4676
      %v4755 = vmax.f32 %v4563, %v4678
      %v4756 = vmax.f32 %v4564, %v4680
      %v4757 = vmax.f32 %v4565, %v4682
      %v4758 = vmax.f32 %v4566, %v4684
      %v4759 = vmax.f32 %v4567, %v4686
      %v4760 = vmax.f32 %v4568, %v4688
      %v4761 = vmax.f32 %v4569, %v4690
      %v4762 = vmax.f32 %v4570, %v4692
      %v4763 = vmax.f32 %v4571, %v4694
      %v4764 = vmax.f32 %v4572, %v4696
      %v4765 = vmax.f32 %v4573, %v4698
      %v4766 = vmax.f32 %v4574, %v4700
      %v4767 = vmax.f32 %v4575, %v4702
      %v4768 = vmax.f32 %v4576, %v4704
      %v4769 = vsub.f32 %v2018, %v4705
      %v4770 = vsub.f32 %v2020, %v4706
      %v4771 = vsub.f32 %v2022, %v4707
      %v4772 = vsub.f32 %v2024, %v4708
      %v4773 = vsub.f32 %v2026, %v4709
      %v4774 = vsub.f32 %v2028, %v4710
      %v4775 = vsub.f32 %v2030, %v4711
      %v4776 = vsub.f32 %v2032, %v4712
      %v4777 = vsub.f32 %v2034, %v4713
      %v4778 = vsub.f32 %v2036, %v4714
      %v4779 = vsub.f32 %v2038, %v4715
      %v4780 = vsub.f32 %v2040, %v4716
      %v4781 = vsub.f32 %v2042, %v4717
      %v4782 = vsub.f32 %v2044, %v4718
      %v4783 = vsub.f32 %v2046, %v4719
      %v4784 = vsub.f32 %v2048, %v4720
      %v4785 = vsub.f32 %v2050, %v4721
      %v4786 = vsub.f32 %v2052, %v4722
      %v4787 = vsub.f32 %v2054, %v4723
      %v4788 = vsub.f32 %v2056, %v4724
      %v4789 = vsub.f32 %v2058, %v4725
      %v4790 = vsub.f32 %v2060, %v4726
      %v4791 = vsub.f32 %v2062, %v4727
      %v4792 = vsub.f32 %v2064, %v4728
      %v4793 = vsub.f32 %v2066, %v4729
      %v4794 = vsub.f32 %v2068, %v4730
      %v4795 = vsub.f32 %v2070, %v4731
      %v4796 = vsub.f32 %v2072, %v4732
      %v4797 = vsub.f32 %v2074, %v4733
      %v4798 = vsub.f32 %v2076, %v4734
      %v4799 = vsub.f32 %v2078, %v4735
      %v4800 = vsub.f32 %v2080, %v4736
      %v4801 = vsub.f32 %v2082, %v4737
      %v4802 = vsub.f32 %v2084, %v4738
      %v4803 = vsub.f32 %v2086, %v4739
      %v4804 = vsub.f32 %v2088, %v4740
      %v4805 = vsub.f32 %v2090, %v4741
      %v4806 = vsub.f32 %v2092, %v4742
      %v4807 = vsub.f32 %v2094, %v4743
      %v4808 = vsub.f32 %v2096, %v4744
      %v4809 = vsub.f32 %v2098, %v4745
      %v4810 = vsub.f32 %v2100, %v4746
      %v4811 = vsub.f32 %v2102, %v4747
      %v4812 = vsub.f32 %v2104, %v4748
      %v4813 = vsub.f32 %v2106, %v4749
      %v4814 = vsub.f32 %v2108, %v4750
      %v4815 = vsub.f32 %v2110, %v4751
      %v4816 = vsub.f32 %v2112, %v4752
      %v4817 = vsub.f32 %v2114, %v4753
      %v4818 = vsub.f32 %v2116, %v4754
      %v4819 = vsub.f32 %v2118, %v4755
      %v4820 = vsub.f32 %v2120, %v4756
      %v4821 = vsub.f32 %v2122, %v4757
      %v4822 = vsub.f32 %v2124, %v4758
      %v4823 = vsub.f32 %v2126, %v4759
      %v4824 = vsub.f32 %v2128, %v4760
      %v4825 = vsub.f32 %v2130, %v4761
      %v4826 = vsub.f32 %v2132, %v4762
      %v4827 = vsub.f32 %v2134, %v4763
      %v4828 = vsub.f32 %v2136, %v4764
      %v4829 = vsub.f32 %v2138, %v4765
      %v4830 = vsub.f32 %v2140, %v4766
      %v4831 = vsub.f32 %v2142, %v4767
      %v4832 = vsub.f32 %v2144, %v4768
      %v4833 = vmul.f32 %v4769, 1.442695
      %v4834 = vpow.pop %v4833
      %v4835 = vmul.f32 %v4770, 1.442695
      %v4836 = vpow.pop %v4835
      %v4837 = vmul.f32 %v4771, 1.442695
      %v4838 = vpow.pop %v4837
      %v4839 = vmul.f32 %v4772, 1.442695
      %v4840 = vpow.pop %v4839
      %v4841 = vmul.f32 %v4773, 1.442695
      %v4842 = vpow.pop %v4841
      %v4843 = vmul.f32 %v4774, 1.442695
      %v4844 = vpow.pop %v4843
      %v4845 = vmul.f32 %v4775, 1.442695
      %v4846 = vpow.pop %v4845
      %v4847 = vmul.f32 %v4776, 1.442695
      %v4848 = vpow.pop %v4847
      %v4849 = vmul.f32 %v4777, 1.442695
      %v4850 = vpow.pop %v4849
      %v4851 = vmul.f32 %v4778, 1.442695
      %v4852 = vpow.pop %v4851
      %v4853 = vmul.f32 %v4779, 1.442695
      %v4854 = vpow.pop %v4853
      %v4855 = vmul.f32 %v4780, 1.442695
      %v4856 = vpow.pop %v4855
      %v4857 = vmul.f32 %v4781, 1.442695
      %v4858 = vpow.pop %v4857
      %v4859 = vmul.f32 %v4782, 1.442695
      %v4860 = vpow.pop %v4859
      %v4861 = vmul.f32 %v4783, 1.442695
      %v4862 = vpow.pop %v4861
      %v4863 = vmul.f32 %v4784, 1.442695
      %v4864 = vpow.pop %v4863
      %v4865 = vmul.f32 %v4785, 1.442695
      %v4866 = vpow.pop %v4865
      %v4867 = vmul.f32 %v4786, 1.442695
      %v4868 = vpow.pop %v4867
      %v4869 = vmul.f32 %v4787, 1.442695
      %v4870 = vpow.pop %v4869
      %v4871 = vmul.f32 %v4788, 1.442695
      %v4872 = vpow.pop %v4871
      %v4873 = vmul.f32 %v4789, 1.442695
      %v4874 = vpow.pop %v4873
      %v4875 = vmul.f32 %v4790, 1.442695
      %v4876 = vpow.pop %v4875
      %v4877 = vmul.f32 %v4791, 1.442695
      %v4878 = vpow.pop %v4877
      %v4879 = vmul.f32 %v4792, 1.442695
      %v4880 = vpow.pop %v4879
      %v4881 = vmul.f32 %v4793, 1.442695
      %v4882 = vpow.pop %v4881
      %v4883 = vmul.f32 %v4794, 1.442695
      %v4884 = vpow.pop %v4883
      %v4885 = vmul.f32 %v4795, 1.442695
      %v4886 = vpow.pop %v4885
      %v4887 = vmul.f32 %v4796, 1.442695
      %v4888 = vpow.pop %v4887
      %v4889 = vmul.f32 %v4797, 1.442695
      %v4890 = vpow.pop %v4889
      %v4891 = vmul.f32 %v4798, 1.442695
      %v4892 = vpow.pop %v4891
      %v4893 = vmul.f32 %v4799, 1.442695
      %v4894 = vpow.pop %v4893
      %v4895 = vmul.f32 %v4800, 1.442695
      %v4896 = vpow.pop %v4895
      %v4897 = vmul.f32 %v4801, 1.442695
      %v4898 = vpow.pop %v4897
      %v4899 = vmul.f32 %v4802, 1.442695
      %v4900 = vpow.pop %v4899
      %v4901 = vmul.f32 %v4803, 1.442695
      %v4902 = vpow.pop %v4901
      %v4903 = vmul.f32 %v4804, 1.442695
      %v4904 = vpow.pop %v4903
      %v4905 = vmul.f32 %v4805, 1.442695
      %v4906 = vpow.pop %v4905
      %v4907 = vmul.f32 %v4806, 1.442695
      %v4908 = vpow.pop %v4907
      %v4909 = vmul.f32 %v4807, 1.442695
      %v4910 = vpow.pop %v4909
      %v4911 = vmul.f32 %v4808, 1.442695
      %v4912 = vpow.pop %v4911
      %v4913 = vmul.f32 %v4809, 1.442695
      %v4914 = vpow.pop %v4913
      %v4915 = vmul.f32 %v4810, 1.442695
      %v4916 = vpow.pop %v4915
      %v4917 = vmul.f32 %v4811, 1.442695
      %v4918 = vpow.pop %v4917
      %v4919 = vmul.f32 %v4812, 1.442695
      %v4920 = vpow.pop %v4919
      %v4921 = vmul.f32 %v4813, 1.442695
      %v4922 = vpow.pop %v4921
      %v4923 = vmul.f32 %v4814, 1.442695
      %v4924 = vpow.pop %v4923
      %v4925 = vmul.f32 %v4815, 1.442695
      %v4926 = vpow.pop %v4925
      %v4927 = vmul.f32 %v4816, 1.442695
      %v4928 = vpow.pop %v4927
      %v4929 = vmul.f32 %v4817, 1.442695
      %v4930 = vpow.pop %v4929
      %v4931 = vmul.f32 %v4818, 1.442695
      %v4932 = vpow.pop %v4931
      %v4933 = vmul.f32 %v4819, 1.442695
      %v4934 = vpow.pop %v4933
      %v4935 = vmul.f32 %v4820, 1.442695
      %v4936 = vpow.pop %v4935
      %v4937 = vmul.f32 %v4821, 1.442695
      %v4938 = vpow.pop %v4937
      %v4939 = vmul.f32 %v4822, 1.442695
      %v4940 = vpow.pop %v4939
      %v4941 = vmul.f32 %v4823, 1.442695
      %v4942 = vpow.pop %v4941
      %v4943 = vmul.f32 %v4824, 1.442695
      %v4944 = vpow.pop %v4943
      %v4945 = vmul.f32 %v4825, 1.442695
      %v4946 = vpow.pop %v4945
      %v4947 = vmul.f32 %v4826, 1.442695
      %v4948 = vpow.pop %v4947
      %v4949 = vmul.f32 %v4827, 1.442695
      %v4950 = vpow.pop %v4949
      %v4951 = vmul.f32 %v4828, 1.442695
      %v4952 = vpow.pop %v4951
      %v4953 = vmul.f32 %v4829, 1.442695
      %v4954 = vpow.pop %v4953
      %v4955 = vmul.f32 %v4830, 1.442695
      %v4956 = vpow.pop %v4955
      %v4957 = vmul.f32 %v4831, 1.442695
      %v4958 = vpow.pop %v4957
      %v4959 = vmul.f32 %v4832, 1.442695
      %v4960 = vpow.pop %v4959
      %4961 = vrot.lane.b32.xlu0 %v4834, 8
      %v4962 = vpop.permute.xlu0 %4961
      %4963 = vrot.lane.b32.xlu0 %v4836, 8
      %v4964 = vpop.permute.xlu0 %4963
      %4965 = vrot.lane.b32.xlu0 %v4838, 8
      %v4966 = vpop.permute.xlu0 %4965
      %4967 = vrot.lane.b32.xlu0 %v4840, 8
      %v4968 = vpop.permute.xlu0 %4967
      %4969 = vrot.lane.b32.xlu0 %v4842, 8
      %v4970 = vpop.permute.xlu0 %4969
      %4971 = vrot.lane.b32.xlu0 %v4844, 8
      %v4972 = vpop.permute.xlu0 %4971
      %4973 = vrot.lane.b32.xlu0 %v4846, 8
      %v4974 = vpop.permute.xlu0 %4973
      %4975 = vrot.lane.b32.xlu0 %v4848, 8
      %v4976 = vpop.permute.xlu0 %4975
      %4977 = vrot.lane.b32.xlu0 %v4850, 8
      %v4978 = vpop.permute.xlu0 %4977
      %4979 = vrot.lane.b32.xlu0 %v4852, 8
      %v4980 = vpop.permute.xlu0 %4979
      %4981 = vrot.lane.b32.xlu0 %v4854, 8
      %v4982 = vpop.permute.xlu0 %4981
      %4983 = vrot.lane.b32.xlu0 %v4856, 8
      %v4984 = vpop.permute.xlu0 %4983
      %4985 = vrot.lane.b32.xlu0 %v4858, 8
      %v4986 = vpop.permute.xlu0 %4985
      %4987 = vrot.lane.b32.xlu0 %v4860, 8
      %v4988 = vpop.permute.xlu0 %4987
      %4989 = vrot.lane.b32.xlu0 %v4862, 8
      %v4990 = vpop.permute.xlu0 %4989
      %4991 = vrot.lane.b32.xlu0 %v4864, 8
      %v4992 = vpop.permute.xlu0 %4991
      %4993 = vrot.lane.b32.xlu0 %v4866, 8
      %v4994 = vpop.permute.xlu0 %4993
      %4995 = vrot.lane.b32.xlu0 %v4868, 8
      %v4996 = vpop.permute.xlu0 %4995
      %4997 = vrot.lane.b32.xlu0 %v4870, 8
      %v4998 = vpop.permute.xlu0 %4997
      %4999 = vrot.lane.b32.xlu0 %v4872, 8
      %v5000 = vpop.permute.xlu0 %4999
      %5001 = vrot.lane.b32.xlu0 %v4874, 8
      %v5002 = vpop.permute.xlu0 %5001
      %5003 = vrot.lane.b32.xlu0 %v4876, 8
      %v5004 = vpop.permute.xlu0 %5003
      %5005 = vrot.lane.b32.xlu0 %v4878, 8
      %v5006 = vpop.permute.xlu0 %5005
      %5007 = vrot.lane.b32.xlu0 %v4880, 8
      %v5008 = vpop.permute.xlu0 %5007
      %5009 = vrot.lane.b32.xlu0 %v4882, 8
      %v5010 = vpop.permute.xlu0 %5009
      %5011 = vrot.lane.b32.xlu0 %v4884, 8
      %v5012 = vpop.permute.xlu0 %5011
      %5013 = vrot.lane.b32.xlu0 %v4886, 8
      %v5014 = vpop.permute.xlu0 %5013
      %5015 = vrot.lane.b32.xlu0 %v4888, 8
      %v5016 = vpop.permute.xlu0 %5015
      %5017 = vrot.lane.b32.xlu0 %v4890, 8
      %v5018 = vpop.permute.xlu0 %5017
      %5019 = vrot.lane.b32.xlu0 %v4892, 8
      %v5020 = vpop.permute.xlu0 %5019
      %5021 = vrot.lane.b32.xlu0 %v4894, 8
      %v5022 = vpop.permute.xlu0 %5021
      %5023 = vrot.lane.b32.xlu0 %v4896, 8
      %v5024 = vpop.permute.xlu0 %5023
      %5025 = vrot.lane.b32.xlu0 %v4898, 8
      %v5026 = vpop.permute.xlu0 %5025
      %5027 = vrot.lane.b32.xlu0 %v4900, 8
      %v5028 = vpop.permute.xlu0 %5027
      %5029 = vrot.lane.b32.xlu0 %v4902, 8
      %v5030 = vpop.permute.xlu0 %5029
      %5031 = vrot.lane.b32.xlu0 %v4904, 8
      %v5032 = vpop.permute.xlu0 %5031
      %5033 = vrot.lane.b32.xlu0 %v4906, 8
      %v5034 = vpop.permute.xlu0 %5033
      %5035 = vrot.lane.b32.xlu0 %v4908, 8
      %v5036 = vpop.permute.xlu0 %5035
      %5037 = vrot.lane.b32.xlu0 %v4910, 8
      %v5038 = vpop.permute.xlu0 %5037
      %5039 = vrot.lane.b32.xlu0 %v4912, 8
      %v5040 = vpop.permute.xlu0 %5039
      %5041 = vrot.lane.b32.xlu0 %v4914, 8
      %v5042 = vpop.permute.xlu0 %5041
      %5043 = vrot.lane.b32.xlu0 %v4916, 8
      %v5044 = vpop.permute.xlu0 %5043
      %5045 = vrot.lane.b32.xlu0 %v4918, 8
      %v5046 = vpop.permute.xlu0 %5045
      %5047 = vrot.lane.b32.xlu0 %v4920, 8
      %v5048 = vpop.permute.xlu0 %5047
      %5049 = vrot.lane.b32.xlu0 %v4922, 8
      %v5050 = vpop.permute.xlu0 %5049
      %5051 = vrot.lane.b32.xlu0 %v4924, 8
      %v5052 = vpop.permute.xlu0 %5051
      %5053 = vrot.lane.b32.xlu0 %v4926, 8
      %v5054 = vpop.permute.xlu0 %5053
      %5055 = vrot.lane.b32.xlu0 %v4928, 8
      %v5056 = vpop.permute.xlu0 %5055
      %5057 = vrot.lane.b32.xlu0 %v4930, 8
      %v5058 = vpop.permute.xlu0 %5057
      %5059 = vrot.lane.b32.xlu0 %v4932, 8
      %v5060 = vpop.permute.xlu0 %5059
      %5061 = vrot.lane.b32.xlu0 %v4934, 8
      %v5062 = vpop.permute.xlu0 %5061
      %5063 = vrot.lane.b32.xlu0 %v4936, 8
      %v5064 = vpop.permute.xlu0 %5063
      %5065 = vrot.lane.b32.xlu0 %v4938, 8
      %v5066 = vpop.permute.xlu0 %5065
      %5067 = vrot.lane.b32.xlu0 %v4940, 8
      %v5068 = vpop.permute.xlu0 %5067
      %5069 = vrot.lane.b32.xlu0 %v4942, 8
      %v5070 = vpop.permute.xlu0 %5069
      %5071 = vrot.lane.b32.xlu0 %v4944, 8
      %v5072 = vpop.permute.xlu0 %5071
      %5073 = vrot.lane.b32.xlu0 %v4946, 8
      %v5074 = vpop.permute.xlu0 %5073
      %5075 = vrot.lane.b32.xlu0 %v4948, 8
      %v5076 = vpop.permute.xlu0 %5075
      %5077 = vrot.lane.b32.xlu0 %v4950, 8
      %v5078 = vpop.permute.xlu0 %5077
      %5079 = vrot.lane.b32.xlu0 %v4952, 8
      %v5080 = vpop.permute.xlu0 %5079
      %5081 = vrot.lane.b32.xlu0 %v4954, 8
      %v5082 = vpop.permute.xlu0 %5081
      %5083 = vrot.lane.b32.xlu0 %v4956, 8
      %v5084 = vpop.permute.xlu0 %5083
      %5085 = vrot.lane.b32.xlu0 %v4958, 8
      %v5086 = vpop.permute.xlu0 %5085
      %5087 = vrot.lane.b32.xlu0 %v4960, 8
      %v5088 = vpop.permute.xlu0 %5087
      %v5089 = vadd.f32 %v4834, %v4962
      %v5090 = vadd.f32 %v4836, %v4964
      %v5091 = vadd.f32 %v4838, %v4966
      %v5092 = vadd.f32 %v4840, %v4968
      %v5093 = vadd.f32 %v4842, %v4970
      %v5094 = vadd.f32 %v4844, %v4972
      %v5095 = vadd.f32 %v4846, %v4974
      %v5096 = vadd.f32 %v4848, %v4976
      %v5097 = vadd.f32 %v4850, %v4978
      %v5098 = vadd.f32 %v4852, %v4980
      %v5099 = vadd.f32 %v4854, %v4982
      %v5100 = vadd.f32 %v4856, %v4984
      %v5101 = vadd.f32 %v4858, %v4986
      %v5102 = vadd.f32 %v4860, %v4988
      %v5103 = vadd.f32 %v4862, %v4990
      %v5104 = vadd.f32 %v4864, %v4992
      %v5105 = vadd.f32 %v4866, %v4994
      %v5106 = vadd.f32 %v4868, %v4996
      %v5107 = vadd.f32 %v4870, %v4998
      %v5108 = vadd.f32 %v4872, %v5000
      %v5109 = vadd.f32 %v4874, %v5002
      %v5110 = vadd.f32 %v4876, %v5004
      %v5111 = vadd.f32 %v4878, %v5006
      %v5112 = vadd.f32 %v4880, %v5008
      %v5113 = vadd.f32 %v4882, %v5010
      %v5114 = vadd.f32 %v4884, %v5012
      %v5115 = vadd.f32 %v4886, %v5014
      %v5116 = vadd.f32 %v4888, %v5016
      %v5117 = vadd.f32 %v4890, %v5018
      %v5118 = vadd.f32 %v4892, %v5020
      %v5119 = vadd.f32 %v4894, %v5022
      %v5120 = vadd.f32 %v4896, %v5024
      %v5121 = vadd.f32 %v4898, %v5026
      %v5122 = vadd.f32 %v4900, %v5028
      %v5123 = vadd.f32 %v4902, %v5030
      %v5124 = vadd.f32 %v4904, %v5032
      %v5125 = vadd.f32 %v4906, %v5034
      %v5126 = vadd.f32 %v4908, %v5036
      %v5127 = vadd.f32 %v4910, %v5038
      %v5128 = vadd.f32 %v4912, %v5040
      %v5129 = vadd.f32 %v4914, %v5042
      %v5130 = vadd.f32 %v4916, %v5044
      %v5131 = vadd.f32 %v4918, %v5046
      %v5132 = vadd.f32 %v4920, %v5048
      %v5133 = vadd.f32 %v4922, %v5050
      %v5134 = vadd.f32 %v4924, %v5052
      %v5135 = vadd.f32 %v4926, %v5054
      %v5136 = vadd.f32 %v4928, %v5056
      %v5137 = vadd.f32 %v4930, %v5058
      %v5138 = vadd.f32 %v4932, %v5060
      %v5139 = vadd.f32 %v4934, %v5062
      %v5140 = vadd.f32 %v4936, %v5064
      %v5141 = vadd.f32 %v4938, %v5066
      %v5142 = vadd.f32 %v4940, %v5068
      %v5143 = vadd.f32 %v4942, %v5070
      %v5144 = vadd.f32 %v4944, %v5072
      %v5145 = vadd.f32 %v4946, %v5074
      %v5146 = vadd.f32 %v4948, %v5076
      %v5147 = vadd.f32 %v4950, %v5078
      %v5148 = vadd.f32 %v4952, %v5080
      %v5149 = vadd.f32 %v4954, %v5082
      %v5150 = vadd.f32 %v4956, %v5084
      %v5151 = vadd.f32 %v4958, %v5086
      %v5152 = vadd.f32 %v4960, %v5088
      %5153 = vrot.lane.b32.xlu0 %v5089, 16
      %v5154 = vpop.permute.xlu0 %5153
      %5155 = vrot.lane.b32.xlu0 %v5090, 16
      %v5156 = vpop.permute.xlu0 %5155
      %5157 = vrot.lane.b32.xlu0 %v5091, 16
      %v5158 = vpop.permute.xlu0 %5157
      %5159 = vrot.lane.b32.xlu0 %v5092, 16
      %v5160 = vpop.permute.xlu0 %5159
      %5161 = vrot.lane.b32.xlu0 %v5093, 16
      %v5162 = vpop.permute.xlu0 %5161
      %5163 = vrot.lane.b32.xlu0 %v5094, 16
      %v5164 = vpop.permute.xlu0 %5163
      %5165 = vrot.lane.b32.xlu0 %v5095, 16
      %v5166 = vpop.permute.xlu0 %5165
      %5167 = vrot.lane.b32.xlu0 %v5096, 16
      %v5168 = vpop.permute.xlu0 %5167
      %5169 = vrot.lane.b32.xlu0 %v5097, 16
      %v5170 = vpop.permute.xlu0 %5169
      %5171 = vrot.lane.b32.xlu0 %v5098, 16
      %v5172 = vpop.permute.xlu0 %5171
      %5173 = vrot.lane.b32.xlu0 %v5099, 16
      %v5174 = vpop.permute.xlu0 %5173
      %5175 = vrot.lane.b32.xlu0 %v5100, 16
      %v5176 = vpop.permute.xlu0 %5175
      %5177 = vrot.lane.b32.xlu0 %v5101, 16
      %v5178 = vpop.permute.xlu0 %5177
      %5179 = vrot.lane.b32.xlu0 %v5102, 16
      %v5180 = vpop.permute.xlu0 %5179
      %5181 = vrot.lane.b32.xlu0 %v5103, 16
      %v5182 = vpop.permute.xlu0 %5181
      %5183 = vrot.lane.b32.xlu0 %v5104, 16
      %v5184 = vpop.permute.xlu0 %5183
      %5185 = vrot.lane.b32.xlu0 %v5105, 16
      %v5186 = vpop.permute.xlu0 %5185
      %5187 = vrot.lane.b32.xlu0 %v5106, 16
      %v5188 = vpop.permute.xlu0 %5187
      %5189 = vrot.lane.b32.xlu0 %v5107, 16
      %v5190 = vpop.permute.xlu0 %5189
      %5191 = vrot.lane.b32.xlu0 %v5108, 16
      %v5192 = vpop.permute.xlu0 %5191
      %5193 = vrot.lane.b32.xlu0 %v5109, 16
      %v5194 = vpop.permute.xlu0 %5193
      %5195 = vrot.lane.b32.xlu0 %v5110, 16
      %v5196 = vpop.permute.xlu0 %5195
      %5197 = vrot.lane.b32.xlu0 %v5111, 16
      %v5198 = vpop.permute.xlu0 %5197
      %5199 = vrot.lane.b32.xlu0 %v5112, 16
      %v5200 = vpop.permute.xlu0 %5199
      %5201 = vrot.lane.b32.xlu0 %v5113, 16
      %v5202 = vpop.permute.xlu0 %5201
      %5203 = vrot.lane.b32.xlu0 %v5114, 16
      %v5204 = vpop.permute.xlu0 %5203
      %5205 = vrot.lane.b32.xlu0 %v5115, 16
      %v5206 = vpop.permute.xlu0 %5205
      %5207 = vrot.lane.b32.xlu0 %v5116, 16
      %v5208 = vpop.permute.xlu0 %5207
      %5209 = vrot.lane.b32.xlu0 %v5117, 16
      %v5210 = vpop.permute.xlu0 %5209
      %5211 = vrot.lane.b32.xlu0 %v5118, 16
      %v5212 = vpop.permute.xlu0 %5211
      %5213 = vrot.lane.b32.xlu0 %v5119, 16
      %v5214 = vpop.permute.xlu0 %5213
      %5215 = vrot.lane.b32.xlu0 %v5120, 16
      %v5216 = vpop.permute.xlu0 %5215
      %5217 = vrot.lane.b32.xlu0 %v5121, 16
      %v5218 = vpop.permute.xlu0 %5217
      %5219 = vrot.lane.b32.xlu0 %v5122, 16
      %v5220 = vpop.permute.xlu0 %5219
      %5221 = vrot.lane.b32.xlu0 %v5123, 16
      %v5222 = vpop.permute.xlu0 %5221
      %5223 = vrot.lane.b32.xlu0 %v5124, 16
      %v5224 = vpop.permute.xlu0 %5223
      %5225 = vrot.lane.b32.xlu0 %v5125, 16
      %v5226 = vpop.permute.xlu0 %5225
      %5227 = vrot.lane.b32.xlu0 %v5126, 16
      %v5228 = vpop.permute.xlu0 %5227
      %5229 = vrot.lane.b32.xlu0 %v5127, 16
      %v5230 = vpop.permute.xlu0 %5229
      %5231 = vrot.lane.b32.xlu0 %v5128, 16
      %v5232 = vpop.permute.xlu0 %5231
      %5233 = vrot.lane.b32.xlu0 %v5129, 16
      %v5234 = vpop.permute.xlu0 %5233
      %5235 = vrot.lane.b32.xlu0 %v5130, 16
      %v5236 = vpop.permute.xlu0 %5235
      %5237 = vrot.lane.b32.xlu0 %v5131, 16
      %v5238 = vpop.permute.xlu0 %5237
      %5239 = vrot.lane.b32.xlu0 %v5132, 16
      %v5240 = vpop.permute.xlu0 %5239
      %5241 = vrot.lane.b32.xlu0 %v5133, 16
      %v5242 = vpop.permute.xlu0 %5241
      %5243 = vrot.lane.b32.xlu0 %v5134, 16
      %v5244 = vpop.permute.xlu0 %5243
      %5245 = vrot.lane.b32.xlu0 %v5135, 16
      %v5246 = vpop.permute.xlu0 %5245
      %5247 = vrot.lane.b32.xlu0 %v5136, 16
      %v5248 = vpop.permute.xlu0 %5247
      %5249 = vrot.lane.b32.xlu0 %v5137, 16
      %v5250 = vpop.permute.xlu0 %5249
      %5251 = vrot.lane.b32.xlu0 %v5138, 16
      %v5252 = vpop.permute.xlu0 %5251
      %5253 = vrot.lane.b32.xlu0 %v5139, 16
      %v5254 = vpop.permute.xlu0 %5253
      %5255 = vrot.lane.b32.xlu0 %v5140, 16
      %v5256 = vpop.permute.xlu0 %5255
      %5257 = vrot.lane.b32.xlu0 %v5141, 16
      %v5258 = vpop.permute.xlu0 %5257
      %5259 = vrot.lane.b32.xlu0 %v5142, 16
      %v5260 = vpop.permute.xlu0 %5259
      %5261 = vrot.lane.b32.xlu0 %v5143, 16
      %v5262 = vpop.permute.xlu0 %5261
      %5263 = vrot.lane.b32.xlu0 %v5144, 16
      %v5264 = vpop.permute.xlu0 %5263
      %5265 = vrot.lane.b32.xlu0 %v5145, 16
      %v5266 = vpop.permute.xlu0 %5265
      %5267 = vrot.lane.b32.xlu0 %v5146, 16
      %v5268 = vpop.permute.xlu0 %5267
      %5269 = vrot.lane.b32.xlu0 %v5147, 16
      %v5270 = vpop.permute.xlu0 %5269
      %5271 = vrot.lane.b32.xlu0 %v5148, 16
      %v5272 = vpop.permute.xlu0 %5271
      %5273 = vrot.lane.b32.xlu0 %v5149, 16
      %v5274 = vpop.permute.xlu0 %5273
      %5275 = vrot.lane.b32.xlu0 %v5150, 16
      %v5276 = vpop.permute.xlu0 %5275
      %5277 = vrot.lane.b32.xlu0 %v5151, 16
      %v5278 = vpop.permute.xlu0 %5277
      %5279 = vrot.lane.b32.xlu0 %v5152, 16
      %v5280 = vpop.permute.xlu0 %5279
      %v5281 = vadd.f32 %v5089, %v5154
      %v5282 = vadd.f32 %v5090, %v5156
      %v5283 = vadd.f32 %v5091, %v5158
      %v5284 = vadd.f32 %v5092, %v5160
      %v5285 = vadd.f32 %v5093, %v5162
      %v5286 = vadd.f32 %v5094, %v5164
      %v5287 = vadd.f32 %v5095, %v5166
      %v5288 = vadd.f32 %v5096, %v5168
      %v5289 = vadd.f32 %v5097, %v5170
      %v5290 = vadd.f32 %v5098, %v5172
      %v5291 = vadd.f32 %v5099, %v5174
      %v5292 = vadd.f32 %v5100, %v5176
      %v5293 = vadd.f32 %v5101, %v5178
      %v5294 = vadd.f32 %v5102, %v5180
      %v5295 = vadd.f32 %v5103, %v5182
      %v5296 = vadd.f32 %v5104, %v5184
      %v5297 = vadd.f32 %v5105, %v5186
      %v5298 = vadd.f32 %v5106, %v5188
      %v5299 = vadd.f32 %v5107, %v5190
      %v5300 = vadd.f32 %v5108, %v5192
      %v5301 = vadd.f32 %v5109, %v5194
      %v5302 = vadd.f32 %v5110, %v5196
      %v5303 = vadd.f32 %v5111, %v5198
      %v5304 = vadd.f32 %v5112, %v5200
      %v5305 = vadd.f32 %v5113, %v5202
      %v5306 = vadd.f32 %v5114, %v5204
      %v5307 = vadd.f32 %v5115, %v5206
      %v5308 = vadd.f32 %v5116, %v5208
      %v5309 = vadd.f32 %v5117, %v5210
      %v5310 = vadd.f32 %v5118, %v5212
      %v5311 = vadd.f32 %v5119, %v5214
      %v5312 = vadd.f32 %v5120, %v5216
      %v5313 = vadd.f32 %v5121, %v5218
      %v5314 = vadd.f32 %v5122, %v5220
      %v5315 = vadd.f32 %v5123, %v5222
      %v5316 = vadd.f32 %v5124, %v5224
      %v5317 = vadd.f32 %v5125, %v5226
      %v5318 = vadd.f32 %v5126, %v5228
      %v5319 = vadd.f32 %v5127, %v5230
      %v5320 = vadd.f32 %v5128, %v5232
      %v5321 = vadd.f32 %v5129, %v5234
      %v5322 = vadd.f32 %v5130, %v5236
      %v5323 = vadd.f32 %v5131, %v5238
      %v5324 = vadd.f32 %v5132, %v5240
      %v5325 = vadd.f32 %v5133, %v5242
      %v5326 = vadd.f32 %v5134, %v5244
      %v5327 = vadd.f32 %v5135, %v5246
      %v5328 = vadd.f32 %v5136, %v5248
      %v5329 = vadd.f32 %v5137, %v5250
      %v5330 = vadd.f32 %v5138, %v5252
      %v5331 = vadd.f32 %v5139, %v5254
      %v5332 = vadd.f32 %v5140, %v5256
      %v5333 = vadd.f32 %v5141, %v5258
      %v5334 = vadd.f32 %v5142, %v5260
      %v5335 = vadd.f32 %v5143, %v5262
      %v5336 = vadd.f32 %v5144, %v5264
      %v5337 = vadd.f32 %v5145, %v5266
      %v5338 = vadd.f32 %v5146, %v5268
      %v5339 = vadd.f32 %v5147, %v5270
      %v5340 = vadd.f32 %v5148, %v5272
      %v5341 = vadd.f32 %v5149, %v5274
      %v5342 = vadd.f32 %v5150, %v5276
      %v5343 = vadd.f32 %v5151, %v5278
      %v5344 = vadd.f32 %v5152, %v5280
      %5345 = vrot.lane.b32.xlu0 %v5281, 32
      %v5346 = vpop.permute.xlu0 %5345
      %5347 = vrot.lane.b32.xlu0 %v5282, 32
      %v5348 = vpop.permute.xlu0 %5347
      %5349 = vrot.lane.b32.xlu0 %v5283, 32
      %v5350 = vpop.permute.xlu0 %5349
      %5351 = vrot.lane.b32.xlu0 %v5284, 32
      %v5352 = vpop.permute.xlu0 %5351
      %5353 = vrot.lane.b32.xlu0 %v5285, 32
      %v5354 = vpop.permute.xlu0 %5353
      %5355 = vrot.lane.b32.xlu0 %v5286, 32
      %v5356 = vpop.permute.xlu0 %5355
      %5357 = vrot.lane.b32.xlu0 %v5287, 32
      %v5358 = vpop.permute.xlu0 %5357
      %5359 = vrot.lane.b32.xlu0 %v5288, 32
      %v5360 = vpop.permute.xlu0 %5359
      %5361 = vrot.lane.b32.xlu0 %v5289, 32
      %v5362 = vpop.permute.xlu0 %5361
      %5363 = vrot.lane.b32.xlu0 %v5290, 32
      %v5364 = vpop.permute.xlu0 %5363
      %5365 = vrot.lane.b32.xlu0 %v5291, 32
      %v5366 = vpop.permute.xlu0 %5365
      %5367 = vrot.lane.b32.xlu0 %v5292, 32
      %v5368 = vpop.permute.xlu0 %5367
      %5369 = vrot.lane.b32.xlu0 %v5293, 32
      %v5370 = vpop.permute.xlu0 %5369
      %5371 = vrot.lane.b32.xlu0 %v5294, 32
      %v5372 = vpop.permute.xlu0 %5371
      %5373 = vrot.lane.b32.xlu0 %v5295, 32
      %v5374 = vpop.permute.xlu0 %5373
      %5375 = vrot.lane.b32.xlu0 %v5296, 32
      %v5376 = vpop.permute.xlu0 %5375
      %5377 = vrot.lane.b32.xlu0 %v5297, 32
      %v5378 = vpop.permute.xlu0 %5377
      %5379 = vrot.lane.b32.xlu0 %v5298, 32
      %v5380 = vpop.permute.xlu0 %5379
      %5381 = vrot.lane.b32.xlu0 %v5299, 32
      %v5382 = vpop.permute.xlu0 %5381
      %5383 = vrot.lane.b32.xlu0 %v5300, 32
      %v5384 = vpop.permute.xlu0 %5383
      %5385 = vrot.lane.b32.xlu0 %v5301, 32
      %v5386 = vpop.permute.xlu0 %5385
      %5387 = vrot.lane.b32.xlu0 %v5302, 32
      %v5388 = vpop.permute.xlu0 %5387
      %5389 = vrot.lane.b32.xlu0 %v5303, 32
      %v5390 = vpop.permute.xlu0 %5389
      %5391 = vrot.lane.b32.xlu0 %v5304, 32
      %v5392 = vpop.permute.xlu0 %5391
      %5393 = vrot.lane.b32.xlu0 %v5305, 32
      %v5394 = vpop.permute.xlu0 %5393
      %5395 = vrot.lane.b32.xlu0 %v5306, 32
      %v5396 = vpop.permute.xlu0 %5395
      %5397 = vrot.lane.b32.xlu0 %v5307, 32
      %v5398 = vpop.permute.xlu0 %5397
      %5399 = vrot.lane.b32.xlu0 %v5308, 32
      %v5400 = vpop.permute.xlu0 %5399
      %5401 = vrot.lane.b32.xlu0 %v5309, 32
      %v5402 = vpop.permute.xlu0 %5401
      %5403 = vrot.lane.b32.xlu0 %v5310, 32
      %v5404 = vpop.permute.xlu0 %5403
      %5405 = vrot.lane.b32.xlu0 %v5311, 32
      %v5406 = vpop.permute.xlu0 %5405
      %5407 = vrot.lane.b32.xlu0 %v5312, 32
      %v5408 = vpop.permute.xlu0 %5407
      %5409 = vrot.lane.b32.xlu0 %v5313, 32
      %v5410 = vpop.permute.xlu0 %5409
      %5411 = vrot.lane.b32.xlu0 %v5314, 32
      %v5412 = vpop.permute.xlu0 %5411
      %5413 = vrot.lane.b32.xlu0 %v5315, 32
      %v5414 = vpop.permute.xlu0 %5413
      %5415 = vrot.lane.b32.xlu0 %v5316, 32
      %v5416 = vpop.permute.xlu0 %5415
      %5417 = vrot.lane.b32.xlu0 %v5317, 32
      %v5418 = vpop.permute.xlu0 %5417
      %5419 = vrot.lane.b32.xlu0 %v5318, 32
      %v5420 = vpop.permute.xlu0 %5419
      %5421 = vrot.lane.b32.xlu0 %v5319, 32
      %v5422 = vpop.permute.xlu0 %5421
      %5423 = vrot.lane.b32.xlu0 %v5320, 32
      %v5424 = vpop.permute.xlu0 %5423
      %5425 = vrot.lane.b32.xlu0 %v5321, 32
      %v5426 = vpop.permute.xlu0 %5425
      %5427 = vrot.lane.b32.xlu0 %v5322, 32
      %v5428 = vpop.permute.xlu0 %5427
      %5429 = vrot.lane.b32.xlu0 %v5323, 32
      %v5430 = vpop.permute.xlu0 %5429
      %5431 = vrot.lane.b32.xlu0 %v5324, 32
      %v5432 = vpop.permute.xlu0 %5431
      %5433 = vrot.lane.b32.xlu0 %v5325, 32
      %v5434 = vpop.permute.xlu0 %5433
      %5435 = vrot.lane.b32.xlu0 %v5326, 32
      %v5436 = vpop.permute.xlu0 %5435
      %5437 = vrot.lane.b32.xlu0 %v5327, 32
      %v5438 = vpop.permute.xlu0 %5437
      %5439 = vrot.lane.b32.xlu0 %v5328, 32
      %v5440 = vpop.permute.xlu0 %5439
      %5441 = vrot.lane.b32.xlu0 %v5329, 32
      %v5442 = vpop.permute.xlu0 %5441
      %5443 = vrot.lane.b32.xlu0 %v5330, 32
      %v5444 = vpop.permute.xlu0 %5443
      %5445 = vrot.lane.b32.xlu0 %v5331, 32
      %v5446 = vpop.permute.xlu0 %5445
      %5447 = vrot.lane.b32.xlu0 %v5332, 32
      %v5448 = vpop.permute.xlu0 %5447
      %5449 = vrot.lane.b32.xlu0 %v5333, 32
      %v5450 = vpop.permute.xlu0 %5449
      %5451 = vrot.lane.b32.xlu0 %v5334, 32
      %v5452 = vpop.permute.xlu0 %5451
      %5453 = vrot.lane.b32.xlu0 %v5335, 32
      %v5454 = vpop.permute.xlu0 %5453
      %5455 = vrot.lane.b32.xlu0 %v5336, 32
      %v5456 = vpop.permute.xlu0 %5455
      %5457 = vrot.lane.b32.xlu0 %v5337, 32
      %v5458 = vpop.permute.xlu0 %5457
      %5459 = vrot.lane.b32.xlu0 %v5338, 32
      %v5460 = vpop.permute.xlu0 %5459
      %5461 = vrot.lane.b32.xlu0 %v5339, 32
      %v5462 = vpop.permute.xlu0 %5461
      %5463 = vrot.lane.b32.xlu0 %v5340, 32
      %v5464 = vpop.permute.xlu0 %5463
      %5465 = vrot.lane.b32.xlu0 %v5341, 32
      %v5466 = vpop.permute.xlu0 %5465
      %5467 = vrot.lane.b32.xlu0 %v5342, 32
      %v5468 = vpop.permute.xlu0 %5467
      %5469 = vrot.lane.b32.xlu0 %v5343, 32
      %v5470 = vpop.permute.xlu0 %5469
      %5471 = vrot.lane.b32.xlu0 %v5344, 32
      %v5472 = vpop.permute.xlu0 %5471
      %v5473 = vadd.f32 %v5281, %v5346
      %v5474 = vadd.f32 %v5282, %v5348
      %v5475 = vadd.f32 %v5283, %v5350
      %v5476 = vadd.f32 %v5284, %v5352
      %v5477 = vadd.f32 %v5285, %v5354
      %v5478 = vadd.f32 %v5286, %v5356
      %v5479 = vadd.f32 %v5287, %v5358
      %v5480 = vadd.f32 %v5288, %v5360
      %v5481 = vadd.f32 %v5289, %v5362
      %v5482 = vadd.f32 %v5290, %v5364
      %v5483 = vadd.f32 %v5291, %v5366
      %v5484 = vadd.f32 %v5292, %v5368
      %v5485 = vadd.f32 %v5293, %v5370
      %v5486 = vadd.f32 %v5294, %v5372
      %v5487 = vadd.f32 %v5295, %v5374
      %v5488 = vadd.f32 %v5296, %v5376
      %v5489 = vadd.f32 %v5297, %v5378
      %v5490 = vadd.f32 %v5298, %v5380
      %v5491 = vadd.f32 %v5299, %v5382
      %v5492 = vadd.f32 %v5300, %v5384
      %v5493 = vadd.f32 %v5301, %v5386
      %v5494 = vadd.f32 %v5302, %v5388
      %v5495 = vadd.f32 %v5303, %v5390
      %v5496 = vadd.f32 %v5304, %v5392
      %v5497 = vadd.f32 %v5305, %v5394
      %v5498 = vadd.f32 %v5306, %v5396
      %v5499 = vadd.f32 %v5307, %v5398
      %v5500 = vadd.f32 %v5308, %v5400
      %v5501 = vadd.f32 %v5309, %v5402
      %v5502 = vadd.f32 %v5310, %v5404
      %v5503 = vadd.f32 %v5311, %v5406
      %v5504 = vadd.f32 %v5312, %v5408
      %v5505 = vadd.f32 %v5313, %v5410
      %v5506 = vadd.f32 %v5314, %v5412
      %v5507 = vadd.f32 %v5315, %v5414
      %v5508 = vadd.f32 %v5316, %v5416
      %v5509 = vadd.f32 %v5317, %v5418
      %v5510 = vadd.f32 %v5318, %v5420
      %v5511 = vadd.f32 %v5319, %v5422
      %v5512 = vadd.f32 %v5320, %v5424
      %v5513 = vadd.f32 %v5321, %v5426
      %v5514 = vadd.f32 %v5322, %v5428
      %v5515 = vadd.f32 %v5323, %v5430
      %v5516 = vadd.f32 %v5324, %v5432
      %v5517 = vadd.f32 %v5325, %v5434
      %v5518 = vadd.f32 %v5326, %v5436
      %v5519 = vadd.f32 %v5327, %v5438
      %v5520 = vadd.f32 %v5328, %v5440
      %v5521 = vadd.f32 %v5329, %v5442
      %v5522 = vadd.f32 %v5330, %v5444
      %v5523 = vadd.f32 %v5331, %v5446
      %v5524 = vadd.f32 %v5332, %v5448
      %v5525 = vadd.f32 %v5333, %v5450
      %v5526 = vadd.f32 %v5334, %v5452
      %v5527 = vadd.f32 %v5335, %v5454
      %v5528 = vadd.f32 %v5336, %v5456
      %v5529 = vadd.f32 %v5337, %v5458
      %v5530 = vadd.f32 %v5338, %v5460
      %v5531 = vadd.f32 %v5339, %v5462
      %v5532 = vadd.f32 %v5340, %v5464
      %v5533 = vadd.f32 %v5341, %v5466
      %v5534 = vadd.f32 %v5342, %v5468
      %v5535 = vadd.f32 %v5343, %v5470
      %v5536 = vadd.f32 %v5344, %v5472
      %5537 = vrot.lane.b32.xlu0 %v5473, 64
      %v5538 = vpop.permute.xlu0 %5537
      %5539 = vrot.lane.b32.xlu0 %v5474, 64
      %v5540 = vpop.permute.xlu0 %5539
      %5541 = vrot.lane.b32.xlu0 %v5475, 64
      %v5542 = vpop.permute.xlu0 %5541
      %5543 = vrot.lane.b32.xlu0 %v5476, 64
      %v5544 = vpop.permute.xlu0 %5543
      %5545 = vrot.lane.b32.xlu0 %v5477, 64
      %v5546 = vpop.permute.xlu0 %5545
      %5547 = vrot.lane.b32.xlu0 %v5478, 64
      %v5548 = vpop.permute.xlu0 %5547
      %5549 = vrot.lane.b32.xlu0 %v5479, 64
      %v5550 = vpop.permute.xlu0 %5549
      %5551 = vrot.lane.b32.xlu0 %v5480, 64
      %v5552 = vpop.permute.xlu0 %5551
      %5553 = vrot.lane.b32.xlu0 %v5481, 64
      %v5554 = vpop.permute.xlu0 %5553
      %5555 = vrot.lane.b32.xlu0 %v5482, 64
      %v5556 = vpop.permute.xlu0 %5555
      %5557 = vrot.lane.b32.xlu0 %v5483, 64
      %v5558 = vpop.permute.xlu0 %5557
      %5559 = vrot.lane.b32.xlu0 %v5484, 64
      %v5560 = vpop.permute.xlu0 %5559
      %5561 = vrot.lane.b32.xlu0 %v5485, 64
      %v5562 = vpop.permute.xlu0 %5561
      %5563 = vrot.lane.b32.xlu0 %v5486, 64
      %v5564 = vpop.permute.xlu0 %5563
      %5565 = vrot.lane.b32.xlu0 %v5487, 64
      %v5566 = vpop.permute.xlu0 %5565
      %5567 = vrot.lane.b32.xlu0 %v5488, 64
      %v5568 = vpop.permute.xlu0 %5567
      %5569 = vrot.lane.b32.xlu0 %v5489, 64
      %v5570 = vpop.permute.xlu0 %5569
      %5571 = vrot.lane.b32.xlu0 %v5490, 64
      %v5572 = vpop.permute.xlu0 %5571
      %5573 = vrot.lane.b32.xlu0 %v5491, 64
      %v5574 = vpop.permute.xlu0 %5573
      %5575 = vrot.lane.b32.xlu0 %v5492, 64
      %v5576 = vpop.permute.xlu0 %5575
      %5577 = vrot.lane.b32.xlu0 %v5493, 64
      %v5578 = vpop.permute.xlu0 %5577
      %5579 = vrot.lane.b32.xlu0 %v5494, 64
      %v5580 = vpop.permute.xlu0 %5579
      %5581 = vrot.lane.b32.xlu0 %v5495, 64
      %v5582 = vpop.permute.xlu0 %5581
      %5583 = vrot.lane.b32.xlu0 %v5496, 64
      %v5584 = vpop.permute.xlu0 %5583
      %5585 = vrot.lane.b32.xlu0 %v5497, 64
      %v5586 = vpop.permute.xlu0 %5585
      %5587 = vrot.lane.b32.xlu0 %v5498, 64
      %v5588 = vpop.permute.xlu0 %5587
      %5589 = vrot.lane.b32.xlu0 %v5499, 64
      %v5590 = vpop.permute.xlu0 %5589
      %5591 = vrot.lane.b32.xlu0 %v5500, 64
      %v5592 = vpop.permute.xlu0 %5591
      %5593 = vrot.lane.b32.xlu0 %v5501, 64
      %v5594 = vpop.permute.xlu0 %5593
      %5595 = vrot.lane.b32.xlu0 %v5502, 64
      %v5596 = vpop.permute.xlu0 %5595
      %5597 = vrot.lane.b32.xlu0 %v5503, 64
      %v5598 = vpop.permute.xlu0 %5597
      %5599 = vrot.lane.b32.xlu0 %v5504, 64
      %v5600 = vpop.permute.xlu0 %5599
      %5601 = vrot.lane.b32.xlu0 %v5505, 64
      %v5602 = vpop.permute.xlu0 %5601
      %5603 = vrot.lane.b32.xlu0 %v5506, 64
      %v5604 = vpop.permute.xlu0 %5603
      %5605 = vrot.lane.b32.xlu0 %v5507, 64
      %v5606 = vpop.permute.xlu0 %5605
      %5607 = vrot.lane.b32.xlu0 %v5508, 64
      %v5608 = vpop.permute.xlu0 %5607
      %5609 = vrot.lane.b32.xlu0 %v5509, 64
      %v5610 = vpop.permute.xlu0 %5609
      %5611 = vrot.lane.b32.xlu0 %v5510, 64
      %v5612 = vpop.permute.xlu0 %5611
      %5613 = vrot.lane.b32.xlu0 %v5511, 64
      %v5614 = vpop.permute.xlu0 %5613
      %5615 = vrot.lane.b32.xlu0 %v5512, 64
      %v5616 = vpop.permute.xlu0 %5615
      %5617 = vrot.lane.b32.xlu0 %v5513, 64
      %v5618 = vpop.permute.xlu0 %5617
      %5619 = vrot.lane.b32.xlu0 %v5514, 64
      %v5620 = vpop.permute.xlu0 %5619
      %5621 = vrot.lane.b32.xlu0 %v5515, 64
      %v5622 = vpop.permute.xlu0 %5621
      %5623 = vrot.lane.b32.xlu0 %v5516, 64
      %v5624 = vpop.permute.xlu0 %5623
      %5625 = vrot.lane.b32.xlu0 %v5517, 64
      %v5626 = vpop.permute.xlu0 %5625
      %5627 = vrot.lane.b32.xlu0 %v5518, 64
      %v5628 = vpop.permute.xlu0 %5627
      %5629 = vrot.lane.b32.xlu0 %v5519, 64
      %v5630 = vpop.permute.xlu0 %5629
      %5631 = vrot.lane.b32.xlu0 %v5520, 64
      %v5632 = vpop.permute.xlu0 %5631
      %5633 = vrot.lane.b32.xlu0 %v5521, 64
      %v5634 = vpop.permute.xlu0 %5633
      %5635 = vrot.lane.b32.xlu0 %v5522, 64
      %v5636 = vpop.permute.xlu0 %5635
      %5637 = vrot.lane.b32.xlu0 %v5523, 64
      %v5638 = vpop.permute.xlu0 %5637
      %5639 = vrot.lane.b32.xlu0 %v5524, 64
      %v5640 = vpop.permute.xlu0 %5639
      %5641 = vrot.lane.b32.xlu0 %v5525, 64
      %v5642 = vpop.permute.xlu0 %5641
      %5643 = vrot.lane.b32.xlu0 %v5526, 64
      %v5644 = vpop.permute.xlu0 %5643
      %5645 = vrot.lane.b32.xlu0 %v5527, 64
      %v5646 = vpop.permute.xlu0 %5645
      %5647 = vrot.lane.b32.xlu0 %v5528, 64
      %v5648 = vpop.permute.xlu0 %5647
      %5649 = vrot.lane.b32.xlu0 %v5529, 64
      %v5650 = vpop.permute.xlu0 %5649
      %5651 = vrot.lane.b32.xlu0 %v5530, 64
      %v5652 = vpop.permute.xlu0 %5651
      %5653 = vrot.lane.b32.xlu0 %v5531, 64
      %v5654 = vpop.permute.xlu0 %5653
      %5655 = vrot.lane.b32.xlu0 %v5532, 64
      %v5656 = vpop.permute.xlu0 %5655
      %5657 = vrot.lane.b32.xlu0 %v5533, 64
      %v5658 = vpop.permute.xlu0 %5657
      %5659 = vrot.lane.b32.xlu0 %v5534, 64
      %v5660 = vpop.permute.xlu0 %5659
      %5661 = vrot.lane.b32.xlu0 %v5535, 64
      %v5662 = vpop.permute.xlu0 %5661
      %5663 = vrot.lane.b32.xlu0 %v5536, 64
      %v5664 = vpop.permute.xlu0 %5663
      %v5665 = vadd.f32 %v5473, %v5538
      %v5666 = vadd.f32 %v5474, %v5540
      %v5667 = vadd.f32 %v5475, %v5542
      %v5668 = vadd.f32 %v5476, %v5544
      %v5669 = vadd.f32 %v5477, %v5546
      %v5670 = vadd.f32 %v5478, %v5548
      %v5671 = vadd.f32 %v5479, %v5550
      %v5672 = vadd.f32 %v5480, %v5552
      %v5673 = vadd.f32 %v5481, %v5554
      %v5674 = vadd.f32 %v5482, %v5556
      %v5675 = vadd.f32 %v5483, %v5558
      %v5676 = vadd.f32 %v5484, %v5560
      %v5677 = vadd.f32 %v5485, %v5562
      %v5678 = vadd.f32 %v5486, %v5564
      %v5679 = vadd.f32 %v5487, %v5566
      %v5680 = vadd.f32 %v5488, %v5568
      %v5681 = vadd.f32 %v5489, %v5570
      %v5682 = vadd.f32 %v5490, %v5572
      %v5683 = vadd.f32 %v5491, %v5574
      %v5684 = vadd.f32 %v5492, %v5576
      %v5685 = vadd.f32 %v5493, %v5578
      %v5686 = vadd.f32 %v5494, %v5580
      %v5687 = vadd.f32 %v5495, %v5582
      %v5688 = vadd.f32 %v5496, %v5584
      %v5689 = vadd.f32 %v5497, %v5586
      %v5690 = vadd.f32 %v5498, %v5588
      %v5691 = vadd.f32 %v5499, %v5590
      %v5692 = vadd.f32 %v5500, %v5592
      %v5693 = vadd.f32 %v5501, %v5594
      %v5694 = vadd.f32 %v5502, %v5596
      %v5695 = vadd.f32 %v5503, %v5598
      %v5696 = vadd.f32 %v5504, %v5600
      %v5697 = vadd.f32 %v5505, %v5602
      %v5698 = vadd.f32 %v5506, %v5604
      %v5699 = vadd.f32 %v5507, %v5606
      %v5700 = vadd.f32 %v5508, %v5608
      %v5701 = vadd.f32 %v5509, %v5610
      %v5702 = vadd.f32 %v5510, %v5612
      %v5703 = vadd.f32 %v5511, %v5614
      %v5704 = vadd.f32 %v5512, %v5616
      %v5705 = vadd.f32 %v5513, %v5618
      %v5706 = vadd.f32 %v5514, %v5620
      %v5707 = vadd.f32 %v5515, %v5622
      %v5708 = vadd.f32 %v5516, %v5624
      %v5709 = vadd.f32 %v5517, %v5626
      %v5710 = vadd.f32 %v5518, %v5628
      %v5711 = vadd.f32 %v5519, %v5630
      %v5712 = vadd.f32 %v5520, %v5632
      %v5713 = vadd.f32 %v5521, %v5634
      %v5714 = vadd.f32 %v5522, %v5636
      %v5715 = vadd.f32 %v5523, %v5638
      %v5716 = vadd.f32 %v5524, %v5640
      %v5717 = vadd.f32 %v5525, %v5642
      %v5718 = vadd.f32 %v5526, %v5644
      %v5719 = vadd.f32 %v5527, %v5646
      %v5720 = vadd.f32 %v5528, %v5648
      %v5721 = vadd.f32 %v5529, %v5650
      %v5722 = vadd.f32 %v5530, %v5652
      %v5723 = vadd.f32 %v5531, %v5654
      %v5724 = vadd.f32 %v5532, %v5656
      %v5725 = vadd.f32 %v5533, %v5658
      %v5726 = vadd.f32 %v5534, %v5660
      %v5727 = vadd.f32 %v5535, %v5662
      %v5728 = vadd.f32 %v5536, %v5664
      %v5729 = vrcp.pop %v5665
      %v5730 = vrcp.pop %v5666
      %v5731 = vrcp.pop %v5667
      %v5732 = vrcp.pop %v5668
      %v5733 = vrcp.pop %v5669
      %v5734 = vrcp.pop %v5670
      %v5735 = vrcp.pop %v5671
      %v5736 = vrcp.pop %v5672
      %v5737 = vrcp.pop %v5673
      %v5738 = vrcp.pop %v5674
      %v5739 = vrcp.pop %v5675
      %v5740 = vrcp.pop %v5676
      %v5741 = vrcp.pop %v5677
      %v5742 = vrcp.pop %v5678
      %v5743 = vrcp.pop %v5679
      %v5744 = vrcp.pop %v5680
      %v5745 = vrcp.pop %v5681
      %v5746 = vrcp.pop %v5682
      %v5747 = vrcp.pop %v5683
      %v5748 = vrcp.pop %v5684
      %v5749 = vrcp.pop %v5685
      %v5750 = vrcp.pop %v5686
      %v5751 = vrcp.pop %v5687
      %v5752 = vrcp.pop %v5688
      %v5753 = vrcp.pop %v5689
      %v5754 = vrcp.pop %v5690
      %v5755 = vrcp.pop %v5691
      %v5756 = vrcp.pop %v5692
      %v5757 = vrcp.pop %v5693
      %v5758 = vrcp.pop %v5694
      %v5759 = vrcp.pop %v5695
      %v5760 = vrcp.pop %v5696
      %v5761 = vrcp.pop %v5697
      %v5762 = vrcp.pop %v5698
      %v5763 = vrcp.pop %v5699
      %v5764 = vrcp.pop %v5700
      %v5765 = vrcp.pop %v5701
      %v5766 = vrcp.pop %v5702
      %v5767 = vrcp.pop %v5703
      %v5768 = vrcp.pop %v5704
      %v5769 = vrcp.pop %v5705
      %v5770 = vrcp.pop %v5706
      %v5771 = vrcp.pop %v5707
      %v5772 = vrcp.pop %v5708
      %v5773 = vrcp.pop %v5709
      %v5774 = vrcp.pop %v5710
      %v5775 = vrcp.pop %v5711
      %v5776 = vrcp.pop %v5712
      %v5777 = vrcp.pop %v5713
      %v5778 = vrcp.pop %v5714
      %v5779 = vrcp.pop %v5715
      %v5780 = vrcp.pop %v5716
      %v5781 = vrcp.pop %v5717
      %v5782 = vrcp.pop %v5718
      %v5783 = vrcp.pop %v5719
      %v5784 = vrcp.pop %v5720
      %v5785 = vrcp.pop %v5721
      %v5786 = vrcp.pop %v5722
      %v5787 = vrcp.pop %v5723
      %v5788 = vrcp.pop %v5724
      %v5789 = vrcp.pop %v5725
      %v5790 = vrcp.pop %v5726
      %v5791 = vrcp.pop %v5727
      %v5792 = vrcp.pop %v5728
      %v5793 = vmul.f32 %v4834, %v5729
      %v5794 = vmul.f32 %v4836, %v5730
      %v5795 = vmul.f32 %v4838, %v5731
      %v5796 = vmul.f32 %v4840, %v5732
      %v5797 = vmul.f32 %v4842, %v5733
      %v5798 = vmul.f32 %v4844, %v5734
      %v5799 = vmul.f32 %v4846, %v5735
      %v5800 = vmul.f32 %v4848, %v5736
      %v5801 = vmul.f32 %v4850, %v5737
      %v5802 = vmul.f32 %v4852, %v5738
      %v5803 = vmul.f32 %v4854, %v5739
      %v5804 = vmul.f32 %v4856, %v5740
      %v5805 = vmul.f32 %v4858, %v5741
      %v5806 = vmul.f32 %v4860, %v5742
      %v5807 = vmul.f32 %v4862, %v5743
      %v5808 = vmul.f32 %v4864, %v5744
      %v5809 = vmul.f32 %v4866, %v5745
      %v5810 = vmul.f32 %v4868, %v5746
      %v5811 = vmul.f32 %v4870, %v5747
      %v5812 = vmul.f32 %v4872, %v5748
      %v5813 = vmul.f32 %v4874, %v5749
      %v5814 = vmul.f32 %v4876, %v5750
      %v5815 = vmul.f32 %v4878, %v5751
      %v5816 = vmul.f32 %v4880, %v5752
      %v5817 = vmul.f32 %v4882, %v5753
      %v5818 = vmul.f32 %v4884, %v5754
      %v5819 = vmul.f32 %v4886, %v5755
      %v5820 = vmul.f32 %v4888, %v5756
      %v5821 = vmul.f32 %v4890, %v5757
      %v5822 = vmul.f32 %v4892, %v5758
      %v5823 = vmul.f32 %v4894, %v5759
      %v5824 = vmul.f32 %v4896, %v5760
      %v5825 = vmul.f32 %v4898, %v5761
      %v5826 = vmul.f32 %v4900, %v5762
      %v5827 = vmul.f32 %v4902, %v5763
      %v5828 = vmul.f32 %v4904, %v5764
      %v5829 = vmul.f32 %v4906, %v5765
      %v5830 = vmul.f32 %v4908, %v5766
      %v5831 = vmul.f32 %v4910, %v5767
      %v5832 = vmul.f32 %v4912, %v5768
      %v5833 = vmul.f32 %v4914, %v5769
      %v5834 = vmul.f32 %v4916, %v5770
      %v5835 = vmul.f32 %v4918, %v5771
      %v5836 = vmul.f32 %v4920, %v5772
      %v5837 = vmul.f32 %v4922, %v5773
      %v5838 = vmul.f32 %v4924, %v5774
      %v5839 = vmul.f32 %v4926, %v5775
      %v5840 = vmul.f32 %v4928, %v5776
      %v5841 = vmul.f32 %v4930, %v5777
      %v5842 = vmul.f32 %v4932, %v5778
      %v5843 = vmul.f32 %v4934, %v5779
      %v5844 = vmul.f32 %v4936, %v5780
      %v5845 = vmul.f32 %v4938, %v5781
      %v5846 = vmul.f32 %v4940, %v5782
      %v5847 = vmul.f32 %v4942, %v5783
      %v5848 = vmul.f32 %v4944, %v5784
      %v5849 = vmul.f32 %v4946, %v5785
      %v5850 = vmul.f32 %v4948, %v5786
      %v5851 = vmul.f32 %v4950, %v5787
      %v5852 = vmul.f32 %v4952, %v5788
      %v5853 = vmul.f32 %v4954, %v5789
      %v5854 = vmul.f32 %v4956, %v5790
      %v5855 = vmul.f32 %v4958, %v5791
      %v5856 = vmul.f32 %v4960, %v5792
      %v5857 = vmul.f32 %v1172, %v3937
      %v5858 = vmul.f32 %v1173, %v3938
      %v5859 = vmul.f32 %v1174, %v3939
      %v5860 = vmul.f32 %v1175, %v3940
      %v5861 = vmul.f32 %v1176, %v3941
      %v5862 = vmul.f32 %v1177, %v3942
      %v5863 = vmul.f32 %v1178, %v3943
      %v5864 = vmul.f32 %v1179, %v3944
      %v5865 = vmul.f32 %v1180, %v3945
      %v5866 = vmul.f32 %v1181, %v3946
      %v5867 = vmul.f32 %v1182, %v3947
      %v5868 = vmul.f32 %v1183, %v3948
      %v5869 = vmul.f32 %v1184, %v3949
      %v5870 = vmul.f32 %v1185, %v3950
      %v5871 = vmul.f32 %v1186, %v3951
      %v5872 = vmul.f32 %v1187, %v3952
      %v5873 = vmul.f32 %v1188, %v3953
      %v5874 = vmul.f32 %v1189, %v3954
      %v5875 = vmul.f32 %v1190, %v3955
      %v5876 = vmul.f32 %v1191, %v3956
      %v5877 = vmul.f32 %v1192, %v3957
      %v5878 = vmul.f32 %v1193, %v3958
      %v5879 = vmul.f32 %v1194, %v3959
      %v5880 = vmul.f32 %v1195, %v3960
      %v5881 = vmul.f32 %v1196, %v3961
      %v5882 = vmul.f32 %v1197, %v3962
      %v5883 = vmul.f32 %v1198, %v3963
      %v5884 = vmul.f32 %v1199, %v3964
      %v5885 = vmul.f32 %v1200, %v3965
      %v5886 = vmul.f32 %v1201, %v3966
      %v5887 = vmul.f32 %v1202, %v3967
      %v5888 = vmul.f32 %v1203, %v3968
      %v5889 = vmul.f32 %v1204, %v3969
      %v5890 = vmul.f32 %v1205, %v3970
      %v5891 = vmul.f32 %v1206, %v3971
      %v5892 = vmul.f32 %v1207, %v3972
      %v5893 = vmul.f32 %v1208, %v3973
      %v5894 = vmul.f32 %v1209, %v3974
      %v5895 = vmul.f32 %v1210, %v3975
      %v5896 = vmul.f32 %v1211, %v3976
      %v5897 = vmul.f32 %v1212, %v3977
      %v5898 = vmul.f32 %v1213, %v3978
      %v5899 = vmul.f32 %v1214, %v3979
      %v5900 = vmul.f32 %v1215, %v3980
      %v5901 = vmul.f32 %v1216, %v3981
      %v5902 = vmul.f32 %v1217, %v3982
      %v5903 = vmul.f32 %v1218, %v3983
      %v5904 = vmul.f32 %v1219, %v3984
      %v5905 = vmul.f32 %v1220, %v3985
      %v5906 = vmul.f32 %v1221, %v3986
      %v5907 = vmul.f32 %v1222, %v3987
      %v5908 = vmul.f32 %v1223, %v3988
      %v5909 = vmul.f32 %v1224, %v3989
      %v5910 = vmul.f32 %v1225, %v3990
      %v5911 = vmul.f32 %v1226, %v3991
      %v5912 = vmul.f32 %v1227, %v3992
      %v5913 = vmul.f32 %v1228, %v3993
      %v5914 = vmul.f32 %v1229, %v3994
      %v5915 = vmul.f32 %v1230, %v3995
      %v5916 = vmul.f32 %v1231, %v3996
      %v5917 = vmul.f32 %v1232, %v3997
      %v5918 = vmul.f32 %v1233, %v3998
      %v5919 = vmul.f32 %v1234, %v3999
      %v5920 = vmul.f32 %v1235, %v4000
      %v5921 = vunpack.c.l.bf16 %v396
      %v5922 = vunpack.c.l.bf16 %v397
      %v5923 = vunpack.c.l.bf16 %v398
      %v5924 = vunpack.c.l.bf16 %v399
      %v5925 = vunpack.c.l.bf16 %v400
      %v5926 = vunpack.c.l.bf16 %v401
      %v5927 = vunpack.c.l.bf16 %v402
      %v5928 = vunpack.c.l.bf16 %v403
      %v5929 = vunpack.c.l.bf16 %v404
      %v5930 = vunpack.c.l.bf16 %v405
      %v5931 = vunpack.c.l.bf16 %v406
      %v5932 = vunpack.c.l.bf16 %v407
      %v5933 = vunpack.c.l.bf16 %v408
      %v5934 = vunpack.c.l.bf16 %v409
      %v5935 = vunpack.c.l.bf16 %v410
      %v5936 = vunpack.c.l.bf16 %v411
      %v5937 = vunpack.c.l.bf16 %v412
      %v5938 = vunpack.c.l.bf16 %v413
      %v5939 = vunpack.c.l.bf16 %v414
      %v5940 = vunpack.c.l.bf16 %v415
      %v5941 = vunpack.c.l.bf16 %v416
      %v5942 = vunpack.c.l.bf16 %v417
      %v5943 = vunpack.c.l.bf16 %v418
      %v5944 = vunpack.c.l.bf16 %v419
      %v5945 = vunpack.c.l.bf16 %v420
      %v5946 = vunpack.c.l.bf16 %v421
      %v5947 = vunpack.c.l.bf16 %v422
      %v5948 = vunpack.c.l.bf16 %v423
      %v5949 = vunpack.c.l.bf16 %v424
      %v5950 = vunpack.c.l.bf16 %v425
      %v5951 = vunpack.c.l.bf16 %v426
      %v5952 = vunpack.c.l.bf16 %v427
      %v5953 = vunpack.c.l.bf16 %v428
      %v5954 = vunpack.c.l.bf16 %v429
      %v5955 = vunpack.c.l.bf16 %v430
      %v5956 = vunpack.c.l.bf16 %v431
      %v5957 = vunpack.c.l.bf16 %v432
      %v5958 = vunpack.c.l.bf16 %v433
      %v5959 = vunpack.c.l.bf16 %v434
      %v5960 = vunpack.c.l.bf16 %v435
      %v5961 = vunpack.c.l.bf16 %v436
      %v5962 = vunpack.c.l.bf16 %v437
      %v5963 = vunpack.c.l.bf16 %v438
      %v5964 = vunpack.c.l.bf16 %v439
      %v5965 = vunpack.c.l.bf16 %v440
      %v5966 = vunpack.c.l.bf16 %v441
      %v5967 = vunpack.c.l.bf16 %v442
      %v5968 = vunpack.c.l.bf16 %v443
      %v5969 = vunpack.c.l.bf16 %v444
      %v5970 = vunpack.c.l.bf16 %v445
      %v5971 = vunpack.c.l.bf16 %v446
      %v5972 = vunpack.c.l.bf16 %v447
      %v5973 = vunpack.c.l.bf16 %v448
      %v5974 = vunpack.c.l.bf16 %v449
      %v5975 = vunpack.c.l.bf16 %v450
      %v5976 = vunpack.c.l.bf16 %v451
      %v5977 = vunpack.c.l.bf16 %v452
      %v5978 = vunpack.c.l.bf16 %v453
      %v5979 = vunpack.c.l.bf16 %v454
      %v5980 = vunpack.c.l.bf16 %v455
      %v5981 = vunpack.c.l.bf16 %v456
      %v5982 = vunpack.c.l.bf16 %v457
      %v5983 = vunpack.c.l.bf16 %v458
      %v5984 = vunpack.c.l.bf16 %v459
      %v5985 = vmul.f32 %v5921, %v5793
      %v5986 = vmul.f32 %v5922, %v5794
      %v5987 = vmul.f32 %v5923, %v5795
      %v5988 = vmul.f32 %v5924, %v5796
      %v5989 = vmul.f32 %v5925, %v5797
      %v5990 = vmul.f32 %v5926, %v5798
      %v5991 = vmul.f32 %v5927, %v5799
      %v5992 = vmul.f32 %v5928, %v5800
      %v5993 = vmul.f32 %v5929, %v5801
      %v5994 = vmul.f32 %v5930, %v5802
      %v5995 = vmul.f32 %v5931, %v5803
      %v5996 = vmul.f32 %v5932, %v5804
      %v5997 = vmul.f32 %v5933, %v5805
      %v5998 = vmul.f32 %v5934, %v5806
      %v5999 = vmul.f32 %v5935, %v5807
      %v6000 = vmul.f32 %v5936, %v5808
      %v6001 = vmul.f32 %v5937, %v5809
      %v6002 = vmul.f32 %v5938, %v5810
      %v6003 = vmul.f32 %v5939, %v5811
      %v6004 = vmul.f32 %v5940, %v5812
      %v6005 = vmul.f32 %v5941, %v5813
      %v6006 = vmul.f32 %v5942, %v5814
      %v6007 = vmul.f32 %v5943, %v5815
      %v6008 = vmul.f32 %v5944, %v5816
      %v6009 = vmul.f32 %v5945, %v5817
      %v6010 = vmul.f32 %v5946, %v5818
      %v6011 = vmul.f32 %v5947, %v5819
      %v6012 = vmul.f32 %v5948, %v5820
      %v6013 = vmul.f32 %v5949, %v5821
      %v6014 = vmul.f32 %v5950, %v5822
      %v6015 = vmul.f32 %v5951, %v5823
      %v6016 = vmul.f32 %v5952, %v5824
      %v6017 = vmul.f32 %v5953, %v5825
      %v6018 = vmul.f32 %v5954, %v5826
      %v6019 = vmul.f32 %v5955, %v5827
      %v6020 = vmul.f32 %v5956, %v5828
      %v6021 = vmul.f32 %v5957, %v5829
      %v6022 = vmul.f32 %v5958, %v5830
      %v6023 = vmul.f32 %v5959, %v5831
      %v6024 = vmul.f32 %v5960, %v5832
      %v6025 = vmul.f32 %v5961, %v5833
      %v6026 = vmul.f32 %v5962, %v5834
      %v6027 = vmul.f32 %v5963, %v5835
      %v6028 = vmul.f32 %v5964, %v5836
      %v6029 = vmul.f32 %v5965, %v5837
      %v6030 = vmul.f32 %v5966, %v5838
      %v6031 = vmul.f32 %v5967, %v5839
      %v6032 = vmul.f32 %v5968, %v5840
      %v6033 = vmul.f32 %v5969, %v5841
      %v6034 = vmul.f32 %v5970, %v5842
      %v6035 = vmul.f32 %v5971, %v5843
      %v6036 = vmul.f32 %v5972, %v5844
      %v6037 = vmul.f32 %v5973, %v5845
      %v6038 = vmul.f32 %v5974, %v5846
      %v6039 = vmul.f32 %v5975, %v5847
      %v6040 = vmul.f32 %v5976, %v5848
      %v6041 = vmul.f32 %v5977, %v5849
      %v6042 = vmul.f32 %v5978, %v5850
      %v6043 = vmul.f32 %v5979, %v5851
      %v6044 = vmul.f32 %v5980, %v5852
      %v6045 = vmul.f32 %v5981, %v5853
      %v6046 = vmul.f32 %v5982, %v5854
      %v6047 = vmul.f32 %v5983, %v5855
      %v6048 = vmul.f32 %v5984, %v5856
      %v6049 = vpack.c.bf16 %v5858, %v5857
      %v6050 = vpack.c.bf16 %v5986, %v5985
      %v6051 = vpack.c.bf16 %v5860, %v5859
      %v6052 = vpack.c.bf16 %v5988, %v5987
      %v6053 = vpack.c.bf16 %v5862, %v5861
      %v6054 = vpack.c.bf16 %v5990, %v5989
      %v6055 = vpack.c.bf16 %v5864, %v5863
      %v6056 = vpack.c.bf16 %v5992, %v5991
      %v6057 = vpack.c.bf16 %v5866, %v5865
      %v6058 = vpack.c.bf16 %v5994, %v5993
      %v6059 = vpack.c.bf16 %v5868, %v5867
      %v6060 = vpack.c.bf16 %v5996, %v5995
      %v6061 = vpack.c.bf16 %v5870, %v5869
      %v6062 = vpack.c.bf16 %v5998, %v5997
      %v6063 = vpack.c.bf16 %v5872, %v5871
      %v6064 = vpack.c.bf16 %v6000, %v5999
      %v6065 = vpack.c.bf16 %v5874, %v5873
      %v6066 = vpack.c.bf16 %v6002, %v6001
      %v6067 = vpack.c.bf16 %v5876, %v5875
      %v6068 = vpack.c.bf16 %v6004, %v6003
      %v6069 = vpack.c.bf16 %v5878, %v5877
      %v6070 = vpack.c.bf16 %v6006, %v6005
      %v6071 = vpack.c.bf16 %v5880, %v5879
      %v6072 = vpack.c.bf16 %v6008, %v6007
      %v6073 = vpack.c.bf16 %v5882, %v5881
      %v6074 = vpack.c.bf16 %v6010, %v6009
      %v6075 = vpack.c.bf16 %v5884, %v5883
      %v6076 = vpack.c.bf16 %v6012, %v6011
      %v6077 = vpack.c.bf16 %v5886, %v5885
      %v6078 = vpack.c.bf16 %v6014, %v6013
      %v6079 = vpack.c.bf16 %v5888, %v5887
      %v6080 = vpack.c.bf16 %v6016, %v6015
      %v6081 = vpack.c.bf16 %v5890, %v5889
      %v6082 = vpack.c.bf16 %v6018, %v6017
      %v6083 = vpack.c.bf16 %v5892, %v5891
      %v6084 = vpack.c.bf16 %v6020, %v6019
      %v6085 = vpack.c.bf16 %v5894, %v5893
      %v6086 = vpack.c.bf16 %v6022, %v6021
      %v6087 = vpack.c.bf16 %v5896, %v5895
      %v6088 = vpack.c.bf16 %v6024, %v6023
      %v6089 = vpack.c.bf16 %v5898, %v5897
      %v6090 = vpack.c.bf16 %v6026, %v6025
      %v6091 = vpack.c.bf16 %v5900, %v5899
      %v6092 = vpack.c.bf16 %v6028, %v6027
      %v6093 = vpack.c.bf16 %v5902, %v5901
      %v6094 = vpack.c.bf16 %v6030, %v6029
      %v6095 = vpack.c.bf16 %v5904, %v5903
      %v6096 = vpack.c.bf16 %v6032, %v6031
      %v6097 = vpack.c.bf16 %v5906, %v5905
      %v6098 = vpack.c.bf16 %v6034, %v6033
      %v6099 = vpack.c.bf16 %v5908, %v5907
      %v6100 = vpack.c.bf16 %v6036, %v6035
      %v6101 = vpack.c.bf16 %v5910, %v5909
      %v6102 = vpack.c.bf16 %v6038, %v6037
      %v6103 = vpack.c.bf16 %v5912, %v5911
      %v6104 = vpack.c.bf16 %v6040, %v6039
      %v6105 = vpack.c.bf16 %v5914, %v5913
      %v6106 = vpack.c.bf16 %v6042, %v6041
      %v6107 = vpack.c.bf16 %v5916, %v5915
      %v6108 = vpack.c.bf16 %v6044, %v6043
      %v6109 = vpack.c.bf16 %v5918, %v5917
      %v6110 = vpack.c.bf16 %v6046, %v6045
      %v6111 = vpack.c.bf16 %v5920, %v5919
      %v6112 = vpack.c.bf16 %v6048, %v6047
      %v6113 = vld [vmem:[%s6] sm:$0xf]
      %v6114 = vld [vmem:[%s6 + $0x4] sm:$0xf]
      %v6115 = vld [vmem:[%s6 + $0x8] sm:$0xf]
      %v6116 = vld [vmem:[%s6 + $0xc] sm:$0xf]
      %v6117 = vld [vmem:[%s6 + $0x10] sm:$0xf]
      %v6118 = vld [vmem:[%s6 + $0x14] sm:$0xf]
      %v6119 = vld [vmem:[%s6 + $0x18] sm:$0xf]
      %v6120 = vld [vmem:[%s6 + $0x1c] sm:$0xf]
      %v6121 = vld [vmem:[%s6 + $0x20] sm:$0xf]
      %v6122 = vld [vmem:[%s6 + $0x24] sm:$0xf]
      %v6123 = vld [vmem:[%s6 + $0x28] sm:$0xf]
      %v6124 = vld [vmem:[%s6 + $0x2c] sm:$0xf]
      %v6125 = vld [vmem:[%s6 + $0x30] sm:$0xf]
      %v6126 = vld [vmem:[%s6 + $0x34] sm:$0xf]
      %v6127 = vld [vmem:[%s6 + $0x38] sm:$0xf]
      %v6128 = vld [vmem:[%s6 + $0x3c] sm:$0xf]
      %v6129 = vld [vmem:[%s6 + $0x40] sm:$0xf]
      %v6130 = vld [vmem:[%s6 + $0x44] sm:$0xf]
      %v6131 = vld [vmem:[%s6 + $0x48] sm:$0xf]
      %v6132 = vld [vmem:[%s6 + $0x4c] sm:$0xf]
      %v6133 = vld [vmem:[%s6 + $0x50] sm:$0xf]
      %v6134 = vld [vmem:[%s6 + $0x54] sm:$0xf]
      %v6135 = vld [vmem:[%s6 + $0x58] sm:$0xf]
      %v6136 = vld [vmem:[%s6 + $0x5c] sm:$0xf]
      %v6137 = vld [vmem:[%s6 + $0x60] sm:$0xf]
      %v6138 = vld [vmem:[%s6 + $0x64] sm:$0xf]
      %v6139 = vld [vmem:[%s6 + $0x68] sm:$0xf]
      %v6140 = vld [vmem:[%s6 + $0x6c] sm:$0xf]
      %v6141 = vld [vmem:[%s6 + $0x70] sm:$0xf]
      %v6142 = vld [vmem:[%s6 + $0x74] sm:$0xf]
      %v6143 = vld [vmem:[%s6 + $0x78] sm:$0xf]
      %v6144 = vld [vmem:[%s6 + $0x7c] sm:$0xf]
      %v6145 = vld [vmem:[%s7] sm:$0x1]
      %v6147 = vlaneseq
      %v6148 = vshrl.u32 %v6147, 7
      %v6149 = vsub.s32 0, %v6148
      %v6150 = vrot.slane %v6145, %v6149
      %v6184 = vunpack.c.l.b16 %v6113
      %v6185 = vunpack.c.l.b16 %v6114
      %v6186 = vunpack.c.l.b16 %v6115
      %v6187 = vunpack.c.l.b16 %v6116
      %v6188 = vunpack.c.l.b16 %v6117
      %v6189 = vunpack.c.l.b16 %v6118
      %v6190 = vunpack.c.l.b16 %v6119
      %v6191 = vunpack.c.l.b16 %v6120
      %v6192 = vunpack.c.l.b16 %v6121
      %v6193 = vunpack.c.l.b16 %v6122
      %v6194 = vunpack.c.l.b16 %v6123
      %v6195 = vunpack.c.l.b16 %v6124
      %v6196 = vunpack.c.l.b16 %v6125
      %v6197 = vunpack.c.l.b16 %v6126
      %v6198 = vunpack.c.l.b16 %v6127
      %v6199 = vunpack.c.l.b16 %v6128
      %v6200 = vunpack.c.l.b16 %v6129
      %v6201 = vunpack.c.l.b16 %v6130
      %v6202 = vunpack.c.l.b16 %v6131
      %v6203 = vunpack.c.l.b16 %v6132
      %v6204 = vunpack.c.l.b16 %v6133
      %v6205 = vunpack.c.l.b16 %v6134
      %v6206 = vunpack.c.l.b16 %v6135
      %v6207 = vunpack.c.l.b16 %v6136
      %v6208 = vunpack.c.l.b16 %v6137
      %v6209 = vunpack.c.l.b16 %v6138
      %v6210 = vunpack.c.l.b16 %v6139
      %v6211 = vunpack.c.l.b16 %v6140
      %v6212 = vunpack.c.l.b16 %v6141
      %v6213 = vunpack.c.l.b16 %v6142
      %v6214 = vunpack.c.l.b16 %v6143
      %v6215 = vunpack.c.l.b16 %v6144
      %v6216 = vpack.c.b16 %v6185, %v6184
      %v6217 = vpack.c.b16 %v6187, %v6186
      %v6218 = vpack.c.b16 %v6189, %v6188
      %v6219 = vpack.c.b16 %v6191, %v6190
      %v6220 = vpack.c.b16 %v6193, %v6192
      %v6221 = vpack.c.b16 %v6195, %v6194
      %v6222 = vpack.c.b16 %v6197, %v6196
      %v6223 = vpack.c.b16 %v6199, %v6198
      %v6224 = vpack.c.b16 %v6201, %v6200
      %v6225 = vpack.c.b16 %v6203, %v6202
      %v6226 = vpack.c.b16 %v6205, %v6204
      %v6227 = vpack.c.b16 %v6207, %v6206
      %v6228 = vpack.c.b16 %v6209, %v6208
      %v6229 = vpack.c.b16 %v6211, %v6210
      %v6230 = vpack.c.b16 %v6213, %v6212
      %v6231 = vpack.c.b16 %v6215, %v6214
      %6248 = vmatprep.subr.bf16.mxu0 0
      %6249 = vmatpush1.bf16.msra.mxu0 %v6216
      %6250 = vmatprep.subr.bf16.mxu0 0
      %6251 = vmatpush1.bf16.msra.mxu0 %v6217
      %6252 = vmatprep.subr.bf16.mxu0 0
      %6253 = vmatpush1.bf16.msra.mxu0 %v6218
      %6254 = vmatprep.subr.bf16.mxu0 0
      %6255 = vmatpush1.bf16.msra.mxu0 %v6219
      %6256 = vmatprep.subr.bf16.mxu0 0
      %6257 = vmatpush1.bf16.msra.mxu0 %v6220
      %6258 = vmatprep.subr.bf16.mxu0 0
      %6259 = vmatpush1.bf16.msra.mxu0 %v6221
      %6260 = vmatprep.subr.bf16.mxu0 0
      %6261 = vmatpush1.bf16.msra.mxu0 %v6222
      %6262 = vmatprep.subr.bf16.mxu0 0
      %6263 = vmatpush1.bf16.msra.mxu0 %v6223
      %6264 = vmatprep.subr.bf16.mxu0 0
      %6265 = vmatpush1.bf16.msra.mxu0 %v6224
      %6266 = vmatprep.subr.bf16.mxu0 0
      %6267 = vmatpush1.bf16.msra.mxu0 %v6225
      %6268 = vmatprep.subr.bf16.mxu0 0
      %6269 = vmatpush1.bf16.msra.mxu0 %v6226
      %6270 = vmatprep.subr.bf16.mxu0 0
      %6271 = vmatpush1.bf16.msra.mxu0 %v6227
      %6272 = vmatprep.subr.bf16.mxu0 0
      %6273 = vmatpush1.bf16.msra.mxu0 %v6228
      %6274 = vmatprep.subr.bf16.mxu0 0
      %6275 = vmatpush1.bf16.msra.mxu0 %v6229
      %6276 = vmatprep.subr.bf16.mxu0 0
      %6277 = vmatpush1.bf16.msra.mxu0 %v6230
      %6278 = vmatprep.subr.bf16.mxu0 0
      %6279 = vmatpush1.bf16.msra.mxu0 %v6231
      %6280 = vmatprep.mubr.bf16.mxu0 %v6050
      %6281 = vmatmul.mubr.bf16.gmra.mrb[0].mxu0 %v6049
      %v6282 = vpop.f32.mrb[0].mxu0
      %v6283 = vadd.f32 %v6150, %v6282
      %v6284 = vpop.f32.mrb[0].mxu0
      %v6285 = vpop.f32.mrb[0].mxu0
      %v6286 = vadd.f32 %v6150, %v6285
      %v6287 = vpop.f32.mrb[0].mxu0
      %6288 = vmatprep.mubr.bf16.mxu0 %v6052
      %6289 = vmatmul.mubr.bf16.gmra.mrb[0].mxu0 %v6051
      %v6290 = vpop.f32.mrb[0].mxu0
      %v6291 = vadd.f32 %v6150, %v6290
      %v6292 = vpop.f32.mrb[0].mxu0
      %v6293 = vpop.f32.mrb[0].mxu0
      %v6294 = vadd.f32 %v6150, %v6293
      %v6295 = vpop.f32.mrb[0].mxu0
      %6296 = vmatprep.mubr.bf16.mxu0 %v6054
      %6297 = vmatmul.mubr.bf16.gmra.mrb[0].mxu0 %v6053
      %v6298 = vpop.f32.mrb[0].mxu0
      %v6299 = vadd.f32 %v6150, %v6298
      %v6300 = vpop.f32.mrb[0].mxu0
      %v6301 = vpop.f32.mrb[0].mxu0
      %v6302 = vadd.f32 %v6150, %v6301
      %v6303 = vpop.f32.mrb[0].mxu0
      %6304 = vmatprep.mubr.bf16.mxu0 %v6056
      %6305 = vmatmul.mubr.bf16.gmra.mrb[0].mxu0 %v6055
      %v6306 = vpop.f32.mrb[0].mxu0
      %v6307 = vadd.f32 %v6150, %v6306
      %v6308 = vpop.f32.mrb[0].mxu0
      %v6309 = vpop.f32.mrb[0].mxu0
      %v6310 = vadd.f32 %v6150, %v6309
      %v6311 = vpop.f32.mrb[0].mxu0
      %6312 = vmatprep.mubr.bf16.mxu0 %v6058
      %6313 = vmatmul.mubr.bf16.gmra.mrb[0].mxu0 %v6057
      %v6314 = vpop.f32.mrb[0].mxu0
      %v6315 = vadd.f32 %v6150, %v6314
      %v6316 = vpop.f32.mrb[0].mxu0
      %v6317 = vpop.f32.mrb[0].mxu0
      %v6318 = vadd.f32 %v6150, %v6317
      %v6319 = vpop.f32.mrb[0].mxu0
      %6320 = vmatprep.mubr.bf16.mxu0 %v6060
      %6321 = vmatmul.mubr.bf16.gmra.mrb[0].mxu0 %v6059
      %v6322 = vpop.f32.mrb[0].mxu0
      %v6323 = vadd.f32 %v6150, %v6322
      %v6324 = vpop.f32.mrb[0].mxu0
      %v6325 = vpop.f32.mrb[0].mxu0
      %v6326 = vadd.f32 %v6150, %v6325
      %v6327 = vpop.f32.mrb[0].mxu0
      %6328 = vmatprep.mubr.bf16.mxu0 %v6062
      %6329 = vmatmul.mubr.bf16.gmra.mrb[0].mxu0 %v6061
      %v6330 = vpop.f32.mrb[0].mxu0
      %v6331 = vadd.f32 %v6150, %v6330
      %v6332 = vpop.f32.mrb[0].mxu0
      %v6333 = vpop.f32.mrb[0].mxu0
      %v6334 = vadd.f32 %v6150, %v6333
      %v6335 = vpop.f32.mrb[0].mxu0
      %6336 = vmatprep.mubr.bf16.mxu0 %v6064
      %6337 = vmatmul.mubr.bf16.gmra.mrb[0].mxu0 %v6063
      %v6338 = vpop.f32.mrb[0].mxu0
      %v6339 = vadd.f32 %v6150, %v6338
      %v6340 = vpop.f32.mrb[0].mxu0
      %v6341 = vpop.f32.mrb[0].mxu0
      %v6342 = vadd.f32 %v6150, %v6341
      %v6343 = vpop.f32.mrb[0].mxu0
      %6344 = vmatprep.mubr.bf16.mxu0 %v6066
      %6345 = vmatmul.mubr.bf16.gmra.mrb[0].mxu0 %v6065
      %v6346 = vpop.f32.mrb[0].mxu0
      %v6347 = vadd.f32 %v6150, %v6346
      %v6348 = vpop.f32.mrb[0].mxu0
      %v6349 = vpop.f32.mrb[0].mxu0
      %v6350 = vadd.f32 %v6150, %v6349
      %v6351 = vpop.f32.mrb[0].mxu0
      %6352 = vmatprep.mubr.bf16.mxu0 %v6068
      %6353 = vmatmul.mubr.bf16.gmra.mrb[0].mxu0 %v6067
      %v6354 = vpop.f32.mrb[0].mxu0
      %v6355 = vadd.f32 %v6150, %v6354
      %v6356 = vpop.f32.mrb[0].mxu0
      %v6357 = vpop.f32.mrb[0].mxu0
      %v6358 = vadd.f32 %v6150, %v6357
      %v6359 = vpop.f32.mrb[0].mxu0
      %6360 = vmatprep.mubr.bf16.mxu0 %v6070
      %6361 = vmatmul.mubr.bf16.gmra.mrb[0].mxu0 %v6069
      %v6362 = vpop.f32.mrb[0].mxu0
      %v6363 = vadd.f32 %v6150, %v6362
      %v6364 = vpop.f32.mrb[0].mxu0
      %v6365 = vpop.f32.mrb[0].mxu0
      %v6366 = vadd.f32 %v6150, %v6365
      %v6367 = vpop.f32.mrb[0].mxu0
      %6368 = vmatprep.mubr.bf16.mxu0 %v6072
      %6369 = vmatmul.mubr.bf16.gmra.mrb[0].mxu0 %v6071
      %v6370 = vpop.f32.mrb[0].mxu0
      %v6371 = vadd.f32 %v6150, %v6370
      %v6372 = vpop.f32.mrb[0].mxu0
      %v6373 = vpop.f32.mrb[0].mxu0
      %v6374 = vadd.f32 %v6150, %v6373
      %v6375 = vpop.f32.mrb[0].mxu0
      %6376 = vmatprep.mubr.bf16.mxu0 %v6074
      %6377 = vmatmul.mubr.bf16.gmra.mrb[0].mxu0 %v6073
      %v6378 = vpop.f32.mrb[0].mxu0
      %v6379 = vadd.f32 %v6150, %v6378
      %v6380 = vpop.f32.mrb[0].mxu0
      %v6381 = vpop.f32.mrb[0].mxu0
      %v6382 = vadd.f32 %v6150, %v6381
      %v6383 = vpop.f32.mrb[0].mxu0
      %6384 = vmatprep.mubr.bf16.mxu0 %v6076
      %6385 = vmatmul.mubr.bf16.gmra.mrb[0].mxu0 %v6075
      %v6386 = vpop.f32.mrb[0].mxu0
      %v6387 = vadd.f32 %v6150, %v6386
      %v6388 = vpop.f32.mrb[0].mxu0
      %v6389 = vpop.f32.mrb[0].mxu0
      %v6390 = vadd.f32 %v6150, %v6389
      %v6391 = vpop.f32.mrb[0].mxu0
      %6392 = vmatprep.mubr.bf16.mxu0 %v6078
      %6393 = vmatmul.mubr.bf16.gmra.mrb[0].mxu0 %v6077
      %v6394 = vpop.f32.mrb[0].mxu0
      %v6395 = vadd.f32 %v6150, %v6394
      %v6396 = vpop.f32.mrb[0].mxu0
      %v6397 = vpop.f32.mrb[0].mxu0
      %v6398 = vadd.f32 %v6150, %v6397
      %v6399 = vpop.f32.mrb[0].mxu0
      %6400 = vmatprep.mubr.bf16.mxu0 %v6080
      %6401 = vmatmul.mubr.bf16.gmra.mrb[0].mxu0 %v6079
      %v6402 = vpop.f32.mrb[0].mxu0
      %v6403 = vadd.f32 %v6150, %v6402
      %v6404 = vpop.f32.mrb[0].mxu0
      %v6405 = vpop.f32.mrb[0].mxu0
      %v6406 = vadd.f32 %v6150, %v6405
      %v6407 = vpop.f32.mrb[0].mxu0
      %6408 = vmatprep.mubr.bf16.mxu0 %v6082
      %6409 = vmatmul.mubr.bf16.gmra.mrb[0].mxu0 %v6081
      %v6410 = vpop.f32.mrb[0].mxu0
      %v6411 = vadd.f32 %v6150, %v6410
      %v6412 = vpop.f32.mrb[0].mxu0
      %v6413 = vpop.f32.mrb[0].mxu0
      %v6414 = vadd.f32 %v6150, %v6413
      %v6415 = vpop.f32.mrb[0].mxu0
      %6416 = vmatprep.mubr.bf16.mxu0 %v6084
      %6417 = vmatmul.mubr.bf16.gmra.mrb[0].mxu0 %v6083
      %v6418 = vpop.f32.mrb[0].mxu0
      %v6419 = vadd.f32 %v6150, %v6418
      %v6420 = vpop.f32.mrb[0].mxu0
      %v6421 = vpop.f32.mrb[0].mxu0
      %v6422 = vadd.f32 %v6150, %v6421
      %v6423 = vpop.f32.mrb[0].mxu0
      %6424 = vmatprep.mubr.bf16.mxu0 %v6086
      %6425 = vmatmul.mubr.bf16.gmra.mrb[0].mxu0 %v6085
      %v6426 = vpop.f32.mrb[0].mxu0
      %v6427 = vadd.f32 %v6150, %v6426
      %v6428 = vpop.f32.mrb[0].mxu0
      %v6429 = vpop.f32.mrb[0].mxu0
      %v6430 = vadd.f32 %v6150, %v6429
      %v6431 = vpop.f32.mrb[0].mxu0
      %6432 = vmatprep.mubr.bf16.mxu0 %v6088
      %6433 = vmatmul.mubr.bf16.gmra.mrb[0].mxu0 %v6087
      %v6434 = vpop.f32.mrb[0].mxu0
      %v6435 = vadd.f32 %v6150, %v6434
      %v6436 = vpop.f32.mrb[0].mxu0
      %v6437 = vpop.f32.mrb[0].mxu0
      %v6438 = vadd.f32 %v6150, %v6437
      %v6439 = vpop.f32.mrb[0].mxu0
      %6440 = vmatprep.mubr.bf16.mxu0 %v6090
      %6441 = vmatmul.mubr.bf16.gmra.mrb[0].mxu0 %v6089
      %v6442 = vpop.f32.mrb[0].mxu0
      %v6443 = vadd.f32 %v6150, %v6442
      %v6444 = vpop.f32.mrb[0].mxu0
      %v6445 = vpop.f32.mrb[0].mxu0
      %v6446 = vadd.f32 %v6150, %v6445
      %v6447 = vpop.f32.mrb[0].mxu0
      %6448 = vmatprep.mubr.bf16.mxu0 %v6092
      %6449 = vmatmul.mubr.bf16.gmra.mrb[0].mxu0 %v6091
      %v6450 = vpop.f32.mrb[0].mxu0
      %v6451 = vadd.f32 %v6150, %v6450
      %v6452 = vpop.f32.mrb[0].mxu0
      %v6453 = vpop.f32.mrb[0].mxu0
      %v6454 = vadd.f32 %v6150, %v6453
      %v6455 = vpop.f32.mrb[0].mxu0
      %6456 = vmatprep.mubr.bf16.mxu0 %v6094
      %6457 = vmatmul.mubr.bf16.gmra.mrb[0].mxu0 %v6093
      %v6458 = vpop.f32.mrb[0].mxu0
      %v6459 = vadd.f32 %v6150, %v6458
      %v6460 = vpop.f32.mrb[0].mxu0
      %v6461 = vpop.f32.mrb[0].mxu0
      %v6462 = vadd.f32 %v6150, %v6461
      %v6463 = vpop.f32.mrb[0].mxu0
      %6464 = vmatprep.mubr.bf16.mxu0 %v6096
      %6465 = vmatmul.mubr.bf16.gmra.mrb[0].mxu0 %v6095
      %v6466 = vpop.f32.mrb[0].mxu0
      %v6467 = vadd.f32 %v6150, %v6466
      %v6468 = vpop.f32.mrb[0].mxu0
      %v6469 = vpop.f32.mrb[0].mxu0
      %v6470 = vadd.f32 %v6150, %v6469
      %v6471 = vpop.f32.mrb[0].mxu0
      %6472 = vmatprep.mubr.bf16.mxu0 %v6098
      %6473 = vmatmul.mubr.bf16.gmra.mrb[0].mxu0 %v6097
      %v6474 = vpop.f32.mrb[0].mxu0
      %v6475 = vadd.f32 %v6150, %v6474
      %v6476 = vpop.f32.mrb[0].mxu0
      %v6477 = vpop.f32.mrb[0].mxu0
      %v6478 = vadd.f32 %v6150, %v6477
      %v6479 = vpop.f32.mrb[0].mxu0
      %6480 = vmatprep.mubr.bf16.mxu0 %v6100
      %6481 = vmatmul.mubr.bf16.gmra.mrb[0].mxu0 %v6099
      %v6482 = vpop.f32.mrb[0].mxu0
      %v6483 = vadd.f32 %v6150, %v6482
      %v6484 = vpop.f32.mrb[0].mxu0
      %v6485 = vpop.f32.mrb[0].mxu0
      %v6486 = vadd.f32 %v6150, %v6485
      %v6487 = vpop.f32.mrb[0].mxu0
      %6488 = vmatprep.mubr.bf16.mxu0 %v6102
      %6489 = vmatmul.mubr.bf16.gmra.mrb[0].mxu0 %v6101
      %v6490 = vpop.f32.mrb[0].mxu0
      %v6491 = vadd.f32 %v6150, %v6490
      %v6492 = vpop.f32.mrb[0].mxu0
      %v6493 = vpop.f32.mrb[0].mxu0
      %v6494 = vadd.f32 %v6150, %v6493
      %v6495 = vpop.f32.mrb[0].mxu0
      %6496 = vmatprep.mubr.bf16.mxu0 %v6104
      %6497 = vmatmul.mubr.bf16.gmra.mrb[0].mxu0 %v6103
      %v6498 = vpop.f32.mrb[0].mxu0
      %v6499 = vadd.f32 %v6150, %v6498
      %v6500 = vpop.f32.mrb[0].mxu0
      %v6501 = vpop.f32.mrb[0].mxu0
      %v6502 = vadd.f32 %v6150, %v6501
      %v6503 = vpop.f32.mrb[0].mxu0
      %6504 = vmatprep.mubr.bf16.mxu0 %v6106
      %6505 = vmatmul.mubr.bf16.gmra.mrb[0].mxu0 %v6105
      %v6506 = vpop.f32.mrb[0].mxu0
      %v6507 = vadd.f32 %v6150, %v6506
      %v6508 = vpop.f32.mrb[0].mxu0
      %v6509 = vpop.f32.mrb[0].mxu0
      %v6510 = vadd.f32 %v6150, %v6509
      %v6511 = vpop.f32.mrb[0].mxu0
      %6512 = vmatprep.mubr.bf16.mxu0 %v6108
      %6513 = vmatmul.mubr.bf16.gmra.mrb[0].mxu0 %v6107
      %v6514 = vpop.f32.mrb[0].mxu0
      %v6515 = vadd.f32 %v6150, %v6514
      %v6516 = vpop.f32.mrb[0].mxu0
      %v6517 = vpop.f32.mrb[0].mxu0
      %v6518 = vadd.f32 %v6150, %v6517
      %v6519 = vpop.f32.mrb[0].mxu0
      %6520 = vmatprep.mubr.bf16.mxu0 %v6110
      %6521 = vmatmul.mubr.bf16.gmra.mrb[0].mxu0 %v6109
      %v6522 = vpop.f32.mrb[0].mxu0
      %v6523 = vadd.f32 %v6150, %v6522
      %v6524 = vpop.f32.mrb[0].mxu0
      %v6525 = vpop.f32.mrb[0].mxu0
      %v6526 = vadd.f32 %v6150, %v6525
      %v6527 = vpop.f32.mrb[0].mxu0
      %6528 = vmatprep.mubr.bf16.mxu0 %v6112
      %6529 = vmatmul.mubr.bf16.gmra.mrb[0].mxu0 %v6111
      %v6530 = vpop.f32.mrb[0].mxu0
      %v6531 = vadd.f32 %v6150, %v6530
      %v6532 = vpop.f32.mrb[0].mxu0
      %v6533 = vpop.f32.mrb[0].mxu0
      %v6534 = vadd.f32 %v6150, %v6533
      %v6535 = vpop.f32.mrb[0].mxu0
      %6536 = vdwg.mxu0
      %v6537 = vmax.f32 %v6283, 0.0
      %v6538 = vmax.f32 %v6286, 0.0
      %v6539 = vmax.f32 %v6291, 0.0
      %v6540 = vmax.f32 %v6294, 0.0
      %v6541 = vmax.f32 %v6299, 0.0
      %v6542 = vmax.f32 %v6302, 0.0
      %v6543 = vmax.f32 %v6307, 0.0
      %v6544 = vmax.f32 %v6310, 0.0
      %v6545 = vmax.f32 %v6315, 0.0
      %v6546 = vmax.f32 %v6318, 0.0
      %v6547 = vmax.f32 %v6323, 0.0
      %v6548 = vmax.f32 %v6326, 0.0
      %v6549 = vmax.f32 %v6331, 0.0
      %v6550 = vmax.f32 %v6334, 0.0
      %v6551 = vmax.f32 %v6339, 0.0
      %v6552 = vmax.f32 %v6342, 0.0
      %v6553 = vmax.f32 %v6347, 0.0
      %v6554 = vmax.f32 %v6350, 0.0
      %v6555 = vmax.f32 %v6355, 0.0
      %v6556 = vmax.f32 %v6358, 0.0
      %v6557 = vmax.f32 %v6363, 0.0
      %v6558 = vmax.f32 %v6366, 0.0
      %v6559 = vmax.f32 %v6371, 0.0
      %v6560 = vmax.f32 %v6374, 0.0
      %v6561 = vmax.f32 %v6379, 0.0
      %v6562 = vmax.f32 %v6382, 0.0
      %v6563 = vmax.f32 %v6387, 0.0
      %v6564 = vmax.f32 %v6390, 0.0
      %v6565 = vmax.f32 %v6395, 0.0
      %v6566 = vmax.f32 %v6398, 0.0
      %v6567 = vmax.f32 %v6403, 0.0
      %v6568 = vmax.f32 %v6406, 0.0
      %v6569 = vmax.f32 %v6411, 0.0
      %v6570 = vmax.f32 %v6414, 0.0
      %v6571 = vmax.f32 %v6419, 0.0
      %v6572 = vmax.f32 %v6422, 0.0
      %v6573 = vmax.f32 %v6427, 0.0
      %v6574 = vmax.f32 %v6430, 0.0
      %v6575 = vmax.f32 %v6435, 0.0
      %v6576 = vmax.f32 %v6438, 0.0
      %v6577 = vmax.f32 %v6443, 0.0
      %v6578 = vmax.f32 %v6446, 0.0
      %v6579 = vmax.f32 %v6451, 0.0
      %v6580 = vmax.f32 %v6454, 0.0
      %v6581 = vmax.f32 %v6459, 0.0
      %v6582 = vmax.f32 %v6462, 0.0
      %v6583 = vmax.f32 %v6467, 0.0
      %v6584 = vmax.f32 %v6470, 0.0
      %v6585 = vmax.f32 %v6475, 0.0
      %v6586 = vmax.f32 %v6478, 0.0
      %v6587 = vmax.f32 %v6483, 0.0
      %v6588 = vmax.f32 %v6486, 0.0
      %v6589 = vmax.f32 %v6491, 0.0
      %v6590 = vmax.f32 %v6494, 0.0
      %v6591 = vmax.f32 %v6499, 0.0
      %v6592 = vmax.f32 %v6502, 0.0
      %v6593 = vmax.f32 %v6507, 0.0
      %v6594 = vmax.f32 %v6510, 0.0
      %v6595 = vmax.f32 %v6515, 0.0
      %v6596 = vmax.f32 %v6518, 0.0
      %v6597 = vmax.f32 %v6523, 0.0
      %v6598 = vmax.f32 %v6526, 0.0
      %v6599 = vmax.f32 %v6531, 0.0
      %v6600 = vmax.f32 %v6534, 0.0
      %v6601 = vadd.f32 %v785, %v6537
      %v6602 = vadd.f32 %v789, %v6538
      %v6603 = vadd.f32 %v795, %v6539
      %v6604 = vadd.f32 %v799, %v6540
      %v6605 = vadd.f32 %v805, %v6541
      %v6606 = vadd.f32 %v809, %v6542
      %v6607 = vadd.f32 %v815, %v6543
      %v6608 = vadd.f32 %v819, %v6544
      %v6609 = vadd.f32 %v825, %v6545
      %v6610 = vadd.f32 %v829, %v6546
      %v6611 = vadd.f32 %v835, %v6547
      %v6612 = vadd.f32 %v839, %v6548
      %v6613 = vadd.f32 %v845, %v6549
      %v6614 = vadd.f32 %v849, %v6550
      %v6615 = vadd.f32 %v855, %v6551
      %v6616 = vadd.f32 %v859, %v6552
      %v6617 = vadd.f32 %v865, %v6553
      %v6618 = vadd.f32 %v869, %v6554
      %v6619 = vadd.f32 %v875, %v6555
      %v6620 = vadd.f32 %v879, %v6556
      %v6621 = vadd.f32 %v885, %v6557
      %v6622 = vadd.f32 %v889, %v6558
      %v6623 = vadd.f32 %v895, %v6559
      %v6624 = vadd.f32 %v899, %v6560
      %v6625 = vadd.f32 %v905, %v6561
      %v6626 = vadd.f32 %v909, %v6562
      %v6627 = vadd.f32 %v915, %v6563
      %v6628 = vadd.f32 %v919, %v6564
      %v6629 = vadd.f32 %v925, %v6565
      %v6630 = vadd.f32 %v929, %v6566
      %v6631 = vadd.f32 %v935, %v6567
      %v6632 = vadd.f32 %v939, %v6568
      %v6633 = vadd.f32 %v945, %v6569
      %v6634 = vadd.f32 %v949, %v6570
      %v6635 = vadd.f32 %v955, %v6571
      %v6636 = vadd.f32 %v959, %v6572
      %v6637 = vadd.f32 %v965, %v6573
      %v6638 = vadd.f32 %v969, %v6574
      %v6639 = vadd.f32 %v975, %v6575
      %v6640 = vadd.f32 %v979, %v6576
      %v6641 = vadd.f32 %v985, %v6577
      %v6642 = vadd.f32 %v989, %v6578
      %v6643 = vadd.f32 %v995, %v6579
      %v6644 = vadd.f32 %v999, %v6580
      %v6645 = vadd.f32 %v1005, %v6581
      %v6646 = vadd.f32 %v1009, %v6582
      %v6647 = vadd.f32 %v1015, %v6583
      %v6648 = vadd.f32 %v1019, %v6584
      %v6649 = vadd.f32 %v1025, %v6585
      %v6650 = vadd.f32 %v1029, %v6586
      %v6651 = vadd.f32 %v1035, %v6587
      %v6652 = vadd.f32 %v1039, %v6588
      %v6653 = vadd.f32 %v1045, %v6589
      %v6654 = vadd.f32 %v1049, %v6590
      %v6655 = vadd.f32 %v1055, %v6591
      %v6656 = vadd.f32 %v1059, %v6592
      %v6657 = vadd.f32 %v1065, %v6593
      %v6658 = vadd.f32 %v1069, %v6594
      %v6659 = vadd.f32 %v1075, %v6595
      %v6660 = vadd.f32 %v1079, %v6596
      %v6661 = vadd.f32 %v1085, %v6597
      %v6662 = vadd.f32 %v1089, %v6598
      %v6663 = vadd.f32 %v1095, %v6599
      %v6664 = vadd.f32 %v1099, %v6600
      %v6665 = vmul.f32 %v6601, 0.1
      %v6666 = vmul.f32 %v6602, 0.1
      %v6667 = vmul.f32 %v6603, 0.1
      %v6668 = vmul.f32 %v6604, 0.1
      %v6669 = vmul.f32 %v6605, 0.1
      %v6670 = vmul.f32 %v6606, 0.1
      %v6671 = vmul.f32 %v6607, 0.1
      %v6672 = vmul.f32 %v6608, 0.1
      %v6673 = vmul.f32 %v6609, 0.1
      %v6674 = vmul.f32 %v6610, 0.1
      %v6675 = vmul.f32 %v6611, 0.1
      %v6676 = vmul.f32 %v6612, 0.1
      %v6677 = vmul.f32 %v6613, 0.1
      %v6678 = vmul.f32 %v6614, 0.1
      %v6679 = vmul.f32 %v6615, 0.1
      %v6680 = vmul.f32 %v6616, 0.1
      %v6681 = vmul.f32 %v6617, 0.1
      %v6682 = vmul.f32 %v6618, 0.1
      %v6683 = vmul.f32 %v6619, 0.1
      %v6684 = vmul.f32 %v6620, 0.1
      %v6685 = vmul.f32 %v6621, 0.1
      %v6686 = vmul.f32 %v6622, 0.1
      %v6687 = vmul.f32 %v6623, 0.1
      %v6688 = vmul.f32 %v6624, 0.1
      %v6689 = vmul.f32 %v6625, 0.1
      %v6690 = vmul.f32 %v6626, 0.1
      %v6691 = vmul.f32 %v6627, 0.1
      %v6692 = vmul.f32 %v6628, 0.1
      %v6693 = vmul.f32 %v6629, 0.1
      %v6694 = vmul.f32 %v6630, 0.1
      %v6695 = vmul.f32 %v6631, 0.1
      %v6696 = vmul.f32 %v6632, 0.1
      %v6697 = vmul.f32 %v6633, 0.1
      %v6698 = vmul.f32 %v6634, 0.1
      %v6699 = vmul.f32 %v6635, 0.1
      %v6700 = vmul.f32 %v6636, 0.1
      %v6701 = vmul.f32 %v6637, 0.1
      %v6702 = vmul.f32 %v6638, 0.1
      %v6703 = vmul.f32 %v6639, 0.1
      %v6704 = vmul.f32 %v6640, 0.1
      %v6705 = vmul.f32 %v6641, 0.1
      %v6706 = vmul.f32 %v6642, 0.1
      %v6707 = vmul.f32 %v6643, 0.1
      %v6708 = vmul.f32 %v6644, 0.1
      %v6709 = vmul.f32 %v6645, 0.1
      %v6710 = vmul.f32 %v6646, 0.1
      %v6711 = vmul.f32 %v6647, 0.1
      %v6712 = vmul.f32 %v6648, 0.1
      %v6713 = vmul.f32 %v6649, 0.1
      %v6714 = vmul.f32 %v6650, 0.1
      %v6715 = vmul.f32 %v6651, 0.1
      %v6716 = vmul.f32 %v6652, 0.1
      %v6717 = vmul.f32 %v6653, 0.1
      %v6718 = vmul.f32 %v6654, 0.1
      %v6719 = vmul.f32 %v6655, 0.1
      %v6720 = vmul.f32 %v6656, 0.1
      %v6721 = vmul.f32 %v6657, 0.1
      %v6722 = vmul.f32 %v6658, 0.1
      %v6723 = vmul.f32 %v6659, 0.1
      %v6724 = vmul.f32 %v6660, 0.1
      %v6725 = vmul.f32 %v6661, 0.1
      %v6726 = vmul.f32 %v6662, 0.1
      %v6727 = vmul.f32 %v6663, 0.1
      %v6728 = vmul.f32 %v6664, 0.1
      %v6729 = vmax.f32 %v6601, %v6665
      %v6730 = vmax.f32 %v6602, %v6666
      %v6731 = vmax.f32 %v6603, %v6667
      %v6732 = vmax.f32 %v6604, %v6668
      %v6733 = vmax.f32 %v6605, %v6669
      %v6734 = vmax.f32 %v6606, %v6670
      %v6735 = vmax.f32 %v6607, %v6671
      %v6736 = vmax.f32 %v6608, %v6672
      %v6737 = vmax.f32 %v6609, %v6673
      %v6738 = vmax.f32 %v6610, %v6674
      %v6739 = vmax.f32 %v6611, %v6675
      %v6740 = vmax.f32 %v6612, %v6676
      %v6741 = vmax.f32 %v6613, %v6677
      %v6742 = vmax.f32 %v6614, %v6678
      %v6743 = vmax.f32 %v6615, %v6679
      %v6744 = vmax.f32 %v6616, %v6680
      %v6745 = vmax.f32 %v6617, %v6681
      %v6746 = vmax.f32 %v6618, %v6682
      %v6747 = vmax.f32 %v6619, %v6683
      %v6748 = vmax.f32 %v6620, %v6684
      %v6749 = vmax.f32 %v6621, %v6685
      %v6750 = vmax.f32 %v6622, %v6686
      %v6751 = vmax.f32 %v6623, %v6687
      %v6752 = vmax.f32 %v6624, %v6688
      %v6753 = vmax.f32 %v6625, %v6689
      %v6754 = vmax.f32 %v6626, %v6690
      %v6755 = vmax.f32 %v6627, %v6691
      %v6756 = vmax.f32 %v6628, %v6692
      %v6757 = vmax.f32 %v6629, %v6693
      %v6758 = vmax.f32 %v6630, %v6694
      %v6759 = vmax.f32 %v6631, %v6695
      %v6760 = vmax.f32 %v6632, %v6696
      %v6761 = vmax.f32 %v6633, %v6697
      %v6762 = vmax.f32 %v6634, %v6698
      %v6763 = vmax.f32 %v6635, %v6699
      %v6764 = vmax.f32 %v6636, %v6700
      %v6765 = vmax.f32 %v6637, %v6701
      %v6766 = vmax.f32 %v6638, %v6702
      %v6767 = vmax.f32 %v6639, %v6703
      %v6768 = vmax.f32 %v6640, %v6704
      %v6769 = vmax.f32 %v6641, %v6705
      %v6770 = vmax.f32 %v6642, %v6706
      %v6771 = vmax.f32 %v6643, %v6707
      %v6772 = vmax.f32 %v6644, %v6708
      %v6773 = vmax.f32 %v6645, %v6709
      %v6774 = vmax.f32 %v6646, %v6710
      %v6775 = vmax.f32 %v6647, %v6711
      %v6776 = vmax.f32 %v6648, %v6712
      %v6777 = vmax.f32 %v6649, %v6713
      %v6778 = vmax.f32 %v6650, %v6714
      %v6779 = vmax.f32 %v6651, %v6715
      %v6780 = vmax.f32 %v6652, %v6716
      %v6781 = vmax.f32 %v6653, %v6717
      %v6782 = vmax.f32 %v6654, %v6718
      %v6783 = vmax.f32 %v6655, %v6719
      %v6784 = vmax.f32 %v6656, %v6720
      %v6785 = vmax.f32 %v6657, %v6721
      %v6786 = vmax.f32 %v6658, %v6722
      %v6787 = vmax.f32 %v6659, %v6723
      %v6788 = vmax.f32 %v6660, %v6724
      %v6789 = vmax.f32 %v6661, %v6725
      %v6790 = vmax.f32 %v6662, %v6726
      %v6791 = vmax.f32 %v6663, %v6727
      %v6792 = vmax.f32 %v6664, %v6728
      %vm6793 = vcmask 261120
      %6794 = vst.msk [vmem:[%s329] sm:$0xff] %vm6793, %v6729
      %6795 = vst.msk [vmem:[%s329 + $0x8] sm:$0xff] %vm6793, %v6730
      %6796 = vst.msk [vmem:[%s329 + $0x10] sm:$0xff] %vm6793, %v6731
      %6797 = vst.msk [vmem:[%s329 + $0x18] sm:$0xff] %vm6793, %v6732
      %6798 = vst.msk [vmem:[%s329 + $0x20] sm:$0xff] %vm6793, %v6733
      %6799 = vst.msk [vmem:[%s329 + $0x28] sm:$0xff] %vm6793, %v6734
      %6800 = vst.msk [vmem:[%s329 + $0x30] sm:$0xff] %vm6793, %v6735
      %6801 = vst.msk [vmem:[%s329 + $0x38] sm:$0xff] %vm6793, %v6736
      %6802 = vst.msk [vmem:[%s329 + $0x40] sm:$0xff] %vm6793, %v6737
      %6803 = vst.msk [vmem:[%s329 + $0x48] sm:$0xff] %vm6793, %v6738
      %6804 = vst.msk [vmem:[%s329 + $0x50] sm:$0xff] %vm6793, %v6739
      %6805 = vst.msk [vmem:[%s329 + $0x58] sm:$0xff] %vm6793, %v6740
      %6806 = vst.msk [vmem:[%s329 + $0x60] sm:$0xff] %vm6793, %v6741
      %6807 = vst.msk [vmem:[%s329 + $0x68] sm:$0xff] %vm6793, %v6742
      %6808 = vst.msk [vmem:[%s329 + $0x70] sm:$0xff] %vm6793, %v6743
      %6809 = vst.msk [vmem:[%s329 + $0x78] sm:$0xff] %vm6793, %v6744
      %6810 = vst.msk [vmem:[%s329 + $0x80] sm:$0xff] %vm6793, %v6745
      %6811 = vst.msk [vmem:[%s329 + $0x88] sm:$0xff] %vm6793, %v6746
      %6812 = vst.msk [vmem:[%s329 + $0x90] sm:$0xff] %vm6793, %v6747
      %6813 = vst.msk [vmem:[%s329 + $0x98] sm:$0xff] %vm6793, %v6748
      %6814 = vst.msk [vmem:[%s329 + $0xa0] sm:$0xff] %vm6793, %v6749
      %6815 = vst.msk [vmem:[%s329 + $0xa8] sm:$0xff] %vm6793, %v6750
      %6816 = vst.msk [vmem:[%s329 + $0xb0] sm:$0xff] %vm6793, %v6751
      %6817 = vst.msk [vmem:[%s329 + $0xb8] sm:$0xff] %vm6793, %v6752
      %6818 = vst.msk [vmem:[%s329 + $0xc0] sm:$0xff] %vm6793, %v6753
      %6819 = vst.msk [vmem:[%s329 + $0xc8] sm:$0xff] %vm6793, %v6754
      %6820 = vst.msk [vmem:[%s329 + $0xd0] sm:$0xff] %vm6793, %v6755
      %6821 = vst.msk [vmem:[%s329 + $0xd8] sm:$0xff] %vm6793, %v6756
      %6822 = vst.msk [vmem:[%s329 + $0xe0] sm:$0xff] %vm6793, %v6757
      %6823 = vst.msk [vmem:[%s329 + $0xe8] sm:$0xff] %vm6793, %v6758
      %6824 = vst.msk [vmem:[%s329 + $0xf0] sm:$0xff] %vm6793, %v6759
      %6825 = vst.msk [vmem:[%s329 + $0xf8] sm:$0xff] %vm6793, %v6760
      %6826 = vst.msk [vmem:[%s329 + $0x100] sm:$0xff] %vm6793, %v6761
      %6827 = vst.msk [vmem:[%s329 + $0x108] sm:$0xff] %vm6793, %v6762
      %6828 = vst.msk [vmem:[%s329 + $0x110] sm:$0xff] %vm6793, %v6763
      %6829 = vst.msk [vmem:[%s329 + $0x118] sm:$0xff] %vm6793, %v6764
      %6830 = vst.msk [vmem:[%s329 + $0x120] sm:$0xff] %vm6793, %v6765
      %6831 = vst.msk [vmem:[%s329 + $0x128] sm:$0xff] %vm6793, %v6766
      %6832 = vst.msk [vmem:[%s329 + $0x130] sm:$0xff] %vm6793, %v6767
      %6833 = vst.msk [vmem:[%s329 + $0x138] sm:$0xff] %vm6793, %v6768
      %6834 = vst.msk [vmem:[%s329 + $0x140] sm:$0xff] %vm6793, %v6769
      %6835 = vst.msk [vmem:[%s329 + $0x148] sm:$0xff] %vm6793, %v6770
      %6836 = vst.msk [vmem:[%s329 + $0x150] sm:$0xff] %vm6793, %v6771
      %6837 = vst.msk [vmem:[%s329 + $0x158] sm:$0xff] %vm6793, %v6772
      %6838 = vst.msk [vmem:[%s329 + $0x160] sm:$0xff] %vm6793, %v6773
      %6839 = vst.msk [vmem:[%s329 + $0x168] sm:$0xff] %vm6793, %v6774
      %6840 = vst.msk [vmem:[%s329 + $0x170] sm:$0xff] %vm6793, %v6775
      %6841 = vst.msk [vmem:[%s329 + $0x178] sm:$0xff] %vm6793, %v6776
      %6842 = vst.msk [vmem:[%s329 + $0x180] sm:$0xff] %vm6793, %v6777
      %6843 = vst.msk [vmem:[%s329 + $0x188] sm:$0xff] %vm6793, %v6778
      %6844 = vst.msk [vmem:[%s329 + $0x190] sm:$0xff] %vm6793, %v6779
      %6845 = vst.msk [vmem:[%s329 + $0x198] sm:$0xff] %vm6793, %v6780
      %6846 = vst.msk [vmem:[%s329 + $0x1a0] sm:$0xff] %vm6793, %v6781
      %6847 = vst.msk [vmem:[%s329 + $0x1a8] sm:$0xff] %vm6793, %v6782
      %6848 = vst.msk [vmem:[%s329 + $0x1b0] sm:$0xff] %vm6793, %v6783
      %6849 = vst.msk [vmem:[%s329 + $0x1b8] sm:$0xff] %vm6793, %v6784
      %6850 = vst.msk [vmem:[%s329 + $0x1c0] sm:$0xff] %vm6793, %v6785
      %6851 = vst.msk [vmem:[%s329 + $0x1c8] sm:$0xff] %vm6793, %v6786
      %6852 = vst.msk [vmem:[%s329 + $0x1d0] sm:$0xff] %vm6793, %v6787
      %6853 = vst.msk [vmem:[%s329 + $0x1d8] sm:$0xff] %vm6793, %v6788
      %6854 = vst.msk [vmem:[%s329 + $0x1e0] sm:$0xff] %vm6793, %v6789
      %6855 = vst.msk [vmem:[%s329 + $0x1e8] sm:$0xff] %vm6793, %v6790
      %6856 = vst.msk [vmem:[%s329 + $0x1f0] sm:$0xff] %vm6793, %v6791
      %6857 = vst.msk [vmem:[%s329 + $0x1f8] sm:$0xff] %vm6793, %v6792
      %s6858 = smul.u32 64, %s19
      %p6859 = scmp.lt.s32.totalorder %s6858, 127
      %s6860 = scalar_select %p6859, %s6858, 127
      %s6861 = smul.addr %s6860, 8
      %s6862 = scalar_lea.vmem %s8, %s6861
      // Predicated region
      $region53: #{lfa_forward.1} parent=51 // pred_check
        %p6863 = pneg %p215
      $region54: #{lfa_forward.1} parent=51 // pred_check_branch
        %6865 = sbr.rel (%p6863) target = $region56
      $region55: #{lfa_forward.1} parent=51 // pred_region
        %s6866 = smul.u32 64, %s19
      $region56: #{lfa_forward.1} parent=51 // pred_fallthru
        _
    $region52: #{lfa_forward.1} parent=5 // pred_fallthru
      _
    %p6867 = scmp.le.s32.totalorder 2, %s14
    // Predicated region
    $region57: #{lfa_forward.1} parent=5 // pred_check
      %p6868 = pneg %p6867
    $region58: #{lfa_forward.1} parent=5 // pred_check_branch
      %6870 = sbr.rel (%p6868) target = $region60
    $region59: #{lfa_forward.1} parent=5 // pred_region
      %s6871 = ssub.s32 %s14, 2
      // Predicated region
      $region61: #{lfa_forward.1} parent=59 // pred_check
        %p6872 = pneg %p221
      $region62: #{lfa_forward.1} parent=59 // pred_check_branch
        %6874 = sbr.rel (%p6872) target = $region64
      $region63: #{lfa_forward.1} parent=59 // pred_region
        %s6875 = smul.u32 64, %s20
        %p6876 = scmp.lt.s32.totalorder %s6875, 127
        %s6877 = scalar_select %p6876, %s6875, 127
        %s6878 = smul.addr %s6877, 8
        %s6879 = scalar_lea.vmem %s8, %s6878
      $region64: #{lfa_forward.1} parent=59 // pred_fallthru
        _
    $region60: #{lfa_forward.1} parent=5 // pred_fallthru
      _
  $region6: #{lfa_forward.1} parent=0 // loop_footer
    %s18 = sadd.s32 1, %s14
  $region7: #{lfa_forward.1} parent=0 // loop_footer_branch
    %13 = sbr.rel target = $region3
  $region8: #{lfa_forward.1} parent=0 // loop_exit
    _

</llo_original>
